<compile_context>
chip_gen: v6e
topology: v6e:2x2x1
jax: 0.10.0
libtpu: 0.0.40
codegen_flags: <defaults>
</compile_context>

<pallas_src>
import functools
import math

import jax
import jax.numpy as jnp
from jax import lax
from jax.experimental import pallas as pl
from jax.experimental.pallas import tpu as pltpu


# ---------------------------------------------------------------------------
# Static architecture description (never traced):
#   (transposed, C_in, C_out, K, stride, padding, output_padding, act, slope)
# ---------------------------------------------------------------------------
_LAYERS = (
    # encoder: Conv1d (+ReLU), last encoder layer uses F.leaky_relu (slope 0.01)
    (False, 1, 16, 3, 2, 1, 0, "relu", 0.0),
    (False, 16, 32, 3, 2, 1, 0, "relu", 0.0),
    (False, 32, 64, 3, 2, 1, 0, "relu", 0.0),
    (False, 64, 16, 16, 8, 0, 0, "leaky", 0.01),
    # decoder: ConvTranspose1d (+ReLU), last decoder layer uses LeakyReLU(0.1)
    (True, 16, 64, 16, 8, 0, 0, "relu", 0.0),
    (True, 64, 32, 3, 2, 1, 1, "relu", 0.0),
    (True, 32, 16, 3, 2, 1, 1, "relu", 0.0),
    (True, 16, 1, 3, 2, 1, 1, "leaky", 0.1),
)


def _length_plan(l_in):
    """Static per-layer (L_in, L_out), plus the final output length."""
    plan, cur = [], l_in
    for transposed, _ci, _co, k, s, p, op, _act, _slope in _LAYERS:
        nxt = (cur - 1) * s - 2 * p + k + op if transposed else (cur + 2 * p - k) // s + 1
        plan.append((cur, nxt))
        cur = nxt
    return plan, cur


# ---------------------------------------------------------------------------
# Fused Pallas kernel: full autoencoder forward for one batch element.
# ---------------------------------------------------------------------------
def _autoencoder_kernel(x_ref, *refs, cfgs):
    """x_ref: (1, 1, L) input block.  refs = (A_0, b_0, ..., A_7, b_7, out_ref) with
    A_l: (K, C_out, C_in) bf16 (pre-transposed conv weight), b_l: (C_out, 1) f32."""
    out_ref = refs[-1]
    wb = refs[:-1]

    act = x_ref[0].astype(jnp.bfloat16)                 # (C_in=1, L): lane-dense layout
    y = None
    for li, (transposed, c_in, c_out, k_sz, s, p, _op, act_kind, slope,
             l_in, l_out) in enumerate(cfgs):
        a_ref, b_ref = wb[2 * li], wb[2 * li + 1]

        # Tap-selection index field (built on the VPU; implicit zero-padding is free):
        #   conv : input j feeds output t of tap k  iff  j == s*t + k - p
        #   convT: input j feeds output t of tap k  iff  t == s*j + k - p  (overlap-add)
        jj = lax.broadcasted_iota(jnp.int32, (l_in, l_out), 0)
        tt = lax.broadcasted_iota(jnp.int32, (l_in, l_out), 1)
        d = (tt - s * jj + p) if transposed else (jj - s * tt + p)

        acc = jnp.zeros((c_out, l_out), jnp.float32)
        for k in range(k_sz):                           # K is 3 or 16 -> fully unrolled
            m_k = jnp.where(d == k, 1.0, 0.0).astype(jnp.bfloat16)    # (l_in, l_out)
            # Spatial select / scatter as a matmul (each column has <= 1 hit -> exact).
            if l_in == 1:
                z = act * m_k                           # outer product on the VPU
            else:
                z = jnp.dot(act, m_k, preferred_element_type=jnp.float32)
            z = z.astype(jnp.bfloat16)                  # (c_in, l_out), lossless selection
            a_k = a_ref[k]                              # (c_out, c_in) bf16
            if c_in == 1:
                acc = acc + a_k.astype(jnp.float32) * z.astype(jnp.float32)
            else:
                acc = acc + jnp.dot(a_k, z, preferred_element_type=jnp.float32)

        y = acc + b_ref[...]                            # (c_out, l_out) + (c_out, 1)
        if act_kind == "relu":
            y = jnp.maximum(y, 0.0)
        else:                                           # leaky relu
            y = jnp.where(y >= 0.0, y, slope * y)
        act = y.astype(jnp.bfloat16)

    out_ref[0] = y.astype(out_ref.dtype)                # final y: (1, L), full lane row


# ---------------------------------------------------------------------------
# Wrapper: one pallas_call for the whole forward pass.
# ---------------------------------------------------------------------------
def forward(params, x):
    """x: (B, 1, L) f32 -> (B, 1, L) f32 (RunningMode.encoder_decoder)."""
    b_sz, c0, l_sz = x.shape
    assert c0 == 1
    plan, l_final = _length_plan(l_sz)
    assert l_final == l_sz, (l_final, l_sz)
    cfgs = tuple(layer + lens for layer, lens in zip(_LAYERS, plan))

    flat = []
    for a, b in params:
        flat.append(a)
        flat.append(b)

    def _resident(arr):                                 # whole array, VMEM-resident
        nd = arr.ndim
        return pl.BlockSpec(arr.shape, lambda i, _nd=nd: (0,) * _nd)

    kern = functools.partial(_autoencoder_kernel, cfgs=cfgs)
    return pl.pallas_call(
        kern,
        out_shape=jax.ShapeDtypeStruct((b_sz, 1, l_sz), jnp.float32),
        grid=(b_sz,),
        in_specs=[pl.BlockSpec((1, 1, l_sz), lambda i: (i, 0, 0))]
                 + [_resident(a) for a in flat],
        out_specs=pl.BlockSpec((1, 1, l_sz), lambda i: (i, 0, 0)),
        compiler_params=pltpu.CompilerParams(
            dimension_semantics=("parallel",),          # shard batch across v7x's 2 TCs
        ),
    )(x, *flat)


# ---------------------------------------------------------------------------
# Parameter init (PyTorch layout) + one-time preprocessing for the kernel.
# ---------------------------------------------------------------------------
def init_params(key):
    """Deterministic PyTorch-style uniform init, weights in PyTorch layout."""
    keys = jax.random.split(key, len(_LAYERS))
    raw = []
    for lk, (transposed, c_in, c_out, k, _s, _p, _op, _act, _slope) in zip(keys, _LAYERS):
        kw, kb = jax.random.split(lk)
        bound = 1.0 / math.sqrt(c_in * k)
        shape = (c_in, c_out, k) if transposed else (c_out, c_in, k)
        w = jax.random.uniform(kw, shape, jnp.float32, -bound, bound)
        b = jax.random.uniform(kb, (c_out,), jnp.float32, -bound, bound)
        raw.append((w, b))
    return raw


def prepare_params(raw):
    """One-time (outside jit): PyTorch weights -> (K, C_out, C_in) bf16, bias -> (C_out, 1) f32."""
    prepared = []
    for (w, b), (transposed, _ci, c_out, *_rest) in zip(raw, _LAYERS):
        a = jnp.transpose(w, (2, 1, 0)) if transposed else jnp.transpose(w, (2, 0, 1))
        prepared.append((a.astype(jnp.bfloat16), b.reshape(c_out, 1).astype(jnp.float32)))
    return prepared


# ---------------------------------------------------------------------------
# Pure-JAX/XLA reference (PyTorch Conv1d / ConvTranspose1d semantics).
# ---------------------------------------------------------------------------
def reference_forward(raw_params, x):
    dn = ("NCH", "OIH", "NCH")
    for (w, b), (transposed, _ci, _co, k, s, p, op, act, slope) in zip(raw_params, _LAYERS):
        if transposed:
            w_conv = jnp.flip(w, axis=-1).transpose(1, 0, 2)        # (C_out, C_in, K)
            y = lax.conv_general_dilated(x, w_conv, window_strides=(1,),
                                         padding=[(k - 1 - p, k - 1 - p + op)],
                                         lhs_dilation=(s,), dimension_numbers=dn)
        else:
            y = lax.conv_general_dilated(x, w, window_strides=(s,),
                                         padding=[(p, p)], dimension_numbers=dn)
        y = y + b[None, :, None]
        x = jnp.maximum(y, 0.0) if act == "relu" else jnp.where(y >= 0.0, y, slope * y)
    return x


# ---------------------------------------------------------------------------
if __name__ == "__main__":
    key = jax.random.PRNGKey(0)
    k_x, k_p = jax.random.split(key)

    # Smallest spatial size compatible with the k=16/s=8 bottleneck conv:
    # 128 -> 64 -> 32 -> 16 -> 1, decoder maps 1 -> 16 -> 32 -> 64 -> 128.
    B, L = 2, 128
    x = jax.random.normal(k_x, (B, 1, L), dtype=jnp.float32)

    raw = init_params(k_p)
    params = prepare_params(raw)          # one-time weight preprocessing (outside jit)

    out = jax.jit(forward)(params, x)
    out = jax.block_until_ready(out)

    assert out.shape == (B, 1, L), out.shape
    assert out.dtype == jnp.float32
    assert bool(jnp.all(jnp.isfinite(out)))

    # sanity check vs. pure-XLA reference (loose tolerance: bf16 MXU matmuls in the kernel)
    ref = reference_forward(raw, x)
    scale = float(jnp.max(jnp.abs(ref)))
    err = float(jnp.max(jnp.abs(out - ref)))
    assert err <= 1e-1 * scale + 2e-2, (err, scale)

    print("KERNEL_OK")
</pallas_src>

<mosaic_0001>
module attributes {stable_mosaic.version = 11 : i64} {
  func.func @_autoencoder_kernel(%arg0: i32, %arg1: memref<1x1x128xf32, #tpu.memory_space<vmem>>, %arg2: memref<3x16x1xbf16, #tpu.memory_space<vmem>>, %arg3: memref<16x1xf32, #tpu.memory_space<vmem>>, %arg4: memref<3x32x16xbf16, #tpu.memory_space<vmem>>, %arg5: memref<32x1xf32, #tpu.memory_space<vmem>>, %arg6: memref<3x64x32xbf16, #tpu.memory_space<vmem>>, %arg7: memref<64x1xf32, #tpu.memory_space<vmem>>, %arg8: memref<16x16x64xbf16, #tpu.memory_space<vmem>>, %arg9: memref<16x1xf32, #tpu.memory_space<vmem>>, %arg10: memref<16x64x16xbf16, #tpu.memory_space<vmem>>, %arg11: memref<64x1xf32, #tpu.memory_space<vmem>>, %arg12: memref<3x32x64xbf16, #tpu.memory_space<vmem>>, %arg13: memref<32x1xf32, #tpu.memory_space<vmem>>, %arg14: memref<3x16x32xbf16, #tpu.memory_space<vmem>>, %arg15: memref<16x1xf32, #tpu.memory_space<vmem>>, %arg16: memref<3x1x16xbf16, #tpu.memory_space<vmem>>, %arg17: memref<1x1xf32, #tpu.memory_space<vmem>>, %arg18: memref<1x1x128xf32, #tpu.memory_space<vmem>>) attributes {dimension_semantics = [#tpu.dimension_semantics<parallel>], iteration_bounds = array<i64: 2>, scalar_prefetch = 0 : i64, scratch_operands = 0 : i64, tpu.core_type = #tpu.core_type<tc>, window_params = [{transform_indices = @transform_0, window_bounds = array<i64: 1, 1, 128>}, {pipeline_mode = #tpu.pipeline_mode<synchronous>, transform_indices = @transform_1, window_bounds = array<i64: 3, 16, 1>}, {pipeline_mode = #tpu.pipeline_mode<synchronous>, transform_indices = @transform_2, window_bounds = array<i64: 16, 1>}, {pipeline_mode = #tpu.pipeline_mode<synchronous>, transform_indices = @transform_3, window_bounds = array<i64: 3, 32, 16>}, {pipeline_mode = #tpu.pipeline_mode<synchronous>, transform_indices = @transform_4, window_bounds = array<i64: 32, 1>}, {pipeline_mode = #tpu.pipeline_mode<synchronous>, transform_indices = @transform_5, window_bounds = array<i64: 3, 64, 32>}, {pipeline_mode = #tpu.pipeline_mode<synchronous>, transform_indices = @transform_6, window_bounds = array<i64: 64, 1>}, {pipeline_mode = #tpu.pipeline_mode<synchronous>, transform_indices = @transform_7, window_bounds = array<i64: 16, 16, 64>}, {pipeline_mode = #tpu.pipeline_mode<synchronous>, transform_indices = @transform_8, window_bounds = array<i64: 16, 1>}, {pipeline_mode = #tpu.pipeline_mode<synchronous>, transform_indices = @transform_9, window_bounds = array<i64: 16, 64, 16>}, {pipeline_mode = #tpu.pipeline_mode<synchronous>, transform_indices = @transform_10, window_bounds = array<i64: 64, 1>}, {pipeline_mode = #tpu.pipeline_mode<synchronous>, transform_indices = @transform_11, window_bounds = array<i64: 3, 32, 64>}, {pipeline_mode = #tpu.pipeline_mode<synchronous>, transform_indices = @transform_12, window_bounds = array<i64: 32, 1>}, {pipeline_mode = #tpu.pipeline_mode<synchronous>, transform_indices = @transform_13, window_bounds = array<i64: 3, 16, 32>}, {pipeline_mode = #tpu.pipeline_mode<synchronous>, transform_indices = @transform_14, window_bounds = array<i64: 16, 1>}, {pipeline_mode = #tpu.pipeline_mode<synchronous>, transform_indices = @transform_15, window_bounds = array<i64: 3, 1, 16>}, {pipeline_mode = #tpu.pipeline_mode<synchronous>, transform_indices = @transform_16, window_bounds = array<i64: 1, 1>}, {transform_indices = @transform_17, window_bounds = array<i64: 1, 1, 128>}]} {
    %c0 = arith.constant 0 : index
    %c0_0 = arith.constant 0 : index
    %c0_1 = arith.constant 0 : index
    %0 = vector.load %arg1[%c0, %c0_0, %c0_1] : memref<1x1x128xf32, #tpu.memory_space<vmem>>, vector<1x1x128xf32>
    %1 = vector.shape_cast %0 : vector<1x1x128xf32> to vector<1x128xf32>
    %2 = arith.truncf %1 : vector<1x128xf32> to vector<1x128xbf16>
    %3 = tpu.iota {dimensions = array<i32: 0>} : vector<128x64xi32>
    %4 = tpu.iota {dimensions = array<i32: 1>} : vector<128x64xi32>
    %c2_i32 = arith.constant 2 : i32
    %5 = vector.broadcast %c2_i32 : i32 to vector<128x64xi32>
    %6 = arith.muli %5, %4 : vector<128x64xi32>
    %7 = arith.subi %3, %6 : vector<128x64xi32>
    %c1_i32 = arith.constant 1 : i32
    %8 = vector.broadcast %c1_i32 : i32 to vector<128x64xi32>
    %9 = arith.addi %7, %8 : vector<128x64xi32>
    %cst = arith.constant 0.000000e+00 : f32
    %10 = vector.broadcast %cst : f32 to vector<16x64xf32>
    %c0_i32 = arith.constant 0 : i32
    %11 = vector.broadcast %c0_i32 : i32 to vector<128x64xi32>
    %12 = arith.cmpi eq, %9, %11 : vector<128x64xi32>
    %cst_2 = arith.constant 1.000000e+00 : f32
    %cst_3 = arith.constant 0.000000e+00 : f32
    %13 = vector.broadcast %cst_2 : f32 to vector<128x64xf32>
    %14 = vector.broadcast %cst_3 : f32 to vector<128x64xf32>
    %15 = arith.select %12, %13, %14 : vector<128x64xi1>, vector<128x64xf32>
    %16 = arith.truncf %15 : vector<128x64xf32> to vector<128x64xbf16>
    %cst_4 = arith.constant dense<0.000000e+00> : vector<1x64xf32>
    %17 = tpu.matmul %2, %16, %cst_4 {dimension_numbers = #tpu.dot_dimension_numbers<[1], [0], [0], [1], [0, 0, 1, 1], [], []>} : vector<1x128xbf16>, vector<128x64xbf16>, vector<1x64xf32> -> vector<1x64xf32>
    %18 = arith.truncf %17 : vector<1x64xf32> to vector<1x64xbf16>
    %c0_5 = arith.constant 0 : index
    %c0_6 = arith.constant 0 : index
    %c0_7 = arith.constant 0 : index
    %19 = vector.load %arg2[%c0_5, %c0_6, %c0_7] : memref<3x16x1xbf16, #tpu.memory_space<vmem>>, vector<1x16x1xbf16>
    %20 = vector.shape_cast %19 : vector<1x16x1xbf16> to vector<16x1xbf16>
    %21 = arith.extf %20 : vector<16x1xbf16> to vector<16x1xf32>
    %22 = arith.extf %18 : vector<1x64xbf16> to vector<1x64xf32>
    %23 = vector.broadcast %21 : vector<16x1xf32> to vector<16x64xf32>
    %24 = vector.broadcast %22 : vector<1x64xf32> to vector<16x64xf32>
    %25 = arith.mulf %23, %24 : vector<16x64xf32>
    %26 = arith.addf %10, %25 : vector<16x64xf32>
    %c1_i32_8 = arith.constant 1 : i32
    %27 = vector.broadcast %c1_i32_8 : i32 to vector<128x64xi32>
    %28 = arith.cmpi eq, %9, %27 : vector<128x64xi32>
    %cst_9 = arith.constant 1.000000e+00 : f32
    %cst_10 = arith.constant 0.000000e+00 : f32
    %29 = vector.broadcast %cst_9 : f32 to vector<128x64xf32>
    %30 = vector.broadcast %cst_10 : f32 to vector<128x64xf32>
    %31 = arith.select %28, %29, %30 : vector<128x64xi1>, vector<128x64xf32>
    %32 = arith.truncf %31 : vector<128x64xf32> to vector<128x64xbf16>
    %cst_11 = arith.constant dense<0.000000e+00> : vector<1x64xf32>
    %33 = tpu.matmul %2, %32, %cst_11 {dimension_numbers = #tpu.dot_dimension_numbers<[1], [0], [0], [1], [0, 0, 1, 1], [], []>} : vector<1x128xbf16>, vector<128x64xbf16>, vector<1x64xf32> -> vector<1x64xf32>
    %34 = arith.truncf %33 : vector<1x64xf32> to vector<1x64xbf16>
    %c1 = arith.constant 1 : index
    %c0_12 = arith.constant 0 : index
    %c0_13 = arith.constant 0 : index
    %35 = vector.load %arg2[%c1, %c0_12, %c0_13] : memref<3x16x1xbf16, #tpu.memory_space<vmem>>, vector<1x16x1xbf16>
    %36 = vector.shape_cast %35 : vector<1x16x1xbf16> to vector<16x1xbf16>
    %37 = arith.extf %36 : vector<16x1xbf16> to vector<16x1xf32>
    %38 = arith.extf %34 : vector<1x64xbf16> to vector<1x64xf32>
    %39 = vector.broadcast %37 : vector<16x1xf32> to vector<16x64xf32>
    %40 = vector.broadcast %38 : vector<1x64xf32> to vector<16x64xf32>
    %41 = arith.mulf %39, %40 : vector<16x64xf32>
    %42 = arith.addf %26, %41 : vector<16x64xf32>
    %c2_i32_14 = arith.constant 2 : i32
    %43 = vector.broadcast %c2_i32_14 : i32 to vector<128x64xi32>
    %44 = arith.cmpi eq, %9, %43 : vector<128x64xi32>
    %cst_15 = arith.constant 1.000000e+00 : f32
    %cst_16 = arith.constant 0.000000e+00 : f32
    %45 = vector.broadcast %cst_15 : f32 to vector<128x64xf32>
    %46 = vector.broadcast %cst_16 : f32 to vector<128x64xf32>
    %47 = arith.select %44, %45, %46 : vector<128x64xi1>, vector<128x64xf32>
    %48 = arith.truncf %47 : vector<128x64xf32> to vector<128x64xbf16>
    %cst_17 = arith.constant dense<0.000000e+00> : vector<1x64xf32>
    %49 = tpu.matmul %2, %48, %cst_17 {dimension_numbers = #tpu.dot_dimension_numbers<[1], [0], [0], [1], [0, 0, 1, 1], [], []>} : vector<1x128xbf16>, vector<128x64xbf16>, vector<1x64xf32> -> vector<1x64xf32>
    %50 = arith.truncf %49 : vector<1x64xf32> to vector<1x64xbf16>
    %c2 = arith.constant 2 : index
    %c0_18 = arith.constant 0 : index
    %c0_19 = arith.constant 0 : index
    %51 = vector.load %arg2[%c2, %c0_18, %c0_19] : memref<3x16x1xbf16, #tpu.memory_space<vmem>>, vector<1x16x1xbf16>
    %52 = vector.shape_cast %51 : vector<1x16x1xbf16> to vector<16x1xbf16>
    %53 = arith.extf %52 : vector<16x1xbf16> to vector<16x1xf32>
    %54 = arith.extf %50 : vector<1x64xbf16> to vector<1x64xf32>
    %55 = vector.broadcast %53 : vector<16x1xf32> to vector<16x64xf32>
    %56 = vector.broadcast %54 : vector<1x64xf32> to vector<16x64xf32>
    %57 = arith.mulf %55, %56 : vector<16x64xf32>
    %58 = arith.addf %42, %57 : vector<16x64xf32>
    %c0_20 = arith.constant 0 : index
    %c0_21 = arith.constant 0 : index
    %59 = vector.load %arg3[%c0_20, %c0_21] : memref<16x1xf32, #tpu.memory_space<vmem>>, vector<16x1xf32>
    %60 = vector.broadcast %59 : vector<16x1xf32> to vector<16x64xf32>
    %61 = arith.addf %58, %60 : vector<16x64xf32>
    %cst_22 = arith.constant 0.000000e+00 : f32
    %62 = vector.broadcast %cst_22 : f32 to vector<16x64xf32>
    %63 = arith.maximumf %61, %62 : vector<16x64xf32>
    %64 = arith.truncf %63 : vector<16x64xf32> to vector<16x64xbf16>
    %65 = tpu.iota {dimensions = array<i32: 0>} : vector<64x32xi32>
    %66 = tpu.iota {dimensions = array<i32: 1>} : vector<64x32xi32>
    %c2_i32_23 = arith.constant 2 : i32
    %67 = vector.broadcast %c2_i32_23 : i32 to vector<64x32xi32>
    %68 = arith.muli %67, %66 : vector<64x32xi32>
    %69 = arith.subi %65, %68 : vector<64x32xi32>
    %c1_i32_24 = arith.constant 1 : i32
    %70 = vector.broadcast %c1_i32_24 : i32 to vector<64x32xi32>
    %71 = arith.addi %69, %70 : vector<64x32xi32>
    %cst_25 = arith.constant 0.000000e+00 : f32
    %72 = vector.broadcast %cst_25 : f32 to vector<32x32xf32>
    %c0_i32_26 = arith.constant 0 : i32
    %73 = vector.broadcast %c0_i32_26 : i32 to vector<64x32xi32>
    %74 = arith.cmpi eq, %71, %73 : vector<64x32xi32>
    %cst_27 = arith.constant 1.000000e+00 : f32
    %cst_28 = arith.constant 0.000000e+00 : f32
    %75 = vector.broadcast %cst_27 : f32 to vector<64x32xf32>
    %76 = vector.broadcast %cst_28 : f32 to vector<64x32xf32>
    %77 = arith.select %74, %75, %76 : vector<64x32xi1>, vector<64x32xf32>
    %78 = arith.truncf %77 : vector<64x32xf32> to vector<64x32xbf16>
    %cst_29 = arith.constant dense<0.000000e+00> : vector<16x32xf32>
    %79 = tpu.matmul %64, %78, %cst_29 {dimension_numbers = #tpu.dot_dimension_numbers<[1], [0], [0], [1], [0, 0, 1, 1], [], []>} : vector<16x64xbf16>, vector<64x32xbf16>, vector<16x32xf32> -> vector<16x32xf32>
    %80 = arith.truncf %79 : vector<16x32xf32> to vector<16x32xbf16>
    %c0_30 = arith.constant 0 : index
    %c0_31 = arith.constant 0 : index
    %c0_32 = arith.constant 0 : index
    %81 = vector.load %arg4[%c0_30, %c0_31, %c0_32] : memref<3x32x16xbf16, #tpu.memory_space<vmem>>, vector<1x32x16xbf16>
    %82 = vector.shape_cast %81 : vector<1x32x16xbf16> to vector<32x16xbf16>
    %cst_33 = arith.constant dense<0.000000e+00> : vector<32x32xf32>
    %83 = tpu.matmul %82, %80, %cst_33 {dimension_numbers = #tpu.dot_dimension_numbers<[1], [0], [0], [1], [0, 0, 1, 1], [], []>} : vector<32x16xbf16>, vector<16x32xbf16>, vector<32x32xf32> -> vector<32x32xf32>
    %84 = arith.addf %72, %83 : vector<32x32xf32>
    %c1_i32_34 = arith.constant 1 : i32
    %85 = vector.broadcast %c1_i32_34 : i32 to vector<64x32xi32>
    %86 = arith.cmpi eq, %71, %85 : vector<64x32xi32>
    %cst_35 = arith.constant 1.000000e+00 : f32
    %cst_36 = arith.constant 0.000000e+00 : f32
    %87 = vector.broadcast %cst_35 : f32 to vector<64x32xf32>
    %88 = vector.broadcast %cst_36 : f32 to vector<64x32xf32>
    %89 = arith.select %86, %87, %88 : vector<64x32xi1>, vector<64x32xf32>
    %90 = arith.truncf %89 : vector<64x32xf32> to vector<64x32xbf16>
    %cst_37 = arith.constant dense<0.000000e+00> : vector<16x32xf32>
    %91 = tpu.matmul %64, %90, %cst_37 {dimension_numbers = #tpu.dot_dimension_numbers<[1], [0], [0], [1], [0, 0, 1, 1], [], []>} : vector<16x64xbf16>, vector<64x32xbf16>, vector<16x32xf32> -> vector<16x32xf32>
    %92 = arith.truncf %91 : vector<16x32xf32> to vector<16x32xbf16>
    %c1_38 = arith.constant 1 : index
    %c0_39 = arith.constant 0 : index
    %c0_40 = arith.constant 0 : index
    %93 = vector.load %arg4[%c1_38, %c0_39, %c0_40] : memref<3x32x16xbf16, #tpu.memory_space<vmem>>, vector<1x32x16xbf16>
    %94 = vector.shape_cast %93 : vector<1x32x16xbf16> to vector<32x16xbf16>
    %cst_41 = arith.constant dense<0.000000e+00> : vector<32x32xf32>
    %95 = tpu.matmul %94, %92, %cst_41 {dimension_numbers = #tpu.dot_dimension_numbers<[1], [0], [0], [1], [0, 0, 1, 1], [], []>} : vector<32x16xbf16>, vector<16x32xbf16>, vector<32x32xf32> -> vector<32x32xf32>
    %96 = arith.addf %84, %95 : vector<32x32xf32>
    %c2_i32_42 = arith.constant 2 : i32
    %97 = vector.broadcast %c2_i32_42 : i32 to vector<64x32xi32>
    %98 = arith.cmpi eq, %71, %97 : vector<64x32xi32>
    %cst_43 = arith.constant 1.000000e+00 : f32
    %cst_44 = arith.constant 0.000000e+00 : f32
    %99 = vector.broadcast %cst_43 : f32 to vector<64x32xf32>
    %100 = vector.broadcast %cst_44 : f32 to vector<64x32xf32>
    %101 = arith.select %98, %99, %100 : vector<64x32xi1>, vector<64x32xf32>
    %102 = arith.truncf %101 : vector<64x32xf32> to vector<64x32xbf16>
    %cst_45 = arith.constant dense<0.000000e+00> : vector<16x32xf32>
    %103 = tpu.matmul %64, %102, %cst_45 {dimension_numbers = #tpu.dot_dimension_numbers<[1], [0], [0], [1], [0, 0, 1, 1], [], []>} : vector<16x64xbf16>, vector<64x32xbf16>, vector<16x32xf32> -> vector<16x32xf32>
    %104 = arith.truncf %103 : vector<16x32xf32> to vector<16x32xbf16>
    %c2_46 = arith.constant 2 : index
    %c0_47 = arith.constant 0 : index
    %c0_48 = arith.constant 0 : index
    %105 = vector.load %arg4[%c2_46, %c0_47, %c0_48] : memref<3x32x16xbf16, #tpu.memory_space<vmem>>, vector<1x32x16xbf16>
    %106 = vector.shape_cast %105 : vector<1x32x16xbf16> to vector<32x16xbf16>
    %cst_49 = arith.constant dense<0.000000e+00> : vector<32x32xf32>
    %107 = tpu.matmul %106, %104, %cst_49 {dimension_numbers = #tpu.dot_dimension_numbers<[1], [0], [0], [1], [0, 0, 1, 1], [], []>} : vector<32x16xbf16>, vector<16x32xbf16>, vector<32x32xf32> -> vector<32x32xf32>
    %108 = arith.addf %96, %107 : vector<32x32xf32>
    %c0_50 = arith.constant 0 : index
    %c0_51 = arith.constant 0 : index
    %109 = vector.load %arg5[%c0_50, %c0_51] : memref<32x1xf32, #tpu.memory_space<vmem>>, vector<32x1xf32>
    %110 = vector.broadcast %109 : vector<32x1xf32> to vector<32x32xf32>
    %111 = arith.addf %108, %110 : vector<32x32xf32>
    %cst_52 = arith.constant 0.000000e+00 : f32
    %112 = vector.broadcast %cst_52 : f32 to vector<32x32xf32>
    %113 = arith.maximumf %111, %112 : vector<32x32xf32>
    %114 = arith.truncf %113 : vector<32x32xf32> to vector<32x32xbf16>
    %115 = tpu.iota {dimensions = array<i32: 0>} : vector<32x16xi32>
    %116 = tpu.iota {dimensions = array<i32: 1>} : vector<32x16xi32>
    %c2_i32_53 = arith.constant 2 : i32
    %117 = vector.broadcast %c2_i32_53 : i32 to vector<32x16xi32>
    %118 = arith.muli %117, %116 : vector<32x16xi32>
    %119 = arith.subi %115, %118 : vector<32x16xi32>
    %c1_i32_54 = arith.constant 1 : i32
    %120 = vector.broadcast %c1_i32_54 : i32 to vector<32x16xi32>
    %121 = arith.addi %119, %120 : vector<32x16xi32>
    %cst_55 = arith.constant 0.000000e+00 : f32
    %122 = vector.broadcast %cst_55 : f32 to vector<64x16xf32>
    %c0_i32_56 = arith.constant 0 : i32
    %123 = vector.broadcast %c0_i32_56 : i32 to vector<32x16xi32>
    %124 = arith.cmpi eq, %121, %123 : vector<32x16xi32>
    %cst_57 = arith.constant 1.000000e+00 : f32
    %cst_58 = arith.constant 0.000000e+00 : f32
    %125 = vector.broadcast %cst_57 : f32 to vector<32x16xf32>
    %126 = vector.broadcast %cst_58 : f32 to vector<32x16xf32>
    %127 = arith.select %124, %125, %126 : vector<32x16xi1>, vector<32x16xf32>
    %128 = arith.truncf %127 : vector<32x16xf32> to vector<32x16xbf16>
    %cst_59 = arith.constant dense<0.000000e+00> : vector<32x16xf32>
    %129 = tpu.matmul %114, %128, %cst_59 {dimension_numbers = #tpu.dot_dimension_numbers<[1], [0], [0], [1], [0, 0, 1, 1], [], []>} : vector<32x32xbf16>, vector<32x16xbf16>, vector<32x16xf32> -> vector<32x16xf32>
    %130 = arith.truncf %129 : vector<32x16xf32> to vector<32x16xbf16>
    %c0_60 = arith.constant 0 : index
    %c0_61 = arith.constant 0 : index
    %c0_62 = arith.constant 0 : index
    %131 = vector.load %arg6[%c0_60, %c0_61, %c0_62] : memref<3x64x32xbf16, #tpu.memory_space<vmem>>, vector<1x64x32xbf16>
    %132 = vector.shape_cast %131 : vector<1x64x32xbf16> to vector<64x32xbf16>
    %cst_63 = arith.constant dense<0.000000e+00> : vector<64x16xf32>
    %133 = tpu.matmul %132, %130, %cst_63 {dimension_numbers = #tpu.dot_dimension_numbers<[1], [0], [0], [1], [0, 0, 1, 1], [], []>} : vector<64x32xbf16>, vector<32x16xbf16>, vector<64x16xf32> -> vector<64x16xf32>
    %134 = arith.addf %122, %133 : vector<64x16xf32>
    %c1_i32_64 = arith.constant 1 : i32
    %135 = vector.broadcast %c1_i32_64 : i32 to vector<32x16xi32>
    %136 = arith.cmpi eq, %121, %135 : vector<32x16xi32>
    %cst_65 = arith.constant 1.000000e+00 : f32
    %cst_66 = arith.constant 0.000000e+00 : f32
    %137 = vector.broadcast %cst_65 : f32 to vector<32x16xf32>
    %138 = vector.broadcast %cst_66 : f32 to vector<32x16xf32>
    %139 = arith.select %136, %137, %138 : vector<32x16xi1>, vector<32x16xf32>
    %140 = arith.truncf %139 : vector<32x16xf32> to vector<32x16xbf16>
    %cst_67 = arith.constant dense<0.000000e+00> : vector<32x16xf32>
    %141 = tpu.matmul %114, %140, %cst_67 {dimension_numbers = #tpu.dot_dimension_numbers<[1], [0], [0], [1], [0, 0, 1, 1], [], []>} : vector<32x32xbf16>, vector<32x16xbf16>, vector<32x16xf32> -> vector<32x16xf32>
    %142 = arith.truncf %141 : vector<32x16xf32> to vector<32x16xbf16>
    %c1_68 = arith.constant 1 : index
    %c0_69 = arith.constant 0 : index
    %c0_70 = arith.constant 0 : index
    %143 = vector.load %arg6[%c1_68, %c0_69, %c0_70] : memref<3x64x32xbf16, #tpu.memory_space<vmem>>, vector<1x64x32xbf16>
    %144 = vector.shape_cast %143 : vector<1x64x32xbf16> to vector<64x32xbf16>
    %cst_71 = arith.constant dense<0.000000e+00> : vector<64x16xf32>
    %145 = tpu.matmul %144, %142, %cst_71 {dimension_numbers = #tpu.dot_dimension_numbers<[1], [0], [0], [1], [0, 0, 1, 1], [], []>} : vector<64x32xbf16>, vector<32x16xbf16>, vector<64x16xf32> -> vector<64x16xf32>
    %146 = arith.addf %134, %145 : vector<64x16xf32>
    %c2_i32_72 = arith.constant 2 : i32
    %147 = vector.broadcast %c2_i32_72 : i32 to vector<32x16xi32>
    %148 = arith.cmpi eq, %121, %147 : vector<32x16xi32>
    %cst_73 = arith.constant 1.000000e+00 : f32
    %cst_74 = arith.constant 0.000000e+00 : f32
    %149 = vector.broadcast %cst_73 : f32 to vector<32x16xf32>
    %150 = vector.broadcast %cst_74 : f32 to vector<32x16xf32>
    %151 = arith.select %148, %149, %150 : vector<32x16xi1>, vector<32x16xf32>
    %152 = arith.truncf %151 : vector<32x16xf32> to vector<32x16xbf16>
    %cst_75 = arith.constant dense<0.000000e+00> : vector<32x16xf32>
    %153 = tpu.matmul %114, %152, %cst_75 {dimension_numbers = #tpu.dot_dimension_numbers<[1], [0], [0], [1], [0, 0, 1, 1], [], []>} : vector<32x32xbf16>, vector<32x16xbf16>, vector<32x16xf32> -> vector<32x16xf32>
    %154 = arith.truncf %153 : vector<32x16xf32> to vector<32x16xbf16>
    %c2_76 = arith.constant 2 : index
    %c0_77 = arith.constant 0 : index
    %c0_78 = arith.constant 0 : index
    %155 = vector.load %arg6[%c2_76, %c0_77, %c0_78] : memref<3x64x32xbf16, #tpu.memory_space<vmem>>, vector<1x64x32xbf16>
    %156 = vector.shape_cast %155 : vector<1x64x32xbf16> to vector<64x32xbf16>
    %cst_79 = arith.constant dense<0.000000e+00> : vector<64x16xf32>
    %157 = tpu.matmul %156, %154, %cst_79 {dimension_numbers = #tpu.dot_dimension_numbers<[1], [0], [0], [1], [0, 0, 1, 1], [], []>} : vector<64x32xbf16>, vector<32x16xbf16>, vector<64x16xf32> -> vector<64x16xf32>
    %158 = arith.addf %146, %157 : vector<64x16xf32>
    %c0_80 = arith.constant 0 : index
    %c0_81 = arith.constant 0 : index
    %159 = vector.load %arg7[%c0_80, %c0_81] : memref<64x1xf32, #tpu.memory_space<vmem>>, vector<64x1xf32>
    %160 = vector.broadcast %159 : vector<64x1xf32> to vector<64x16xf32>
    %161 = arith.addf %158, %160 : vector<64x16xf32>
    %cst_82 = arith.constant 0.000000e+00 : f32
    %162 = vector.broadcast %cst_82 : f32 to vector<64x16xf32>
    %163 = arith.maximumf %161, %162 : vector<64x16xf32>
    %164 = arith.truncf %163 : vector<64x16xf32> to vector<64x16xbf16>
    %165 = tpu.iota {dimensions = array<i32: 0>} : vector<16x1xi32>
    %166 = tpu.iota {dimensions = array<i32: 1>} : vector<16x1xi32>
    %c8_i32 = arith.constant 8 : i32
    %167 = vector.broadcast %c8_i32 : i32 to vector<16x1xi32>
    %168 = arith.muli %167, %166 : vector<16x1xi32>
    %169 = arith.subi %165, %168 : vector<16x1xi32>
    %c0_i32_83 = arith.constant 0 : i32
    %170 = vector.broadcast %c0_i32_83 : i32 to vector<16x1xi32>
    %171 = arith.addi %169, %170 : vector<16x1xi32>
    %cst_84 = arith.constant 0.000000e+00 : f32
    %172 = vector.broadcast %cst_84 : f32 to vector<16x1xf32>
    %c0_i32_85 = arith.constant 0 : i32
    %173 = vector.broadcast %c0_i32_85 : i32 to vector<16x1xi32>
    %174 = arith.cmpi eq, %171, %173 : vector<16x1xi32>
    %cst_86 = arith.constant 1.000000e+00 : f32
    %cst_87 = arith.constant 0.000000e+00 : f32
    %175 = vector.broadcast %cst_86 : f32 to vector<16x1xf32>
    %176 = vector.broadcast %cst_87 : f32 to vector<16x1xf32>
    %177 = arith.select %174, %175, %176 : vector<16x1xi1>, vector<16x1xf32>
    %178 = arith.truncf %177 : vector<16x1xf32> to vector<16x1xbf16>
    %cst_88 = arith.constant dense<0.000000e+00> : vector<64x1xf32>
    %179 = tpu.matmul %164, %178, %cst_88 {dimension_numbers = #tpu.dot_dimension_numbers<[1], [0], [0], [1], [0, 0, 1, 1], [], []>} : vector<64x16xbf16>, vector<16x1xbf16>, vector<64x1xf32> -> vector<64x1xf32>
    %180 = arith.truncf %179 : vector<64x1xf32> to vector<64x1xbf16>
    %c0_89 = arith.constant 0 : index
    %c0_90 = arith.constant 0 : index
    %c0_91 = arith.constant 0 : index
    %181 = vector.load %arg8[%c0_89, %c0_90, %c0_91] : memref<16x16x64xbf16, #tpu.memory_space<vmem>>, vector<1x16x64xbf16>
    %182 = vector.shape_cast %181 : vector<1x16x64xbf16> to vector<16x64xbf16>
    %cst_92 = arith.constant dense<0.000000e+00> : vector<16x1xf32>
    %183 = tpu.matmul %182, %180, %cst_92 {dimension_numbers = #tpu.dot_dimension_numbers<[1], [0], [0], [1], [0, 0, 1, 1], [], []>} : vector<16x64xbf16>, vector<64x1xbf16>, vector<16x1xf32> -> vector<16x1xf32>
    %184 = arith.addf %172, %183 : vector<16x1xf32>
    %c1_i32_93 = arith.constant 1 : i32
    %185 = vector.broadcast %c1_i32_93 : i32 to vector<16x1xi32>
    %186 = arith.cmpi eq, %171, %185 : vector<16x1xi32>
    %cst_94 = arith.constant 1.000000e+00 : f32
    %cst_95 = arith.constant 0.000000e+00 : f32
    %187 = vector.broadcast %cst_94 : f32 to vector<16x1xf32>
    %188 = vector.broadcast %cst_95 : f32 to vector<16x1xf32>
    %189 = arith.select %186, %187, %188 : vector<16x1xi1>, vector<16x1xf32>
    %190 = arith.truncf %189 : vector<16x1xf32> to vector<16x1xbf16>
    %cst_96 = arith.constant dense<0.000000e+00> : vector<64x1xf32>
    %191 = tpu.matmul %164, %190, %cst_96 {dimension_numbers = #tpu.dot_dimension_numbers<[1], [0], [0], [1], [0, 0, 1, 1], [], []>} : vector<64x16xbf16>, vector<16x1xbf16>, vector<64x1xf32> -> vector<64x1xf32>
    %192 = arith.truncf %191 : vector<64x1xf32> to vector<64x1xbf16>
    %c1_97 = arith.constant 1 : index
    %c0_98 = arith.constant 0 : index
    %c0_99 = arith.constant 0 : index
    %193 = vector.load %arg8[%c1_97, %c0_98, %c0_99] : memref<16x16x64xbf16, #tpu.memory_space<vmem>>, vector<1x16x64xbf16>
    %194 = vector.shape_cast %193 : vector<1x16x64xbf16> to vector<16x64xbf16>
    %cst_100 = arith.constant dense<0.000000e+00> : vector<16x1xf32>
    %195 = tpu.matmul %194, %192, %cst_100 {dimension_numbers = #tpu.dot_dimension_numbers<[1], [0], [0], [1], [0, 0, 1, 1], [], []>} : vector<16x64xbf16>, vector<64x1xbf16>, vector<16x1xf32> -> vector<16x1xf32>
    %196 = arith.addf %184, %195 : vector<16x1xf32>
    %c2_i32_101 = arith.constant 2 : i32
    %197 = vector.broadcast %c2_i32_101 : i32 to vector<16x1xi32>
    %198 = arith.cmpi eq, %171, %197 : vector<16x1xi32>
    %cst_102 = arith.constant 1.000000e+00 : f32
    %cst_103 = arith.constant 0.000000e+00 : f32
    %199 = vector.broadcast %cst_102 : f32 to vector<16x1xf32>
    %200 = vector.broadcast %cst_103 : f32 to vector<16x1xf32>
    %201 = arith.select %198, %199, %200 : vector<16x1xi1>, vector<16x1xf32>
    %202 = arith.truncf %201 : vector<16x1xf32> to vector<16x1xbf16>
    %cst_104 = arith.constant dense<0.000000e+00> : vector<64x1xf32>
    %203 = tpu.matmul %164, %202, %cst_104 {dimension_numbers = #tpu.dot_dimension_numbers<[1], [0], [0], [1], [0, 0, 1, 1], [], []>} : vector<64x16xbf16>, vector<16x1xbf16>, vector<64x1xf32> -> vector<64x1xf32>
    %204 = arith.truncf %203 : vector<64x1xf32> to vector<64x1xbf16>
    %c2_105 = arith.constant 2 : index
    %c0_106 = arith.constant 0 : index
    %c0_107 = arith.constant 0 : index
    %205 = vector.load %arg8[%c2_105, %c0_106, %c0_107] : memref<16x16x64xbf16, #tpu.memory_space<vmem>>, vector<1x16x64xbf16>
    %206 = vector.shape_cast %205 : vector<1x16x64xbf16> to vector<16x64xbf16>
    %cst_108 = arith.constant dense<0.000000e+00> : vector<16x1xf32>
    %207 = tpu.matmul %206, %204, %cst_108 {dimension_numbers = #tpu.dot_dimension_numbers<[1], [0], [0], [1], [0, 0, 1, 1], [], []>} : vector<16x64xbf16>, vector<64x1xbf16>, vector<16x1xf32> -> vector<16x1xf32>
    %208 = arith.addf %196, %207 : vector<16x1xf32>
    %c3_i32 = arith.constant 3 : i32
    %209 = vector.broadcast %c3_i32 : i32 to vector<16x1xi32>
    %210 = arith.cmpi eq, %171, %209 : vector<16x1xi32>
    %cst_109 = arith.constant 1.000000e+00 : f32
    %cst_110 = arith.constant 0.000000e+00 : f32
    %211 = vector.broadcast %cst_109 : f32 to vector<16x1xf32>
    %212 = vector.broadcast %cst_110 : f32 to vector<16x1xf32>
    %213 = arith.select %210, %211, %212 : vector<16x1xi1>, vector<16x1xf32>
    %214 = arith.truncf %213 : vector<16x1xf32> to vector<16x1xbf16>
    %cst_111 = arith.constant dense<0.000000e+00> : vector<64x1xf32>
    %215 = tpu.matmul %164, %214, %cst_111 {dimension_numbers = #tpu.dot_dimension_numbers<[1], [0], [0], [1], [0, 0, 1, 1], [], []>} : vector<64x16xbf16>, vector<16x1xbf16>, vector<64x1xf32> -> vector<64x1xf32>
    %216 = arith.truncf %215 : vector<64x1xf32> to vector<64x1xbf16>
    %c3 = arith.constant 3 : index
    %c0_112 = arith.constant 0 : index
    %c0_113 = arith.constant 0 : index
    %217 = vector.load %arg8[%c3, %c0_112, %c0_113] : memref<16x16x64xbf16, #tpu.memory_space<vmem>>, vector<1x16x64xbf16>
    %218 = vector.shape_cast %217 : vector<1x16x64xbf16> to vector<16x64xbf16>
    %cst_114 = arith.constant dense<0.000000e+00> : vector<16x1xf32>
    %219 = tpu.matmul %218, %216, %cst_114 {dimension_numbers = #tpu.dot_dimension_numbers<[1], [0], [0], [1], [0, 0, 1, 1], [], []>} : vector<16x64xbf16>, vector<64x1xbf16>, vector<16x1xf32> -> vector<16x1xf32>
    %220 = arith.addf %208, %219 : vector<16x1xf32>
    %c4_i32 = arith.constant 4 : i32
    %221 = vector.broadcast %c4_i32 : i32 to vector<16x1xi32>
    %222 = arith.cmpi eq, %171, %221 : vector<16x1xi32>
    %cst_115 = arith.constant 1.000000e+00 : f32
    %cst_116 = arith.constant 0.000000e+00 : f32
    %223 = vector.broadcast %cst_115 : f32 to vector<16x1xf32>
    %224 = vector.broadcast %cst_116 : f32 to vector<16x1xf32>
    %225 = arith.select %222, %223, %224 : vector<16x1xi1>, vector<16x1xf32>
    %226 = arith.truncf %225 : vector<16x1xf32> to vector<16x1xbf16>
    %cst_117 = arith.constant dense<0.000000e+00> : vector<64x1xf32>
    %227 = tpu.matmul %164, %226, %cst_117 {dimension_numbers = #tpu.dot_dimension_numbers<[1], [0], [0], [1], [0, 0, 1, 1], [], []>} : vector<64x16xbf16>, vector<16x1xbf16>, vector<64x1xf32> -> vector<64x1xf32>
    %228 = arith.truncf %227 : vector<64x1xf32> to vector<64x1xbf16>
    %c4 = arith.constant 4 : index
    %c0_118 = arith.constant 0 : index
    %c0_119 = arith.constant 0 : index
    %229 = vector.load %arg8[%c4, %c0_118, %c0_119] : memref<16x16x64xbf16, #tpu.memory_space<vmem>>, vector<1x16x64xbf16>
    %230 = vector.shape_cast %229 : vector<1x16x64xbf16> to vector<16x64xbf16>
    %cst_120 = arith.constant dense<0.000000e+00> : vector<16x1xf32>
    %231 = tpu.matmul %230, %228, %cst_120 {dimension_numbers = #tpu.dot_dimension_numbers<[1], [0], [0], [1], [0, 0, 1, 1], [], []>} : vector<16x64xbf16>, vector<64x1xbf16>, vector<16x1xf32> -> vector<16x1xf32>
    %232 = arith.addf %220, %231 : vector<16x1xf32>
    %c5_i32 = arith.constant 5 : i32
    %233 = vector.broadcast %c5_i32 : i32 to vector<16x1xi32>
    %234 = arith.cmpi eq, %171, %233 : vector<16x1xi32>
    %cst_121 = arith.constant 1.000000e+00 : f32
    %cst_122 = arith.constant 0.000000e+00 : f32
    %235 = vector.broadcast %cst_121 : f32 to vector<16x1xf32>
    %236 = vector.broadcast %cst_122 : f32 to vector<16x1xf32>
    %237 = arith.select %234, %235, %236 : vector<16x1xi1>, vector<16x1xf32>
    %238 = arith.truncf %237 : vector<16x1xf32> to vector<16x1xbf16>
    %cst_123 = arith.constant dense<0.000000e+00> : vector<64x1xf32>
    %239 = tpu.matmul %164, %238, %cst_123 {dimension_numbers = #tpu.dot_dimension_numbers<[1], [0], [0], [1], [0, 0, 1, 1], [], []>} : vector<64x16xbf16>, vector<16x1xbf16>, vector<64x1xf32> -> vector<64x1xf32>
    %240 = arith.truncf %239 : vector<64x1xf32> to vector<64x1xbf16>
    %c5 = arith.constant 5 : index
    %c0_124 = arith.constant 0 : index
    %c0_125 = arith.constant 0 : index
    %241 = vector.load %arg8[%c5, %c0_124, %c0_125] : memref<16x16x64xbf16, #tpu.memory_space<vmem>>, vector<1x16x64xbf16>
    %242 = vector.shape_cast %241 : vector<1x16x64xbf16> to vector<16x64xbf16>
    %cst_126 = arith.constant dense<0.000000e+00> : vector<16x1xf32>
    %243 = tpu.matmul %242, %240, %cst_126 {dimension_numbers = #tpu.dot_dimension_numbers<[1], [0], [0], [1], [0, 0, 1, 1], [], []>} : vector<16x64xbf16>, vector<64x1xbf16>, vector<16x1xf32> -> vector<16x1xf32>
    %244 = arith.addf %232, %243 : vector<16x1xf32>
    %c6_i32 = arith.constant 6 : i32
    %245 = vector.broadcast %c6_i32 : i32 to vector<16x1xi32>
    %246 = arith.cmpi eq, %171, %245 : vector<16x1xi32>
    %cst_127 = arith.constant 1.000000e+00 : f32
    %cst_128 = arith.constant 0.000000e+00 : f32
    %247 = vector.broadcast %cst_127 : f32 to vector<16x1xf32>
    %248 = vector.broadcast %cst_128 : f32 to vector<16x1xf32>
    %249 = arith.select %246, %247, %248 : vector<16x1xi1>, vector<16x1xf32>
    %250 = arith.truncf %249 : vector<16x1xf32> to vector<16x1xbf16>
    %cst_129 = arith.constant dense<0.000000e+00> : vector<64x1xf32>
    %251 = tpu.matmul %164, %250, %cst_129 {dimension_numbers = #tpu.dot_dimension_numbers<[1], [0], [0], [1], [0, 0, 1, 1], [], []>} : vector<64x16xbf16>, vector<16x1xbf16>, vector<64x1xf32> -> vector<64x1xf32>
    %252 = arith.truncf %251 : vector<64x1xf32> to vector<64x1xbf16>
    %c6 = arith.constant 6 : index
    %c0_130 = arith.constant 0 : index
    %c0_131 = arith.constant 0 : index
    %253 = vector.load %arg8[%c6, %c0_130, %c0_131] : memref<16x16x64xbf16, #tpu.memory_space<vmem>>, vector<1x16x64xbf16>
    %254 = vector.shape_cast %253 : vector<1x16x64xbf16> to vector<16x64xbf16>
    %cst_132 = arith.constant dense<0.000000e+00> : vector<16x1xf32>
    %255 = tpu.matmul %254, %252, %cst_132 {dimension_numbers = #tpu.dot_dimension_numbers<[1], [0], [0], [1], [0, 0, 1, 1], [], []>} : vector<16x64xbf16>, vector<64x1xbf16>, vector<16x1xf32> -> vector<16x1xf32>
    %256 = arith.addf %244, %255 : vector<16x1xf32>
    %c7_i32 = arith.constant 7 : i32
    %257 = vector.broadcast %c7_i32 : i32 to vector<16x1xi32>
    %258 = arith.cmpi eq, %171, %257 : vector<16x1xi32>
    %cst_133 = arith.constant 1.000000e+00 : f32
    %cst_134 = arith.constant 0.000000e+00 : f32
    %259 = vector.broadcast %cst_133 : f32 to vector<16x1xf32>
    %260 = vector.broadcast %cst_134 : f32 to vector<16x1xf32>
    %261 = arith.select %258, %259, %260 : vector<16x1xi1>, vector<16x1xf32>
    %262 = arith.truncf %261 : vector<16x1xf32> to vector<16x1xbf16>
    %cst_135 = arith.constant dense<0.000000e+00> : vector<64x1xf32>
    %263 = tpu.matmul %164, %262, %cst_135 {dimension_numbers = #tpu.dot_dimension_numbers<[1], [0], [0], [1], [0, 0, 1, 1], [], []>} : vector<64x16xbf16>, vector<16x1xbf16>, vector<64x1xf32> -> vector<64x1xf32>
    %264 = arith.truncf %263 : vector<64x1xf32> to vector<64x1xbf16>
    %c7 = arith.constant 7 : index
    %c0_136 = arith.constant 0 : index
    %c0_137 = arith.constant 0 : index
    %265 = vector.load %arg8[%c7, %c0_136, %c0_137] : memref<16x16x64xbf16, #tpu.memory_space<vmem>>, vector<1x16x64xbf16>
    %266 = vector.shape_cast %265 : vector<1x16x64xbf16> to vector<16x64xbf16>
    %cst_138 = arith.constant dense<0.000000e+00> : vector<16x1xf32>
    %267 = tpu.matmul %266, %264, %cst_138 {dimension_numbers = #tpu.dot_dimension_numbers<[1], [0], [0], [1], [0, 0, 1, 1], [], []>} : vector<16x64xbf16>, vector<64x1xbf16>, vector<16x1xf32> -> vector<16x1xf32>
    %268 = arith.addf %256, %267 : vector<16x1xf32>
    %c8_i32_139 = arith.constant 8 : i32
    %269 = vector.broadcast %c8_i32_139 : i32 to vector<16x1xi32>
    %270 = arith.cmpi eq, %171, %269 : vector<16x1xi32>
    %cst_140 = arith.constant 1.000000e+00 : f32
    %cst_141 = arith.constant 0.000000e+00 : f32
    %271 = vector.broadcast %cst_140 : f32 to vector<16x1xf32>
    %272 = vector.broadcast %cst_141 : f32 to vector<16x1xf32>
    %273 = arith.select %270, %271, %272 : vector<16x1xi1>, vector<16x1xf32>
    %274 = arith.truncf %273 : vector<16x1xf32> to vector<16x1xbf16>
    %cst_142 = arith.constant dense<0.000000e+00> : vector<64x1xf32>
    %275 = tpu.matmul %164, %274, %cst_142 {dimension_numbers = #tpu.dot_dimension_numbers<[1], [0], [0], [1], [0, 0, 1, 1], [], []>} : vector<64x16xbf16>, vector<16x1xbf16>, vector<64x1xf32> -> vector<64x1xf32>
    %276 = arith.truncf %275 : vector<64x1xf32> to vector<64x1xbf16>
    %c8 = arith.constant 8 : index
    %c0_143 = arith.constant 0 : index
    %c0_144 = arith.constant 0 : index
    %277 = vector.load %arg8[%c8, %c0_143, %c0_144] : memref<16x16x64xbf16, #tpu.memory_space<vmem>>, vector<1x16x64xbf16>
    %278 = vector.shape_cast %277 : vector<1x16x64xbf16> to vector<16x64xbf16>
    %cst_145 = arith.constant dense<0.000000e+00> : vector<16x1xf32>
    %279 = tpu.matmul %278, %276, %cst_145 {dimension_numbers = #tpu.dot_dimension_numbers<[1], [0], [0], [1], [0, 0, 1, 1], [], []>} : vector<16x64xbf16>, vector<64x1xbf16>, vector<16x1xf32> -> vector<16x1xf32>
    %280 = arith.addf %268, %279 : vector<16x1xf32>
    %c9_i32 = arith.constant 9 : i32
    %281 = vector.broadcast %c9_i32 : i32 to vector<16x1xi32>
    %282 = arith.cmpi eq, %171, %281 : vector<16x1xi32>
    %cst_146 = arith.constant 1.000000e+00 : f32
    %cst_147 = arith.constant 0.000000e+00 : f32
    %283 = vector.broadcast %cst_146 : f32 to vector<16x1xf32>
    %284 = vector.broadcast %cst_147 : f32 to vector<16x1xf32>
    %285 = arith.select %282, %283, %284 : vector<16x1xi1>, vector<16x1xf32>
    %286 = arith.truncf %285 : vector<16x1xf32> to vector<16x1xbf16>
    %cst_148 = arith.constant dense<0.000000e+00> : vector<64x1xf32>
    %287 = tpu.matmul %164, %286, %cst_148 {dimension_numbers = #tpu.dot_dimension_numbers<[1], [0], [0], [1], [0, 0, 1, 1], [], []>} : vector<64x16xbf16>, vector<16x1xbf16>, vector<64x1xf32> -> vector<64x1xf32>
    %288 = arith.truncf %287 : vector<64x1xf32> to vector<64x1xbf16>
    %c9 = arith.constant 9 : index
    %c0_149 = arith.constant 0 : index
    %c0_150 = arith.constant 0 : index
    %289 = vector.load %arg8[%c9, %c0_149, %c0_150] : memref<16x16x64xbf16, #tpu.memory_space<vmem>>, vector<1x16x64xbf16>
    %290 = vector.shape_cast %289 : vector<1x16x64xbf16> to vector<16x64xbf16>
    %cst_151 = arith.constant dense<0.000000e+00> : vector<16x1xf32>
    %291 = tpu.matmul %290, %288, %cst_151 {dimension_numbers = #tpu.dot_dimension_numbers<[1], [0], [0], [1], [0, 0, 1, 1], [], []>} : vector<16x64xbf16>, vector<64x1xbf16>, vector<16x1xf32> -> vector<16x1xf32>
    %292 = arith.addf %280, %291 : vector<16x1xf32>
    %c10_i32 = arith.constant 10 : i32
    %293 = vector.broadcast %c10_i32 : i32 to vector<16x1xi32>
    %294 = arith.cmpi eq, %171, %293 : vector<16x1xi32>
    %cst_152 = arith.constant 1.000000e+00 : f32
    %cst_153 = arith.constant 0.000000e+00 : f32
    %295 = vector.broadcast %cst_152 : f32 to vector<16x1xf32>
    %296 = vector.broadcast %cst_153 : f32 to vector<16x1xf32>
    %297 = arith.select %294, %295, %296 : vector<16x1xi1>, vector<16x1xf32>
    %298 = arith.truncf %297 : vector<16x1xf32> to vector<16x1xbf16>
    %cst_154 = arith.constant dense<0.000000e+00> : vector<64x1xf32>
    %299 = tpu.matmul %164, %298, %cst_154 {dimension_numbers = #tpu.dot_dimension_numbers<[1], [0], [0], [1], [0, 0, 1, 1], [], []>} : vector<64x16xbf16>, vector<16x1xbf16>, vector<64x1xf32> -> vector<64x1xf32>
    %300 = arith.truncf %299 : vector<64x1xf32> to vector<64x1xbf16>
    %c10 = arith.constant 10 : index
    %c0_155 = arith.constant 0 : index
    %c0_156 = arith.constant 0 : index
    %301 = vector.load %arg8[%c10, %c0_155, %c0_156] : memref<16x16x64xbf16, #tpu.memory_space<vmem>>, vector<1x16x64xbf16>
    %302 = vector.shape_cast %301 : vector<1x16x64xbf16> to vector<16x64xbf16>
    %cst_157 = arith.constant dense<0.000000e+00> : vector<16x1xf32>
    %303 = tpu.matmul %302, %300, %cst_157 {dimension_numbers = #tpu.dot_dimension_numbers<[1], [0], [0], [1], [0, 0, 1, 1], [], []>} : vector<16x64xbf16>, vector<64x1xbf16>, vector<16x1xf32> -> vector<16x1xf32>
    %304 = arith.addf %292, %303 : vector<16x1xf32>
    %c11_i32 = arith.constant 11 : i32
    %305 = vector.broadcast %c11_i32 : i32 to vector<16x1xi32>
    %306 = arith.cmpi eq, %171, %305 : vector<16x1xi32>
    %cst_158 = arith.constant 1.000000e+00 : f32
    %cst_159 = arith.constant 0.000000e+00 : f32
    %307 = vector.broadcast %cst_158 : f32 to vector<16x1xf32>
    %308 = vector.broadcast %cst_159 : f32 to vector<16x1xf32>
    %309 = arith.select %306, %307, %308 : vector<16x1xi1>, vector<16x1xf32>
    %310 = arith.truncf %309 : vector<16x1xf32> to vector<16x1xbf16>
    %cst_160 = arith.constant dense<0.000000e+00> : vector<64x1xf32>
    %311 = tpu.matmul %164, %310, %cst_160 {dimension_numbers = #tpu.dot_dimension_numbers<[1], [0], [0], [1], [0, 0, 1, 1], [], []>} : vector<64x16xbf16>, vector<16x1xbf16>, vector<64x1xf32> -> vector<64x1xf32>
    %312 = arith.truncf %311 : vector<64x1xf32> to vector<64x1xbf16>
    %c11 = arith.constant 11 : index
    %c0_161 = arith.constant 0 : index
    %c0_162 = arith.constant 0 : index
    %313 = vector.load %arg8[%c11, %c0_161, %c0_162] : memref<16x16x64xbf16, #tpu.memory_space<vmem>>, vector<1x16x64xbf16>
    %314 = vector.shape_cast %313 : vector<1x16x64xbf16> to vector<16x64xbf16>
    %cst_163 = arith.constant dense<0.000000e+00> : vector<16x1xf32>
    %315 = tpu.matmul %314, %312, %cst_163 {dimension_numbers = #tpu.dot_dimension_numbers<[1], [0], [0], [1], [0, 0, 1, 1], [], []>} : vector<16x64xbf16>, vector<64x1xbf16>, vector<16x1xf32> -> vector<16x1xf32>
    %316 = arith.addf %304, %315 : vector<16x1xf32>
    %c12_i32 = arith.constant 12 : i32
    %317 = vector.broadcast %c12_i32 : i32 to vector<16x1xi32>
    %318 = arith.cmpi eq, %171, %317 : vector<16x1xi32>
    %cst_164 = arith.constant 1.000000e+00 : f32
    %cst_165 = arith.constant 0.000000e+00 : f32
    %319 = vector.broadcast %cst_164 : f32 to vector<16x1xf32>
    %320 = vector.broadcast %cst_165 : f32 to vector<16x1xf32>
    %321 = arith.select %318, %319, %320 : vector<16x1xi1>, vector<16x1xf32>
    %322 = arith.truncf %321 : vector<16x1xf32> to vector<16x1xbf16>
    %cst_166 = arith.constant dense<0.000000e+00> : vector<64x1xf32>
    %323 = tpu.matmul %164, %322, %cst_166 {dimension_numbers = #tpu.dot_dimension_numbers<[1], [0], [0], [1], [0, 0, 1, 1], [], []>} : vector<64x16xbf16>, vector<16x1xbf16>, vector<64x1xf32> -> vector<64x1xf32>
    %324 = arith.truncf %323 : vector<64x1xf32> to vector<64x1xbf16>
    %c12 = arith.constant 12 : index
    %c0_167 = arith.constant 0 : index
    %c0_168 = arith.constant 0 : index
    %325 = vector.load %arg8[%c12, %c0_167, %c0_168] : memref<16x16x64xbf16, #tpu.memory_space<vmem>>, vector<1x16x64xbf16>
    %326 = vector.shape_cast %325 : vector<1x16x64xbf16> to vector<16x64xbf16>
    %cst_169 = arith.constant dense<0.000000e+00> : vector<16x1xf32>
    %327 = tpu.matmul %326, %324, %cst_169 {dimension_numbers = #tpu.dot_dimension_numbers<[1], [0], [0], [1], [0, 0, 1, 1], [], []>} : vector<16x64xbf16>, vector<64x1xbf16>, vector<16x1xf32> -> vector<16x1xf32>
    %328 = arith.addf %316, %327 : vector<16x1xf32>
    %c13_i32 = arith.constant 13 : i32
    %329 = vector.broadcast %c13_i32 : i32 to vector<16x1xi32>
    %330 = arith.cmpi eq, %171, %329 : vector<16x1xi32>
    %cst_170 = arith.constant 1.000000e+00 : f32
    %cst_171 = arith.constant 0.000000e+00 : f32
    %331 = vector.broadcast %cst_170 : f32 to vector<16x1xf32>
    %332 = vector.broadcast %cst_171 : f32 to vector<16x1xf32>
    %333 = arith.select %330, %331, %332 : vector<16x1xi1>, vector<16x1xf32>
    %334 = arith.truncf %333 : vector<16x1xf32> to vector<16x1xbf16>
    %cst_172 = arith.constant dense<0.000000e+00> : vector<64x1xf32>
    %335 = tpu.matmul %164, %334, %cst_172 {dimension_numbers = #tpu.dot_dimension_numbers<[1], [0], [0], [1], [0, 0, 1, 1], [], []>} : vector<64x16xbf16>, vector<16x1xbf16>, vector<64x1xf32> -> vector<64x1xf32>
    %336 = arith.truncf %335 : vector<64x1xf32> to vector<64x1xbf16>
    %c13 = arith.constant 13 : index
    %c0_173 = arith.constant 0 : index
    %c0_174 = arith.constant 0 : index
    %337 = vector.load %arg8[%c13, %c0_173, %c0_174] : memref<16x16x64xbf16, #tpu.memory_space<vmem>>, vector<1x16x64xbf16>
    %338 = vector.shape_cast %337 : vector<1x16x64xbf16> to vector<16x64xbf16>
    %cst_175 = arith.constant dense<0.000000e+00> : vector<16x1xf32>
    %339 = tpu.matmul %338, %336, %cst_175 {dimension_numbers = #tpu.dot_dimension_numbers<[1], [0], [0], [1], [0, 0, 1, 1], [], []>} : vector<16x64xbf16>, vector<64x1xbf16>, vector<16x1xf32> -> vector<16x1xf32>
    %340 = arith.addf %328, %339 : vector<16x1xf32>
    %c14_i32 = arith.constant 14 : i32
    %341 = vector.broadcast %c14_i32 : i32 to vector<16x1xi32>
    %342 = arith.cmpi eq, %171, %341 : vector<16x1xi32>
    %cst_176 = arith.constant 1.000000e+00 : f32
    %cst_177 = arith.constant 0.000000e+00 : f32
    %343 = vector.broadcast %cst_176 : f32 to vector<16x1xf32>
    %344 = vector.broadcast %cst_177 : f32 to vector<16x1xf32>
    %345 = arith.select %342, %343, %344 : vector<16x1xi1>, vector<16x1xf32>
    %346 = arith.truncf %345 : vector<16x1xf32> to vector<16x1xbf16>
    %cst_178 = arith.constant dense<0.000000e+00> : vector<64x1xf32>
    %347 = tpu.matmul %164, %346, %cst_178 {dimension_numbers = #tpu.dot_dimension_numbers<[1], [0], [0], [1], [0, 0, 1, 1], [], []>} : vector<64x16xbf16>, vector<16x1xbf16>, vector<64x1xf32> -> vector<64x1xf32>
    %348 = arith.truncf %347 : vector<64x1xf32> to vector<64x1xbf16>
    %c14 = arith.constant 14 : index
    %c0_179 = arith.constant 0 : index
    %c0_180 = arith.constant 0 : index
    %349 = vector.load %arg8[%c14, %c0_179, %c0_180] : memref<16x16x64xbf16, #tpu.memory_space<vmem>>, vector<1x16x64xbf16>
    %350 = vector.shape_cast %349 : vector<1x16x64xbf16> to vector<16x64xbf16>
    %cst_181 = arith.constant dense<0.000000e+00> : vector<16x1xf32>
    %351 = tpu.matmul %350, %348, %cst_181 {dimension_numbers = #tpu.dot_dimension_numbers<[1], [0], [0], [1], [0, 0, 1, 1], [], []>} : vector<16x64xbf16>, vector<64x1xbf16>, vector<16x1xf32> -> vector<16x1xf32>
    %352 = arith.addf %340, %351 : vector<16x1xf32>
    %c15_i32 = arith.constant 15 : i32
    %353 = vector.broadcast %c15_i32 : i32 to vector<16x1xi32>
    %354 = arith.cmpi eq, %171, %353 : vector<16x1xi32>
    %cst_182 = arith.constant 1.000000e+00 : f32
    %cst_183 = arith.constant 0.000000e+00 : f32
    %355 = vector.broadcast %cst_182 : f32 to vector<16x1xf32>
    %356 = vector.broadcast %cst_183 : f32 to vector<16x1xf32>
    %357 = arith.select %354, %355, %356 : vector<16x1xi1>, vector<16x1xf32>
    %358 = arith.truncf %357 : vector<16x1xf32> to vector<16x1xbf16>
    %cst_184 = arith.constant dense<0.000000e+00> : vector<64x1xf32>
    %359 = tpu.matmul %164, %358, %cst_184 {dimension_numbers = #tpu.dot_dimension_numbers<[1], [0], [0], [1], [0, 0, 1, 1], [], []>} : vector<64x16xbf16>, vector<16x1xbf16>, vector<64x1xf32> -> vector<64x1xf32>
    %360 = arith.truncf %359 : vector<64x1xf32> to vector<64x1xbf16>
    %c15 = arith.constant 15 : index
    %c0_185 = arith.constant 0 : index
    %c0_186 = arith.constant 0 : index
    %361 = vector.load %arg8[%c15, %c0_185, %c0_186] : memref<16x16x64xbf16, #tpu.memory_space<vmem>>, vector<1x16x64xbf16>
    %362 = vector.shape_cast %361 : vector<1x16x64xbf16> to vector<16x64xbf16>
    %cst_187 = arith.constant dense<0.000000e+00> : vector<16x1xf32>
    %363 = tpu.matmul %362, %360, %cst_187 {dimension_numbers = #tpu.dot_dimension_numbers<[1], [0], [0], [1], [0, 0, 1, 1], [], []>} : vector<16x64xbf16>, vector<64x1xbf16>, vector<16x1xf32> -> vector<16x1xf32>
    %364 = arith.addf %352, %363 : vector<16x1xf32>
    %c0_188 = arith.constant 0 : index
    %c0_189 = arith.constant 0 : index
    %365 = vector.load %arg9[%c0_188, %c0_189] : memref<16x1xf32, #tpu.memory_space<vmem>>, vector<16x1xf32>
    %366 = arith.addf %364, %365 : vector<16x1xf32>
    %cst_190 = arith.constant 0.000000e+00 : f32
    %367 = vector.broadcast %cst_190 : f32 to vector<16x1xf32>
    %368 = arith.cmpf oge, %366, %367 : vector<16x1xf32>
    %cst_191 = arith.constant 0.00999999977 : f32
    %369 = vector.broadcast %cst_191 : f32 to vector<16x1xf32>
    %370 = arith.mulf %369, %366 : vector<16x1xf32>
    %371 = arith.select %368, %366, %370 : vector<16x1xi1>, vector<16x1xf32>
    %372 = arith.truncf %371 : vector<16x1xf32> to vector<16x1xbf16>
    %373 = tpu.iota {dimensions = array<i32: 0>} : vector<1x16xi32>
    %374 = tpu.iota {dimensions = array<i32: 1>} : vector<1x16xi32>
    %c8_i32_192 = arith.constant 8 : i32
    %375 = vector.broadcast %c8_i32_192 : i32 to vector<1x16xi32>
    %376 = arith.muli %375, %373 : vector<1x16xi32>
    %377 = arith.subi %374, %376 : vector<1x16xi32>
    %c0_i32_193 = arith.constant 0 : i32
    %378 = vector.broadcast %c0_i32_193 : i32 to vector<1x16xi32>
    %379 = arith.addi %377, %378 : vector<1x16xi32>
    %cst_194 = arith.constant 0.000000e+00 : f32
    %380 = vector.broadcast %cst_194 : f32 to vector<64x16xf32>
    %c0_i32_195 = arith.constant 0 : i32
    %381 = vector.broadcast %c0_i32_195 : i32 to vector<1x16xi32>
    %382 = arith.cmpi eq, %379, %381 : vector<1x16xi32>
    %cst_196 = arith.constant 1.000000e+00 : f32
    %cst_197 = arith.constant 0.000000e+00 : f32
    %383 = vector.broadcast %cst_196 : f32 to vector<1x16xf32>
    %384 = vector.broadcast %cst_197 : f32 to vector<1x16xf32>
    %385 = arith.select %382, %383, %384 : vector<1x16xi1>, vector<1x16xf32>
    %386 = arith.truncf %385 : vector<1x16xf32> to vector<1x16xbf16>
    %387 = vector.broadcast %372 : vector<16x1xbf16> to vector<16x16xbf16>
    %388 = vector.broadcast %386 : vector<1x16xbf16> to vector<16x16xbf16>
    %389 = arith.mulf %387, %388 : vector<16x16xbf16>
    %c0_198 = arith.constant 0 : index
    %c0_199 = arith.constant 0 : index
    %c0_200 = arith.constant 0 : index
    %390 = vector.load %arg10[%c0_198, %c0_199, %c0_200] : memref<16x64x16xbf16, #tpu.memory_space<vmem>>, vector<1x64x16xbf16>
    %391 = vector.shape_cast %390 : vector<1x64x16xbf16> to vector<64x16xbf16>
    %cst_201 = arith.constant dense<0.000000e+00> : vector<64x16xf32>
    %392 = tpu.matmul %391, %389, %cst_201 {dimension_numbers = #tpu.dot_dimension_numbers<[1], [0], [0], [1], [0, 0, 1, 1], [], []>} : vector<64x16xbf16>, vector<16x16xbf16>, vector<64x16xf32> -> vector<64x16xf32>
    %393 = arith.addf %380, %392 : vector<64x16xf32>
    %c1_i32_202 = arith.constant 1 : i32
    %394 = vector.broadcast %c1_i32_202 : i32 to vector<1x16xi32>
    %395 = arith.cmpi eq, %379, %394 : vector<1x16xi32>
    %cst_203 = arith.constant 1.000000e+00 : f32
    %cst_204 = arith.constant 0.000000e+00 : f32
    %396 = vector.broadcast %cst_203 : f32 to vector<1x16xf32>
    %397 = vector.broadcast %cst_204 : f32 to vector<1x16xf32>
    %398 = arith.select %395, %396, %397 : vector<1x16xi1>, vector<1x16xf32>
    %399 = arith.truncf %398 : vector<1x16xf32> to vector<1x16xbf16>
    %400 = vector.broadcast %372 : vector<16x1xbf16> to vector<16x16xbf16>
    %401 = vector.broadcast %399 : vector<1x16xbf16> to vector<16x16xbf16>
    %402 = arith.mulf %400, %401 : vector<16x16xbf16>
    %c1_205 = arith.constant 1 : index
    %c0_206 = arith.constant 0 : index
    %c0_207 = arith.constant 0 : index
    %403 = vector.load %arg10[%c1_205, %c0_206, %c0_207] : memref<16x64x16xbf16, #tpu.memory_space<vmem>>, vector<1x64x16xbf16>
    %404 = vector.shape_cast %403 : vector<1x64x16xbf16> to vector<64x16xbf16>
    %cst_208 = arith.constant dense<0.000000e+00> : vector<64x16xf32>
    %405 = tpu.matmul %404, %402, %cst_208 {dimension_numbers = #tpu.dot_dimension_numbers<[1], [0], [0], [1], [0, 0, 1, 1], [], []>} : vector<64x16xbf16>, vector<16x16xbf16>, vector<64x16xf32> -> vector<64x16xf32>
    %406 = arith.addf %393, %405 : vector<64x16xf32>
    %c2_i32_209 = arith.constant 2 : i32
    %407 = vector.broadcast %c2_i32_209 : i32 to vector<1x16xi32>
    %408 = arith.cmpi eq, %379, %407 : vector<1x16xi32>
    %cst_210 = arith.constant 1.000000e+00 : f32
    %cst_211 = arith.constant 0.000000e+00 : f32
    %409 = vector.broadcast %cst_210 : f32 to vector<1x16xf32>
    %410 = vector.broadcast %cst_211 : f32 to vector<1x16xf32>
    %411 = arith.select %408, %409, %410 : vector<1x16xi1>, vector<1x16xf32>
    %412 = arith.truncf %411 : vector<1x16xf32> to vector<1x16xbf16>
    %413 = vector.broadcast %372 : vector<16x1xbf16> to vector<16x16xbf16>
    %414 = vector.broadcast %412 : vector<1x16xbf16> to vector<16x16xbf16>
    %415 = arith.mulf %413, %414 : vector<16x16xbf16>
    %c2_212 = arith.constant 2 : index
    %c0_213 = arith.constant 0 : index
    %c0_214 = arith.constant 0 : index
    %416 = vector.load %arg10[%c2_212, %c0_213, %c0_214] : memref<16x64x16xbf16, #tpu.memory_space<vmem>>, vector<1x64x16xbf16>
    %417 = vector.shape_cast %416 : vector<1x64x16xbf16> to vector<64x16xbf16>
    %cst_215 = arith.constant dense<0.000000e+00> : vector<64x16xf32>
    %418 = tpu.matmul %417, %415, %cst_215 {dimension_numbers = #tpu.dot_dimension_numbers<[1], [0], [0], [1], [0, 0, 1, 1], [], []>} : vector<64x16xbf16>, vector<16x16xbf16>, vector<64x16xf32> -> vector<64x16xf32>
    %419 = arith.addf %406, %418 : vector<64x16xf32>
    %c3_i32_216 = arith.constant 3 : i32
    %420 = vector.broadcast %c3_i32_216 : i32 to vector<1x16xi32>
    %421 = arith.cmpi eq, %379, %420 : vector<1x16xi32>
    %cst_217 = arith.constant 1.000000e+00 : f32
    %cst_218 = arith.constant 0.000000e+00 : f32
    %422 = vector.broadcast %cst_217 : f32 to vector<1x16xf32>
    %423 = vector.broadcast %cst_218 : f32 to vector<1x16xf32>
    %424 = arith.select %421, %422, %423 : vector<1x16xi1>, vector<1x16xf32>
    %425 = arith.truncf %424 : vector<1x16xf32> to vector<1x16xbf16>
    %426 = vector.broadcast %372 : vector<16x1xbf16> to vector<16x16xbf16>
    %427 = vector.broadcast %425 : vector<1x16xbf16> to vector<16x16xbf16>
    %428 = arith.mulf %426, %427 : vector<16x16xbf16>
    %c3_219 = arith.constant 3 : index
    %c0_220 = arith.constant 0 : index
    %c0_221 = arith.constant 0 : index
    %429 = vector.load %arg10[%c3_219, %c0_220, %c0_221] : memref<16x64x16xbf16, #tpu.memory_space<vmem>>, vector<1x64x16xbf16>
    %430 = vector.shape_cast %429 : vector<1x64x16xbf16> to vector<64x16xbf16>
    %cst_222 = arith.constant dense<0.000000e+00> : vector<64x16xf32>
    %431 = tpu.matmul %430, %428, %cst_222 {dimension_numbers = #tpu.dot_dimension_numbers<[1], [0], [0], [1], [0, 0, 1, 1], [], []>} : vector<64x16xbf16>, vector<16x16xbf16>, vector<64x16xf32> -> vector<64x16xf32>
    %432 = arith.addf %419, %431 : vector<64x16xf32>
    %c4_i32_223 = arith.constant 4 : i32
    %433 = vector.broadcast %c4_i32_223 : i32 to vector<1x16xi32>
    %434 = arith.cmpi eq, %379, %433 : vector<1x16xi32>
    %cst_224 = arith.constant 1.000000e+00 : f32
    %cst_225 = arith.constant 0.000000e+00 : f32
    %435 = vector.broadcast %cst_224 : f32 to vector<1x16xf32>
    %436 = vector.broadcast %cst_225 : f32 to vector<1x16xf32>
    %437 = arith.select %434, %435, %436 : vector<1x16xi1>, vector<1x16xf32>
    %438 = arith.truncf %437 : vector<1x16xf32> to vector<1x16xbf16>
    %439 = vector.broadcast %372 : vector<16x1xbf16> to vector<16x16xbf16>
    %440 = vector.broadcast %438 : vector<1x16xbf16> to vector<16x16xbf16>
    %441 = arith.mulf %439, %440 : vector<16x16xbf16>
    %c4_226 = arith.constant 4 : index
    %c0_227 = arith.constant 0 : index
    %c0_228 = arith.constant 0 : index
    %442 = vector.load %arg10[%c4_226, %c0_227, %c0_228] : memref<16x64x16xbf16, #tpu.memory_space<vmem>>, vector<1x64x16xbf16>
    %443 = vector.shape_cast %442 : vector<1x64x16xbf16> to vector<64x16xbf16>
    %cst_229 = arith.constant dense<0.000000e+00> : vector<64x16xf32>
    %444 = tpu.matmul %443, %441, %cst_229 {dimension_numbers = #tpu.dot_dimension_numbers<[1], [0], [0], [1], [0, 0, 1, 1], [], []>} : vector<64x16xbf16>, vector<16x16xbf16>, vector<64x16xf32> -> vector<64x16xf32>
    %445 = arith.addf %432, %444 : vector<64x16xf32>
    %c5_i32_230 = arith.constant 5 : i32
    %446 = vector.broadcast %c5_i32_230 : i32 to vector<1x16xi32>
    %447 = arith.cmpi eq, %379, %446 : vector<1x16xi32>
    %cst_231 = arith.constant 1.000000e+00 : f32
    %cst_232 = arith.constant 0.000000e+00 : f32
    %448 = vector.broadcast %cst_231 : f32 to vector<1x16xf32>
    %449 = vector.broadcast %cst_232 : f32 to vector<1x16xf32>
    %450 = arith.select %447, %448, %449 : vector<1x16xi1>, vector<1x16xf32>
    %451 = arith.truncf %450 : vector<1x16xf32> to vector<1x16xbf16>
    %452 = vector.broadcast %372 : vector<16x1xbf16> to vector<16x16xbf16>
    %453 = vector.broadcast %451 : vector<1x16xbf16> to vector<16x16xbf16>
    %454 = arith.mulf %452, %453 : vector<16x16xbf16>
    %c5_233 = arith.constant 5 : index
    %c0_234 = arith.constant 0 : index
    %c0_235 = arith.constant 0 : index
    %455 = vector.load %arg10[%c5_233, %c0_234, %c0_235] : memref<16x64x16xbf16, #tpu.memory_space<vmem>>, vector<1x64x16xbf16>
    %456 = vector.shape_cast %455 : vector<1x64x16xbf16> to vector<64x16xbf16>
    %cst_236 = arith.constant dense<0.000000e+00> : vector<64x16xf32>
    %457 = tpu.matmul %456, %454, %cst_236 {dimension_numbers = #tpu.dot_dimension_numbers<[1], [0], [0], [1], [0, 0, 1, 1], [], []>} : vector<64x16xbf16>, vector<16x16xbf16>, vector<64x16xf32> -> vector<64x16xf32>
    %458 = arith.addf %445, %457 : vector<64x16xf32>
    %c6_i32_237 = arith.constant 6 : i32
    %459 = vector.broadcast %c6_i32_237 : i32 to vector<1x16xi32>
    %460 = arith.cmpi eq, %379, %459 : vector<1x16xi32>
    %cst_238 = arith.constant 1.000000e+00 : f32
    %cst_239 = arith.constant 0.000000e+00 : f32
    %461 = vector.broadcast %cst_238 : f32 to vector<1x16xf32>
    %462 = vector.broadcast %cst_239 : f32 to vector<1x16xf32>
    %463 = arith.select %460, %461, %462 : vector<1x16xi1>, vector<1x16xf32>
    %464 = arith.truncf %463 : vector<1x16xf32> to vector<1x16xbf16>
    %465 = vector.broadcast %372 : vector<16x1xbf16> to vector<16x16xbf16>
    %466 = vector.broadcast %464 : vector<1x16xbf16> to vector<16x16xbf16>
    %467 = arith.mulf %465, %466 : vector<16x16xbf16>
    %c6_240 = arith.constant 6 : index
    %c0_241 = arith.constant 0 : index
    %c0_242 = arith.constant 0 : index
    %468 = vector.load %arg10[%c6_240, %c0_241, %c0_242] : memref<16x64x16xbf16, #tpu.memory_space<vmem>>, vector<1x64x16xbf16>
    %469 = vector.shape_cast %468 : vector<1x64x16xbf16> to vector<64x16xbf16>
    %cst_243 = arith.constant dense<0.000000e+00> : vector<64x16xf32>
    %470 = tpu.matmul %469, %467, %cst_243 {dimension_numbers = #tpu.dot_dimension_numbers<[1], [0], [0], [1], [0, 0, 1, 1], [], []>} : vector<64x16xbf16>, vector<16x16xbf16>, vector<64x16xf32> -> vector<64x16xf32>
    %471 = arith.addf %458, %470 : vector<64x16xf32>
    %c7_i32_244 = arith.constant 7 : i32
    %472 = vector.broadcast %c7_i32_244 : i32 to vector<1x16xi32>
    %473 = arith.cmpi eq, %379, %472 : vector<1x16xi32>
    %cst_245 = arith.constant 1.000000e+00 : f32
    %cst_246 = arith.constant 0.000000e+00 : f32
    %474 = vector.broadcast %cst_245 : f32 to vector<1x16xf32>
    %475 = vector.broadcast %cst_246 : f32 to vector<1x16xf32>
    %476 = arith.select %473, %474, %475 : vector<1x16xi1>, vector<1x16xf32>
    %477 = arith.truncf %476 : vector<1x16xf32> to vector<1x16xbf16>
    %478 = vector.broadcast %372 : vector<16x1xbf16> to vector<16x16xbf16>
    %479 = vector.broadcast %477 : vector<1x16xbf16> to vector<16x16xbf16>
    %480 = arith.mulf %478, %479 : vector<16x16xbf16>
    %c7_247 = arith.constant 7 : index
    %c0_248 = arith.constant 0 : index
    %c0_249 = arith.constant 0 : index
    %481 = vector.load %arg10[%c7_247, %c0_248, %c0_249] : memref<16x64x16xbf16, #tpu.memory_space<vmem>>, vector<1x64x16xbf16>
    %482 = vector.shape_cast %481 : vector<1x64x16xbf16> to vector<64x16xbf16>
    %cst_250 = arith.constant dense<0.000000e+00> : vector<64x16xf32>
    %483 = tpu.matmul %482, %480, %cst_250 {dimension_numbers = #tpu.dot_dimension_numbers<[1], [0], [0], [1], [0, 0, 1, 1], [], []>} : vector<64x16xbf16>, vector<16x16xbf16>, vector<64x16xf32> -> vector<64x16xf32>
    %484 = arith.addf %471, %483 : vector<64x16xf32>
    %c8_i32_251 = arith.constant 8 : i32
    %485 = vector.broadcast %c8_i32_251 : i32 to vector<1x16xi32>
    %486 = arith.cmpi eq, %379, %485 : vector<1x16xi32>
    %cst_252 = arith.constant 1.000000e+00 : f32
    %cst_253 = arith.constant 0.000000e+00 : f32
    %487 = vector.broadcast %cst_252 : f32 to vector<1x16xf32>
    %488 = vector.broadcast %cst_253 : f32 to vector<1x16xf32>
    %489 = arith.select %486, %487, %488 : vector<1x16xi1>, vector<1x16xf32>
    %490 = arith.truncf %489 : vector<1x16xf32> to vector<1x16xbf16>
    %491 = vector.broadcast %372 : vector<16x1xbf16> to vector<16x16xbf16>
    %492 = vector.broadcast %490 : vector<1x16xbf16> to vector<16x16xbf16>
    %493 = arith.mulf %491, %492 : vector<16x16xbf16>
    %c8_254 = arith.constant 8 : index
    %c0_255 = arith.constant 0 : index
    %c0_256 = arith.constant 0 : index
    %494 = vector.load %arg10[%c8_254, %c0_255, %c0_256] : memref<16x64x16xbf16, #tpu.memory_space<vmem>>, vector<1x64x16xbf16>
    %495 = vector.shape_cast %494 : vector<1x64x16xbf16> to vector<64x16xbf16>
    %cst_257 = arith.constant dense<0.000000e+00> : vector<64x16xf32>
    %496 = tpu.matmul %495, %493, %cst_257 {dimension_numbers = #tpu.dot_dimension_numbers<[1], [0], [0], [1], [0, 0, 1, 1], [], []>} : vector<64x16xbf16>, vector<16x16xbf16>, vector<64x16xf32> -> vector<64x16xf32>
    %497 = arith.addf %484, %496 : vector<64x16xf32>
    %c9_i32_258 = arith.constant 9 : i32
    %498 = vector.broadcast %c9_i32_258 : i32 to vector<1x16xi32>
    %499 = arith.cmpi eq, %379, %498 : vector<1x16xi32>
    %cst_259 = arith.constant 1.000000e+00 : f32
    %cst_260 = arith.constant 0.000000e+00 : f32
    %500 = vector.broadcast %cst_259 : f32 to vector<1x16xf32>
    %501 = vector.broadcast %cst_260 : f32 to vector<1x16xf32>
    %502 = arith.select %499, %500, %501 : vector<1x16xi1>, vector<1x16xf32>
    %503 = arith.truncf %502 : vector<1x16xf32> to vector<1x16xbf16>
    %504 = vector.broadcast %372 : vector<16x1xbf16> to vector<16x16xbf16>
    %505 = vector.broadcast %503 : vector<1x16xbf16> to vector<16x16xbf16>
    %506 = arith.mulf %504, %505 : vector<16x16xbf16>
    %c9_261 = arith.constant 9 : index
    %c0_262 = arith.constant 0 : index
    %c0_263 = arith.constant 0 : index
    %507 = vector.load %arg10[%c9_261, %c0_262, %c0_263] : memref<16x64x16xbf16, #tpu.memory_space<vmem>>, vector<1x64x16xbf16>
    %508 = vector.shape_cast %507 : vector<1x64x16xbf16> to vector<64x16xbf16>
    %cst_264 = arith.constant dense<0.000000e+00> : vector<64x16xf32>
    %509 = tpu.matmul %508, %506, %cst_264 {dimension_numbers = #tpu.dot_dimension_numbers<[1], [0], [0], [1], [0, 0, 1, 1], [], []>} : vector<64x16xbf16>, vector<16x16xbf16>, vector<64x16xf32> -> vector<64x16xf32>
    %510 = arith.addf %497, %509 : vector<64x16xf32>
    %c10_i32_265 = arith.constant 10 : i32
    %511 = vector.broadcast %c10_i32_265 : i32 to vector<1x16xi32>
    %512 = arith.cmpi eq, %379, %511 : vector<1x16xi32>
    %cst_266 = arith.constant 1.000000e+00 : f32
    %cst_267 = arith.constant 0.000000e+00 : f32
    %513 = vector.broadcast %cst_266 : f32 to vector<1x16xf32>
    %514 = vector.broadcast %cst_267 : f32 to vector<1x16xf32>
    %515 = arith.select %512, %513, %514 : vector<1x16xi1>, vector<1x16xf32>
    %516 = arith.truncf %515 : vector<1x16xf32> to vector<1x16xbf16>
    %517 = vector.broadcast %372 : vector<16x1xbf16> to vector<16x16xbf16>
    %518 = vector.broadcast %516 : vector<1x16xbf16> to vector<16x16xbf16>
    %519 = arith.mulf %517, %518 : vector<16x16xbf16>
    %c10_268 = arith.constant 10 : index
    %c0_269 = arith.constant 0 : index
    %c0_270 = arith.constant 0 : index
    %520 = vector.load %arg10[%c10_268, %c0_269, %c0_270] : memref<16x64x16xbf16, #tpu.memory_space<vmem>>, vector<1x64x16xbf16>
    %521 = vector.shape_cast %520 : vector<1x64x16xbf16> to vector<64x16xbf16>
    %cst_271 = arith.constant dense<0.000000e+00> : vector<64x16xf32>
    %522 = tpu.matmul %521, %519, %cst_271 {dimension_numbers = #tpu.dot_dimension_numbers<[1], [0], [0], [1], [0, 0, 1, 1], [], []>} : vector<64x16xbf16>, vector<16x16xbf16>, vector<64x16xf32> -> vector<64x16xf32>
    %523 = arith.addf %510, %522 : vector<64x16xf32>
    %c11_i32_272 = arith.constant 11 : i32
    %524 = vector.broadcast %c11_i32_272 : i32 to vector<1x16xi32>
    %525 = arith.cmpi eq, %379, %524 : vector<1x16xi32>
    %cst_273 = arith.constant 1.000000e+00 : f32
    %cst_274 = arith.constant 0.000000e+00 : f32
    %526 = vector.broadcast %cst_273 : f32 to vector<1x16xf32>
    %527 = vector.broadcast %cst_274 : f32 to vector<1x16xf32>
    %528 = arith.select %525, %526, %527 : vector<1x16xi1>, vector<1x16xf32>
    %529 = arith.truncf %528 : vector<1x16xf32> to vector<1x16xbf16>
    %530 = vector.broadcast %372 : vector<16x1xbf16> to vector<16x16xbf16>
    %531 = vector.broadcast %529 : vector<1x16xbf16> to vector<16x16xbf16>
    %532 = arith.mulf %530, %531 : vector<16x16xbf16>
    %c11_275 = arith.constant 11 : index
    %c0_276 = arith.constant 0 : index
    %c0_277 = arith.constant 0 : index
    %533 = vector.load %arg10[%c11_275, %c0_276, %c0_277] : memref<16x64x16xbf16, #tpu.memory_space<vmem>>, vector<1x64x16xbf16>
    %534 = vector.shape_cast %533 : vector<1x64x16xbf16> to vector<64x16xbf16>
    %cst_278 = arith.constant dense<0.000000e+00> : vector<64x16xf32>
    %535 = tpu.matmul %534, %532, %cst_278 {dimension_numbers = #tpu.dot_dimension_numbers<[1], [0], [0], [1], [0, 0, 1, 1], [], []>} : vector<64x16xbf16>, vector<16x16xbf16>, vector<64x16xf32> -> vector<64x16xf32>
    %536 = arith.addf %523, %535 : vector<64x16xf32>
    %c12_i32_279 = arith.constant 12 : i32
    %537 = vector.broadcast %c12_i32_279 : i32 to vector<1x16xi32>
    %538 = arith.cmpi eq, %379, %537 : vector<1x16xi32>
    %cst_280 = arith.constant 1.000000e+00 : f32
    %cst_281 = arith.constant 0.000000e+00 : f32
    %539 = vector.broadcast %cst_280 : f32 to vector<1x16xf32>
    %540 = vector.broadcast %cst_281 : f32 to vector<1x16xf32>
    %541 = arith.select %538, %539, %540 : vector<1x16xi1>, vector<1x16xf32>
    %542 = arith.truncf %541 : vector<1x16xf32> to vector<1x16xbf16>
    %543 = vector.broadcast %372 : vector<16x1xbf16> to vector<16x16xbf16>
    %544 = vector.broadcast %542 : vector<1x16xbf16> to vector<16x16xbf16>
    %545 = arith.mulf %543, %544 : vector<16x16xbf16>
    %c12_282 = arith.constant 12 : index
    %c0_283 = arith.constant 0 : index
    %c0_284 = arith.constant 0 : index
    %546 = vector.load %arg10[%c12_282, %c0_283, %c0_284] : memref<16x64x16xbf16, #tpu.memory_space<vmem>>, vector<1x64x16xbf16>
    %547 = vector.shape_cast %546 : vector<1x64x16xbf16> to vector<64x16xbf16>
    %cst_285 = arith.constant dense<0.000000e+00> : vector<64x16xf32>
    %548 = tpu.matmul %547, %545, %cst_285 {dimension_numbers = #tpu.dot_dimension_numbers<[1], [0], [0], [1], [0, 0, 1, 1], [], []>} : vector<64x16xbf16>, vector<16x16xbf16>, vector<64x16xf32> -> vector<64x16xf32>
    %549 = arith.addf %536, %548 : vector<64x16xf32>
    %c13_i32_286 = arith.constant 13 : i32
    %550 = vector.broadcast %c13_i32_286 : i32 to vector<1x16xi32>
    %551 = arith.cmpi eq, %379, %550 : vector<1x16xi32>
    %cst_287 = arith.constant 1.000000e+00 : f32
    %cst_288 = arith.constant 0.000000e+00 : f32
    %552 = vector.broadcast %cst_287 : f32 to vector<1x16xf32>
    %553 = vector.broadcast %cst_288 : f32 to vector<1x16xf32>
    %554 = arith.select %551, %552, %553 : vector<1x16xi1>, vector<1x16xf32>
    %555 = arith.truncf %554 : vector<1x16xf32> to vector<1x16xbf16>
    %556 = vector.broadcast %372 : vector<16x1xbf16> to vector<16x16xbf16>
    %557 = vector.broadcast %555 : vector<1x16xbf16> to vector<16x16xbf16>
    %558 = arith.mulf %556, %557 : vector<16x16xbf16>
    %c13_289 = arith.constant 13 : index
    %c0_290 = arith.constant 0 : index
    %c0_291 = arith.constant 0 : index
    %559 = vector.load %arg10[%c13_289, %c0_290, %c0_291] : memref<16x64x16xbf16, #tpu.memory_space<vmem>>, vector<1x64x16xbf16>
    %560 = vector.shape_cast %559 : vector<1x64x16xbf16> to vector<64x16xbf16>
    %cst_292 = arith.constant dense<0.000000e+00> : vector<64x16xf32>
    %561 = tpu.matmul %560, %558, %cst_292 {dimension_numbers = #tpu.dot_dimension_numbers<[1], [0], [0], [1], [0, 0, 1, 1], [], []>} : vector<64x16xbf16>, vector<16x16xbf16>, vector<64x16xf32> -> vector<64x16xf32>
    %562 = arith.addf %549, %561 : vector<64x16xf32>
    %c14_i32_293 = arith.constant 14 : i32
    %563 = vector.broadcast %c14_i32_293 : i32 to vector<1x16xi32>
    %564 = arith.cmpi eq, %379, %563 : vector<1x16xi32>
    %cst_294 = arith.constant 1.000000e+00 : f32
    %cst_295 = arith.constant 0.000000e+00 : f32
    %565 = vector.broadcast %cst_294 : f32 to vector<1x16xf32>
    %566 = vector.broadcast %cst_295 : f32 to vector<1x16xf32>
    %567 = arith.select %564, %565, %566 : vector<1x16xi1>, vector<1x16xf32>
    %568 = arith.truncf %567 : vector<1x16xf32> to vector<1x16xbf16>
    %569 = vector.broadcast %372 : vector<16x1xbf16> to vector<16x16xbf16>
    %570 = vector.broadcast %568 : vector<1x16xbf16> to vector<16x16xbf16>
    %571 = arith.mulf %569, %570 : vector<16x16xbf16>
    %c14_296 = arith.constant 14 : index
    %c0_297 = arith.constant 0 : index
    %c0_298 = arith.constant 0 : index
    %572 = vector.load %arg10[%c14_296, %c0_297, %c0_298] : memref<16x64x16xbf16, #tpu.memory_space<vmem>>, vector<1x64x16xbf16>
    %573 = vector.shape_cast %572 : vector<1x64x16xbf16> to vector<64x16xbf16>
    %cst_299 = arith.constant dense<0.000000e+00> : vector<64x16xf32>
    %574 = tpu.matmul %573, %571, %cst_299 {dimension_numbers = #tpu.dot_dimension_numbers<[1], [0], [0], [1], [0, 0, 1, 1], [], []>} : vector<64x16xbf16>, vector<16x16xbf16>, vector<64x16xf32> -> vector<64x16xf32>
    %575 = arith.addf %562, %574 : vector<64x16xf32>
    %c15_i32_300 = arith.constant 15 : i32
    %576 = vector.broadcast %c15_i32_300 : i32 to vector<1x16xi32>
    %577 = arith.cmpi eq, %379, %576 : vector<1x16xi32>
    %cst_301 = arith.constant 1.000000e+00 : f32
    %cst_302 = arith.constant 0.000000e+00 : f32
    %578 = vector.broadcast %cst_301 : f32 to vector<1x16xf32>
    %579 = vector.broadcast %cst_302 : f32 to vector<1x16xf32>
    %580 = arith.select %577, %578, %579 : vector<1x16xi1>, vector<1x16xf32>
    %581 = arith.truncf %580 : vector<1x16xf32> to vector<1x16xbf16>
    %582 = vector.broadcast %372 : vector<16x1xbf16> to vector<16x16xbf16>
    %583 = vector.broadcast %581 : vector<1x16xbf16> to vector<16x16xbf16>
    %584 = arith.mulf %582, %583 : vector<16x16xbf16>
    %c15_303 = arith.constant 15 : index
    %c0_304 = arith.constant 0 : index
    %c0_305 = arith.constant 0 : index
    %585 = vector.load %arg10[%c15_303, %c0_304, %c0_305] : memref<16x64x16xbf16, #tpu.memory_space<vmem>>, vector<1x64x16xbf16>
    %586 = vector.shape_cast %585 : vector<1x64x16xbf16> to vector<64x16xbf16>
    %cst_306 = arith.constant dense<0.000000e+00> : vector<64x16xf32>
    %587 = tpu.matmul %586, %584, %cst_306 {dimension_numbers = #tpu.dot_dimension_numbers<[1], [0], [0], [1], [0, 0, 1, 1], [], []>} : vector<64x16xbf16>, vector<16x16xbf16>, vector<64x16xf32> -> vector<64x16xf32>
    %588 = arith.addf %575, %587 : vector<64x16xf32>
    %c0_307 = arith.constant 0 : index
    %c0_308 = arith.constant 0 : index
    %589 = vector.load %arg11[%c0_307, %c0_308] : memref<64x1xf32, #tpu.memory_space<vmem>>, vector<64x1xf32>
    %590 = vector.broadcast %589 : vector<64x1xf32> to vector<64x16xf32>
    %591 = arith.addf %588, %590 : vector<64x16xf32>
    %cst_309 = arith.constant 0.000000e+00 : f32
    %592 = vector.broadcast %cst_309 : f32 to vector<64x16xf32>
    %593 = arith.maximumf %591, %592 : vector<64x16xf32>
    %594 = arith.truncf %593 : vector<64x16xf32> to vector<64x16xbf16>
    %595 = tpu.iota {dimensions = array<i32: 0>} : vector<16x32xi32>
    %596 = tpu.iota {dimensions = array<i32: 1>} : vector<16x32xi32>
    %c2_i32_310 = arith.constant 2 : i32
    %597 = vector.broadcast %c2_i32_310 : i32 to vector<16x32xi32>
    %598 = arith.muli %597, %595 : vector<16x32xi32>
    %599 = arith.subi %596, %598 : vector<16x32xi32>
    %c1_i32_311 = arith.constant 1 : i32
    %600 = vector.broadcast %c1_i32_311 : i32 to vector<16x32xi32>
    %601 = arith.addi %599, %600 : vector<16x32xi32>
    %cst_312 = arith.constant 0.000000e+00 : f32
    %602 = vector.broadcast %cst_312 : f32 to vector<32x32xf32>
    %c0_i32_313 = arith.constant 0 : i32
    %603 = vector.broadcast %c0_i32_313 : i32 to vector<16x32xi32>
    %604 = arith.cmpi eq, %601, %603 : vector<16x32xi32>
    %cst_314 = arith.constant 1.000000e+00 : f32
    %cst_315 = arith.constant 0.000000e+00 : f32
    %605 = vector.broadcast %cst_314 : f32 to vector<16x32xf32>
    %606 = vector.broadcast %cst_315 : f32 to vector<16x32xf32>
    %607 = arith.select %604, %605, %606 : vector<16x32xi1>, vector<16x32xf32>
    %608 = arith.truncf %607 : vector<16x32xf32> to vector<16x32xbf16>
    %cst_316 = arith.constant dense<0.000000e+00> : vector<64x32xf32>
    %609 = tpu.matmul %594, %608, %cst_316 {dimension_numbers = #tpu.dot_dimension_numbers<[1], [0], [0], [1], [0, 0, 1, 1], [], []>} : vector<64x16xbf16>, vector<16x32xbf16>, vector<64x32xf32> -> vector<64x32xf32>
    %610 = arith.truncf %609 : vector<64x32xf32> to vector<64x32xbf16>
    %c0_317 = arith.constant 0 : index
    %c0_318 = arith.constant 0 : index
    %c0_319 = arith.constant 0 : index
    %611 = vector.load %arg12[%c0_317, %c0_318, %c0_319] : memref<3x32x64xbf16, #tpu.memory_space<vmem>>, vector<1x32x64xbf16>
    %612 = vector.shape_cast %611 : vector<1x32x64xbf16> to vector<32x64xbf16>
    %cst_320 = arith.constant dense<0.000000e+00> : vector<32x32xf32>
    %613 = tpu.matmul %612, %610, %cst_320 {dimension_numbers = #tpu.dot_dimension_numbers<[1], [0], [0], [1], [0, 0, 1, 1], [], []>} : vector<32x64xbf16>, vector<64x32xbf16>, vector<32x32xf32> -> vector<32x32xf32>
    %614 = arith.addf %602, %613 : vector<32x32xf32>
    %c1_i32_321 = arith.constant 1 : i32
    %615 = vector.broadcast %c1_i32_321 : i32 to vector<16x32xi32>
    %616 = arith.cmpi eq, %601, %615 : vector<16x32xi32>
    %cst_322 = arith.constant 1.000000e+00 : f32
    %cst_323 = arith.constant 0.000000e+00 : f32
    %617 = vector.broadcast %cst_322 : f32 to vector<16x32xf32>
    %618 = vector.broadcast %cst_323 : f32 to vector<16x32xf32>
    %619 = arith.select %616, %617, %618 : vector<16x32xi1>, vector<16x32xf32>
    %620 = arith.truncf %619 : vector<16x32xf32> to vector<16x32xbf16>
    %cst_324 = arith.constant dense<0.000000e+00> : vector<64x32xf32>
    %621 = tpu.matmul %594, %620, %cst_324 {dimension_numbers = #tpu.dot_dimension_numbers<[1], [0], [0], [1], [0, 0, 1, 1], [], []>} : vector<64x16xbf16>, vector<16x32xbf16>, vector<64x32xf32> -> vector<64x32xf32>
    %622 = arith.truncf %621 : vector<64x32xf32> to vector<64x32xbf16>
    %c1_325 = arith.constant 1 : index
    %c0_326 = arith.constant 0 : index
    %c0_327 = arith.constant 0 : index
    %623 = vector.load %arg12[%c1_325, %c0_326, %c0_327] : memref<3x32x64xbf16, #tpu.memory_space<vmem>>, vector<1x32x64xbf16>
    %624 = vector.shape_cast %623 : vector<1x32x64xbf16> to vector<32x64xbf16>
    %cst_328 = arith.constant dense<0.000000e+00> : vector<32x32xf32>
    %625 = tpu.matmul %624, %622, %cst_328 {dimension_numbers = #tpu.dot_dimension_numbers<[1], [0], [0], [1], [0, 0, 1, 1], [], []>} : vector<32x64xbf16>, vector<64x32xbf16>, vector<32x32xf32> -> vector<32x32xf32>
    %626 = arith.addf %614, %625 : vector<32x32xf32>
    %c2_i32_329 = arith.constant 2 : i32
    %627 = vector.broadcast %c2_i32_329 : i32 to vector<16x32xi32>
    %628 = arith.cmpi eq, %601, %627 : vector<16x32xi32>
    %cst_330 = arith.constant 1.000000e+00 : f32
    %cst_331 = arith.constant 0.000000e+00 : f32
    %629 = vector.broadcast %cst_330 : f32 to vector<16x32xf32>
    %630 = vector.broadcast %cst_331 : f32 to vector<16x32xf32>
    %631 = arith.select %628, %629, %630 : vector<16x32xi1>, vector<16x32xf32>
    %632 = arith.truncf %631 : vector<16x32xf32> to vector<16x32xbf16>
    %cst_332 = arith.constant dense<0.000000e+00> : vector<64x32xf32>
    %633 = tpu.matmul %594, %632, %cst_332 {dimension_numbers = #tpu.dot_dimension_numbers<[1], [0], [0], [1], [0, 0, 1, 1], [], []>} : vector<64x16xbf16>, vector<16x32xbf16>, vector<64x32xf32> -> vector<64x32xf32>
    %634 = arith.truncf %633 : vector<64x32xf32> to vector<64x32xbf16>
    %c2_333 = arith.constant 2 : index
    %c0_334 = arith.constant 0 : index
    %c0_335 = arith.constant 0 : index
    %635 = vector.load %arg12[%c2_333, %c0_334, %c0_335] : memref<3x32x64xbf16, #tpu.memory_space<vmem>>, vector<1x32x64xbf16>
    %636 = vector.shape_cast %635 : vector<1x32x64xbf16> to vector<32x64xbf16>
    %cst_336 = arith.constant dense<0.000000e+00> : vector<32x32xf32>
    %637 = tpu.matmul %636, %634, %cst_336 {dimension_numbers = #tpu.dot_dimension_numbers<[1], [0], [0], [1], [0, 0, 1, 1], [], []>} : vector<32x64xbf16>, vector<64x32xbf16>, vector<32x32xf32> -> vector<32x32xf32>
    %638 = arith.addf %626, %637 : vector<32x32xf32>
    %c0_337 = arith.constant 0 : index
    %c0_338 = arith.constant 0 : index
    %639 = vector.load %arg13[%c0_337, %c0_338] : memref<32x1xf32, #tpu.memory_space<vmem>>, vector<32x1xf32>
    %640 = vector.broadcast %639 : vector<32x1xf32> to vector<32x32xf32>
    %641 = arith.addf %638, %640 : vector<32x32xf32>
    %cst_339 = arith.constant 0.000000e+00 : f32
    %642 = vector.broadcast %cst_339 : f32 to vector<32x32xf32>
    %643 = arith.maximumf %641, %642 : vector<32x32xf32>
    %644 = arith.truncf %643 : vector<32x32xf32> to vector<32x32xbf16>
    %645 = tpu.iota {dimensions = array<i32: 0>} : vector<32x64xi32>
    %646 = tpu.iota {dimensions = array<i32: 1>} : vector<32x64xi32>
    %c2_i32_340 = arith.constant 2 : i32
    %647 = vector.broadcast %c2_i32_340 : i32 to vector<32x64xi32>
    %648 = arith.muli %647, %645 : vector<32x64xi32>
    %649 = arith.subi %646, %648 : vector<32x64xi32>
    %c1_i32_341 = arith.constant 1 : i32
    %650 = vector.broadcast %c1_i32_341 : i32 to vector<32x64xi32>
    %651 = arith.addi %649, %650 : vector<32x64xi32>
    %cst_342 = arith.constant 0.000000e+00 : f32
    %652 = vector.broadcast %cst_342 : f32 to vector<16x64xf32>
    %c0_i32_343 = arith.constant 0 : i32
    %653 = vector.broadcast %c0_i32_343 : i32 to vector<32x64xi32>
    %654 = arith.cmpi eq, %651, %653 : vector<32x64xi32>
    %cst_344 = arith.constant 1.000000e+00 : f32
    %cst_345 = arith.constant 0.000000e+00 : f32
    %655 = vector.broadcast %cst_344 : f32 to vector<32x64xf32>
    %656 = vector.broadcast %cst_345 : f32 to vector<32x64xf32>
    %657 = arith.select %654, %655, %656 : vector<32x64xi1>, vector<32x64xf32>
    %658 = arith.truncf %657 : vector<32x64xf32> to vector<32x64xbf16>
    %cst_346 = arith.constant dense<0.000000e+00> : vector<32x64xf32>
    %659 = tpu.matmul %644, %658, %cst_346 {dimension_numbers = #tpu.dot_dimension_numbers<[1], [0], [0], [1], [0, 0, 1, 1], [], []>} : vector<32x32xbf16>, vector<32x64xbf16>, vector<32x64xf32> -> vector<32x64xf32>
    %660 = arith.truncf %659 : vector<32x64xf32> to vector<32x64xbf16>
    %c0_347 = arith.constant 0 : index
    %c0_348 = arith.constant 0 : index
    %c0_349 = arith.constant 0 : index
    %661 = vector.load %arg14[%c0_347, %c0_348, %c0_349] : memref<3x16x32xbf16, #tpu.memory_space<vmem>>, vector<1x16x32xbf16>
    %662 = vector.shape_cast %661 : vector<1x16x32xbf16> to vector<16x32xbf16>
    %cst_350 = arith.constant dense<0.000000e+00> : vector<16x64xf32>
    %663 = tpu.matmul %662, %660, %cst_350 {dimension_numbers = #tpu.dot_dimension_numbers<[1], [0], [0], [1], [0, 0, 1, 1], [], []>} : vector<16x32xbf16>, vector<32x64xbf16>, vector<16x64xf32> -> vector<16x64xf32>
    %664 = arith.addf %652, %663 : vector<16x64xf32>
    %c1_i32_351 = arith.constant 1 : i32
    %665 = vector.broadcast %c1_i32_351 : i32 to vector<32x64xi32>
    %666 = arith.cmpi eq, %651, %665 : vector<32x64xi32>
    %cst_352 = arith.constant 1.000000e+00 : f32
    %cst_353 = arith.constant 0.000000e+00 : f32
    %667 = vector.broadcast %cst_352 : f32 to vector<32x64xf32>
    %668 = vector.broadcast %cst_353 : f32 to vector<32x64xf32>
    %669 = arith.select %666, %667, %668 : vector<32x64xi1>, vector<32x64xf32>
    %670 = arith.truncf %669 : vector<32x64xf32> to vector<32x64xbf16>
    %cst_354 = arith.constant dense<0.000000e+00> : vector<32x64xf32>
    %671 = tpu.matmul %644, %670, %cst_354 {dimension_numbers = #tpu.dot_dimension_numbers<[1], [0], [0], [1], [0, 0, 1, 1], [], []>} : vector<32x32xbf16>, vector<32x64xbf16>, vector<32x64xf32> -> vector<32x64xf32>
    %672 = arith.truncf %671 : vector<32x64xf32> to vector<32x64xbf16>
    %c1_355 = arith.constant 1 : index
    %c0_356 = arith.constant 0 : index
    %c0_357 = arith.constant 0 : index
    %673 = vector.load %arg14[%c1_355, %c0_356, %c0_357] : memref<3x16x32xbf16, #tpu.memory_space<vmem>>, vector<1x16x32xbf16>
    %674 = vector.shape_cast %673 : vector<1x16x32xbf16> to vector<16x32xbf16>
    %cst_358 = arith.constant dense<0.000000e+00> : vector<16x64xf32>
    %675 = tpu.matmul %674, %672, %cst_358 {dimension_numbers = #tpu.dot_dimension_numbers<[1], [0], [0], [1], [0, 0, 1, 1], [], []>} : vector<16x32xbf16>, vector<32x64xbf16>, vector<16x64xf32> -> vector<16x64xf32>
    %676 = arith.addf %664, %675 : vector<16x64xf32>
    %c2_i32_359 = arith.constant 2 : i32
    %677 = vector.broadcast %c2_i32_359 : i32 to vector<32x64xi32>
    %678 = arith.cmpi eq, %651, %677 : vector<32x64xi32>
    %cst_360 = arith.constant 1.000000e+00 : f32
    %cst_361 = arith.constant 0.000000e+00 : f32
    %679 = vector.broadcast %cst_360 : f32 to vector<32x64xf32>
    %680 = vector.broadcast %cst_361 : f32 to vector<32x64xf32>
    %681 = arith.select %678, %679, %680 : vector<32x64xi1>, vector<32x64xf32>
    %682 = arith.truncf %681 : vector<32x64xf32> to vector<32x64xbf16>
    %cst_362 = arith.constant dense<0.000000e+00> : vector<32x64xf32>
    %683 = tpu.matmul %644, %682, %cst_362 {dimension_numbers = #tpu.dot_dimension_numbers<[1], [0], [0], [1], [0, 0, 1, 1], [], []>} : vector<32x32xbf16>, vector<32x64xbf16>, vector<32x64xf32> -> vector<32x64xf32>
    %684 = arith.truncf %683 : vector<32x64xf32> to vector<32x64xbf16>
    %c2_363 = arith.constant 2 : index
    %c0_364 = arith.constant 0 : index
    %c0_365 = arith.constant 0 : index
    %685 = vector.load %arg14[%c2_363, %c0_364, %c0_365] : memref<3x16x32xbf16, #tpu.memory_space<vmem>>, vector<1x16x32xbf16>
    %686 = vector.shape_cast %685 : vector<1x16x32xbf16> to vector<16x32xbf16>
    %cst_366 = arith.constant dense<0.000000e+00> : vector<16x64xf32>
    %687 = tpu.matmul %686, %684, %cst_366 {dimension_numbers = #tpu.dot_dimension_numbers<[1], [0], [0], [1], [0, 0, 1, 1], [], []>} : vector<16x32xbf16>, vector<32x64xbf16>, vector<16x64xf32> -> vector<16x64xf32>
    %688 = arith.addf %676, %687 : vector<16x64xf32>
    %c0_367 = arith.constant 0 : index
    %c0_368 = arith.constant 0 : index
    %689 = vector.load %arg15[%c0_367, %c0_368] : memref<16x1xf32, #tpu.memory_space<vmem>>, vector<16x1xf32>
    %690 = vector.broadcast %689 : vector<16x1xf32> to vector<16x64xf32>
    %691 = arith.addf %688, %690 : vector<16x64xf32>
    %cst_369 = arith.constant 0.000000e+00 : f32
    %692 = vector.broadcast %cst_369 : f32 to vector<16x64xf32>
    %693 = arith.maximumf %691, %692 : vector<16x64xf32>
    %694 = arith.truncf %693 : vector<16x64xf32> to vector<16x64xbf16>
    %695 = tpu.iota {dimensions = array<i32: 0>} : vector<64x128xi32>
    %696 = tpu.iota {dimensions = array<i32: 1>} : vector<64x128xi32>
    %c2_i32_370 = arith.constant 2 : i32
    %697 = vector.broadcast %c2_i32_370 : i32 to vector<64x128xi32>
    %698 = arith.muli %697, %695 : vector<64x128xi32>
    %699 = arith.subi %696, %698 : vector<64x128xi32>
    %c1_i32_371 = arith.constant 1 : i32
    %700 = vector.broadcast %c1_i32_371 : i32 to vector<64x128xi32>
    %701 = arith.addi %699, %700 : vector<64x128xi32>
    %cst_372 = arith.constant 0.000000e+00 : f32
    %702 = vector.broadcast %cst_372 : f32 to vector<1x128xf32>
    %c0_i32_373 = arith.constant 0 : i32
    %703 = vector.broadcast %c0_i32_373 : i32 to vector<64x128xi32>
    %704 = arith.cmpi eq, %701, %703 : vector<64x128xi32>
    %cst_374 = arith.constant 1.000000e+00 : f32
    %cst_375 = arith.constant 0.000000e+00 : f32
    %705 = vector.broadcast %cst_374 : f32 to vector<64x128xf32>
    %706 = vector.broadcast %cst_375 : f32 to vector<64x128xf32>
    %707 = arith.select %704, %705, %706 : vector<64x128xi1>, vector<64x128xf32>
    %708 = arith.truncf %707 : vector<64x128xf32> to vector<64x128xbf16>
    %cst_376 = arith.constant dense<0.000000e+00> : vector<16x128xf32>
    %709 = tpu.matmul %694, %708, %cst_376 {dimension_numbers = #tpu.dot_dimension_numbers<[1], [0], [0], [1], [0, 0, 1, 1], [], []>} : vector<16x64xbf16>, vector<64x128xbf16>, vector<16x128xf32> -> vector<16x128xf32>
    %710 = arith.truncf %709 : vector<16x128xf32> to vector<16x128xbf16>
    %c0_377 = arith.constant 0 : index
    %c0_378 = arith.constant 0 : index
    %c0_379 = arith.constant 0 : index
    %711 = vector.load %arg16[%c0_377, %c0_378, %c0_379] : memref<3x1x16xbf16, #tpu.memory_space<vmem>>, vector<1x1x16xbf16>
    %712 = vector.shape_cast %711 : vector<1x1x16xbf16> to vector<1x16xbf16>
    %cst_380 = arith.constant dense<0.000000e+00> : vector<1x128xf32>
    %713 = tpu.matmul %712, %710, %cst_380 {dimension_numbers = #tpu.dot_dimension_numbers<[1], [0], [0], [1], [0, 0, 1, 1], [], []>} : vector<1x16xbf16>, vector<16x128xbf16>, vector<1x128xf32> -> vector<1x128xf32>
    %714 = arith.addf %702, %713 : vector<1x128xf32>
    %c1_i32_381 = arith.constant 1 : i32
    %715 = vector.broadcast %c1_i32_381 : i32 to vector<64x128xi32>
    %716 = arith.cmpi eq, %701, %715 : vector<64x128xi32>
    %cst_382 = arith.constant 1.000000e+00 : f32
    %cst_383 = arith.constant 0.000000e+00 : f32
    %717 = vector.broadcast %cst_382 : f32 to vector<64x128xf32>
    %718 = vector.broadcast %cst_383 : f32 to vector<64x128xf32>
    %719 = arith.select %716, %717, %718 : vector<64x128xi1>, vector<64x128xf32>
    %720 = arith.truncf %719 : vector<64x128xf32> to vector<64x128xbf16>
    %cst_384 = arith.constant dense<0.000000e+00> : vector<16x128xf32>
    %721 = tpu.matmul %694, %720, %cst_384 {dimension_numbers = #tpu.dot_dimension_numbers<[1], [0], [0], [1], [0, 0, 1, 1], [], []>} : vector<16x64xbf16>, vector<64x128xbf16>, vector<16x128xf32> -> vector<16x128xf32>
    %722 = arith.truncf %721 : vector<16x128xf32> to vector<16x128xbf16>
    %c1_385 = arith.constant 1 : index
    %c0_386 = arith.constant 0 : index
    %c0_387 = arith.constant 0 : index
    %723 = vector.load %arg16[%c1_385, %c0_386, %c0_387] : memref<3x1x16xbf16, #tpu.memory_space<vmem>>, vector<1x1x16xbf16>
    %724 = vector.shape_cast %723 : vector<1x1x16xbf16> to vector<1x16xbf16>
    %cst_388 = arith.constant dense<0.000000e+00> : vector<1x128xf32>
    %725 = tpu.matmul %724, %722, %cst_388 {dimension_numbers = #tpu.dot_dimension_numbers<[1], [0], [0], [1], [0, 0, 1, 1], [], []>} : vector<1x16xbf16>, vector<16x128xbf16>, vector<1x128xf32> -> vector<1x128xf32>
    %726 = arith.addf %714, %725 : vector<1x128xf32>
    %c2_i32_389 = arith.constant 2 : i32
    %727 = vector.broadcast %c2_i32_389 : i32 to vector<64x128xi32>
    %728 = arith.cmpi eq, %701, %727 : vector<64x128xi32>
    %cst_390 = arith.constant 1.000000e+00 : f32
    %cst_391 = arith.constant 0.000000e+00 : f32
    %729 = vector.broadcast %cst_390 : f32 to vector<64x128xf32>
    %730 = vector.broadcast %cst_391 : f32 to vector<64x128xf32>
    %731 = arith.select %728, %729, %730 : vector<64x128xi1>, vector<64x128xf32>
    %732 = arith.truncf %731 : vector<64x128xf32> to vector<64x128xbf16>
    %cst_392 = arith.constant dense<0.000000e+00> : vector<16x128xf32>
    %733 = tpu.matmul %694, %732, %cst_392 {dimension_numbers = #tpu.dot_dimension_numbers<[1], [0], [0], [1], [0, 0, 1, 1], [], []>} : vector<16x64xbf16>, vector<64x128xbf16>, vector<16x128xf32> -> vector<16x128xf32>
    %734 = arith.truncf %733 : vector<16x128xf32> to vector<16x128xbf16>
    %c2_393 = arith.constant 2 : index
    %c0_394 = arith.constant 0 : index
    %c0_395 = arith.constant 0 : index
    %735 = vector.load %arg16[%c2_393, %c0_394, %c0_395] : memref<3x1x16xbf16, #tpu.memory_space<vmem>>, vector<1x1x16xbf16>
    %736 = vector.shape_cast %735 : vector<1x1x16xbf16> to vector<1x16xbf16>
    %cst_396 = arith.constant dense<0.000000e+00> : vector<1x128xf32>
    %737 = tpu.matmul %736, %734, %cst_396 {dimension_numbers = #tpu.dot_dimension_numbers<[1], [0], [0], [1], [0, 0, 1, 1], [], []>} : vector<1x16xbf16>, vector<16x128xbf16>, vector<1x128xf32> -> vector<1x128xf32>
    %738 = arith.addf %726, %737 : vector<1x128xf32>
    %c0_397 = arith.constant 0 : index
    %c0_398 = arith.constant 0 : index
    %739 = vector.load %arg17[%c0_397, %c0_398] : memref<1x1xf32, #tpu.memory_space<vmem>>, vector<1x1xf32>
    %740 = vector.broadcast %739 : vector<1x1xf32> to vector<1x128xf32>
    %741 = arith.addf %738, %740 : vector<1x128xf32>
    %cst_399 = arith.constant 0.000000e+00 : f32
    %742 = vector.broadcast %cst_399 : f32 to vector<1x128xf32>
    %743 = arith.cmpf oge, %741, %742 : vector<1x128xf32>
    %cst_400 = arith.constant 1.000000e-01 : f32
    %744 = vector.broadcast %cst_400 : f32 to vector<1x128xf32>
    %745 = arith.mulf %744, %741 : vector<1x128xf32>
    %746 = arith.select %743, %741, %745 : vector<1x128xi1>, vector<1x128xf32>
    %c0_401 = arith.constant 0 : index
    %c0_402 = arith.constant 0 : index
    %c0_403 = arith.constant 0 : index
    %747 = vector.load %arg18[%c0_401, %c0_402, %c0_403] : memref<1x1x128xf32, #tpu.memory_space<vmem>>, vector<1x1x128xf32>
    %748 = vector.shape_cast %747 : vector<1x1x128xf32> to vector<1x128xf32>
    %749 = vector.shape_cast %746 : vector<1x128xf32> to vector<1x1x128xf32>
    tpu.vector_store %arg18[%c0_401, %c0_402, %c0_403], %749 {strides = array<i32>} : memref<1x1x128xf32, #tpu.memory_space<vmem>>, vector<1x1x128xf32>,
    return
  }
  func.func @transform_0(%arg0: i32) -> (i32, i32, i32) {
    %c0_i32 = arith.constant 0 : i32
    %c0_i32_0 = arith.constant 0 : i32
    %c0_i32_1 = arith.constant 0 : i32
    return %arg0, %c0_i32, %c0_i32_0 : i32, i32, i32
  }
  func.func @transform_1(%arg0: i32) -> (i32, i32, i32) {
    %c0_i32 = arith.constant 0 : i32
    %c0_i32_0 = arith.constant 0 : i32
    %c0_i32_1 = arith.constant 0 : i32
    %c0_i32_2 = arith.constant 0 : i32
    return %c0_i32, %c0_i32_0, %c0_i32_1 : i32, i32, i32
  }
  func.func @transform_2(%arg0: i32) -> (i32, i32) {
    %c0_i32 = arith.constant 0 : i32
    %c0_i32_0 = arith.constant 0 : i32
    %c0_i32_1 = arith.constant 0 : i32
    return %c0_i32, %c0_i32_0 : i32, i32
  }
  func.func @transform_3(%arg0: i32) -> (i32, i32, i32) {
    %c0_i32 = arith.constant 0 : i32
    %c0_i32_0 = arith.constant 0 : i32
    %c0_i32_1 = arith.constant 0 : i32
    %c0_i32_2 = arith.constant 0 : i32
    return %c0_i32, %c0_i32_0, %c0_i32_1 : i32, i32, i32
  }
  func.func @transform_4(%arg0: i32) -> (i32, i32) {
    %c0_i32 = arith.constant 0 : i32
    %c0_i32_0 = arith.constant 0 : i32
    %c0_i32_1 = arith.constant 0 : i32
    return %c0_i32, %c0_i32_0 : i32, i32
  }
  func.func @transform_5(%arg0: i32) -> (i32, i32, i32) {
    %c0_i32 = arith.constant 0 : i32
    %c0_i32_0 = arith.constant 0 : i32
    %c0_i32_1 = arith.constant 0 : i32
    %c0_i32_2 = arith.constant 0 : i32
    return %c0_i32, %c0_i32_0, %c0_i32_1 : i32, i32, i32
  }
  func.func @transform_6(%arg0: i32) -> (i32, i32) {
    %c0_i32 = arith.constant 0 : i32
    %c0_i32_0 = arith.constant 0 : i32
    %c0_i32_1 = arith.constant 0 : i32
    return %c0_i32, %c0_i32_0 : i32, i32
  }
  func.func @transform_7(%arg0: i32) -> (i32, i32, i32) {
    %c0_i32 = arith.constant 0 : i32
    %c0_i32_0 = arith.constant 0 : i32
    %c0_i32_1 = arith.constant 0 : i32
    %c0_i32_2 = arith.constant 0 : i32
    return %c0_i32, %c0_i32_0, %c0_i32_1 : i32, i32, i32
  }
  func.func @transform_8(%arg0: i32) -> (i32, i32) {
    %c0_i32 = arith.constant 0 : i32
    %c0_i32_0 = arith.constant 0 : i32
    %c0_i32_1 = arith.constant 0 : i32
    return %c0_i32, %c0_i32_0 : i32, i32
  }
  func.func @transform_9(%arg0: i32) -> (i32, i32, i32) {
    %c0_i32 = arith.constant 0 : i32
    %c0_i32_0 = arith.constant 0 : i32
    %c0_i32_1 = arith.constant 0 : i32
    %c0_i32_2 = arith.constant 0 : i32
    return %c0_i32, %c0_i32_0, %c0_i32_1 : i32, i32, i32
  }
  func.func @transform_10(%arg0: i32) -> (i32, i32) {
    %c0_i32 = arith.constant 0 : i32
    %c0_i32_0 = arith.constant 0 : i32
    %c0_i32_1 = arith.constant 0 : i32
    return %c0_i32, %c0_i32_0 : i32, i32
  }
  func.func @transform_11(%arg0: i32) -> (i32, i32, i32) {
    %c0_i32 = arith.constant 0 : i32
    %c0_i32_0 = arith.constant 0 : i32
    %c0_i32_1 = arith.constant 0 : i32
    %c0_i32_2 = arith.constant 0 : i32
    return %c0_i32, %c0_i32_0, %c0_i32_1 : i32, i32, i32
  }
  func.func @transform_12(%arg0: i32) -> (i32, i32) {
    %c0_i32 = arith.constant 0 : i32
    %c0_i32_0 = arith.constant 0 : i32
    %c0_i32_1 = arith.constant 0 : i32
    return %c0_i32, %c0_i32_0 : i32, i32
  }
  func.func @transform_13(%arg0: i32) -> (i32, i32, i32) {
    %c0_i32 = arith.constant 0 : i32
    %c0_i32_0 = arith.constant 0 : i32
    %c0_i32_1 = arith.constant 0 : i32
    %c0_i32_2 = arith.constant 0 : i32
    return %c0_i32, %c0_i32_0, %c0_i32_1 : i32, i32, i32
  }
  func.func @transform_14(%arg0: i32) -> (i32, i32) {
    %c0_i32 = arith.constant 0 : i32
    %c0_i32_0 = arith.constant 0 : i32
    %c0_i32_1 = arith.constant 0 : i32
    return %c0_i32, %c0_i32_0 : i32, i32
  }
  func.func @transform_15(%arg0: i32) -> (i32, i32, i32) {
    %c0_i32 = arith.constant 0 : i32
    %c0_i32_0 = arith.constant 0 : i32
    %c0_i32_1 = arith.constant 0 : i32
    %c0_i32_2 = arith.constant 0 : i32
    return %c0_i32, %c0_i32_0, %c0_i32_1 : i32, i32, i32
  }
  func.func @transform_16(%arg0: i32) -> (i32, i32) {
    %c0_i32 = arith.constant 0 : i32
    %c0_i32_0 = arith.constant 0 : i32
    %c0_i32_1 = arith.constant 0 : i32
    return %c0_i32, %c0_i32_0 : i32, i32
  }
  func.func @transform_17(%arg0: i32) -> (i32, i32, i32) {
    %c0_i32 = arith.constant 0 : i32
    %c0_i32_0 = arith.constant 0 : i32
    %c0_i32_1 = arith.constant 0 : i32
    return %arg0, %c0_i32, %c0_i32_0 : i32, i32, i32
  }
}

</mosaic_0001>

<llo_original>
// kernel: forward.1
$region0: #{forward.1}
  #allocation0 [shape = 'u32[]', space=smem, size = 0x4, offset = 0x4, fixed_abs, tag = 'smem constant byte address 0x4 - core index']
  #allocation1 [shape = 'u32[144,128]{1,0:T(1,128)}', space=vmem, size = 0x12000, scoped, tag = 'internal scratch']
  #allocation2 [shape = 'f32[1,1]{1,0:T(1,128)S(1)}', space=vmem, size = 0x200, scoped, tag = 'scoped memory for forward.1']
  %s0 = inlined_call_operand.vmem [shape: f32[2,1,128], index: 0, kind: input, shape index: {}]
  %s1 = inlined_call_operand.vmem [shape: bf16[3,16,1], index: 1, kind: input, shape index: {}]
  %s2 = inlined_call_operand.vmem [shape: f32[16,1], index: 2, kind: input, shape index: {}]
  %s3 = inlined_call_operand.vmem [shape: bf16[3,32,16], index: 3, kind: input, shape index: {}]
  %s4 = inlined_call_operand.vmem [shape: f32[32,1], index: 4, kind: input, shape index: {}]
  %s5 = inlined_call_operand.vmem [shape: bf16[3,64,32], index: 5, kind: input, shape index: {}]
  %s6 = inlined_call_operand.vmem [shape: f32[64,1], index: 6, kind: input, shape index: {}]
  %s7 = inlined_call_operand.vmem [shape: bf16[16,16,64], index: 7, kind: input, shape index: {}]
  %s8 = inlined_call_operand.vmem [shape: f32[16,1], index: 8, kind: input, shape index: {}]
  %s9 = inlined_call_operand.vmem [shape: bf16[16,64,16], index: 9, kind: input, shape index: {}]
  %s10 = inlined_call_operand.vmem [shape: f32[64,1], index: 10, kind: input, shape index: {}]
  %s11 = inlined_call_operand.vmem [shape: bf16[3,32,64], index: 11, kind: input, shape index: {}]
  %s12 = inlined_call_operand.vmem [shape: f32[32,1], index: 12, kind: input, shape index: {}]
  %s13 = inlined_call_operand.vmem [shape: bf16[3,16,32], index: 13, kind: input, shape index: {}]
  %s14 = inlined_call_operand.vmem [shape: f32[16,1], index: 14, kind: input, shape index: {}]
  %s15 = inlined_call_operand.vmem [shape: bf16[3,1,16], index: 15, kind: input, shape index: {}]
  %s16 = inlined_call_operand.<no memory space> [shape: f32[1,1], index: 16, kind: input, shape index: {}]
  %s17 = inlined_call_operand.hbm [shape: f32[2,1,128], index: 17, kind: output, shape index: {}]
  %s18 = sld [smem:[#allocation0]]
  $region101: #{forward.1} parent=0
    _
  %s20 = ssub.s32 1, %s18
  %s21 = scalar_select 0, %s20, %s18
  %v22 = vstv %s16
  %23 = vst [vmem:[#allocation2] sm:$0x1] %v22
  $region1: #{forward.1} parent=0
    #allocation3 [shape = 'u8[1024]{0}', space=vmem, size = 0x400, scoped, tag = 'output window, operand 0']
    #allocation4 [shape = 's32[2]{0}', space=sflag, size = 0x8, scoped, tag = 'scoped memory for forward.1']
    %24 = vsyncpa [#allocation4], 0
    %s25 = scalar_lea.sflag [#allocation4], 1
    %26 = vsyncpa %s25, 0
    loop: start=0, step=1, limit=4
    $region2: #{forward.1} parent=1 // loop_pre_header
      _
    $region3: #{forward.1} parent=1 // loop_header
      %s28 = sphi 0, %s32
      %p29 = scmp.ge.s32.totalorder %s28, 4
      %s38 = sphi 0, %s40
      %s41 = sphi 0, %s38
      %s42 = sphi 0, %s41
      %s58 = sphi 0, %s42
      %s62 = sphi 0, %s62
      %s64 = sphi 0, %s62
      %s65 = sphi 0, %s64
      %s79 = sphi 0, %s65
      %s83 = sphi 0, %s83
      %s85 = sphi 0, %s83
      %s86 = sphi 0, %s85
      %s100 = sphi 0, %s86
      %s104 = sphi 0, %s104
      %s106 = sphi 0, %s104
      %s107 = sphi 0, %s106
      %s121 = sphi 0, %s107
      %s125 = sphi 0, %s125
      %s127 = sphi 0, %s125
      %s128 = sphi 0, %s127
      %s142 = sphi 0, %s128
      %s146 = sphi 0, %s146
      %s148 = sphi 0, %s146
      %s149 = sphi 0, %s148
      %s163 = sphi 0, %s149
      %s167 = sphi 0, %s167
      %s169 = sphi 0, %s167
      %s170 = sphi 0, %s169
      %s184 = sphi 0, %s170
      %s188 = sphi 0, %s188
      %s190 = sphi 0, %s188
      %s191 = sphi 0, %s190
      %s205 = sphi 0, %s191
      %s209 = sphi 0, %s209
      %s211 = sphi 0, %s209
      %s212 = sphi 0, %s211
      %s226 = sphi 0, %s212
      %s230 = sphi 0, %s230
      %s232 = sphi 0, %s230
      %s233 = sphi 0, %s232
      %s247 = sphi 0, %s233
      %s251 = sphi 0, %s251
      %s253 = sphi 0, %s251
      %s254 = sphi 0, %s253
      %s268 = sphi 0, %s254
      %s272 = sphi 0, %s272
      %s274 = sphi 0, %s272
      %s275 = sphi 0, %s274
      %s289 = sphi 0, %s275
      %s293 = sphi 0, %s293
      %s295 = sphi 0, %s293
      %s296 = sphi 0, %s295
      %s310 = sphi 0, %s296
      %s314 = sphi 0, %s314
      %s316 = sphi 0, %s314
      %s317 = sphi 0, %s316
      %s331 = sphi 0, %s317
      %s335 = sphi 0, %s335
      %s337 = sphi 0, %s335
      %s338 = sphi 0, %s337
      %s352 = sphi 0, %s338
      %s356 = sphi 0, %s356
      %s358 = sphi 0, %s356
      %s359 = sphi 0, %s358
      %s373 = sphi 0, %s359
      %s377 = sphi 0, %s377
      %s379 = sphi 0, %s377
      %s380 = sphi 0, %s379
      %s394 = sphi 0, %s380
      %s400 = sphi 0, %s402
      %s403 = sphi 0, %s400
      %s404 = sphi 0, %s403
      %s420 = sphi 0, %s404
    $region4: #{forward.1} parent=1 // loop_header_branch
      %31 = sbr.rel (%p29) target = $region8
    $region5: #{forward.1} parent=1 // loop_body
      %s33 = ssub.s32 %s28, 1
      %s34 = ssub.s32 %s28, 2
      %s35 = sadd.s32 %s28, 1
      %s36 = ssub.s32 %s28, %s35
      %p37 = scmp.eq.s32.totalorder %s36, 0
      %s39 = sadd.s32 %s38, 1
      %s40 = scalar_select %p37, %s38, %s39
      %p43 = pneg %p37
      %p44 = scmp.eq.s32.totalorder %s28, 1
      %p45 = por %p43, %p44
      %p46 = scmp.ne.s32.totalorder %s38, %s41
      %p47 = scmp.eq.s32.totalorder %s28, 0
      %p48 = por %p46, %p47
      %p49 = scmp.ne.s32.totalorder %s38, %s41
      %p50 = scmp.eq.s32.totalorder %s33, 1
      %p51 = por %p49, %p50
      %p52 = scmp.ne.s32.totalorder %s41, %s42
      %p53 = scmp.eq.s32.totalorder %s33, 0
      %p54 = por %p52, %p53
      %p55 = scmp.ne.s32.totalorder %s41, %s42
      %p56 = scmp.eq.s32.totalorder %s34, 1
      %p57 = por %p55, %p56
      %p59 = scmp.ne.s32.totalorder %s42, %s58
      %p60 = scmp.eq.s32.totalorder %s34, 0
      %p61 = por %p59, %p60
      %s63 = sadd.s32 %s62, 1
      %p66 = scmp.eq.s32.totalorder %s28, 1
      %p67 = scmp.ne.s32.totalorder %s62, %s64
      %p68 = scmp.eq.s32.totalorder %s28, 0
      %p69 = por %p67, %p68
      %p70 = scmp.ne.s32.totalorder %s62, %s64
      %p71 = scmp.eq.s32.totalorder %s33, 1
      %p72 = por %p70, %p71
      %p73 = scmp.ne.s32.totalorder %s64, %s65
      %p74 = scmp.eq.s32.totalorder %s33, 0
      %p75 = por %p73, %p74
      %p76 = scmp.ne.s32.totalorder %s64, %s65
      %p77 = scmp.eq.s32.totalorder %s34, 1
      %p78 = por %p76, %p77
      %p80 = scmp.ne.s32.totalorder %s65, %s79
      %p81 = scmp.eq.s32.totalorder %s34, 0
      %p82 = por %p80, %p81
      %s84 = sadd.s32 %s83, 1
      %p87 = scmp.eq.s32.totalorder %s28, 1
      %p88 = scmp.ne.s32.totalorder %s83, %s85
      %p89 = scmp.eq.s32.totalorder %s28, 0
      %p90 = por %p88, %p89
      %p91 = scmp.ne.s32.totalorder %s83, %s85
      %p92 = scmp.eq.s32.totalorder %s33, 1
      %p93 = por %p91, %p92
      %p94 = scmp.ne.s32.totalorder %s85, %s86
      %p95 = scmp.eq.s32.totalorder %s33, 0
      %p96 = por %p94, %p95
      %p97 = scmp.ne.s32.totalorder %s85, %s86
      %p98 = scmp.eq.s32.totalorder %s34, 1
      %p99 = por %p97, %p98
      %p101 = scmp.ne.s32.totalorder %s86, %s100
      %p102 = scmp.eq.s32.totalorder %s34, 0
      %p103 = por %p101, %p102
      %s105 = sadd.s32 %s104, 1
      %p108 = scmp.eq.s32.totalorder %s28, 1
      %p109 = scmp.ne.s32.totalorder %s104, %s106
      %p110 = scmp.eq.s32.totalorder %s28, 0
      %p111 = por %p109, %p110
      %p112 = scmp.ne.s32.totalorder %s104, %s106
      %p113 = scmp.eq.s32.totalorder %s33, 1
      %p114 = por %p112, %p113
      %p115 = scmp.ne.s32.totalorder %s106, %s107
      %p116 = scmp.eq.s32.totalorder %s33, 0
      %p117 = por %p115, %p116
      %p118 = scmp.ne.s32.totalorder %s106, %s107
      %p119 = scmp.eq.s32.totalorder %s34, 1
      %p120 = por %p118, %p119
      %p122 = scmp.ne.s32.totalorder %s107, %s121
      %p123 = scmp.eq.s32.totalorder %s34, 0
      %p124 = por %p122, %p123
      %s126 = sadd.s32 %s125, 1
      %p129 = scmp.eq.s32.totalorder %s28, 1
      %p130 = scmp.ne.s32.totalorder %s125, %s127
      %p131 = scmp.eq.s32.totalorder %s28, 0
      %p132 = por %p130, %p131
      %p133 = scmp.ne.s32.totalorder %s125, %s127
      %p134 = scmp.eq.s32.totalorder %s33, 1
      %p135 = por %p133, %p134
      %p136 = scmp.ne.s32.totalorder %s127, %s128
      %p137 = scmp.eq.s32.totalorder %s33, 0
      %p138 = por %p136, %p137
      %p139 = scmp.ne.s32.totalorder %s127, %s128
      %p140 = scmp.eq.s32.totalorder %s34, 1
      %p141 = por %p139, %p140
      %p143 = scmp.ne.s32.totalorder %s128, %s142
      %p144 = scmp.eq.s32.totalorder %s34, 0
      %p145 = por %p143, %p144
      %s147 = sadd.s32 %s146, 1
      %p150 = scmp.eq.s32.totalorder %s28, 1
      %p151 = scmp.ne.s32.totalorder %s146, %s148
      %p152 = scmp.eq.s32.totalorder %s28, 0
      %p153 = por %p151, %p152
      %p154 = scmp.ne.s32.totalorder %s146, %s148
      %p155 = scmp.eq.s32.totalorder %s33, 1
      %p156 = por %p154, %p155
      %p157 = scmp.ne.s32.totalorder %s148, %s149
      %p158 = scmp.eq.s32.totalorder %s33, 0
      %p159 = por %p157, %p158
      %p160 = scmp.ne.s32.totalorder %s148, %s149
      %p161 = scmp.eq.s32.totalorder %s34, 1
      %p162 = por %p160, %p161
      %p164 = scmp.ne.s32.totalorder %s149, %s163
      %p165 = scmp.eq.s32.totalorder %s34, 0
      %p166 = por %p164, %p165
      %s168 = sadd.s32 %s167, 1
      %p171 = scmp.eq.s32.totalorder %s28, 1
      %p172 = scmp.ne.s32.totalorder %s167, %s169
      %p173 = scmp.eq.s32.totalorder %s28, 0
      %p174 = por %p172, %p173
      %p175 = scmp.ne.s32.totalorder %s167, %s169
      %p176 = scmp.eq.s32.totalorder %s33, 1
      %p177 = por %p175, %p176
      %p178 = scmp.ne.s32.totalorder %s169, %s170
      %p179 = scmp.eq.s32.totalorder %s33, 0
      %p180 = por %p178, %p179
      %p181 = scmp.ne.s32.totalorder %s169, %s170
      %p182 = scmp.eq.s32.totalorder %s34, 1
      %p183 = por %p181, %p182
      %p185 = scmp.ne.s32.totalorder %s170, %s184
      %p186 = scmp.eq.s32.totalorder %s34, 0
      %p187 = por %p185, %p186
      %s189 = sadd.s32 %s188, 1
      %p192 = scmp.eq.s32.totalorder %s28, 1
      %p193 = scmp.ne.s32.totalorder %s188, %s190
      %p194 = scmp.eq.s32.totalorder %s28, 0
      %p195 = por %p193, %p194
      %p196 = scmp.ne.s32.totalorder %s188, %s190
      %p197 = scmp.eq.s32.totalorder %s33, 1
      %p198 = por %p196, %p197
      %p199 = scmp.ne.s32.totalorder %s190, %s191
      %p200 = scmp.eq.s32.totalorder %s33, 0
      %p201 = por %p199, %p200
      %p202 = scmp.ne.s32.totalorder %s190, %s191
      %p203 = scmp.eq.s32.totalorder %s34, 1
      %p204 = por %p202, %p203
      %p206 = scmp.ne.s32.totalorder %s191, %s205
      %p207 = scmp.eq.s32.totalorder %s34, 0
      %p208 = por %p206, %p207
      %s210 = sadd.s32 %s209, 1
      %p213 = scmp.eq.s32.totalorder %s28, 1
      %p214 = scmp.ne.s32.totalorder %s209, %s211
      %p215 = scmp.eq.s32.totalorder %s28, 0
      %p216 = por %p214, %p215
      %p217 = scmp.ne.s32.totalorder %s209, %s211
      %p218 = scmp.eq.s32.totalorder %s33, 1
      %p219 = por %p217, %p218
      %p220 = scmp.ne.s32.totalorder %s211, %s212
      %p221 = scmp.eq.s32.totalorder %s33, 0
      %p222 = por %p220, %p221
      %p223 = scmp.ne.s32.totalorder %s211, %s212
      %p224 = scmp.eq.s32.totalorder %s34, 1
      %p225 = por %p223, %p224
      %p227 = scmp.ne.s32.totalorder %s212, %s226
      %p228 = scmp.eq.s32.totalorder %s34, 0
      %p229 = por %p227, %p228
      %s231 = sadd.s32 %s230, 1
      %p234 = scmp.eq.s32.totalorder %s28, 1
      %p235 = scmp.ne.s32.totalorder %s230, %s232
      %p236 = scmp.eq.s32.totalorder %s28, 0
      %p237 = por %p235, %p236
      %p238 = scmp.ne.s32.totalorder %s230, %s232
      %p239 = scmp.eq.s32.totalorder %s33, 1
      %p240 = por %p238, %p239
      %p241 = scmp.ne.s32.totalorder %s232, %s233
      %p242 = scmp.eq.s32.totalorder %s33, 0
      %p243 = por %p241, %p242
      %p244 = scmp.ne.s32.totalorder %s232, %s233
      %p245 = scmp.eq.s32.totalorder %s34, 1
      %p246 = por %p244, %p245
      %p248 = scmp.ne.s32.totalorder %s233, %s247
      %p249 = scmp.eq.s32.totalorder %s34, 0
      %p250 = por %p248, %p249
      %s252 = sadd.s32 %s251, 1
      %p255 = scmp.eq.s32.totalorder %s28, 1
      %p256 = scmp.ne.s32.totalorder %s251, %s253
      %p257 = scmp.eq.s32.totalorder %s28, 0
      %p258 = por %p256, %p257
      %p259 = scmp.ne.s32.totalorder %s251, %s253
      %p260 = scmp.eq.s32.totalorder %s33, 1
      %p261 = por %p259, %p260
      %p262 = scmp.ne.s32.totalorder %s253, %s254
      %p263 = scmp.eq.s32.totalorder %s33, 0
      %p264 = por %p262, %p263
      %p265 = scmp.ne.s32.totalorder %s253, %s254
      %p266 = scmp.eq.s32.totalorder %s34, 1
      %p267 = por %p265, %p266
      %p269 = scmp.ne.s32.totalorder %s254, %s268
      %p270 = scmp.eq.s32.totalorder %s34, 0
      %p271 = por %p269, %p270
      %s273 = sadd.s32 %s272, 1
      %p276 = scmp.eq.s32.totalorder %s28, 1
      %p277 = scmp.ne.s32.totalorder %s272, %s274
      %p278 = scmp.eq.s32.totalorder %s28, 0
      %p279 = por %p277, %p278
      %p280 = scmp.ne.s32.totalorder %s272, %s274
      %p281 = scmp.eq.s32.totalorder %s33, 1
      %p282 = por %p280, %p281
      %p283 = scmp.ne.s32.totalorder %s274, %s275
      %p284 = scmp.eq.s32.totalorder %s33, 0
      %p285 = por %p283, %p284
      %p286 = scmp.ne.s32.totalorder %s274, %s275
      %p287 = scmp.eq.s32.totalorder %s34, 1
      %p288 = por %p286, %p287
      %p290 = scmp.ne.s32.totalorder %s275, %s289
      %p291 = scmp.eq.s32.totalorder %s34, 0
      %p292 = por %p290, %p291
      %s294 = sadd.s32 %s293, 1
      %p297 = scmp.eq.s32.totalorder %s28, 1
      %p298 = scmp.ne.s32.totalorder %s293, %s295
      %p299 = scmp.eq.s32.totalorder %s28, 0
      %p300 = por %p298, %p299
      %p301 = scmp.ne.s32.totalorder %s293, %s295
      %p302 = scmp.eq.s32.totalorder %s33, 1
      %p303 = por %p301, %p302
      %p304 = scmp.ne.s32.totalorder %s295, %s296
      %p305 = scmp.eq.s32.totalorder %s33, 0
      %p306 = por %p304, %p305
      %p307 = scmp.ne.s32.totalorder %s295, %s296
      %p308 = scmp.eq.s32.totalorder %s34, 1
      %p309 = por %p307, %p308
      %p311 = scmp.ne.s32.totalorder %s296, %s310
      %p312 = scmp.eq.s32.totalorder %s34, 0
      %p313 = por %p311, %p312
      %s315 = sadd.s32 %s314, 1
      %p318 = scmp.eq.s32.totalorder %s28, 1
      %p319 = scmp.ne.s32.totalorder %s314, %s316
      %p320 = scmp.eq.s32.totalorder %s28, 0
      %p321 = por %p319, %p320
      %p322 = scmp.ne.s32.totalorder %s314, %s316
      %p323 = scmp.eq.s32.totalorder %s33, 1
      %p324 = por %p322, %p323
      %p325 = scmp.ne.s32.totalorder %s316, %s317
      %p326 = scmp.eq.s32.totalorder %s33, 0
      %p327 = por %p325, %p326
      %p328 = scmp.ne.s32.totalorder %s316, %s317
      %p329 = scmp.eq.s32.totalorder %s34, 1
      %p330 = por %p328, %p329
      %p332 = scmp.ne.s32.totalorder %s317, %s331
      %p333 = scmp.eq.s32.totalorder %s34, 0
      %p334 = por %p332, %p333
      %s336 = sadd.s32 %s335, 1
      %p339 = scmp.eq.s32.totalorder %s28, 1
      %p340 = scmp.ne.s32.totalorder %s335, %s337
      %p341 = scmp.eq.s32.totalorder %s28, 0
      %p342 = por %p340, %p341
      %p343 = scmp.ne.s32.totalorder %s335, %s337
      %p344 = scmp.eq.s32.totalorder %s33, 1
      %p345 = por %p343, %p344
      %p346 = scmp.ne.s32.totalorder %s337, %s338
      %p347 = scmp.eq.s32.totalorder %s33, 0
      %p348 = por %p346, %p347
      %p349 = scmp.ne.s32.totalorder %s337, %s338
      %p350 = scmp.eq.s32.totalorder %s34, 1
      %p351 = por %p349, %p350
      %p353 = scmp.ne.s32.totalorder %s338, %s352
      %p354 = scmp.eq.s32.totalorder %s34, 0
      %p355 = por %p353, %p354
      %s357 = sadd.s32 %s356, 1
      %p360 = scmp.eq.s32.totalorder %s28, 1
      %p361 = scmp.ne.s32.totalorder %s356, %s358
      %p362 = scmp.eq.s32.totalorder %s28, 0
      %p363 = por %p361, %p362
      %p364 = scmp.ne.s32.totalorder %s356, %s358
      %p365 = scmp.eq.s32.totalorder %s33, 1
      %p366 = por %p364, %p365
      %p367 = scmp.ne.s32.totalorder %s358, %s359
      %p368 = scmp.eq.s32.totalorder %s33, 0
      %p369 = por %p367, %p368
      %p370 = scmp.ne.s32.totalorder %s358, %s359
      %p371 = scmp.eq.s32.totalorder %s34, 1
      %p372 = por %p370, %p371
      %p374 = scmp.ne.s32.totalorder %s359, %s373
      %p375 = scmp.eq.s32.totalorder %s34, 0
      %p376 = por %p374, %p375
      %s378 = sadd.s32 %s377, 1
      %p381 = scmp.eq.s32.totalorder %s28, 1
      %p382 = scmp.ne.s32.totalorder %s377, %s379
      %p383 = scmp.eq.s32.totalorder %s28, 0
      %p384 = por %p382, %p383
      %p385 = scmp.ne.s32.totalorder %s377, %s379
      %p386 = scmp.eq.s32.totalorder %s33, 1
      %p387 = por %p385, %p386
      %p388 = scmp.ne.s32.totalorder %s379, %s380
      %p389 = scmp.eq.s32.totalorder %s33, 0
      %p390 = por %p388, %p389
      %p391 = scmp.ne.s32.totalorder %s379, %s380
      %p392 = scmp.eq.s32.totalorder %s34, 1
      %p393 = por %p391, %p392
      %p395 = scmp.ne.s32.totalorder %s380, %s394
      %p396 = scmp.eq.s32.totalorder %s34, 0
      %p397 = por %p395, %p396
      %s398 = ssub.s32 %s28, %s35
      %p399 = scmp.eq.s32.totalorder %s398, 0
      %s401 = sadd.s32 %s400, 1
      %s402 = scalar_select %p399, %s400, %s401
      %p405 = pneg %p399
      %p406 = scmp.eq.s32.totalorder %s28, 1
      %p407 = por %p405, %p406
      %p408 = scmp.ne.s32.totalorder %s400, %s403
      %p409 = scmp.eq.s32.totalorder %s28, 0
      %p410 = por %p408, %p409
      %p411 = scmp.ne.s32.totalorder %s400, %s403
      %p412 = scmp.eq.s32.totalorder %s33, 1
      %p413 = por %p411, %p412
      %p414 = scmp.ne.s32.totalorder %s403, %s404
      %p415 = scmp.eq.s32.totalorder %s33, 0
      %p416 = por %p414, %p415
      %p417 = scmp.ne.s32.totalorder %s403, %s404
      %p418 = scmp.eq.s32.totalorder %s34, 1
      %p419 = por %p417, %p418
      %p421 = scmp.ne.s32.totalorder %s404, %s420
      %p422 = scmp.eq.s32.totalorder %s34, 0
      %p423 = por %p421, %p422
      %p424 = scmp.le.s32.totalorder 1, %s28
      %p425 = scmp.lt.s32.totalorder %s28, 3
      %p426 = pnand %p424, %p425
      %p427 = pneg %p426
      // Predicated region
      $region9: #{forward.1} parent=5 // pred_check
        _
      $region10: #{forward.1} parent=5 // pred_check_branch
        %429 = sbr.rel (%p426) target = $region12
      $region11: #{forward.1} parent=5 // pred_region
        %s430 = ssub.s32 %s28, 1
        // Predicated region
        $region13: #{forward.1} parent=11 // pred_check
          %p431 = pneg %p75
        $region14: #{forward.1} parent=11 // pred_check_branch
          %433 = sbr.rel (%p431) target = $region16
        $region15: #{forward.1} parent=11 // pred_region
          _
        $region16: #{forward.1} parent=11 // pred_fallthru
          _
        // Predicated region
        $region17: #{forward.1} parent=11 // pred_check
          %p434 = pneg %p96
        $region18: #{forward.1} parent=11 // pred_check_branch
          %436 = sbr.rel (%p434) target = $region20
        $region19: #{forward.1} parent=11 // pred_region
          _
        $region20: #{forward.1} parent=11 // pred_fallthru
          _
        // Predicated region
        $region21: #{forward.1} parent=11 // pred_check
          %p437 = pneg %p117
        $region22: #{forward.1} parent=11 // pred_check_branch
          %439 = sbr.rel (%p437) target = $region24
        $region23: #{forward.1} parent=11 // pred_region
          _
        $region24: #{forward.1} parent=11 // pred_fallthru
          _
        // Predicated region
        $region25: #{forward.1} parent=11 // pred_check
          %p440 = pneg %p138
        $region26: #{forward.1} parent=11 // pred_check_branch
          %442 = sbr.rel (%p440) target = $region28
        $region27: #{forward.1} parent=11 // pred_region
          _
        $region28: #{forward.1} parent=11 // pred_fallthru
          _
        // Predicated region
        $region29: #{forward.1} parent=11 // pred_check
          %p443 = pneg %p159
        $region30: #{forward.1} parent=11 // pred_check_branch
          %445 = sbr.rel (%p443) target = $region32
        $region31: #{forward.1} parent=11 // pred_region
          _
        $region32: #{forward.1} parent=11 // pred_fallthru
          _
        // Predicated region
        $region33: #{forward.1} parent=11 // pred_check
          %p446 = pneg %p180
        $region34: #{forward.1} parent=11 // pred_check_branch
          %448 = sbr.rel (%p446) target = $region36
        $region35: #{forward.1} parent=11 // pred_region
          _
        $region36: #{forward.1} parent=11 // pred_fallthru
          _
        // Predicated region
        $region37: #{forward.1} parent=11 // pred_check
          %p449 = pneg %p201
        $region38: #{forward.1} parent=11 // pred_check_branch
          %451 = sbr.rel (%p449) target = $region40
        $region39: #{forward.1} parent=11 // pred_region
          _
        $region40: #{forward.1} parent=11 // pred_fallthru
          _
        // Predicated region
        $region41: #{forward.1} parent=11 // pred_check
          %p452 = pneg %p222
        $region42: #{forward.1} parent=11 // pred_check_branch
          %454 = sbr.rel (%p452) target = $region44
        $region43: #{forward.1} parent=11 // pred_region
          _
        $region44: #{forward.1} parent=11 // pred_fallthru
          _
        // Predicated region
        $region45: #{forward.1} parent=11 // pred_check
          %p455 = pneg %p243
        $region46: #{forward.1} parent=11 // pred_check_branch
          %457 = sbr.rel (%p455) target = $region48
        $region47: #{forward.1} parent=11 // pred_region
          _
        $region48: #{forward.1} parent=11 // pred_fallthru
          _
        // Predicated region
        $region49: #{forward.1} parent=11 // pred_check
          %p458 = pneg %p264
        $region50: #{forward.1} parent=11 // pred_check_branch
          %460 = sbr.rel (%p458) target = $region52
        $region51: #{forward.1} parent=11 // pred_region
          _
        $region52: #{forward.1} parent=11 // pred_fallthru
          _
        // Predicated region
        $region53: #{forward.1} parent=11 // pred_check
          %p461 = pneg %p285
        $region54: #{forward.1} parent=11 // pred_check_branch
          %463 = sbr.rel (%p461) target = $region56
        $region55: #{forward.1} parent=11 // pred_region
          _
        $region56: #{forward.1} parent=11 // pred_fallthru
          _
        // Predicated region
        $region57: #{forward.1} parent=11 // pred_check
          %p464 = pneg %p306
        $region58: #{forward.1} parent=11 // pred_check_branch
          %466 = sbr.rel (%p464) target = $region60
        $region59: #{forward.1} parent=11 // pred_region
          _
        $region60: #{forward.1} parent=11 // pred_fallthru
          _
        // Predicated region
        $region61: #{forward.1} parent=11 // pred_check
          %p467 = pneg %p327
        $region62: #{forward.1} parent=11 // pred_check_branch
          %469 = sbr.rel (%p467) target = $region64
        $region63: #{forward.1} parent=11 // pred_region
          _
        $region64: #{forward.1} parent=11 // pred_fallthru
          _
        // Predicated region
        $region65: #{forward.1} parent=11 // pred_check
          %p470 = pneg %p348
        $region66: #{forward.1} parent=11 // pred_check_branch
          %472 = sbr.rel (%p470) target = $region68
        $region67: #{forward.1} parent=11 // pred_region
          _
        $region68: #{forward.1} parent=11 // pred_fallthru
          _
        // Predicated region
        $region69: #{forward.1} parent=11 // pred_check
          %p473 = pneg %p369
        $region70: #{forward.1} parent=11 // pred_check_branch
          %475 = sbr.rel (%p473) target = $region72
        $region71: #{forward.1} parent=11 // pred_region
          _
        $region72: #{forward.1} parent=11 // pred_fallthru
          _
        // Predicated region
        $region73: #{forward.1} parent=11 // pred_check
          %p476 = pneg %p390
        $region74: #{forward.1} parent=11 // pred_check_branch
          %478 = sbr.rel (%p476) target = $region76
        $region75: #{forward.1} parent=11 // pred_region
          _
        $region76: #{forward.1} parent=11 // pred_fallthru
          _
      $region12: #{forward.1} parent=5 // pred_fallthru
        _
      %p479 = scmp.lt.s32.totalorder %s28, 2
      // Predicated region
      $region77: #{forward.1} parent=5 // pred_check
        %p480 = pneg %p479
      $region78: #{forward.1} parent=5 // pred_check_branch
        %482 = sbr.rel (%p480) target = $region80
      $region79: #{forward.1} parent=5 // pred_region
        // Predicated region
        $region81: #{forward.1} parent=79 // pred_check
          %p483 = pneg %p48
        $region82: #{forward.1} parent=79 // pred_check_branch
          %485 = sbr.rel (%p483) target = $region84
        $region83: #{forward.1} parent=79 // pred_region
          %p486 = scmp.lt.s32.totalorder %s28, 1
          %s487 = scalar_select %p486, %s28, 1
          %s488 = scalar_lea.vmem %s0, %s487
        $region84: #{forward.1} parent=79 // pred_fallthru
          _
      $region80: #{forward.1} parent=5 // pred_fallthru
        _
      %p489 = scmp.le.s32.totalorder 1, %s28
      %p490 = scmp.lt.s32.totalorder %s28, 3
      %p491 = pnand %p489, %p490
      %p492 = pneg %p491
      // Predicated region
      $region85: #{forward.1} parent=5 // pred_check
        _
      $region86: #{forward.1} parent=5 // pred_check_branch
        %494 = sbr.rel (%p491) target = $region88
      $region87: #{forward.1} parent=5 // pred_region
        %s495 = ssub.s32 %s28, 1
        %p496 = scmp.lt.s32.totalorder %s33, 1
        %s497 = scalar_select %p496, %s33, 1
        %s498 = scalar_lea.vmem %s0, %s497
        %p499 = pneg %p54
        %p500 = pneg %p51
        %p501 = pneg %p75
        %p502 = pneg %p72
        %p503 = pneg %p96
        %p504 = pneg %p93
        %p505 = pneg %p117
        %p506 = pneg %p114
        %p507 = pneg %p138
        %p508 = pneg %p135
        %p509 = pneg %p159
        %p510 = pneg %p156
        %p511 = pneg %p180
        %p512 = pneg %p177
        %p513 = pneg %p201
        %p514 = pneg %p198
        %p515 = pneg %p222
        %p516 = pneg %p219
        %p517 = pneg %p243
        %p518 = pneg %p240
        %p519 = pneg %p264
        %p520 = pneg %p261
        %p521 = pneg %p285
        %p522 = pneg %p282
        %p523 = pneg %p306
        %p524 = pneg %p303
        %p525 = pneg %p327
        %p526 = pneg %p324
        %p527 = pneg %p348
        %p528 = pneg %p345
        %p529 = pneg %p369
        %p530 = pneg %p366
        %p531 = pneg %p390
        %p532 = pneg %p387
        %p533 = pneg %p416
        %p534 = pneg %p413
        %s535 = sand.u32 %s403, 1
        %s536 = scalar_lea.sflag [#allocation4], %s535
        %s537 = sand.u32 %s403, 1
        %s538 = scalar_lea.vmem [#allocation3], %s537
        %p539 = scmp.lt.s32.totalorder %s33, 1
        %s540 = scalar_select %p539, %s33, 1
        %s541 = scalar_lea.vmem %s0, %s540
        %v543 = vld [vmem:[%s541] sm:$0x1]
        %v544 = vpack.c.bf16 %v543, %v543
        %v545 = vlaneseq
        %v546 = vshrl.u32 %v545, 7
        %v547 = vadd.s32 %v546, 8
        %v548 = vadd.s32 %v546, 16
        %v549 = vadd.s32 %v546, 24
        %v550 = vadd.s32 %v546, 32
        %v551 = vadd.s32 %v546, 40
        %v552 = vadd.s32 %v546, 48
        %v553 = vadd.s32 %v546, 56
        %v554 = vadd.s32 %v546, 64
        %v555 = vadd.s32 %v546, 72
        %v556 = vadd.s32 %v546, 80
        %v557 = vadd.s32 %v546, 88
        %v558 = vadd.s32 %v546, 96
        %v559 = vadd.s32 %v546, 104
        %v560 = vadd.s32 %v546, 112
        %v561 = vadd.s32 %v546, 120
        %v562 = vlaneseq
        %v563 = vand.u32 %v562, 127
        %v564 = vmul.u32 %v563, 2
        %v565 = vsub.s32 %v546, %v564
        %v566 = vsub.s32 %v547, %v564
        %v567 = vsub.s32 %v548, %v564
        %v568 = vsub.s32 %v549, %v564
        %v569 = vsub.s32 %v550, %v564
        %v570 = vsub.s32 %v551, %v564
        %v571 = vsub.s32 %v552, %v564
        %v572 = vsub.s32 %v553, %v564
        %v573 = vsub.s32 %v554, %v564
        %v574 = vsub.s32 %v555, %v564
        %v575 = vsub.s32 %v556, %v564
        %v576 = vsub.s32 %v557, %v564
        %v577 = vsub.s32 %v558, %v564
        %v578 = vsub.s32 %v559, %v564
        %v579 = vsub.s32 %v560, %v564
        %v580 = vsub.s32 %v561, %v564
        %v581 = vadd.s32 %v565, 1
        %v582 = vadd.s32 %v566, 1
        %v583 = vadd.s32 %v567, 1
        %v584 = vadd.s32 %v568, 1
        %v585 = vadd.s32 %v569, 1
        %v586 = vadd.s32 %v570, 1
        %v587 = vadd.s32 %v571, 1
        %v588 = vadd.s32 %v572, 1
        %v589 = vadd.s32 %v573, 1
        %v590 = vadd.s32 %v574, 1
        %v591 = vadd.s32 %v575, 1
        %v592 = vadd.s32 %v576, 1
        %v593 = vadd.s32 %v577, 1
        %v594 = vadd.s32 %v578, 1
        %v595 = vadd.s32 %v579, 1
        %v596 = vadd.s32 %v580, 1
        %vm597 = vcmp.eq.s32.totalorder %v581, 0
        %vm598 = vcmp.eq.s32.totalorder %v582, 0
        %vm599 = vcmp.eq.s32.totalorder %v583, 0
        %vm600 = vcmp.eq.s32.totalorder %v584, 0
        %vm601 = vcmp.eq.s32.totalorder %v585, 0
        %vm602 = vcmp.eq.s32.totalorder %v586, 0
        %vm603 = vcmp.eq.s32.totalorder %v587, 0
        %vm604 = vcmp.eq.s32.totalorder %v588, 0
        %vm605 = vcmp.eq.s32.totalorder %v589, 0
        %vm606 = vcmp.eq.s32.totalorder %v590, 0
        %vm607 = vcmp.eq.s32.totalorder %v591, 0
        %vm608 = vcmp.eq.s32.totalorder %v592, 0
        %vm609 = vcmp.eq.s32.totalorder %v593, 0
        %vm610 = vcmp.eq.s32.totalorder %v594, 0
        %vm611 = vcmp.eq.s32.totalorder %v595, 0
        %vm612 = vcmp.eq.s32.totalorder %v596, 0
        %v613 = vsel %vm597, 1.0, 0.0
        %v614 = vsel %vm598, 1.0, 0.0
        %v615 = vsel %vm599, 1.0, 0.0
        %v616 = vsel %vm600, 1.0, 0.0
        %v617 = vsel %vm601, 1.0, 0.0
        %v618 = vsel %vm602, 1.0, 0.0
        %v619 = vsel %vm603, 1.0, 0.0
        %v620 = vsel %vm604, 1.0, 0.0
        %v621 = vsel %vm605, 1.0, 0.0
        %v622 = vsel %vm606, 1.0, 0.0
        %v623 = vsel %vm607, 1.0, 0.0
        %v624 = vsel %vm608, 1.0, 0.0
        %v625 = vsel %vm609, 1.0, 0.0
        %v626 = vsel %vm610, 1.0, 0.0
        %v627 = vsel %vm611, 1.0, 0.0
        %v628 = vsel %vm612, 1.0, 0.0
        %v629 = vpack.c.bf16 %v614, %v613
        %v630 = vpack.c.bf16 %v616, %v615
        %v631 = vpack.c.bf16 %v618, %v617
        %v632 = vpack.c.bf16 %v620, %v619
        %v633 = vpack.c.bf16 %v622, %v621
        %v634 = vpack.c.bf16 %v624, %v623
        %v635 = vpack.c.bf16 %v626, %v625
        %v636 = vpack.c.bf16 %v628, %v627
        %637 = vmatprep.subr.bf16.mxu0 0
        %638 = vmatpush1.bf16.msra.mxu0 %v636
        %639 = vmatprep.subr.bf16.mxu0 0
        %640 = vmatpush1.bf16.msra.mxu0 %v635
        %641 = vmatprep.subr.bf16.mxu0 0
        %642 = vmatpush1.bf16.msra.mxu0 %v634
        %643 = vmatprep.subr.bf16.mxu0 0
        %644 = vmatpush1.bf16.msra.mxu0 %v633
        %645 = vmatprep.subr.bf16.mxu0 0
        %646 = vmatpush1.bf16.msra.mxu0 %v632
        %647 = vmatprep.subr.bf16.mxu0 0
        %648 = vmatpush1.bf16.msra.mxu0 %v631
        %649 = vmatprep.subr.bf16.mxu0 0
        %650 = vmatpush1.bf16.msra.mxu0 %v630
        %651 = vmatprep.subr.bf16.mxu0 0
        %652 = vmatpush1.bf16.msra.mxu0 %v629
        %653 = vmatprep.subr.bf16.mxu0 0
        %654 = vmatpush2.bf16.msra.mxu0 0
        %655 = vmatprep.subr.bf16.mxu0 0
        %656 = vmatpush2.bf16.msra.mxu0 0
        %657 = vmatprep.subr.bf16.mxu0 0
        %658 = vmatpush2.bf16.msra.mxu0 0
        %659 = vmatprep.subr.bf16.mxu0 0
        %660 = vmatpush2.bf16.msra.mxu0 0
        %661 = vmatprep.subr.bf16.mxu0 0
        %662 = vmatpush2.bf16.msra.mxu0 0
        %663 = vmatprep.subr.bf16.mxu0 0
        %664 = vmatpush2.bf16.msra.mxu0 0
        %665 = vmatprep.subr.bf16.mxu0 0
        %666 = vmatpush2.bf16.msra.mxu0 0
        %667 = vmatprep.subr.bf16.mxu0 0
        %668 = vmatpush2.bf16.msra.mxu0 0
        %669 = vmatprep.mubr.bf16.mxu0 0
        %670 = vmatmul.mubr.bf16.gmra.mxu0 %v544
        %v671 = vpop.f32.mrf.mxu0
        %v672 = vadd.f32 0.0, %v671
        %v673 = vpop.f32.mrf.mxu0
        %v674 = vpop.f32.mrf.mxu0
        %v675 = vpop.f32.mrf.mxu0
        %676 = vdwg.mxu0
        %v677 = vpack.c.bf16 %v672, %v672
        %v678 = vld [vmem:[%s1] sm:$0xf]
        %v679 = vld [vmem:[%s1 + $0x4] sm:$0xf]
        %v680 = vunpack.c.l.bf16 %v678
        %v681 = vunpack.c.l.bf16 %v679
        %v682 = vunpack.c.l.bf16 %v677
        %684 = vset.pattern.permute.xlu0 0
        %685 = vperm.xlu0 %684, %v680
        %v686 = vpop.permute.xlu0 %685
        %689 = vset.pattern.permute.xlu0 0
        %690 = vperm.xlu0 %689, %v681
        %v691 = vpop.permute.xlu0 %690
        %v693 = vlaneseq
        %v694 = vshrl.u32 %v693, 7
        %v695 = vsub.s32 0, %v694
        %v696 = vrot.slane %v682, %v695
        %v697 = vmul.f32 %v686, %v696
        %v698 = vmul.f32 %v691, %v696
        %v699 = vadd.f32 %v697, 0.0
        %v700 = vadd.f32 %v698, 0.0
        %vm701 = vcmp.eq.s32.totalorder %v581, 1
        %vm702 = vcmp.eq.s32.totalorder %v582, 1
        %vm703 = vcmp.eq.s32.totalorder %v583, 1
        %vm704 = vcmp.eq.s32.totalorder %v584, 1
        %vm705 = vcmp.eq.s32.totalorder %v585, 1
        %vm706 = vcmp.eq.s32.totalorder %v586, 1
        %vm707 = vcmp.eq.s32.totalorder %v587, 1
        %vm708 = vcmp.eq.s32.totalorder %v588, 1
        %vm709 = vcmp.eq.s32.totalorder %v589, 1
        %vm710 = vcmp.eq.s32.totalorder %v590, 1
        %vm711 = vcmp.eq.s32.totalorder %v591, 1
        %vm712 = vcmp.eq.s32.totalorder %v592, 1
        %vm713 = vcmp.eq.s32.totalorder %v593, 1
        %vm714 = vcmp.eq.s32.totalorder %v594, 1
        %vm715 = vcmp.eq.s32.totalorder %v595, 1
        %vm716 = vcmp.eq.s32.totalorder %v596, 1
        %v717 = vsel %vm701, 1.0, 0.0
        %v718 = vsel %vm702, 1.0, 0.0
        %v719 = vsel %vm703, 1.0, 0.0
        %v720 = vsel %vm704, 1.0, 0.0
        %v721 = vsel %vm705, 1.0, 0.0
        %v722 = vsel %vm706, 1.0, 0.0
        %v723 = vsel %vm707, 1.0, 0.0
        %v724 = vsel %vm708, 1.0, 0.0
        %v725 = vsel %vm709, 1.0, 0.0
        %v726 = vsel %vm710, 1.0, 0.0
        %v727 = vsel %vm711, 1.0, 0.0
        %v728 = vsel %vm712, 1.0, 0.0
        %v729 = vsel %vm713, 1.0, 0.0
        %v730 = vsel %vm714, 1.0, 0.0
        %v731 = vsel %vm715, 1.0, 0.0
        %v732 = vsel %vm716, 1.0, 0.0
        %v733 = vpack.c.bf16 %v718, %v717
        %v734 = vpack.c.bf16 %v720, %v719
        %v735 = vpack.c.bf16 %v722, %v721
        %v736 = vpack.c.bf16 %v724, %v723
        %v737 = vpack.c.bf16 %v726, %v725
        %v738 = vpack.c.bf16 %v728, %v727
        %v739 = vpack.c.bf16 %v730, %v729
        %v740 = vpack.c.bf16 %v732, %v731
        %741 = vmatprep.subr.bf16.mxu0 0
        %742 = vmatpush1.bf16.msra.mxu0 %v740
        %743 = vmatprep.subr.bf16.mxu0 0
        %744 = vmatpush1.bf16.msra.mxu0 %v739
        %745 = vmatprep.subr.bf16.mxu0 0
        %746 = vmatpush1.bf16.msra.mxu0 %v738
        %747 = vmatprep.subr.bf16.mxu0 0
        %748 = vmatpush1.bf16.msra.mxu0 %v737
        %749 = vmatprep.subr.bf16.mxu0 0
        %750 = vmatpush1.bf16.msra.mxu0 %v736
        %751 = vmatprep.subr.bf16.mxu0 0
        %752 = vmatpush1.bf16.msra.mxu0 %v735
        %753 = vmatprep.subr.bf16.mxu0 0
        %754 = vmatpush1.bf16.msra.mxu0 %v734
        %755 = vmatprep.subr.bf16.mxu0 0
        %756 = vmatpush1.bf16.msra.mxu0 %v733
        %757 = vmatprep.subr.bf16.mxu0 0
        %758 = vmatpush2.bf16.msra.mxu0 0
        %759 = vmatprep.subr.bf16.mxu0 0
        %760 = vmatpush2.bf16.msra.mxu0 0
        %761 = vmatprep.subr.bf16.mxu0 0
        %762 = vmatpush2.bf16.msra.mxu0 0
        %763 = vmatprep.subr.bf16.mxu0 0
        %764 = vmatpush2.bf16.msra.mxu0 0
        %765 = vmatprep.subr.bf16.mxu0 0
        %766 = vmatpush2.bf16.msra.mxu0 0
        %767 = vmatprep.subr.bf16.mxu0 0
        %768 = vmatpush2.bf16.msra.mxu0 0
        %769 = vmatprep.subr.bf16.mxu0 0
        %770 = vmatpush2.bf16.msra.mxu0 0
        %771 = vmatprep.subr.bf16.mxu0 0
        %772 = vmatpush2.bf16.msra.mxu0 0
        %773 = vmatprep.mubr.bf16.mxu0 0
        %774 = vmatmul.mubr.bf16.gmra.mxu0 %v544
        %v775 = vpop.f32.mrf.mxu0
        %v776 = vadd.f32 0.0, %v775
        %v777 = vpop.f32.mrf.mxu0
        %v778 = vpop.f32.mrf.mxu0
        %v779 = vpop.f32.mrf.mxu0
        %780 = vdwg.mxu0
        %v781 = vpack.c.bf16 %v776, %v776
        %s782 = scalar_lea.vmem %s1, 8
        %v783 = vld [vmem:[%s782] sm:$0xf]
        %v784 = vld [vmem:[%s782 + $0x4] sm:$0xf]
        %v785 = vunpack.c.l.bf16 %v783
        %v786 = vunpack.c.l.bf16 %v784
        %v787 = vunpack.c.l.bf16 %v781
        %789 = vset.pattern.permute.xlu0 0
        %790 = vperm.xlu0 %789, %v785
        %v791 = vpop.permute.xlu0 %790
        %794 = vset.pattern.permute.xlu0 0
        %795 = vperm.xlu0 %794, %v786
        %v796 = vpop.permute.xlu0 %795
        %v798 = vlaneseq
        %v799 = vshrl.u32 %v798, 7
        %v800 = vsub.s32 0, %v799
        %v801 = vrot.slane %v787, %v800
        %v802 = vmul.f32 %v791, %v801
        %v803 = vmul.f32 %v796, %v801
        %v804 = vadd.f32 %v699, %v802
        %v805 = vadd.f32 %v700, %v803
        %vm806 = vcmp.eq.s32.totalorder %v581, 2
        %vm807 = vcmp.eq.s32.totalorder %v582, 2
        %vm808 = vcmp.eq.s32.totalorder %v583, 2
        %vm809 = vcmp.eq.s32.totalorder %v584, 2
        %vm810 = vcmp.eq.s32.totalorder %v585, 2
        %vm811 = vcmp.eq.s32.totalorder %v586, 2
        %vm812 = vcmp.eq.s32.totalorder %v587, 2
        %vm813 = vcmp.eq.s32.totalorder %v588, 2
        %vm814 = vcmp.eq.s32.totalorder %v589, 2
        %vm815 = vcmp.eq.s32.totalorder %v590, 2
        %vm816 = vcmp.eq.s32.totalorder %v591, 2
        %vm817 = vcmp.eq.s32.totalorder %v592, 2
        %vm818 = vcmp.eq.s32.totalorder %v593, 2
        %vm819 = vcmp.eq.s32.totalorder %v594, 2
        %vm820 = vcmp.eq.s32.totalorder %v595, 2
        %vm821 = vcmp.eq.s32.totalorder %v596, 2
        %v822 = vsel %vm806, 1.0, 0.0
        %v823 = vsel %vm807, 1.0, 0.0
        %v824 = vsel %vm808, 1.0, 0.0
        %v825 = vsel %vm809, 1.0, 0.0
        %v826 = vsel %vm810, 1.0, 0.0
        %v827 = vsel %vm811, 1.0, 0.0
        %v828 = vsel %vm812, 1.0, 0.0
        %v829 = vsel %vm813, 1.0, 0.0
        %v830 = vsel %vm814, 1.0, 0.0
        %v831 = vsel %vm815, 1.0, 0.0
        %v832 = vsel %vm816, 1.0, 0.0
        %v833 = vsel %vm817, 1.0, 0.0
        %v834 = vsel %vm818, 1.0, 0.0
        %v835 = vsel %vm819, 1.0, 0.0
        %v836 = vsel %vm820, 1.0, 0.0
        %v837 = vsel %vm821, 1.0, 0.0
        %v838 = vpack.c.bf16 %v823, %v822
        %v839 = vpack.c.bf16 %v825, %v824
        %v840 = vpack.c.bf16 %v827, %v826
        %v841 = vpack.c.bf16 %v829, %v828
        %v842 = vpack.c.bf16 %v831, %v830
        %v843 = vpack.c.bf16 %v833, %v832
        %v844 = vpack.c.bf16 %v835, %v834
        %v845 = vpack.c.bf16 %v837, %v836
        %846 = vmatprep.subr.bf16.mxu0 0
        %847 = vmatpush1.bf16.msra.mxu0 %v845
        %848 = vmatprep.subr.bf16.mxu0 0
        %849 = vmatpush1.bf16.msra.mxu0 %v844
        %850 = vmatprep.subr.bf16.mxu0 0
        %851 = vmatpush1.bf16.msra.mxu0 %v843
        %852 = vmatprep.subr.bf16.mxu0 0
        %853 = vmatpush1.bf16.msra.mxu0 %v842
        %854 = vmatprep.subr.bf16.mxu0 0
        %855 = vmatpush1.bf16.msra.mxu0 %v841
        %856 = vmatprep.subr.bf16.mxu0 0
        %857 = vmatpush1.bf16.msra.mxu0 %v840
        %858 = vmatprep.subr.bf16.mxu0 0
        %859 = vmatpush1.bf16.msra.mxu0 %v839
        %860 = vmatprep.subr.bf16.mxu0 0
        %861 = vmatpush1.bf16.msra.mxu0 %v838
        %862 = vmatprep.subr.bf16.mxu0 0
        %863 = vmatpush2.bf16.msra.mxu0 0
        %864 = vmatprep.subr.bf16.mxu0 0
        %865 = vmatpush2.bf16.msra.mxu0 0
        %866 = vmatprep.subr.bf16.mxu0 0
        %867 = vmatpush2.bf16.msra.mxu0 0
        %868 = vmatprep.subr.bf16.mxu0 0
        %869 = vmatpush2.bf16.msra.mxu0 0
        %870 = vmatprep.subr.bf16.mxu0 0
        %871 = vmatpush2.bf16.msra.mxu0 0
        %872 = vmatprep.subr.bf16.mxu0 0
        %873 = vmatpush2.bf16.msra.mxu0 0
        %874 = vmatprep.subr.bf16.mxu0 0
        %875 = vmatpush2.bf16.msra.mxu0 0
        %876 = vmatprep.subr.bf16.mxu0 0
        %877 = vmatpush2.bf16.msra.mxu0 0
        %878 = vmatprep.mubr.bf16.mxu0 0
        %879 = vmatmul.mubr.bf16.gmra.mxu0 %v544
        %v880 = vpop.f32.mrf.mxu0
        %v881 = vadd.f32 0.0, %v880
        %v882 = vpop.f32.mrf.mxu0
        %v883 = vpop.f32.mrf.mxu0
        %v884 = vpop.f32.mrf.mxu0
        %885 = vdwg.mxu0
        %v886 = vpack.c.bf16 %v881, %v881
        %s887 = scalar_lea.vmem %s1, 16
        %v888 = vld [vmem:[%s887] sm:$0xf]
        %v889 = vld [vmem:[%s887 + $0x4] sm:$0xf]
        %v890 = vunpack.c.l.bf16 %v888
        %v891 = vunpack.c.l.bf16 %v889
        %v892 = vunpack.c.l.bf16 %v886
        %894 = vset.pattern.permute.xlu0 0
        %895 = vperm.xlu0 %894, %v890
        %v896 = vpop.permute.xlu0 %895
        %899 = vset.pattern.permute.xlu0 0
        %900 = vperm.xlu0 %899, %v891
        %v901 = vpop.permute.xlu0 %900
        %v903 = vlaneseq
        %v904 = vshrl.u32 %v903, 7
        %v905 = vsub.s32 0, %v904
        %v906 = vrot.slane %v892, %v905
        %v907 = vmul.f32 %v896, %v906
        %v908 = vmul.f32 %v901, %v906
        %v909 = vadd.f32 %v804, %v907
        %v910 = vadd.f32 %v805, %v908
        %v911 = vld [vmem:[%s2] sm:$0xff]
        %v912 = vld [vmem:[%s2 + $0x8] sm:$0xff]
        %914 = vset.pattern.permute.xlu0 0
        %915 = vperm.xlu0 %914, %v911
        %v916 = vpop.permute.xlu0 %915
        %919 = vset.pattern.permute.xlu0 0
        %920 = vperm.xlu0 %919, %v912
        %v921 = vpop.permute.xlu0 %920
        %v923 = vadd.f32 %v909, %v916
        %v924 = vadd.f32 %v910, %v921
        %v925 = vmax.f32 %v923, 0.0
        %v926 = vmax.f32 %v924, 0.0
        %v927 = vpack.c.bf16 %v926, %v925
        %vm928 = vcmask 523264
        %v930 = vsel %vm928, %v927, 0
        %932 = vmatprep.subr.bf16.mxu0 0
        %933 = vmatpush1.bf16.msra.mxu0 0
        %934 = vmatprep.subr.bf16.mxu0 0
        %935 = vmatpush1.bf16.msra.mxu0 0
        %936 = vmatprep.subr.bf16.mxu0 0
        %937 = vmatpush1.bf16.msra.mxu0 0
        %938 = vmatprep.subr.bf16.mxu0 0
        %939 = vmatpush1.bf16.msra.mxu0 0
        %940 = vmatprep.subr.bf16.mxu0 0
        %941 = vmatpush1.bf16.msra.mxu0 %v632
        %942 = vmatprep.subr.bf16.mxu0 0
        %943 = vmatpush1.bf16.msra.mxu0 %v631
        %944 = vmatprep.subr.bf16.mxu0 0
        %945 = vmatpush1.bf16.msra.mxu0 %v630
        %946 = vmatprep.subr.bf16.mxu0 0
        %947 = vmatpush1.bf16.msra.mxu0 %v629
        %948 = vmatprep.subr.bf16.mxu0 0
        %949 = vmatpush2.bf16.msra.mxu0 0
        %950 = vmatprep.subr.bf16.mxu0 0
        %951 = vmatpush2.bf16.msra.mxu0 0
        %952 = vmatprep.subr.bf16.mxu0 0
        %953 = vmatpush2.bf16.msra.mxu0 0
        %954 = vmatprep.subr.bf16.mxu0 0
        %955 = vmatpush2.bf16.msra.mxu0 0
        %956 = vmatprep.subr.bf16.mxu0 0
        %957 = vmatpush2.bf16.msra.mxu0 0
        %958 = vmatprep.subr.bf16.mxu0 0
        %959 = vmatpush2.bf16.msra.mxu0 0
        %960 = vmatprep.subr.bf16.mxu0 0
        %961 = vmatpush2.bf16.msra.mxu0 0
        %962 = vmatprep.subr.bf16.mxu0 0
        %963 = vmatpush2.bf16.msra.mxu0 0
        %964 = vmatprep.mubr.bf16.mxu0 0
        %965 = vmatmul.mubr.bf16.gmra.mxu0 %v930
        %v966 = vpop.f32.mrf.mxu0
        %v967 = vadd.f32 0.0, %v966
        %v968 = vpop.f32.mrf.mxu0
        %v969 = vpop.f32.mrf.mxu0
        %v970 = vadd.f32 0.0, %v969
        %v971 = vpop.f32.mrf.mxu0
        %972 = vdwg.mxu0
        %v973 = vpack.c.bf16 %v970, %v967
        %v974 = vld [vmem:[%s3] sm:$0xf]
        %v975 = vld [vmem:[%s3 + $0x4] sm:$0xf]
        %v976 = vld [vmem:[%s3 + $0x8] sm:$0xf]
        %v977 = vld [vmem:[%s3 + $0xc] sm:$0xf]
        %978 = vmatprep.subr.bf16.mxu0 0
        %979 = vmatpush1.bf16.msra.mxu0 0
        %980 = vmatprep.subr.bf16.mxu0 0
        %981 = vmatpush1.bf16.msra.mxu0 0
        %982 = vmatprep.subr.bf16.mxu0 0
        %983 = vmatpush1.bf16.msra.mxu0 0
        %984 = vmatprep.subr.bf16.mxu0 0
        %985 = vmatpush1.bf16.msra.mxu0 0
        %986 = vmatprep.subr.bf16.mxu0 0
        %987 = vmatpush1.bf16.msra.mxu0 %v736
        %988 = vmatprep.subr.bf16.mxu0 0
        %989 = vmatpush1.bf16.msra.mxu0 %v735
        %990 = vmatprep.subr.bf16.mxu0 0
        %991 = vmatpush1.bf16.msra.mxu0 %v734
        %992 = vmatprep.subr.bf16.mxu0 0
        %993 = vmatpush1.bf16.msra.mxu0 %v733
        %994 = vmatprep.subr.bf16.mxu0 0
        %995 = vmatpush2.bf16.msra.mxu0 0
        %996 = vmatprep.subr.bf16.mxu0 0
        %997 = vmatpush2.bf16.msra.mxu0 0
        %998 = vmatprep.subr.bf16.mxu0 0
        %999 = vmatpush2.bf16.msra.mxu0 0
        %1000 = vmatprep.subr.bf16.mxu0 0
        %1001 = vmatpush2.bf16.msra.mxu0 0
        %1002 = vmatprep.subr.bf16.mxu0 0
        %1003 = vmatpush2.bf16.msra.mxu0 0
        %1004 = vmatprep.subr.bf16.mxu0 0
        %1005 = vmatpush2.bf16.msra.mxu0 0
        %1006 = vmatprep.subr.bf16.mxu0 0
        %1007 = vmatpush2.bf16.msra.mxu0 0
        %1008 = vmatprep.subr.bf16.mxu0 0
        %1009 = vmatpush2.bf16.msra.mxu0 0
        %1010 = vmatprep.mubr.bf16.mxu0 0
        %1011 = vmatmul.mubr.bf16.gmra.mxu0 %v930
        %v1012 = vpop.f32.mrf.mxu0
        %v1013 = vadd.f32 0.0, %v1012
        %v1014 = vpop.f32.mrf.mxu0
        %v1015 = vpop.f32.mrf.mxu0
        %v1016 = vadd.f32 0.0, %v1015
        %v1017 = vpop.f32.mrf.mxu0
        %1018 = vdwg.mxu0
        %v1019 = vpack.c.bf16 %v1016, %v1013
        %s1020 = scalar_lea.vmem %s3, 16
        %v1021 = vld [vmem:[%s1020] sm:$0xf]
        %v1022 = vld [vmem:[%s1020 + $0x4] sm:$0xf]
        %v1023 = vld [vmem:[%s1020 + $0x8] sm:$0xf]
        %v1024 = vld [vmem:[%s1020 + $0xc] sm:$0xf]
        %v1029 = vunpack.c.l.b16 %v1021
        %v1030 = vunpack.c.l.b16 %v1022
        %v1031 = vunpack.c.l.b16 %v1023
        %v1032 = vunpack.c.l.b16 %v1024
        %v1033 = vpack.c.b16 %v1030, %v1029
        %v1034 = vpack.c.b16 %v1032, %v1031
        %vm1035 = vcmask 130048
        %v1037 = vsel %vm1035, %v1033, 0
        %v1040 = vsel %vm1035, %v1034, 0
        %1042 = vmatprep.subr.bf16.mxu0 0
        %1043 = vmatpush1.bf16.msra.mxu0 0
        %1044 = vmatprep.subr.bf16.mxu0 0
        %1045 = vmatpush1.bf16.msra.mxu0 0
        %1046 = vmatprep.subr.bf16.mxu0 0
        %1047 = vmatpush1.bf16.msra.mxu0 0
        %1048 = vmatprep.subr.bf16.mxu0 0
        %1049 = vmatpush1.bf16.msra.mxu0 0
        %1050 = vmatprep.subr.bf16.mxu0 0
        %1051 = vmatpush1.bf16.msra.mxu0 0
        %1052 = vmatprep.subr.bf16.mxu0 0
        %1053 = vmatpush1.bf16.msra.mxu0 0
        %1054 = vmatprep.subr.bf16.mxu0 0
        %1055 = vmatpush1.bf16.msra.mxu0 0
        %1056 = vmatprep.subr.bf16.mxu0 0
        %1057 = vmatpush1.bf16.msra.mxu0 %v1019
        %1058 = vmatprep.subr.bf16.mxu0 0
        %1059 = vmatpush2.bf16.msra.mxu0 0
        %1060 = vmatprep.subr.bf16.mxu0 0
        %1061 = vmatpush2.bf16.msra.mxu0 0
        %1062 = vmatprep.subr.bf16.mxu0 0
        %1063 = vmatpush2.bf16.msra.mxu0 0
        %1064 = vmatprep.subr.bf16.mxu0 0
        %1065 = vmatpush2.bf16.msra.mxu0 0
        %1066 = vmatprep.subr.bf16.mxu0 0
        %1067 = vmatpush2.bf16.msra.mxu0 0
        %1068 = vmatprep.subr.bf16.mxu0 0
        %1069 = vmatpush2.bf16.msra.mxu0 0
        %1070 = vmatprep.subr.bf16.mxu0 0
        %1071 = vmatpush2.bf16.msra.mxu0 0
        %1072 = vmatprep.subr.bf16.mxu0 0
        %1073 = vmatpush2.bf16.msra.mxu0 0
        %1074 = vmatprep.mubr.bf16.mxu0 0
        %1075 = vmatmul.mubr.bf16.gmra.mxu0 %v1037
        %v1076 = vpop.f32.mrf.mxu0
        %v1077 = vadd.f32 0.0, %v1076
        %v1078 = vpop.f32.mrf.mxu0
        %v1079 = vpop.f32.mrf.mxu0
        %v1080 = vadd.f32 0.0, %v1079
        %v1081 = vpop.f32.mrf.mxu0
        %1082 = vmatprep.mubr.bf16.mxu0 0
        %1083 = vmatmul.mubr.bf16.gmra.mxu0 %v1040
        %v1084 = vpop.f32.mrf.mxu0
        %v1085 = vadd.f32 0.0, %v1084
        %v1086 = vpop.f32.mrf.mxu0
        %v1087 = vpop.f32.mrf.mxu0
        %v1088 = vadd.f32 0.0, %v1087
        %v1089 = vpop.f32.mrf.mxu0
        %1090 = vdwg.mxu0
        %v1095 = vunpack.c.l.b16 %v974
        %v1096 = vunpack.c.l.b16 %v975
        %v1097 = vunpack.c.l.b16 %v976
        %v1098 = vunpack.c.l.b16 %v977
        %v1099 = vpack.c.b16 %v1096, %v1095
        %v1100 = vpack.c.b16 %v1098, %v1097
        %v1102 = vsel %vm1035, %v1099, 0
        %v1105 = vsel %vm1035, %v1100, 0
        %1107 = vmatprep.subr.bf16.mxu0 0
        %1108 = vmatpush1.bf16.msra.mxu0 0
        %1109 = vmatprep.subr.bf16.mxu0 0
        %1110 = vmatpush1.bf16.msra.mxu0 0
        %1111 = vmatprep.subr.bf16.mxu0 0
        %1112 = vmatpush1.bf16.msra.mxu0 0
        %1113 = vmatprep.subr.bf16.mxu0 0
        %1114 = vmatpush1.bf16.msra.mxu0 0
        %1115 = vmatprep.subr.bf16.mxu0 0
        %1116 = vmatpush1.bf16.msra.mxu0 0
        %1117 = vmatprep.subr.bf16.mxu0 0
        %1118 = vmatpush1.bf16.msra.mxu0 0
        %1119 = vmatprep.subr.bf16.mxu0 0
        %1120 = vmatpush1.bf16.msra.mxu0 0
        %1121 = vmatprep.subr.bf16.mxu0 0
        %1122 = vmatpush1.bf16.msra.mxu0 %v973
        %1123 = vmatprep.subr.bf16.mxu0 0
        %1124 = vmatpush2.bf16.msra.mxu0 0
        %1125 = vmatprep.subr.bf16.mxu0 0
        %1126 = vmatpush2.bf16.msra.mxu0 0
        %1127 = vmatprep.subr.bf16.mxu0 0
        %1128 = vmatpush2.bf16.msra.mxu0 0
        %1129 = vmatprep.subr.bf16.mxu0 0
        %1130 = vmatpush2.bf16.msra.mxu0 0
        %1131 = vmatprep.subr.bf16.mxu0 0
        %1132 = vmatpush2.bf16.msra.mxu0 0
        %1133 = vmatprep.subr.bf16.mxu0 0
        %1134 = vmatpush2.bf16.msra.mxu0 0
        %1135 = vmatprep.subr.bf16.mxu0 0
        %1136 = vmatpush2.bf16.msra.mxu0 0
        %1137 = vmatprep.subr.bf16.mxu0 0
        %1138 = vmatpush2.bf16.msra.mxu0 0
        %1139 = vmatprep.mubr.bf16.mxu0 0
        %1140 = vmatmul.mubr.bf16.gmra.mxu0 %v1102
        %v1141 = vpop.f32.mrf.mxu0
        %v1142 = vadd.f32 %v1077, %v1141
        %v1143 = vpop.f32.mrf.mxu0
        %v1144 = vpop.f32.mrf.mxu0
        %v1145 = vadd.f32 %v1080, %v1144
        %v1146 = vpop.f32.mrf.mxu0
        %1147 = vmatprep.mubr.bf16.mxu0 0
        %1148 = vmatmul.mubr.bf16.gmra.mxu0 %v1105
        %v1149 = vpop.f32.mrf.mxu0
        %v1150 = vadd.f32 %v1085, %v1149
        %v1151 = vpop.f32.mrf.mxu0
        %v1152 = vpop.f32.mrf.mxu0
        %v1153 = vadd.f32 %v1088, %v1152
        %v1154 = vpop.f32.mrf.mxu0
        %1155 = vdwg.mxu0
        %1156 = vmatprep.subr.bf16.mxu0 0
        %1157 = vmatpush1.bf16.msra.mxu0 0
        %1158 = vmatprep.subr.bf16.mxu0 0
        %1159 = vmatpush1.bf16.msra.mxu0 0
        %1160 = vmatprep.subr.bf16.mxu0 0
        %1161 = vmatpush1.bf16.msra.mxu0 0
        %1162 = vmatprep.subr.bf16.mxu0 0
        %1163 = vmatpush1.bf16.msra.mxu0 0
        %1164 = vmatprep.subr.bf16.mxu0 0
        %1165 = vmatpush1.bf16.msra.mxu0 %v841
        %1166 = vmatprep.subr.bf16.mxu0 0
        %1167 = vmatpush1.bf16.msra.mxu0 %v840
        %1168 = vmatprep.subr.bf16.mxu0 0
        %1169 = vmatpush1.bf16.msra.mxu0 %v839
        %1170 = vmatprep.subr.bf16.mxu0 0
        %1171 = vmatpush1.bf16.msra.mxu0 %v838
        %1172 = vmatprep.subr.bf16.mxu0 0
        %1173 = vmatpush2.bf16.msra.mxu0 0
        %1174 = vmatprep.subr.bf16.mxu0 0
        %1175 = vmatpush2.bf16.msra.mxu0 0
        %1176 = vmatprep.subr.bf16.mxu0 0
        %1177 = vmatpush2.bf16.msra.mxu0 0
        %1178 = vmatprep.subr.bf16.mxu0 0
        %1179 = vmatpush2.bf16.msra.mxu0 0
        %1180 = vmatprep.subr.bf16.mxu0 0
        %1181 = vmatpush2.bf16.msra.mxu0 0
        %1182 = vmatprep.subr.bf16.mxu0 0
        %1183 = vmatpush2.bf16.msra.mxu0 0
        %1184 = vmatprep.subr.bf16.mxu0 0
        %1185 = vmatpush2.bf16.msra.mxu0 0
        %1186 = vmatprep.subr.bf16.mxu0 0
        %1187 = vmatpush2.bf16.msra.mxu0 0
        %1188 = vmatprep.mubr.bf16.mxu0 0
        %1189 = vmatmul.mubr.bf16.gmra.mxu0 %v930
        %v1190 = vpop.f32.mrf.mxu0
        %v1191 = vadd.f32 0.0, %v1190
        %v1192 = vpop.f32.mrf.mxu0
        %v1193 = vpop.f32.mrf.mxu0
        %v1194 = vadd.f32 0.0, %v1193
        %v1195 = vpop.f32.mrf.mxu0
        %1196 = vdwg.mxu0
        %v1197 = vpack.c.bf16 %v1194, %v1191
        %s1198 = scalar_lea.vmem %s3, 32
        %v1199 = vld [vmem:[%s1198] sm:$0xf]
        %v1200 = vld [vmem:[%s1198 + $0x4] sm:$0xf]
        %v1201 = vld [vmem:[%s1198 + $0x8] sm:$0xf]
        %v1202 = vld [vmem:[%s1198 + $0xc] sm:$0xf]
        %v1207 = vunpack.c.l.b16 %v1199
        %v1208 = vunpack.c.l.b16 %v1200
        %v1209 = vunpack.c.l.b16 %v1201
        %v1210 = vunpack.c.l.b16 %v1202
        %v1211 = vpack.c.b16 %v1208, %v1207
        %v1212 = vpack.c.b16 %v1210, %v1209
        %v1214 = vsel %vm1035, %v1211, 0
        %v1217 = vsel %vm1035, %v1212, 0
        %1219 = vmatprep.subr.bf16.mxu0 0
        %1220 = vmatpush1.bf16.msra.mxu0 0
        %1221 = vmatprep.subr.bf16.mxu0 0
        %1222 = vmatpush1.bf16.msra.mxu0 0
        %1223 = vmatprep.subr.bf16.mxu0 0
        %1224 = vmatpush1.bf16.msra.mxu0 0
        %1225 = vmatprep.subr.bf16.mxu0 0
        %1226 = vmatpush1.bf16.msra.mxu0 0
        %1227 = vmatprep.subr.bf16.mxu0 0
        %1228 = vmatpush1.bf16.msra.mxu0 0
        %1229 = vmatprep.subr.bf16.mxu0 0
        %1230 = vmatpush1.bf16.msra.mxu0 0
        %1231 = vmatprep.subr.bf16.mxu0 0
        %1232 = vmatpush1.bf16.msra.mxu0 0
        %1233 = vmatprep.subr.bf16.mxu0 0
        %1234 = vmatpush1.bf16.msra.mxu0 %v1197
        %1235 = vmatprep.subr.bf16.mxu0 0
        %1236 = vmatpush2.bf16.msra.mxu0 0
        %1237 = vmatprep.subr.bf16.mxu0 0
        %1238 = vmatpush2.bf16.msra.mxu0 0
        %1239 = vmatprep.subr.bf16.mxu0 0
        %1240 = vmatpush2.bf16.msra.mxu0 0
        %1241 = vmatprep.subr.bf16.mxu0 0
        %1242 = vmatpush2.bf16.msra.mxu0 0
        %1243 = vmatprep.subr.bf16.mxu0 0
        %1244 = vmatpush2.bf16.msra.mxu0 0
        %1245 = vmatprep.subr.bf16.mxu0 0
        %1246 = vmatpush2.bf16.msra.mxu0 0
        %1247 = vmatprep.subr.bf16.mxu0 0
        %1248 = vmatpush2.bf16.msra.mxu0 0
        %1249 = vmatprep.subr.bf16.mxu0 0
        %1250 = vmatpush2.bf16.msra.mxu0 0
        %1251 = vmatprep.mubr.bf16.mxu0 0
        %1252 = vmatmul.mubr.bf16.gmra.mxu0 %v1214
        %v1253 = vpop.f32.mrf.mxu0
        %v1254 = vadd.f32 0.0, %v1253
        %v1255 = vpop.f32.mrf.mxu0
        %v1256 = vpop.f32.mrf.mxu0
        %v1257 = vadd.f32 0.0, %v1256
        %v1258 = vpop.f32.mrf.mxu0
        %1259 = vmatprep.mubr.bf16.mxu0 0
        %1260 = vmatmul.mubr.bf16.gmra.mxu0 %v1217
        %v1261 = vpop.f32.mrf.mxu0
        %v1262 = vadd.f32 0.0, %v1261
        %v1263 = vpop.f32.mrf.mxu0
        %v1264 = vpop.f32.mrf.mxu0
        %v1265 = vadd.f32 0.0, %v1264
        %v1266 = vpop.f32.mrf.mxu0
        %1267 = vdwg.mxu0
        %v1268 = vadd.f32 %v1142, %v1254
        %v1269 = vadd.f32 %v1145, %v1257
        %v1270 = vadd.f32 %v1150, %v1262
        %v1271 = vadd.f32 %v1153, %v1265
        %v1272 = vld [vmem:[%s4] sm:$0xff]
        %v1273 = vld [vmem:[%s4 + $0x8] sm:$0xff]
        %v1274 = vld [vmem:[%s4 + $0x10] sm:$0xff]
        %v1275 = vld [vmem:[%s4 + $0x18] sm:$0xff]
        %1277 = vset.pattern.permute.xlu0 0
        %1278 = vperm.xlu0 %1277, %v1272
        %v1279 = vpop.permute.xlu0 %1278
        %1282 = vset.pattern.permute.xlu0 0
        %1283 = vperm.xlu0 %1282, %v1273
        %v1284 = vpop.permute.xlu0 %1283
        %1287 = vset.pattern.permute.xlu0 0
        %1288 = vperm.xlu0 %1287, %v1274
        %v1289 = vpop.permute.xlu0 %1288
        %1292 = vset.pattern.permute.xlu0 0
        %1293 = vperm.xlu0 %1292, %v1275
        %v1294 = vpop.permute.xlu0 %1293
        %v1296 = vadd.f32 %v1268, %v1279
        %v1297 = vadd.f32 %v1269, %v1284
        %v1298 = vadd.f32 %v1270, %v1289
        %v1299 = vadd.f32 %v1271, %v1294
        %v1300 = vmax.f32 %v1296, 0.0
        %v1301 = vmax.f32 %v1297, 0.0
        %v1302 = vmax.f32 %v1298, 0.0
        %v1303 = vmax.f32 %v1299, 0.0
        %v1304 = vpack.c.bf16 %v1301, %v1300
        %v1305 = vpack.c.bf16 %v1303, %v1302
        %vm1306 = vcmask 261120
        %v1308 = vsel %vm1306, %v1304, 0
        %v1311 = vsel %vm1306, %v1305, 0
        %1313 = vmatprep.subr.bf16.mxu0 0
        %1314 = vmatpush1.bf16.msra.mxu0 0
        %1315 = vmatprep.subr.bf16.mxu0 0
        %1316 = vmatpush1.bf16.msra.mxu0 0
        %1317 = vmatprep.subr.bf16.mxu0 0
        %1318 = vmatpush1.bf16.msra.mxu0 0
        %1319 = vmatprep.subr.bf16.mxu0 0
        %1320 = vmatpush1.bf16.msra.mxu0 0
        %1321 = vmatprep.subr.bf16.mxu0 0
        %1322 = vmatpush1.bf16.msra.mxu0 0
        %1323 = vmatprep.subr.bf16.mxu0 0
        %1324 = vmatpush1.bf16.msra.mxu0 0
        %1325 = vmatprep.subr.bf16.mxu0 0
        %1326 = vmatpush1.bf16.msra.mxu0 %v630
        %1327 = vmatprep.subr.bf16.mxu0 0
        %1328 = vmatpush1.bf16.msra.mxu0 %v629
        %1329 = vmatprep.subr.bf16.mxu0 0
        %1330 = vmatpush2.bf16.msra.mxu0 0
        %1331 = vmatprep.subr.bf16.mxu0 0
        %1332 = vmatpush2.bf16.msra.mxu0 0
        %1333 = vmatprep.subr.bf16.mxu0 0
        %1334 = vmatpush2.bf16.msra.mxu0 0
        %1335 = vmatprep.subr.bf16.mxu0 0
        %1336 = vmatpush2.bf16.msra.mxu0 0
        %1337 = vmatprep.subr.bf16.mxu0 0
        %1338 = vmatpush2.bf16.msra.mxu0 0
        %1339 = vmatprep.subr.bf16.mxu0 0
        %1340 = vmatpush2.bf16.msra.mxu0 0
        %1341 = vmatprep.subr.bf16.mxu0 0
        %1342 = vmatpush2.bf16.msra.mxu0 0
        %1343 = vmatprep.subr.bf16.mxu0 0
        %1344 = vmatpush2.bf16.msra.mxu0 0
        %1345 = vmatprep.mubr.bf16.mxu0 0
        %1346 = vmatmul.mubr.bf16.gmra.mxu0 %v1308
        %v1347 = vpop.f32.mrf.mxu0
        %v1348 = vadd.f32 0.0, %v1347
        %v1349 = vpop.f32.mrf.mxu0
        %v1350 = vpop.f32.mrf.mxu0
        %v1351 = vadd.f32 0.0, %v1350
        %v1352 = vpop.f32.mrf.mxu0
        %1353 = vmatprep.mubr.bf16.mxu0 0
        %1354 = vmatmul.mubr.bf16.gmra.mxu0 %v1311
        %v1355 = vpop.f32.mrf.mxu0
        %v1356 = vadd.f32 0.0, %v1355
        %v1357 = vpop.f32.mrf.mxu0
        %v1358 = vpop.f32.mrf.mxu0
        %v1359 = vadd.f32 0.0, %v1358
        %v1360 = vpop.f32.mrf.mxu0
        %1361 = vdwg.mxu0
        %v1362 = vpack.c.bf16 %v1351, %v1348
        %v1363 = vpack.c.bf16 %v1359, %v1356
        %v1364 = vld [vmem:[%s5] sm:$0xf]
        %v1365 = vld [vmem:[%s5 + $0x4] sm:$0xf]
        %v1366 = vld [vmem:[%s5 + $0x8] sm:$0xf]
        %v1367 = vld [vmem:[%s5 + $0xc] sm:$0xf]
        %v1368 = vld [vmem:[%s5 + $0x10] sm:$0xf]
        %v1369 = vld [vmem:[%s5 + $0x14] sm:$0xf]
        %v1370 = vld [vmem:[%s5 + $0x18] sm:$0xf]
        %v1371 = vld [vmem:[%s5 + $0x1c] sm:$0xf]
        %1372 = vmatprep.subr.bf16.mxu0 0
        %1373 = vmatpush1.bf16.msra.mxu0 0
        %1374 = vmatprep.subr.bf16.mxu0 0
        %1375 = vmatpush1.bf16.msra.mxu0 0
        %1376 = vmatprep.subr.bf16.mxu0 0
        %1377 = vmatpush1.bf16.msra.mxu0 0
        %1378 = vmatprep.subr.bf16.mxu0 0
        %1379 = vmatpush1.bf16.msra.mxu0 0
        %1380 = vmatprep.subr.bf16.mxu0 0
        %1381 = vmatpush1.bf16.msra.mxu0 0
        %1382 = vmatprep.subr.bf16.mxu0 0
        %1383 = vmatpush1.bf16.msra.mxu0 0
        %1384 = vmatprep.subr.bf16.mxu0 0
        %1385 = vmatpush1.bf16.msra.mxu0 %v734
        %1386 = vmatprep.subr.bf16.mxu0 0
        %1387 = vmatpush1.bf16.msra.mxu0 %v733
        %1388 = vmatprep.subr.bf16.mxu0 0
        %1389 = vmatpush2.bf16.msra.mxu0 0
        %1390 = vmatprep.subr.bf16.mxu0 0
        %1391 = vmatpush2.bf16.msra.mxu0 0
        %1392 = vmatprep.subr.bf16.mxu0 0
        %1393 = vmatpush2.bf16.msra.mxu0 0
        %1394 = vmatprep.subr.bf16.mxu0 0
        %1395 = vmatpush2.bf16.msra.mxu0 0
        %1396 = vmatprep.subr.bf16.mxu0 0
        %1397 = vmatpush2.bf16.msra.mxu0 0
        %1398 = vmatprep.subr.bf16.mxu0 0
        %1399 = vmatpush2.bf16.msra.mxu0 0
        %1400 = vmatprep.subr.bf16.mxu0 0
        %1401 = vmatpush2.bf16.msra.mxu0 0
        %1402 = vmatprep.subr.bf16.mxu0 0
        %1403 = vmatpush2.bf16.msra.mxu0 0
        %1404 = vmatprep.mubr.bf16.mxu0 0
        %1405 = vmatmul.mubr.bf16.gmra.mxu0 %v1308
        %v1406 = vpop.f32.mrf.mxu0
        %v1407 = vadd.f32 0.0, %v1406
        %v1408 = vpop.f32.mrf.mxu0
        %v1409 = vpop.f32.mrf.mxu0
        %v1410 = vadd.f32 0.0, %v1409
        %v1411 = vpop.f32.mrf.mxu0
        %1412 = vmatprep.mubr.bf16.mxu0 0
        %1413 = vmatmul.mubr.bf16.gmra.mxu0 %v1311
        %v1414 = vpop.f32.mrf.mxu0
        %v1415 = vadd.f32 0.0, %v1414
        %v1416 = vpop.f32.mrf.mxu0
        %v1417 = vpop.f32.mrf.mxu0
        %v1418 = vadd.f32 0.0, %v1417
        %v1419 = vpop.f32.mrf.mxu0
        %1420 = vdwg.mxu0
        %v1421 = vpack.c.bf16 %v1410, %v1407
        %v1422 = vpack.c.bf16 %v1418, %v1415
        %s1423 = scalar_lea.vmem %s5, 32
        %v1424 = vld [vmem:[%s1423] sm:$0xf]
        %v1425 = vld [vmem:[%s1423 + $0x4] sm:$0xf]
        %v1426 = vld [vmem:[%s1423 + $0x8] sm:$0xf]
        %v1427 = vld [vmem:[%s1423 + $0xc] sm:$0xf]
        %v1428 = vld [vmem:[%s1423 + $0x10] sm:$0xf]
        %v1429 = vld [vmem:[%s1423 + $0x14] sm:$0xf]
        %v1430 = vld [vmem:[%s1423 + $0x18] sm:$0xf]
        %v1431 = vld [vmem:[%s1423 + $0x1c] sm:$0xf]
        %v1440 = vunpack.c.l.b16 %v1424
        %v1441 = vunpack.c.l.b16 %v1425
        %v1442 = vunpack.c.l.b16 %v1426
        %v1443 = vunpack.c.l.b16 %v1427
        %v1444 = vunpack.c.l.b16 %v1428
        %v1445 = vunpack.c.l.b16 %v1429
        %v1446 = vunpack.c.l.b16 %v1430
        %v1447 = vunpack.c.l.b16 %v1431
        %v1448 = vpack.c.b16 %v1441, %v1440
        %v1449 = vpack.c.b16 %v1443, %v1442
        %v1450 = vpack.c.b16 %v1445, %v1444
        %v1451 = vpack.c.b16 %v1447, %v1446
        %v1453 = vsel %vm1306, %v1448, 0
        %v1456 = vsel %vm1306, %v1449, 0
        %v1459 = vsel %vm1306, %v1450, 0
        %v1462 = vsel %vm1306, %v1451, 0
        %1464 = vmatprep.subr.bf16.mxu0 0
        %1465 = vmatpush1.bf16.msra.mxu0 0
        %1466 = vmatprep.subr.bf16.mxu0 0
        %1467 = vmatpush1.bf16.msra.mxu0 0
        %1468 = vmatprep.subr.bf16.mxu0 0
        %1469 = vmatpush1.bf16.msra.mxu0 0
        %1470 = vmatprep.subr.bf16.mxu0 0
        %1471 = vmatpush1.bf16.msra.mxu0 0
        %1472 = vmatprep.subr.bf16.mxu0 0
        %1473 = vmatpush1.bf16.msra.mxu0 0
        %1474 = vmatprep.subr.bf16.mxu0 0
        %1475 = vmatpush1.bf16.msra.mxu0 0
        %1476 = vmatprep.subr.bf16.mxu0 0
        %1477 = vmatpush1.bf16.msra.mxu0 %v1422
        %1478 = vmatprep.subr.bf16.mxu0 0
        %1479 = vmatpush1.bf16.msra.mxu0 %v1421
        %1480 = vmatprep.subr.bf16.mxu0 0
        %1481 = vmatpush2.bf16.msra.mxu0 0
        %1482 = vmatprep.subr.bf16.mxu0 0
        %1483 = vmatpush2.bf16.msra.mxu0 0
        %1484 = vmatprep.subr.bf16.mxu0 0
        %1485 = vmatpush2.bf16.msra.mxu0 0
        %1486 = vmatprep.subr.bf16.mxu0 0
        %1487 = vmatpush2.bf16.msra.mxu0 0
        %1488 = vmatprep.subr.bf16.mxu0 0
        %1489 = vmatpush2.bf16.msra.mxu0 0
        %1490 = vmatprep.subr.bf16.mxu0 0
        %1491 = vmatpush2.bf16.msra.mxu0 0
        %1492 = vmatprep.subr.bf16.mxu0 0
        %1493 = vmatpush2.bf16.msra.mxu0 0
        %1494 = vmatprep.subr.bf16.mxu0 0
        %1495 = vmatpush2.bf16.msra.mxu0 0
        %1496 = vmatprep.mubr.bf16.mxu0 0
        %1497 = vmatmul.mubr.bf16.gmra.mxu0 %v1453
        %v1498 = vpop.f32.mrf.mxu0
        %v1499 = vadd.f32 0.0, %v1498
        %v1500 = vpop.f32.mrf.mxu0
        %v1501 = vpop.f32.mrf.mxu0
        %v1502 = vadd.f32 0.0, %v1501
        %v1503 = vpop.f32.mrf.mxu0
        %1504 = vmatprep.mubr.bf16.mxu0 0
        %1505 = vmatmul.mubr.bf16.gmra.mxu0 %v1456
        %v1506 = vpop.f32.mrf.mxu0
        %v1507 = vadd.f32 0.0, %v1506
        %v1508 = vpop.f32.mrf.mxu0
        %v1509 = vpop.f32.mrf.mxu0
        %v1510 = vadd.f32 0.0, %v1509
        %v1511 = vpop.f32.mrf.mxu0
        %1512 = vmatprep.mubr.bf16.mxu0 0
        %1513 = vmatmul.mubr.bf16.gmra.mxu0 %v1459
        %v1514 = vpop.f32.mrf.mxu0
        %v1515 = vadd.f32 0.0, %v1514
        %v1516 = vpop.f32.mrf.mxu0
        %v1517 = vpop.f32.mrf.mxu0
        %v1518 = vadd.f32 0.0, %v1517
        %v1519 = vpop.f32.mrf.mxu0
        %1520 = vmatprep.mubr.bf16.mxu0 0
        %1521 = vmatmul.mubr.bf16.gmra.mxu0 %v1462
        %v1522 = vpop.f32.mrf.mxu0
        %v1523 = vadd.f32 0.0, %v1522
        %v1524 = vpop.f32.mrf.mxu0
        %v1525 = vpop.f32.mrf.mxu0
        %v1526 = vadd.f32 0.0, %v1525
        %v1527 = vpop.f32.mrf.mxu0
        %1528 = vdwg.mxu0
        %v1537 = vunpack.c.l.b16 %v1364
        %v1538 = vunpack.c.l.b16 %v1365
        %v1539 = vunpack.c.l.b16 %v1366
        %v1540 = vunpack.c.l.b16 %v1367
        %v1541 = vunpack.c.l.b16 %v1368
        %v1542 = vunpack.c.l.b16 %v1369
        %v1543 = vunpack.c.l.b16 %v1370
        %v1544 = vunpack.c.l.b16 %v1371
        %v1545 = vpack.c.b16 %v1538, %v1537
        %v1546 = vpack.c.b16 %v1540, %v1539
        %v1547 = vpack.c.b16 %v1542, %v1541
        %v1548 = vpack.c.b16 %v1544, %v1543
        %v1550 = vsel %vm1306, %v1545, 0
        %v1553 = vsel %vm1306, %v1546, 0
        %v1556 = vsel %vm1306, %v1547, 0
        %v1559 = vsel %vm1306, %v1548, 0
        %1561 = vmatprep.subr.bf16.mxu0 0
        %1562 = vmatpush1.bf16.msra.mxu0 0
        %1563 = vmatprep.subr.bf16.mxu0 0
        %1564 = vmatpush1.bf16.msra.mxu0 0
        %1565 = vmatprep.subr.bf16.mxu0 0
        %1566 = vmatpush1.bf16.msra.mxu0 0
        %1567 = vmatprep.subr.bf16.mxu0 0
        %1568 = vmatpush1.bf16.msra.mxu0 0
        %1569 = vmatprep.subr.bf16.mxu0 0
        %1570 = vmatpush1.bf16.msra.mxu0 0
        %1571 = vmatprep.subr.bf16.mxu0 0
        %1572 = vmatpush1.bf16.msra.mxu0 0
        %1573 = vmatprep.subr.bf16.mxu0 0
        %1574 = vmatpush1.bf16.msra.mxu0 %v1363
        %1575 = vmatprep.subr.bf16.mxu0 0
        %1576 = vmatpush1.bf16.msra.mxu0 %v1362
        %1577 = vmatprep.subr.bf16.mxu0 0
        %1578 = vmatpush2.bf16.msra.mxu0 0
        %1579 = vmatprep.subr.bf16.mxu0 0
        %1580 = vmatpush2.bf16.msra.mxu0 0
        %1581 = vmatprep.subr.bf16.mxu0 0
        %1582 = vmatpush2.bf16.msra.mxu0 0
        %1583 = vmatprep.subr.bf16.mxu0 0
        %1584 = vmatpush2.bf16.msra.mxu0 0
        %1585 = vmatprep.subr.bf16.mxu0 0
        %1586 = vmatpush2.bf16.msra.mxu0 0
        %1587 = vmatprep.subr.bf16.mxu0 0
        %1588 = vmatpush2.bf16.msra.mxu0 0
        %1589 = vmatprep.subr.bf16.mxu0 0
        %1590 = vmatpush2.bf16.msra.mxu0 0
        %1591 = vmatprep.subr.bf16.mxu0 0
        %1592 = vmatpush2.bf16.msra.mxu0 0
        %1593 = vmatprep.mubr.bf16.mxu0 0
        %1594 = vmatmul.mubr.bf16.gmra.mxu0 %v1550
        %v1595 = vpop.f32.mrf.mxu0
        %v1596 = vadd.f32 %v1499, %v1595
        %v1597 = vpop.f32.mrf.mxu0
        %v1598 = vpop.f32.mrf.mxu0
        %v1599 = vadd.f32 %v1502, %v1598
        %v1600 = vpop.f32.mrf.mxu0
        %1601 = vmatprep.mubr.bf16.mxu0 0
        %1602 = vmatmul.mubr.bf16.gmra.mxu0 %v1553
        %v1603 = vpop.f32.mrf.mxu0
        %v1604 = vadd.f32 %v1507, %v1603
        %v1605 = vpop.f32.mrf.mxu0
        %v1606 = vpop.f32.mrf.mxu0
        %v1607 = vadd.f32 %v1510, %v1606
        %v1608 = vpop.f32.mrf.mxu0
        %1609 = vmatprep.mubr.bf16.mxu0 0
        %1610 = vmatmul.mubr.bf16.gmra.mxu0 %v1556
        %v1611 = vpop.f32.mrf.mxu0
        %v1612 = vadd.f32 %v1515, %v1611
        %v1613 = vpop.f32.mrf.mxu0
        %v1614 = vpop.f32.mrf.mxu0
        %v1615 = vadd.f32 %v1518, %v1614
        %v1616 = vpop.f32.mrf.mxu0
        %1617 = vmatprep.mubr.bf16.mxu0 0
        %1618 = vmatmul.mubr.bf16.gmra.mxu0 %v1559
        %v1619 = vpop.f32.mrf.mxu0
        %v1620 = vadd.f32 %v1523, %v1619
        %v1621 = vpop.f32.mrf.mxu0
        %v1622 = vpop.f32.mrf.mxu0
        %v1623 = vadd.f32 %v1526, %v1622
        %v1624 = vpop.f32.mrf.mxu0
        %1625 = vdwg.mxu0
        %1626 = vmatprep.subr.bf16.mxu0 0
        %1627 = vmatpush1.bf16.msra.mxu0 0
        %1628 = vmatprep.subr.bf16.mxu0 0
        %1629 = vmatpush1.bf16.msra.mxu0 0
        %1630 = vmatprep.subr.bf16.mxu0 0
        %1631 = vmatpush1.bf16.msra.mxu0 0
        %1632 = vmatprep.subr.bf16.mxu0 0
        %1633 = vmatpush1.bf16.msra.mxu0 0
        %1634 = vmatprep.subr.bf16.mxu0 0
        %1635 = vmatpush1.bf16.msra.mxu0 0
        %1636 = vmatprep.subr.bf16.mxu0 0
        %1637 = vmatpush1.bf16.msra.mxu0 0
        %1638 = vmatprep.subr.bf16.mxu0 0
        %1639 = vmatpush1.bf16.msra.mxu0 %v839
        %1640 = vmatprep.subr.bf16.mxu0 0
        %1641 = vmatpush1.bf16.msra.mxu0 %v838
        %1642 = vmatprep.subr.bf16.mxu0 0
        %1643 = vmatpush2.bf16.msra.mxu0 0
        %1644 = vmatprep.subr.bf16.mxu0 0
        %1645 = vmatpush2.bf16.msra.mxu0 0
        %1646 = vmatprep.subr.bf16.mxu0 0
        %1647 = vmatpush2.bf16.msra.mxu0 0
        %1648 = vmatprep.subr.bf16.mxu0 0
        %1649 = vmatpush2.bf16.msra.mxu0 0
        %1650 = vmatprep.subr.bf16.mxu0 0
        %1651 = vmatpush2.bf16.msra.mxu0 0
        %1652 = vmatprep.subr.bf16.mxu0 0
        %1653 = vmatpush2.bf16.msra.mxu0 0
        %1654 = vmatprep.subr.bf16.mxu0 0
        %1655 = vmatpush2.bf16.msra.mxu0 0
        %1656 = vmatprep.subr.bf16.mxu0 0
        %1657 = vmatpush2.bf16.msra.mxu0 0
        %1658 = vmatprep.mubr.bf16.mxu0 0
        %1659 = vmatmul.mubr.bf16.gmra.mxu0 %v1308
        %v1660 = vpop.f32.mrf.mxu0
        %v1661 = vadd.f32 0.0, %v1660
        %v1662 = vpop.f32.mrf.mxu0
        %v1663 = vpop.f32.mrf.mxu0
        %v1664 = vadd.f32 0.0, %v1663
        %v1665 = vpop.f32.mrf.mxu0
        %1666 = vmatprep.mubr.bf16.mxu0 0
        %1667 = vmatmul.mubr.bf16.gmra.mxu0 %v1311
        %v1668 = vpop.f32.mrf.mxu0
        %v1669 = vadd.f32 0.0, %v1668
        %v1670 = vpop.f32.mrf.mxu0
        %v1671 = vpop.f32.mrf.mxu0
        %v1672 = vadd.f32 0.0, %v1671
        %v1673 = vpop.f32.mrf.mxu0
        %1674 = vdwg.mxu0
        %v1675 = vpack.c.bf16 %v1664, %v1661
        %v1676 = vpack.c.bf16 %v1672, %v1669
        %s1677 = scalar_lea.vmem %s5, 64
        %v1678 = vld [vmem:[%s1677] sm:$0xf]
        %v1679 = vld [vmem:[%s1677 + $0x4] sm:$0xf]
        %v1680 = vld [vmem:[%s1677 + $0x8] sm:$0xf]
        %v1681 = vld [vmem:[%s1677 + $0xc] sm:$0xf]
        %v1682 = vld [vmem:[%s1677 + $0x10] sm:$0xf]
        %v1683 = vld [vmem:[%s1677 + $0x14] sm:$0xf]
        %v1684 = vld [vmem:[%s1677 + $0x18] sm:$0xf]
        %v1685 = vld [vmem:[%s1677 + $0x1c] sm:$0xf]
        %v1694 = vunpack.c.l.b16 %v1678
        %v1695 = vunpack.c.l.b16 %v1679
        %v1696 = vunpack.c.l.b16 %v1680
        %v1697 = vunpack.c.l.b16 %v1681
        %v1698 = vunpack.c.l.b16 %v1682
        %v1699 = vunpack.c.l.b16 %v1683
        %v1700 = vunpack.c.l.b16 %v1684
        %v1701 = vunpack.c.l.b16 %v1685
        %v1702 = vpack.c.b16 %v1695, %v1694
        %v1703 = vpack.c.b16 %v1697, %v1696
        %v1704 = vpack.c.b16 %v1699, %v1698
        %v1705 = vpack.c.b16 %v1701, %v1700
        %v1707 = vsel %vm1306, %v1702, 0
        %v1710 = vsel %vm1306, %v1703, 0
        %v1713 = vsel %vm1306, %v1704, 0
        %v1716 = vsel %vm1306, %v1705, 0
        %1718 = vmatprep.subr.bf16.mxu0 0
        %1719 = vmatpush1.bf16.msra.mxu0 0
        %1720 = vmatprep.subr.bf16.mxu0 0
        %1721 = vmatpush1.bf16.msra.mxu0 0
        %1722 = vmatprep.subr.bf16.mxu0 0
        %1723 = vmatpush1.bf16.msra.mxu0 0
        %1724 = vmatprep.subr.bf16.mxu0 0
        %1725 = vmatpush1.bf16.msra.mxu0 0
        %1726 = vmatprep.subr.bf16.mxu0 0
        %1727 = vmatpush1.bf16.msra.mxu0 0
        %1728 = vmatprep.subr.bf16.mxu0 0
        %1729 = vmatpush1.bf16.msra.mxu0 0
        %1730 = vmatprep.subr.bf16.mxu0 0
        %1731 = vmatpush1.bf16.msra.mxu0 %v1676
        %1732 = vmatprep.subr.bf16.mxu0 0
        %1733 = vmatpush1.bf16.msra.mxu0 %v1675
        %1734 = vmatprep.subr.bf16.mxu0 0
        %1735 = vmatpush2.bf16.msra.mxu0 0
        %1736 = vmatprep.subr.bf16.mxu0 0
        %1737 = vmatpush2.bf16.msra.mxu0 0
        %1738 = vmatprep.subr.bf16.mxu0 0
        %1739 = vmatpush2.bf16.msra.mxu0 0
        %1740 = vmatprep.subr.bf16.mxu0 0
        %1741 = vmatpush2.bf16.msra.mxu0 0
        %1742 = vmatprep.subr.bf16.mxu0 0
        %1743 = vmatpush2.bf16.msra.mxu0 0
        %1744 = vmatprep.subr.bf16.mxu0 0
        %1745 = vmatpush2.bf16.msra.mxu0 0
        %1746 = vmatprep.subr.bf16.mxu0 0
        %1747 = vmatpush2.bf16.msra.mxu0 0
        %1748 = vmatprep.subr.bf16.mxu0 0
        %1749 = vmatpush2.bf16.msra.mxu0 0
        %1750 = vmatprep.mubr.bf16.mxu0 0
        %1751 = vmatmul.mubr.bf16.gmra.mxu0 %v1707
        %v1752 = vpop.f32.mrf.mxu0
        %v1753 = vadd.f32 0.0, %v1752
        %v1754 = vpop.f32.mrf.mxu0
        %v1755 = vpop.f32.mrf.mxu0
        %v1756 = vadd.f32 0.0, %v1755
        %v1757 = vpop.f32.mrf.mxu0
        %1758 = vmatprep.mubr.bf16.mxu0 0
        %1759 = vmatmul.mubr.bf16.gmra.mxu0 %v1710
        %v1760 = vpop.f32.mrf.mxu0
        %v1761 = vadd.f32 0.0, %v1760
        %v1762 = vpop.f32.mrf.mxu0
        %v1763 = vpop.f32.mrf.mxu0
        %v1764 = vadd.f32 0.0, %v1763
        %v1765 = vpop.f32.mrf.mxu0
        %1766 = vmatprep.mubr.bf16.mxu0 0
        %1767 = vmatmul.mubr.bf16.gmra.mxu0 %v1713
        %v1768 = vpop.f32.mrf.mxu0
        %v1769 = vadd.f32 0.0, %v1768
        %v1770 = vpop.f32.mrf.mxu0
        %v1771 = vpop.f32.mrf.mxu0
        %v1772 = vadd.f32 0.0, %v1771
        %v1773 = vpop.f32.mrf.mxu0
        %1774 = vmatprep.mubr.bf16.mxu0 0
        %1775 = vmatmul.mubr.bf16.gmra.mxu0 %v1716
        %v1776 = vpop.f32.mrf.mxu0
        %v1777 = vadd.f32 0.0, %v1776
        %v1778 = vpop.f32.mrf.mxu0
        %v1779 = vpop.f32.mrf.mxu0
        %v1780 = vadd.f32 0.0, %v1779
        %v1781 = vpop.f32.mrf.mxu0
        %1782 = vdwg.mxu0
        %v1783 = vadd.f32 %v1596, %v1753
        %v1784 = vadd.f32 %v1599, %v1756
        %v1785 = vadd.f32 %v1604, %v1761
        %v1786 = vadd.f32 %v1607, %v1764
        %v1787 = vadd.f32 %v1612, %v1769
        %v1788 = vadd.f32 %v1615, %v1772
        %v1789 = vadd.f32 %v1620, %v1777
        %v1790 = vadd.f32 %v1623, %v1780
        %v1791 = vld [vmem:[%s6] sm:$0xff]
        %v1792 = vld [vmem:[%s6 + $0x8] sm:$0xff]
        %v1793 = vld [vmem:[%s6 + $0x10] sm:$0xff]
        %v1794 = vld [vmem:[%s6 + $0x18] sm:$0xff]
        %v1795 = vld [vmem:[%s6 + $0x20] sm:$0xff]
        %v1796 = vld [vmem:[%s6 + $0x28] sm:$0xff]
        %v1797 = vld [vmem:[%s6 + $0x30] sm:$0xff]
        %v1798 = vld [vmem:[%s6 + $0x38] sm:$0xff]
        %1800 = vset.pattern.permute.xlu0 0
        %1801 = vperm.xlu0 %1800, %v1791
        %v1802 = vpop.permute.xlu0 %1801
        %1805 = vset.pattern.permute.xlu0 0
        %1806 = vperm.xlu0 %1805, %v1792
        %v1807 = vpop.permute.xlu0 %1806
        %1810 = vset.pattern.permute.xlu0 0
        %1811 = vperm.xlu0 %1810, %v1793
        %v1812 = vpop.permute.xlu0 %1811
        %1815 = vset.pattern.permute.xlu0 0
        %1816 = vperm.xlu0 %1815, %v1794
        %v1817 = vpop.permute.xlu0 %1816
        %1820 = vset.pattern.permute.xlu0 0
        %1821 = vperm.xlu0 %1820, %v1795
        %v1822 = vpop.permute.xlu0 %1821
        %1825 = vset.pattern.permute.xlu0 0
        %1826 = vperm.xlu0 %1825, %v1796
        %v1827 = vpop.permute.xlu0 %1826
        %1830 = vset.pattern.permute.xlu0 0
        %1831 = vperm.xlu0 %1830, %v1797
        %v1832 = vpop.permute.xlu0 %1831
        %1835 = vset.pattern.permute.xlu0 0
        %1836 = vperm.xlu0 %1835, %v1798
        %v1837 = vpop.permute.xlu0 %1836
        %v1839 = vadd.f32 %v1783, %v1802
        %v1840 = vadd.f32 %v1784, %v1807
        %v1841 = vadd.f32 %v1785, %v1812
        %v1842 = vadd.f32 %v1786, %v1817
        %v1843 = vadd.f32 %v1787, %v1822
        %v1844 = vadd.f32 %v1788, %v1827
        %v1845 = vadd.f32 %v1789, %v1832
        %v1846 = vadd.f32 %v1790, %v1837
        %v1847 = vmax.f32 %v1839, 0.0
        %v1848 = vmax.f32 %v1840, 0.0
        %v1849 = vmax.f32 %v1841, 0.0
        %v1850 = vmax.f32 %v1842, 0.0
        %v1851 = vmax.f32 %v1843, 0.0
        %v1852 = vmax.f32 %v1844, 0.0
        %v1853 = vmax.f32 %v1845, 0.0
        %v1854 = vmax.f32 %v1846, 0.0
        %v1855 = vpack.c.bf16 %v1848, %v1847
        %v1856 = vpack.c.bf16 %v1850, %v1849
        %v1857 = vpack.c.bf16 %v1852, %v1851
        %v1858 = vpack.c.bf16 %v1854, %v1853
        %v1859 = vmul.u32 %v563, 8
        %v1860 = vsub.s32 %v546, %v1859
        %v1861 = vsub.s32 %v547, %v1859
        %vm1862 = vcmp.eq.s32.totalorder %v1860, 0
        %vm1863 = vcmp.eq.s32.totalorder %v1861, 0
        %v1864 = vsel %vm1862, 1.0, 0.0
        %v1865 = vsel %vm1863, 1.0, 0.0
        %v1866 = vpack.c.bf16 %v1865, %v1864
        %v1868 = vsel %vm1035, %v1855, 0
        %v1871 = vsel %vm1035, %v1856, 0
        %v1874 = vsel %vm1035, %v1857, 0
        %v1877 = vsel %vm1035, %v1858, 0
        %1879 = vmatprep.subr.bf16.mxu0 0
        %1880 = vmatpush1.bf16.msra.mxu0 0
        %1881 = vmatprep.subr.bf16.mxu0 0
        %1882 = vmatpush1.bf16.msra.mxu0 0
        %1883 = vmatprep.subr.bf16.mxu0 0
        %1884 = vmatpush1.bf16.msra.mxu0 0
        %1885 = vmatprep.subr.bf16.mxu0 0
        %1886 = vmatpush1.bf16.msra.mxu0 0
        %1887 = vmatprep.subr.bf16.mxu0 0
        %1888 = vmatpush1.bf16.msra.mxu0 0
        %1889 = vmatprep.subr.bf16.mxu0 0
        %1890 = vmatpush1.bf16.msra.mxu0 0
        %1891 = vmatprep.subr.bf16.mxu0 0
        %1892 = vmatpush1.bf16.msra.mxu0 0
        %1893 = vmatprep.subr.bf16.mxu0 0
        %1894 = vmatpush1.bf16.msra.mxu0 %v1866
        %1895 = vmatprep.subr.bf16.mxu0 0
        %1896 = vmatpush2.bf16.msra.mxu0 0
        %1897 = vmatprep.subr.bf16.mxu0 0
        %1898 = vmatpush2.bf16.msra.mxu0 0
        %1899 = vmatprep.subr.bf16.mxu0 0
        %1900 = vmatpush2.bf16.msra.mxu0 0
        %1901 = vmatprep.subr.bf16.mxu0 0
        %1902 = vmatpush2.bf16.msra.mxu0 0
        %1903 = vmatprep.subr.bf16.mxu0 0
        %1904 = vmatpush2.bf16.msra.mxu0 0
        %1905 = vmatprep.subr.bf16.mxu0 0
        %1906 = vmatpush2.bf16.msra.mxu0 0
        %1907 = vmatprep.subr.bf16.mxu0 0
        %1908 = vmatpush2.bf16.msra.mxu0 0
        %1909 = vmatprep.subr.bf16.mxu0 0
        %1910 = vmatpush2.bf16.msra.mxu0 0
        %1911 = vmatprep.mubr.bf16.mxu0 0
        %1912 = vmatmul.mubr.bf16.gmra.mxu0 %v1868
        %v1913 = vpop.f32.mrf.mxu0
        %v1914 = vadd.f32 0.0, %v1913
        %v1915 = vpop.f32.mrf.mxu0
        %v1916 = vpop.f32.mrf.mxu0
        %v1917 = vadd.f32 0.0, %v1916
        %v1918 = vpop.f32.mrf.mxu0
        %1919 = vmatprep.mubr.bf16.mxu0 0
        %1920 = vmatmul.mubr.bf16.gmra.mxu0 %v1871
        %v1921 = vpop.f32.mrf.mxu0
        %v1922 = vadd.f32 0.0, %v1921
        %v1923 = vpop.f32.mrf.mxu0
        %v1924 = vpop.f32.mrf.mxu0
        %v1925 = vadd.f32 0.0, %v1924
        %v1926 = vpop.f32.mrf.mxu0
        %1927 = vmatprep.mubr.bf16.mxu0 0
        %1928 = vmatmul.mubr.bf16.gmra.mxu0 %v1874
        %v1929 = vpop.f32.mrf.mxu0
        %v1930 = vadd.f32 0.0, %v1929
        %v1931 = vpop.f32.mrf.mxu0
        %v1932 = vpop.f32.mrf.mxu0
        %v1933 = vadd.f32 0.0, %v1932
        %v1934 = vpop.f32.mrf.mxu0
        %1935 = vmatprep.mubr.bf16.mxu0 0
        %1936 = vmatmul.mubr.bf16.gmra.mxu0 %v1877
        %v1937 = vpop.f32.mrf.mxu0
        %v1938 = vadd.f32 0.0, %v1937
        %v1939 = vpop.f32.mrf.mxu0
        %v1940 = vpop.f32.mrf.mxu0
        %v1941 = vadd.f32 0.0, %v1940
        %v1942 = vpop.f32.mrf.mxu0
        %1943 = vdwg.mxu0
        %v1944 = vpack.c.bf16 %v1917, %v1914
        %v1945 = vpack.c.bf16 %v1925, %v1922
        %v1946 = vpack.c.bf16 %v1933, %v1930
        %v1947 = vpack.c.bf16 %v1941, %v1938
        %v1948 = vld [vmem:[%s7] sm:$0xf]
        %v1949 = vld [vmem:[%s7 + $0x4] sm:$0xf]
        %vm1950 = vcmp.eq.s32.totalorder %v1860, 1
        %vm1951 = vcmp.eq.s32.totalorder %v1861, 1
        %v1952 = vsel %vm1950, 1.0, 0.0
        %v1953 = vsel %vm1951, 1.0, 0.0
        %v1954 = vpack.c.bf16 %v1953, %v1952
        %1955 = vmatprep.subr.bf16.mxu0 0
        %1956 = vmatpush1.bf16.msra.mxu0 0
        %1957 = vmatprep.subr.bf16.mxu0 0
        %1958 = vmatpush1.bf16.msra.mxu0 0
        %1959 = vmatprep.subr.bf16.mxu0 0
        %1960 = vmatpush1.bf16.msra.mxu0 0
        %1961 = vmatprep.subr.bf16.mxu0 0
        %1962 = vmatpush1.bf16.msra.mxu0 0
        %1963 = vmatprep.subr.bf16.mxu0 0
        %1964 = vmatpush1.bf16.msra.mxu0 0
        %1965 = vmatprep.subr.bf16.mxu0 0
        %1966 = vmatpush1.bf16.msra.mxu0 0
        %1967 = vmatprep.subr.bf16.mxu0 0
        %1968 = vmatpush1.bf16.msra.mxu0 0
        %1969 = vmatprep.subr.bf16.mxu0 0
        %1970 = vmatpush1.bf16.msra.mxu0 %v1954
        %1971 = vmatprep.subr.bf16.mxu0 0
        %1972 = vmatpush2.bf16.msra.mxu0 0
        %1973 = vmatprep.subr.bf16.mxu0 0
        %1974 = vmatpush2.bf16.msra.mxu0 0
        %1975 = vmatprep.subr.bf16.mxu0 0
        %1976 = vmatpush2.bf16.msra.mxu0 0
        %1977 = vmatprep.subr.bf16.mxu0 0
        %1978 = vmatpush2.bf16.msra.mxu0 0
        %1979 = vmatprep.subr.bf16.mxu0 0
        %1980 = vmatpush2.bf16.msra.mxu0 0
        %1981 = vmatprep.subr.bf16.mxu0 0
        %1982 = vmatpush2.bf16.msra.mxu0 0
        %1983 = vmatprep.subr.bf16.mxu0 0
        %1984 = vmatpush2.bf16.msra.mxu0 0
        %1985 = vmatprep.subr.bf16.mxu0 0
        %1986 = vmatpush2.bf16.msra.mxu0 0
        %1987 = vmatprep.mubr.bf16.mxu0 0
        %1988 = vmatmul.mubr.bf16.gmra.mxu0 %v1868
        %v1989 = vpop.f32.mrf.mxu0
        %v1990 = vadd.f32 0.0, %v1989
        %v1991 = vpop.f32.mrf.mxu0
        %v1992 = vpop.f32.mrf.mxu0
        %v1993 = vadd.f32 0.0, %v1992
        %v1994 = vpop.f32.mrf.mxu0
        %1995 = vmatprep.mubr.bf16.mxu0 0
        %1996 = vmatmul.mubr.bf16.gmra.mxu0 %v1871
        %v1997 = vpop.f32.mrf.mxu0
        %v1998 = vadd.f32 0.0, %v1997
        %v1999 = vpop.f32.mrf.mxu0
        %v2000 = vpop.f32.mrf.mxu0
        %v2001 = vadd.f32 0.0, %v2000
        %v2002 = vpop.f32.mrf.mxu0
        %2003 = vmatprep.mubr.bf16.mxu0 0
        %2004 = vmatmul.mubr.bf16.gmra.mxu0 %v1874
        %v2005 = vpop.f32.mrf.mxu0
        %v2006 = vadd.f32 0.0, %v2005
        %v2007 = vpop.f32.mrf.mxu0
        %v2008 = vpop.f32.mrf.mxu0
        %v2009 = vadd.f32 0.0, %v2008
        %v2010 = vpop.f32.mrf.mxu0
        %2011 = vmatprep.mubr.bf16.mxu0 0
        %2012 = vmatmul.mubr.bf16.gmra.mxu0 %v1877
        %v2013 = vpop.f32.mrf.mxu0
        %v2014 = vadd.f32 0.0, %v2013
        %v2015 = vpop.f32.mrf.mxu0
        %v2016 = vpop.f32.mrf.mxu0
        %v2017 = vadd.f32 0.0, %v2016
        %v2018 = vpop.f32.mrf.mxu0
        %2019 = vdwg.mxu0
        %v2020 = vpack.c.bf16 %v1993, %v1990
        %v2021 = vpack.c.bf16 %v2001, %v1998
        %v2022 = vpack.c.bf16 %v2009, %v2006
        %v2023 = vpack.c.bf16 %v2017, %v2014
        %s2024 = scalar_lea.vmem %s7, 8
        %v2025 = vld [vmem:[%s2024] sm:$0xf]
        %v2026 = vld [vmem:[%s2024 + $0x4] sm:$0xf]
        %v2029 = vunpack.c.l.b16 %v2025
        %v2030 = vunpack.c.l.b16 %v2026
        %v2031 = vpack.c.b16 %v2030, %v2029
        %v2033 = vsel %vm928, %v2031, 0
        %2035 = vmatprep.subr.bf16.mxu0 0
        %2036 = vmatpush1.bf16.msra.mxu0 0
        %2037 = vmatprep.subr.bf16.mxu0 0
        %2038 = vmatpush1.bf16.msra.mxu0 0
        %2039 = vmatprep.subr.bf16.mxu0 0
        %2040 = vmatpush1.bf16.msra.mxu0 0
        %2041 = vmatprep.subr.bf16.mxu0 0
        %2042 = vmatpush1.bf16.msra.mxu0 0
        %2043 = vmatprep.subr.bf16.mxu0 0
        %2044 = vmatpush1.bf16.msra.mxu0 %v2023
        %2045 = vmatprep.subr.bf16.mxu0 0
        %2046 = vmatpush1.bf16.msra.mxu0 %v2022
        %2047 = vmatprep.subr.bf16.mxu0 0
        %2048 = vmatpush1.bf16.msra.mxu0 %v2021
        %2049 = vmatprep.subr.bf16.mxu0 0
        %2050 = vmatpush1.bf16.msra.mxu0 %v2020
        %2051 = vmatprep.subr.bf16.mxu0 0
        %2052 = vmatpush2.bf16.msra.mxu0 0
        %2053 = vmatprep.subr.bf16.mxu0 0
        %2054 = vmatpush2.bf16.msra.mxu0 0
        %2055 = vmatprep.subr.bf16.mxu0 0
        %2056 = vmatpush2.bf16.msra.mxu0 0
        %2057 = vmatprep.subr.bf16.mxu0 0
        %2058 = vmatpush2.bf16.msra.mxu0 0
        %2059 = vmatprep.subr.bf16.mxu0 0
        %2060 = vmatpush2.bf16.msra.mxu0 0
        %2061 = vmatprep.subr.bf16.mxu0 0
        %2062 = vmatpush2.bf16.msra.mxu0 0
        %2063 = vmatprep.subr.bf16.mxu0 0
        %2064 = vmatpush2.bf16.msra.mxu0 0
        %2065 = vmatprep.subr.bf16.mxu0 0
        %2066 = vmatpush2.bf16.msra.mxu0 0
        %2067 = vmatprep.mubr.bf16.mxu0 0
        %2068 = vmatmul.mubr.bf16.gmra.mxu0 %v2033
        %v2069 = vpop.f32.mrf.mxu0
        %v2070 = vadd.f32 0.0, %v2069
        %v2071 = vpop.f32.mrf.mxu0
        %v2072 = vpop.f32.mrf.mxu0
        %v2073 = vadd.f32 0.0, %v2072
        %v2074 = vpop.f32.mrf.mxu0
        %2075 = vdwg.mxu0
        %v2078 = vunpack.c.l.b16 %v1948
        %v2079 = vunpack.c.l.b16 %v1949
        %v2080 = vpack.c.b16 %v2079, %v2078
        %v2082 = vsel %vm928, %v2080, 0
        %2084 = vmatprep.subr.bf16.mxu0 0
        %2085 = vmatpush1.bf16.msra.mxu0 0
        %2086 = vmatprep.subr.bf16.mxu0 0
        %2087 = vmatpush1.bf16.msra.mxu0 0
        %2088 = vmatprep.subr.bf16.mxu0 0
        %2089 = vmatpush1.bf16.msra.mxu0 0
        %2090 = vmatprep.subr.bf16.mxu0 0
        %2091 = vmatpush1.bf16.msra.mxu0 0
        %2092 = vmatprep.subr.bf16.mxu0 0
        %2093 = vmatpush1.bf16.msra.mxu0 %v1947
        %2094 = vmatprep.subr.bf16.mxu0 0
        %2095 = vmatpush1.bf16.msra.mxu0 %v1946
        %2096 = vmatprep.subr.bf16.mxu0 0
        %2097 = vmatpush1.bf16.msra.mxu0 %v1945
        %2098 = vmatprep.subr.bf16.mxu0 0
        %2099 = vmatpush1.bf16.msra.mxu0 %v1944
        %2100 = vmatprep.subr.bf16.mxu0 0
        %2101 = vmatpush2.bf16.msra.mxu0 0
        %2102 = vmatprep.subr.bf16.mxu0 0
        %2103 = vmatpush2.bf16.msra.mxu0 0
        %2104 = vmatprep.subr.bf16.mxu0 0
        %2105 = vmatpush2.bf16.msra.mxu0 0
        %2106 = vmatprep.subr.bf16.mxu0 0
        %2107 = vmatpush2.bf16.msra.mxu0 0
        %2108 = vmatprep.subr.bf16.mxu0 0
        %2109 = vmatpush2.bf16.msra.mxu0 0
        %2110 = vmatprep.subr.bf16.mxu0 0
        %2111 = vmatpush2.bf16.msra.mxu0 0
        %2112 = vmatprep.subr.bf16.mxu0 0
        %2113 = vmatpush2.bf16.msra.mxu0 0
        %2114 = vmatprep.subr.bf16.mxu0 0
        %2115 = vmatpush2.bf16.msra.mxu0 0
        %2116 = vmatprep.mubr.bf16.mxu0 0
        %2117 = vmatmul.mubr.bf16.gmra.mxu0 %v2082
        %v2118 = vpop.f32.mrf.mxu0
        %v2119 = vadd.f32 %v2070, %v2118
        %v2120 = vpop.f32.mrf.mxu0
        %v2121 = vpop.f32.mrf.mxu0
        %v2122 = vadd.f32 %v2073, %v2121
        %v2123 = vpop.f32.mrf.mxu0
        %2124 = vdwg.mxu0
        %vm2125 = vcmp.eq.s32.totalorder %v1860, 2
        %vm2126 = vcmp.eq.s32.totalorder %v1861, 2
        %v2127 = vsel %vm2125, 1.0, 0.0
        %v2128 = vsel %vm2126, 1.0, 0.0
        %v2129 = vpack.c.bf16 %v2128, %v2127
        %2130 = vmatprep.subr.bf16.mxu0 0
        %2131 = vmatpush1.bf16.msra.mxu0 0
        %2132 = vmatprep.subr.bf16.mxu0 0
        %2133 = vmatpush1.bf16.msra.mxu0 0
        %2134 = vmatprep.subr.bf16.mxu0 0
        %2135 = vmatpush1.bf16.msra.mxu0 0
        %2136 = vmatprep.subr.bf16.mxu0 0
        %2137 = vmatpush1.bf16.msra.mxu0 0
        %2138 = vmatprep.subr.bf16.mxu0 0
        %2139 = vmatpush1.bf16.msra.mxu0 0
        %2140 = vmatprep.subr.bf16.mxu0 0
        %2141 = vmatpush1.bf16.msra.mxu0 0
        %2142 = vmatprep.subr.bf16.mxu0 0
        %2143 = vmatpush1.bf16.msra.mxu0 0
        %2144 = vmatprep.subr.bf16.mxu0 0
        %2145 = vmatpush1.bf16.msra.mxu0 %v2129
        %2146 = vmatprep.subr.bf16.mxu0 0
        %2147 = vmatpush2.bf16.msra.mxu0 0
        %2148 = vmatprep.subr.bf16.mxu0 0
        %2149 = vmatpush2.bf16.msra.mxu0 0
        %2150 = vmatprep.subr.bf16.mxu0 0
        %2151 = vmatpush2.bf16.msra.mxu0 0
        %2152 = vmatprep.subr.bf16.mxu0 0
        %2153 = vmatpush2.bf16.msra.mxu0 0
        %2154 = vmatprep.subr.bf16.mxu0 0
        %2155 = vmatpush2.bf16.msra.mxu0 0
        %2156 = vmatprep.subr.bf16.mxu0 0
        %2157 = vmatpush2.bf16.msra.mxu0 0
        %2158 = vmatprep.subr.bf16.mxu0 0
        %2159 = vmatpush2.bf16.msra.mxu0 0
        %2160 = vmatprep.subr.bf16.mxu0 0
        %2161 = vmatpush2.bf16.msra.mxu0 0
        %2162 = vmatprep.mubr.bf16.mxu0 0
        %2163 = vmatmul.mubr.bf16.gmra.mxu0 %v1868
        %v2164 = vpop.f32.mrf.mxu0
        %v2165 = vadd.f32 0.0, %v2164
        %v2166 = vpop.f32.mrf.mxu0
        %v2167 = vpop.f32.mrf.mxu0
        %v2168 = vadd.f32 0.0, %v2167
        %v2169 = vpop.f32.mrf.mxu0
        %2170 = vmatprep.mubr.bf16.mxu0 0
        %2171 = vmatmul.mubr.bf16.gmra.mxu0 %v1871
        %v2172 = vpop.f32.mrf.mxu0
        %v2173 = vadd.f32 0.0, %v2172
        %v2174 = vpop.f32.mrf.mxu0
        %v2175 = vpop.f32.mrf.mxu0
        %v2176 = vadd.f32 0.0, %v2175
        %v2177 = vpop.f32.mrf.mxu0
        %2178 = vmatprep.mubr.bf16.mxu0 0
        %2179 = vmatmul.mubr.bf16.gmra.mxu0 %v1874
        %v2180 = vpop.f32.mrf.mxu0
        %v2181 = vadd.f32 0.0, %v2180
        %v2182 = vpop.f32.mrf.mxu0
        %v2183 = vpop.f32.mrf.mxu0
        %v2184 = vadd.f32 0.0, %v2183
        %v2185 = vpop.f32.mrf.mxu0
        %2186 = vmatprep.mubr.bf16.mxu0 0
        %2187 = vmatmul.mubr.bf16.gmra.mxu0 %v1877
        %v2188 = vpop.f32.mrf.mxu0
        %v2189 = vadd.f32 0.0, %v2188
        %v2190 = vpop.f32.mrf.mxu0
        %v2191 = vpop.f32.mrf.mxu0
        %v2192 = vadd.f32 0.0, %v2191
        %v2193 = vpop.f32.mrf.mxu0
        %2194 = vdwg.mxu0
        %v2195 = vpack.c.bf16 %v2168, %v2165
        %v2196 = vpack.c.bf16 %v2176, %v2173
        %v2197 = vpack.c.bf16 %v2184, %v2181
        %v2198 = vpack.c.bf16 %v2192, %v2189
        %s2199 = scalar_lea.vmem %s7, 16
        %v2200 = vld [vmem:[%s2199] sm:$0xf]
        %v2201 = vld [vmem:[%s2199 + $0x4] sm:$0xf]
        %v2204 = vunpack.c.l.b16 %v2200
        %v2205 = vunpack.c.l.b16 %v2201
        %v2206 = vpack.c.b16 %v2205, %v2204
        %v2208 = vsel %vm928, %v2206, 0
        %2210 = vmatprep.subr.bf16.mxu0 0
        %2211 = vmatpush1.bf16.msra.mxu0 0
        %2212 = vmatprep.subr.bf16.mxu0 0
        %2213 = vmatpush1.bf16.msra.mxu0 0
        %2214 = vmatprep.subr.bf16.mxu0 0
        %2215 = vmatpush1.bf16.msra.mxu0 0
        %2216 = vmatprep.subr.bf16.mxu0 0
        %2217 = vmatpush1.bf16.msra.mxu0 0
        %2218 = vmatprep.subr.bf16.mxu0 0
        %2219 = vmatpush1.bf16.msra.mxu0 %v2198
        %2220 = vmatprep.subr.bf16.mxu0 0
        %2221 = vmatpush1.bf16.msra.mxu0 %v2197
        %2222 = vmatprep.subr.bf16.mxu0 0
        %2223 = vmatpush1.bf16.msra.mxu0 %v2196
        %2224 = vmatprep.subr.bf16.mxu0 0
        %2225 = vmatpush1.bf16.msra.mxu0 %v2195
        %2226 = vmatprep.subr.bf16.mxu0 0
        %2227 = vmatpush2.bf16.msra.mxu0 0
        %2228 = vmatprep.subr.bf16.mxu0 0
        %2229 = vmatpush2.bf16.msra.mxu0 0
        %2230 = vmatprep.subr.bf16.mxu0 0
        %2231 = vmatpush2.bf16.msra.mxu0 0
        %2232 = vmatprep.subr.bf16.mxu0 0
        %2233 = vmatpush2.bf16.msra.mxu0 0
        %2234 = vmatprep.subr.bf16.mxu0 0
        %2235 = vmatpush2.bf16.msra.mxu0 0
        %2236 = vmatprep.subr.bf16.mxu0 0
        %2237 = vmatpush2.bf16.msra.mxu0 0
        %2238 = vmatprep.subr.bf16.mxu0 0
        %2239 = vmatpush2.bf16.msra.mxu0 0
        %2240 = vmatprep.subr.bf16.mxu0 0
        %2241 = vmatpush2.bf16.msra.mxu0 0
        %2242 = vmatprep.mubr.bf16.mxu0 0
        %2243 = vmatmul.mubr.bf16.gmra.mxu0 %v2208
        %v2244 = vpop.f32.mrf.mxu0
        %v2245 = vadd.f32 0.0, %v2244
        %v2246 = vpop.f32.mrf.mxu0
        %v2247 = vpop.f32.mrf.mxu0
        %v2248 = vadd.f32 0.0, %v2247
        %v2249 = vpop.f32.mrf.mxu0
        %2250 = vdwg.mxu0
        %v2251 = vadd.f32 %v2119, %v2245
        %v2252 = vadd.f32 %v2122, %v2248
        %vm2253 = vcmp.eq.s32.totalorder %v1860, 3
        %vm2254 = vcmp.eq.s32.totalorder %v1861, 3
        %v2255 = vsel %vm2253, 1.0, 0.0
        %v2256 = vsel %vm2254, 1.0, 0.0
        %v2257 = vpack.c.bf16 %v2256, %v2255
        %2258 = vmatprep.subr.bf16.mxu0 0
        %2259 = vmatpush1.bf16.msra.mxu0 0
        %2260 = vmatprep.subr.bf16.mxu0 0
        %2261 = vmatpush1.bf16.msra.mxu0 0
        %2262 = vmatprep.subr.bf16.mxu0 0
        %2263 = vmatpush1.bf16.msra.mxu0 0
        %2264 = vmatprep.subr.bf16.mxu0 0
        %2265 = vmatpush1.bf16.msra.mxu0 0
        %2266 = vmatprep.subr.bf16.mxu0 0
        %2267 = vmatpush1.bf16.msra.mxu0 0
        %2268 = vmatprep.subr.bf16.mxu0 0
        %2269 = vmatpush1.bf16.msra.mxu0 0
        %2270 = vmatprep.subr.bf16.mxu0 0
        %2271 = vmatpush1.bf16.msra.mxu0 0
        %2272 = vmatprep.subr.bf16.mxu0 0
        %2273 = vmatpush1.bf16.msra.mxu0 %v2257
        %2274 = vmatprep.subr.bf16.mxu0 0
        %2275 = vmatpush2.bf16.msra.mxu0 0
        %2276 = vmatprep.subr.bf16.mxu0 0
        %2277 = vmatpush2.bf16.msra.mxu0 0
        %2278 = vmatprep.subr.bf16.mxu0 0
        %2279 = vmatpush2.bf16.msra.mxu0 0
        %2280 = vmatprep.subr.bf16.mxu0 0
        %2281 = vmatpush2.bf16.msra.mxu0 0
        %2282 = vmatprep.subr.bf16.mxu0 0
        %2283 = vmatpush2.bf16.msra.mxu0 0
        %2284 = vmatprep.subr.bf16.mxu0 0
        %2285 = vmatpush2.bf16.msra.mxu0 0
        %2286 = vmatprep.subr.bf16.mxu0 0
        %2287 = vmatpush2.bf16.msra.mxu0 0
        %2288 = vmatprep.subr.bf16.mxu0 0
        %2289 = vmatpush2.bf16.msra.mxu0 0
        %2290 = vmatprep.mubr.bf16.mxu0 0
        %2291 = vmatmul.mubr.bf16.gmra.mxu0 %v1868
        %v2292 = vpop.f32.mrf.mxu0
        %v2293 = vadd.f32 0.0, %v2292
        %v2294 = vpop.f32.mrf.mxu0
        %v2295 = vpop.f32.mrf.mxu0
        %v2296 = vadd.f32 0.0, %v2295
        %v2297 = vpop.f32.mrf.mxu0
        %2298 = vmatprep.mubr.bf16.mxu0 0
        %2299 = vmatmul.mubr.bf16.gmra.mxu0 %v1871
        %v2300 = vpop.f32.mrf.mxu0
        %v2301 = vadd.f32 0.0, %v2300
        %v2302 = vpop.f32.mrf.mxu0
        %v2303 = vpop.f32.mrf.mxu0
        %v2304 = vadd.f32 0.0, %v2303
        %v2305 = vpop.f32.mrf.mxu0
        %2306 = vmatprep.mubr.bf16.mxu0 0
        %2307 = vmatmul.mubr.bf16.gmra.mxu0 %v1874
        %v2308 = vpop.f32.mrf.mxu0
        %v2309 = vadd.f32 0.0, %v2308
        %v2310 = vpop.f32.mrf.mxu0
        %v2311 = vpop.f32.mrf.mxu0
        %v2312 = vadd.f32 0.0, %v2311
        %v2313 = vpop.f32.mrf.mxu0
        %2314 = vmatprep.mubr.bf16.mxu0 0
        %2315 = vmatmul.mubr.bf16.gmra.mxu0 %v1877
        %v2316 = vpop.f32.mrf.mxu0
        %v2317 = vadd.f32 0.0, %v2316
        %v2318 = vpop.f32.mrf.mxu0
        %v2319 = vpop.f32.mrf.mxu0
        %v2320 = vadd.f32 0.0, %v2319
        %v2321 = vpop.f32.mrf.mxu0
        %2322 = vdwg.mxu0
        %v2323 = vpack.c.bf16 %v2296, %v2293
        %v2324 = vpack.c.bf16 %v2304, %v2301
        %v2325 = vpack.c.bf16 %v2312, %v2309
        %v2326 = vpack.c.bf16 %v2320, %v2317
        %s2327 = scalar_lea.vmem %s7, 24
        %v2328 = vld [vmem:[%s2327] sm:$0xf]
        %v2329 = vld [vmem:[%s2327 + $0x4] sm:$0xf]
        %v2332 = vunpack.c.l.b16 %v2328
        %v2333 = vunpack.c.l.b16 %v2329
        %v2334 = vpack.c.b16 %v2333, %v2332
        %v2336 = vsel %vm928, %v2334, 0
        %2338 = vmatprep.subr.bf16.mxu0 0
        %2339 = vmatpush1.bf16.msra.mxu0 0
        %2340 = vmatprep.subr.bf16.mxu0 0
        %2341 = vmatpush1.bf16.msra.mxu0 0
        %2342 = vmatprep.subr.bf16.mxu0 0
        %2343 = vmatpush1.bf16.msra.mxu0 0
        %2344 = vmatprep.subr.bf16.mxu0 0
        %2345 = vmatpush1.bf16.msra.mxu0 0
        %2346 = vmatprep.subr.bf16.mxu0 0
        %2347 = vmatpush1.bf16.msra.mxu0 %v2326
        %2348 = vmatprep.subr.bf16.mxu0 0
        %2349 = vmatpush1.bf16.msra.mxu0 %v2325
        %2350 = vmatprep.subr.bf16.mxu0 0
        %2351 = vmatpush1.bf16.msra.mxu0 %v2324
        %2352 = vmatprep.subr.bf16.mxu0 0
        %2353 = vmatpush1.bf16.msra.mxu0 %v2323
        %2354 = vmatprep.subr.bf16.mxu0 0
        %2355 = vmatpush2.bf16.msra.mxu0 0
        %2356 = vmatprep.subr.bf16.mxu0 0
        %2357 = vmatpush2.bf16.msra.mxu0 0
        %2358 = vmatprep.subr.bf16.mxu0 0
        %2359 = vmatpush2.bf16.msra.mxu0 0
        %2360 = vmatprep.subr.bf16.mxu0 0
        %2361 = vmatpush2.bf16.msra.mxu0 0
        %2362 = vmatprep.subr.bf16.mxu0 0
        %2363 = vmatpush2.bf16.msra.mxu0 0
        %2364 = vmatprep.subr.bf16.mxu0 0
        %2365 = vmatpush2.bf16.msra.mxu0 0
        %2366 = vmatprep.subr.bf16.mxu0 0
        %2367 = vmatpush2.bf16.msra.mxu0 0
        %2368 = vmatprep.subr.bf16.mxu0 0
        %2369 = vmatpush2.bf16.msra.mxu0 0
        %2370 = vmatprep.mubr.bf16.mxu0 0
        %2371 = vmatmul.mubr.bf16.gmra.mxu0 %v2336
        %v2372 = vpop.f32.mrf.mxu0
        %v2373 = vadd.f32 0.0, %v2372
        %v2374 = vpop.f32.mrf.mxu0
        %v2375 = vpop.f32.mrf.mxu0
        %v2376 = vadd.f32 0.0, %v2375
        %v2377 = vpop.f32.mrf.mxu0
        %2378 = vdwg.mxu0
        %v2379 = vadd.f32 %v2251, %v2373
        %v2380 = vadd.f32 %v2252, %v2376
        %vm2381 = vcmp.eq.s32.totalorder %v1860, 4
        %vm2382 = vcmp.eq.s32.totalorder %v1861, 4
        %v2383 = vsel %vm2381, 1.0, 0.0
        %v2384 = vsel %vm2382, 1.0, 0.0
        %v2385 = vpack.c.bf16 %v2384, %v2383
        %2386 = vmatprep.subr.bf16.mxu0 0
        %2387 = vmatpush1.bf16.msra.mxu0 0
        %2388 = vmatprep.subr.bf16.mxu0 0
        %2389 = vmatpush1.bf16.msra.mxu0 0
        %2390 = vmatprep.subr.bf16.mxu0 0
        %2391 = vmatpush1.bf16.msra.mxu0 0
        %2392 = vmatprep.subr.bf16.mxu0 0
        %2393 = vmatpush1.bf16.msra.mxu0 0
        %2394 = vmatprep.subr.bf16.mxu0 0
        %2395 = vmatpush1.bf16.msra.mxu0 0
        %2396 = vmatprep.subr.bf16.mxu0 0
        %2397 = vmatpush1.bf16.msra.mxu0 0
        %2398 = vmatprep.subr.bf16.mxu0 0
        %2399 = vmatpush1.bf16.msra.mxu0 0
        %2400 = vmatprep.subr.bf16.mxu0 0
        %2401 = vmatpush1.bf16.msra.mxu0 %v2385
        %2402 = vmatprep.subr.bf16.mxu0 0
        %2403 = vmatpush2.bf16.msra.mxu0 0
        %2404 = vmatprep.subr.bf16.mxu0 0
        %2405 = vmatpush2.bf16.msra.mxu0 0
        %2406 = vmatprep.subr.bf16.mxu0 0
        %2407 = vmatpush2.bf16.msra.mxu0 0
        %2408 = vmatprep.subr.bf16.mxu0 0
        %2409 = vmatpush2.bf16.msra.mxu0 0
        %2410 = vmatprep.subr.bf16.mxu0 0
        %2411 = vmatpush2.bf16.msra.mxu0 0
        %2412 = vmatprep.subr.bf16.mxu0 0
        %2413 = vmatpush2.bf16.msra.mxu0 0
        %2414 = vmatprep.subr.bf16.mxu0 0
        %2415 = vmatpush2.bf16.msra.mxu0 0
        %2416 = vmatprep.subr.bf16.mxu0 0
        %2417 = vmatpush2.bf16.msra.mxu0 0
        %2418 = vmatprep.mubr.bf16.mxu0 0
        %2419 = vmatmul.mubr.bf16.gmra.mxu0 %v1868
        %v2420 = vpop.f32.mrf.mxu0
        %v2421 = vadd.f32 0.0, %v2420
        %v2422 = vpop.f32.mrf.mxu0
        %v2423 = vpop.f32.mrf.mxu0
        %v2424 = vadd.f32 0.0, %v2423
        %v2425 = vpop.f32.mrf.mxu0
        %2426 = vmatprep.mubr.bf16.mxu0 0
        %2427 = vmatmul.mubr.bf16.gmra.mxu0 %v1871
        %v2428 = vpop.f32.mrf.mxu0
        %v2429 = vadd.f32 0.0, %v2428
        %v2430 = vpop.f32.mrf.mxu0
        %v2431 = vpop.f32.mrf.mxu0
        %v2432 = vadd.f32 0.0, %v2431
        %v2433 = vpop.f32.mrf.mxu0
        %2434 = vmatprep.mubr.bf16.mxu0 0
        %2435 = vmatmul.mubr.bf16.gmra.mxu0 %v1874
        %v2436 = vpop.f32.mrf.mxu0
        %v2437 = vadd.f32 0.0, %v2436
        %v2438 = vpop.f32.mrf.mxu0
        %v2439 = vpop.f32.mrf.mxu0
        %v2440 = vadd.f32 0.0, %v2439
        %v2441 = vpop.f32.mrf.mxu0
        %2442 = vmatprep.mubr.bf16.mxu0 0
        %2443 = vmatmul.mubr.bf16.gmra.mxu0 %v1877
        %v2444 = vpop.f32.mrf.mxu0
        %v2445 = vadd.f32 0.0, %v2444
        %v2446 = vpop.f32.mrf.mxu0
        %v2447 = vpop.f32.mrf.mxu0
        %v2448 = vadd.f32 0.0, %v2447
        %v2449 = vpop.f32.mrf.mxu0
        %2450 = vdwg.mxu0
        %v2451 = vpack.c.bf16 %v2424, %v2421
        %v2452 = vpack.c.bf16 %v2432, %v2429
        %v2453 = vpack.c.bf16 %v2440, %v2437
        %v2454 = vpack.c.bf16 %v2448, %v2445
        %s2455 = scalar_lea.vmem %s7, 32
        %v2456 = vld [vmem:[%s2455] sm:$0xf]
        %v2457 = vld [vmem:[%s2455 + $0x4] sm:$0xf]
        %v2460 = vunpack.c.l.b16 %v2456
        %v2461 = vunpack.c.l.b16 %v2457
        %v2462 = vpack.c.b16 %v2461, %v2460
        %v2464 = vsel %vm928, %v2462, 0
        %2466 = vmatprep.subr.bf16.mxu0 0
        %2467 = vmatpush1.bf16.msra.mxu0 0
        %2468 = vmatprep.subr.bf16.mxu0 0
        %2469 = vmatpush1.bf16.msra.mxu0 0
        %2470 = vmatprep.subr.bf16.mxu0 0
        %2471 = vmatpush1.bf16.msra.mxu0 0
        %2472 = vmatprep.subr.bf16.mxu0 0
        %2473 = vmatpush1.bf16.msra.mxu0 0
        %2474 = vmatprep.subr.bf16.mxu0 0
        %2475 = vmatpush1.bf16.msra.mxu0 %v2454
        %2476 = vmatprep.subr.bf16.mxu0 0
        %2477 = vmatpush1.bf16.msra.mxu0 %v2453
        %2478 = vmatprep.subr.bf16.mxu0 0
        %2479 = vmatpush1.bf16.msra.mxu0 %v2452
        %2480 = vmatprep.subr.bf16.mxu0 0
        %2481 = vmatpush1.bf16.msra.mxu0 %v2451
        %2482 = vmatprep.subr.bf16.mxu0 0
        %2483 = vmatpush2.bf16.msra.mxu0 0
        %2484 = vmatprep.subr.bf16.mxu0 0
        %2485 = vmatpush2.bf16.msra.mxu0 0
        %2486 = vmatprep.subr.bf16.mxu0 0
        %2487 = vmatpush2.bf16.msra.mxu0 0
        %2488 = vmatprep.subr.bf16.mxu0 0
        %2489 = vmatpush2.bf16.msra.mxu0 0
        %2490 = vmatprep.subr.bf16.mxu0 0
        %2491 = vmatpush2.bf16.msra.mxu0 0
        %2492 = vmatprep.subr.bf16.mxu0 0
        %2493 = vmatpush2.bf16.msra.mxu0 0
        %2494 = vmatprep.subr.bf16.mxu0 0
        %2495 = vmatpush2.bf16.msra.mxu0 0
        %2496 = vmatprep.subr.bf16.mxu0 0
        %2497 = vmatpush2.bf16.msra.mxu0 0
        %2498 = vmatprep.mubr.bf16.mxu0 0
        %2499 = vmatmul.mubr.bf16.gmra.mxu0 %v2464
        %v2500 = vpop.f32.mrf.mxu0
        %v2501 = vadd.f32 0.0, %v2500
        %v2502 = vpop.f32.mrf.mxu0
        %v2503 = vpop.f32.mrf.mxu0
        %v2504 = vadd.f32 0.0, %v2503
        %v2505 = vpop.f32.mrf.mxu0
        %2506 = vdwg.mxu0
        %v2507 = vadd.f32 %v2379, %v2501
        %v2508 = vadd.f32 %v2380, %v2504
        %vm2509 = vcmp.eq.s32.totalorder %v1860, 5
        %vm2510 = vcmp.eq.s32.totalorder %v1861, 5
        %v2511 = vsel %vm2509, 1.0, 0.0
        %v2512 = vsel %vm2510, 1.0, 0.0
        %v2513 = vpack.c.bf16 %v2512, %v2511
        %2514 = vmatprep.subr.bf16.mxu0 0
        %2515 = vmatpush1.bf16.msra.mxu0 0
        %2516 = vmatprep.subr.bf16.mxu0 0
        %2517 = vmatpush1.bf16.msra.mxu0 0
        %2518 = vmatprep.subr.bf16.mxu0 0
        %2519 = vmatpush1.bf16.msra.mxu0 0
        %2520 = vmatprep.subr.bf16.mxu0 0
        %2521 = vmatpush1.bf16.msra.mxu0 0
        %2522 = vmatprep.subr.bf16.mxu0 0
        %2523 = vmatpush1.bf16.msra.mxu0 0
        %2524 = vmatprep.subr.bf16.mxu0 0
        %2525 = vmatpush1.bf16.msra.mxu0 0
        %2526 = vmatprep.subr.bf16.mxu0 0
        %2527 = vmatpush1.bf16.msra.mxu0 0
        %2528 = vmatprep.subr.bf16.mxu0 0
        %2529 = vmatpush1.bf16.msra.mxu0 %v2513
        %2530 = vmatprep.subr.bf16.mxu0 0
        %2531 = vmatpush2.bf16.msra.mxu0 0
        %2532 = vmatprep.subr.bf16.mxu0 0
        %2533 = vmatpush2.bf16.msra.mxu0 0
        %2534 = vmatprep.subr.bf16.mxu0 0
        %2535 = vmatpush2.bf16.msra.mxu0 0
        %2536 = vmatprep.subr.bf16.mxu0 0
        %2537 = vmatpush2.bf16.msra.mxu0 0
        %2538 = vmatprep.subr.bf16.mxu0 0
        %2539 = vmatpush2.bf16.msra.mxu0 0
        %2540 = vmatprep.subr.bf16.mxu0 0
        %2541 = vmatpush2.bf16.msra.mxu0 0
        %2542 = vmatprep.subr.bf16.mxu0 0
        %2543 = vmatpush2.bf16.msra.mxu0 0
        %2544 = vmatprep.subr.bf16.mxu0 0
        %2545 = vmatpush2.bf16.msra.mxu0 0
        %2546 = vmatprep.mubr.bf16.mxu0 0
        %2547 = vmatmul.mubr.bf16.gmra.mxu0 %v1868
        %v2548 = vpop.f32.mrf.mxu0
        %v2549 = vadd.f32 0.0, %v2548
        %v2550 = vpop.f32.mrf.mxu0
        %v2551 = vpop.f32.mrf.mxu0
        %v2552 = vadd.f32 0.0, %v2551
        %v2553 = vpop.f32.mrf.mxu0
        %2554 = vmatprep.mubr.bf16.mxu0 0
        %2555 = vmatmul.mubr.bf16.gmra.mxu0 %v1871
        %v2556 = vpop.f32.mrf.mxu0
        %v2557 = vadd.f32 0.0, %v2556
        %v2558 = vpop.f32.mrf.mxu0
        %v2559 = vpop.f32.mrf.mxu0
        %v2560 = vadd.f32 0.0, %v2559
        %v2561 = vpop.f32.mrf.mxu0
        %2562 = vmatprep.mubr.bf16.mxu0 0
        %2563 = vmatmul.mubr.bf16.gmra.mxu0 %v1874
        %v2564 = vpop.f32.mrf.mxu0
        %v2565 = vadd.f32 0.0, %v2564
        %v2566 = vpop.f32.mrf.mxu0
        %v2567 = vpop.f32.mrf.mxu0
        %v2568 = vadd.f32 0.0, %v2567
        %v2569 = vpop.f32.mrf.mxu0
        %2570 = vmatprep.mubr.bf16.mxu0 0
        %2571 = vmatmul.mubr.bf16.gmra.mxu0 %v1877
        %v2572 = vpop.f32.mrf.mxu0
        %v2573 = vadd.f32 0.0, %v2572
        %v2574 = vpop.f32.mrf.mxu0
        %v2575 = vpop.f32.mrf.mxu0
        %v2576 = vadd.f32 0.0, %v2575
        %v2577 = vpop.f32.mrf.mxu0
        %2578 = vdwg.mxu0
        %v2579 = vpack.c.bf16 %v2552, %v2549
        %v2580 = vpack.c.bf16 %v2560, %v2557
        %v2581 = vpack.c.bf16 %v2568, %v2565
        %v2582 = vpack.c.bf16 %v2576, %v2573
        %s2583 = scalar_lea.vmem %s7, 40
        %v2584 = vld [vmem:[%s2583] sm:$0xf]
        %v2585 = vld [vmem:[%s2583 + $0x4] sm:$0xf]
        %v2588 = vunpack.c.l.b16 %v2584
        %v2589 = vunpack.c.l.b16 %v2585
        %v2590 = vpack.c.b16 %v2589, %v2588
        %v2592 = vsel %vm928, %v2590, 0
        %2594 = vmatprep.subr.bf16.mxu0 0
        %2595 = vmatpush1.bf16.msra.mxu0 0
        %2596 = vmatprep.subr.bf16.mxu0 0
        %2597 = vmatpush1.bf16.msra.mxu0 0
        %2598 = vmatprep.subr.bf16.mxu0 0
        %2599 = vmatpush1.bf16.msra.mxu0 0
        %2600 = vmatprep.subr.bf16.mxu0 0
        %2601 = vmatpush1.bf16.msra.mxu0 0
        %2602 = vmatprep.subr.bf16.mxu0 0
        %2603 = vmatpush1.bf16.msra.mxu0 %v2582
        %2604 = vmatprep.subr.bf16.mxu0 0
        %2605 = vmatpush1.bf16.msra.mxu0 %v2581
        %2606 = vmatprep.subr.bf16.mxu0 0
        %2607 = vmatpush1.bf16.msra.mxu0 %v2580
        %2608 = vmatprep.subr.bf16.mxu0 0
        %2609 = vmatpush1.bf16.msra.mxu0 %v2579
        %2610 = vmatprep.subr.bf16.mxu0 0
        %2611 = vmatpush2.bf16.msra.mxu0 0
        %2612 = vmatprep.subr.bf16.mxu0 0
        %2613 = vmatpush2.bf16.msra.mxu0 0
        %2614 = vmatprep.subr.bf16.mxu0 0
        %2615 = vmatpush2.bf16.msra.mxu0 0
        %2616 = vmatprep.subr.bf16.mxu0 0
        %2617 = vmatpush2.bf16.msra.mxu0 0
        %2618 = vmatprep.subr.bf16.mxu0 0
        %2619 = vmatpush2.bf16.msra.mxu0 0
        %2620 = vmatprep.subr.bf16.mxu0 0
        %2621 = vmatpush2.bf16.msra.mxu0 0
        %2622 = vmatprep.subr.bf16.mxu0 0
        %2623 = vmatpush2.bf16.msra.mxu0 0
        %2624 = vmatprep.subr.bf16.mxu0 0
        %2625 = vmatpush2.bf16.msra.mxu0 0
        %2626 = vmatprep.mubr.bf16.mxu0 0
        %2627 = vmatmul.mubr.bf16.gmra.mxu0 %v2592
        %v2628 = vpop.f32.mrf.mxu0
        %v2629 = vadd.f32 0.0, %v2628
        %v2630 = vpop.f32.mrf.mxu0
        %v2631 = vpop.f32.mrf.mxu0
        %v2632 = vadd.f32 0.0, %v2631
        %v2633 = vpop.f32.mrf.mxu0
        %2634 = vdwg.mxu0
        %v2635 = vadd.f32 %v2507, %v2629
        %v2636 = vadd.f32 %v2508, %v2632
        %vm2637 = vcmp.eq.s32.totalorder %v1860, 6
        %vm2638 = vcmp.eq.s32.totalorder %v1861, 6
        %v2639 = vsel %vm2637, 1.0, 0.0
        %v2640 = vsel %vm2638, 1.0, 0.0
        %v2641 = vpack.c.bf16 %v2640, %v2639
        %2642 = vmatprep.subr.bf16.mxu0 0
        %2643 = vmatpush1.bf16.msra.mxu0 0
        %2644 = vmatprep.subr.bf16.mxu0 0
        %2645 = vmatpush1.bf16.msra.mxu0 0
        %2646 = vmatprep.subr.bf16.mxu0 0
        %2647 = vmatpush1.bf16.msra.mxu0 0
        %2648 = vmatprep.subr.bf16.mxu0 0
        %2649 = vmatpush1.bf16.msra.mxu0 0
        %2650 = vmatprep.subr.bf16.mxu0 0
        %2651 = vmatpush1.bf16.msra.mxu0 0
        %2652 = vmatprep.subr.bf16.mxu0 0
        %2653 = vmatpush1.bf16.msra.mxu0 0
        %2654 = vmatprep.subr.bf16.mxu0 0
        %2655 = vmatpush1.bf16.msra.mxu0 0
        %2656 = vmatprep.subr.bf16.mxu0 0
        %2657 = vmatpush1.bf16.msra.mxu0 %v2641
        %2658 = vmatprep.subr.bf16.mxu0 0
        %2659 = vmatpush2.bf16.msra.mxu0 0
        %2660 = vmatprep.subr.bf16.mxu0 0
        %2661 = vmatpush2.bf16.msra.mxu0 0
        %2662 = vmatprep.subr.bf16.mxu0 0
        %2663 = vmatpush2.bf16.msra.mxu0 0
        %2664 = vmatprep.subr.bf16.mxu0 0
        %2665 = vmatpush2.bf16.msra.mxu0 0
        %2666 = vmatprep.subr.bf16.mxu0 0
        %2667 = vmatpush2.bf16.msra.mxu0 0
        %2668 = vmatprep.subr.bf16.mxu0 0
        %2669 = vmatpush2.bf16.msra.mxu0 0
        %2670 = vmatprep.subr.bf16.mxu0 0
        %2671 = vmatpush2.bf16.msra.mxu0 0
        %2672 = vmatprep.subr.bf16.mxu0 0
        %2673 = vmatpush2.bf16.msra.mxu0 0
        %2674 = vmatprep.mubr.bf16.mxu0 0
        %2675 = vmatmul.mubr.bf16.gmra.mxu0 %v1868
        %v2676 = vpop.f32.mrf.mxu0
        %v2677 = vadd.f32 0.0, %v2676
        %v2678 = vpop.f32.mrf.mxu0
        %v2679 = vpop.f32.mrf.mxu0
        %v2680 = vadd.f32 0.0, %v2679
        %v2681 = vpop.f32.mrf.mxu0
        %2682 = vmatprep.mubr.bf16.mxu0 0
        %2683 = vmatmul.mubr.bf16.gmra.mxu0 %v1871
        %v2684 = vpop.f32.mrf.mxu0
        %v2685 = vadd.f32 0.0, %v2684
        %v2686 = vpop.f32.mrf.mxu0
        %v2687 = vpop.f32.mrf.mxu0
        %v2688 = vadd.f32 0.0, %v2687
        %v2689 = vpop.f32.mrf.mxu0
        %2690 = vmatprep.mubr.bf16.mxu0 0
        %2691 = vmatmul.mubr.bf16.gmra.mxu0 %v1874
        %v2692 = vpop.f32.mrf.mxu0
        %v2693 = vadd.f32 0.0, %v2692
        %v2694 = vpop.f32.mrf.mxu0
        %v2695 = vpop.f32.mrf.mxu0
        %v2696 = vadd.f32 0.0, %v2695
        %v2697 = vpop.f32.mrf.mxu0
        %2698 = vmatprep.mubr.bf16.mxu0 0
        %2699 = vmatmul.mubr.bf16.gmra.mxu0 %v1877
        %v2700 = vpop.f32.mrf.mxu0
        %v2701 = vadd.f32 0.0, %v2700
        %v2702 = vpop.f32.mrf.mxu0
        %v2703 = vpop.f32.mrf.mxu0
        %v2704 = vadd.f32 0.0, %v2703
        %v2705 = vpop.f32.mrf.mxu0
        %2706 = vdwg.mxu0
        %v2707 = vpack.c.bf16 %v2680, %v2677
        %v2708 = vpack.c.bf16 %v2688, %v2685
        %v2709 = vpack.c.bf16 %v2696, %v2693
        %v2710 = vpack.c.bf16 %v2704, %v2701
        %s2711 = scalar_lea.vmem %s7, 48
        %v2712 = vld [vmem:[%s2711] sm:$0xf]
        %v2713 = vld [vmem:[%s2711 + $0x4] sm:$0xf]
        %v2716 = vunpack.c.l.b16 %v2712
        %v2717 = vunpack.c.l.b16 %v2713
        %v2718 = vpack.c.b16 %v2717, %v2716
        %v2720 = vsel %vm928, %v2718, 0
        %2722 = vmatprep.subr.bf16.mxu0 0
        %2723 = vmatpush1.bf16.msra.mxu0 0
        %2724 = vmatprep.subr.bf16.mxu0 0
        %2725 = vmatpush1.bf16.msra.mxu0 0
        %2726 = vmatprep.subr.bf16.mxu0 0
        %2727 = vmatpush1.bf16.msra.mxu0 0
        %2728 = vmatprep.subr.bf16.mxu0 0
        %2729 = vmatpush1.bf16.msra.mxu0 0
        %2730 = vmatprep.subr.bf16.mxu0 0
        %2731 = vmatpush1.bf16.msra.mxu0 %v2710
        %2732 = vmatprep.subr.bf16.mxu0 0
        %2733 = vmatpush1.bf16.msra.mxu0 %v2709
        %2734 = vmatprep.subr.bf16.mxu0 0
        %2735 = vmatpush1.bf16.msra.mxu0 %v2708
        %2736 = vmatprep.subr.bf16.mxu0 0
        %2737 = vmatpush1.bf16.msra.mxu0 %v2707
        %2738 = vmatprep.subr.bf16.mxu0 0
        %2739 = vmatpush2.bf16.msra.mxu0 0
        %2740 = vmatprep.subr.bf16.mxu0 0
        %2741 = vmatpush2.bf16.msra.mxu0 0
        %2742 = vmatprep.subr.bf16.mxu0 0
        %2743 = vmatpush2.bf16.msra.mxu0 0
        %2744 = vmatprep.subr.bf16.mxu0 0
        %2745 = vmatpush2.bf16.msra.mxu0 0
        %2746 = vmatprep.subr.bf16.mxu0 0
        %2747 = vmatpush2.bf16.msra.mxu0 0
        %2748 = vmatprep.subr.bf16.mxu0 0
        %2749 = vmatpush2.bf16.msra.mxu0 0
        %2750 = vmatprep.subr.bf16.mxu0 0
        %2751 = vmatpush2.bf16.msra.mxu0 0
        %2752 = vmatprep.subr.bf16.mxu0 0
        %2753 = vmatpush2.bf16.msra.mxu0 0
        %2754 = vmatprep.mubr.bf16.mxu0 0
        %2755 = vmatmul.mubr.bf16.gmra.mxu0 %v2720
        %v2756 = vpop.f32.mrf.mxu0
        %v2757 = vadd.f32 0.0, %v2756
        %v2758 = vpop.f32.mrf.mxu0
        %v2759 = vpop.f32.mrf.mxu0
        %v2760 = vadd.f32 0.0, %v2759
        %v2761 = vpop.f32.mrf.mxu0
        %2762 = vdwg.mxu0
        %v2763 = vadd.f32 %v2635, %v2757
        %v2764 = vadd.f32 %v2636, %v2760
        %vm2765 = vcmp.eq.s32.totalorder %v1860, 7
        %vm2766 = vcmp.eq.s32.totalorder %v1861, 7
        %v2767 = vsel %vm2765, 1.0, 0.0
        %v2768 = vsel %vm2766, 1.0, 0.0
        %v2769 = vpack.c.bf16 %v2768, %v2767
        %2770 = vmatprep.subr.bf16.mxu0 0
        %2771 = vmatpush1.bf16.msra.mxu0 0
        %2772 = vmatprep.subr.bf16.mxu0 0
        %2773 = vmatpush1.bf16.msra.mxu0 0
        %2774 = vmatprep.subr.bf16.mxu0 0
        %2775 = vmatpush1.bf16.msra.mxu0 0
        %2776 = vmatprep.subr.bf16.mxu0 0
        %2777 = vmatpush1.bf16.msra.mxu0 0
        %2778 = vmatprep.subr.bf16.mxu0 0
        %2779 = vmatpush1.bf16.msra.mxu0 0
        %2780 = vmatprep.subr.bf16.mxu0 0
        %2781 = vmatpush1.bf16.msra.mxu0 0
        %2782 = vmatprep.subr.bf16.mxu0 0
        %2783 = vmatpush1.bf16.msra.mxu0 0
        %2784 = vmatprep.subr.bf16.mxu0 0
        %2785 = vmatpush1.bf16.msra.mxu0 %v2769
        %2786 = vmatprep.subr.bf16.mxu0 0
        %2787 = vmatpush2.bf16.msra.mxu0 0
        %2788 = vmatprep.subr.bf16.mxu0 0
        %2789 = vmatpush2.bf16.msra.mxu0 0
        %2790 = vmatprep.subr.bf16.mxu0 0
        %2791 = vmatpush2.bf16.msra.mxu0 0
        %2792 = vmatprep.subr.bf16.mxu0 0
        %2793 = vmatpush2.bf16.msra.mxu0 0
        %2794 = vmatprep.subr.bf16.mxu0 0
        %2795 = vmatpush2.bf16.msra.mxu0 0
        %2796 = vmatprep.subr.bf16.mxu0 0
        %2797 = vmatpush2.bf16.msra.mxu0 0
        %2798 = vmatprep.subr.bf16.mxu0 0
        %2799 = vmatpush2.bf16.msra.mxu0 0
        %2800 = vmatprep.subr.bf16.mxu0 0
        %2801 = vmatpush2.bf16.msra.mxu0 0
        %2802 = vmatprep.mubr.bf16.mxu0 0
        %2803 = vmatmul.mubr.bf16.gmra.mxu0 %v1868
        %v2804 = vpop.f32.mrf.mxu0
        %v2805 = vadd.f32 0.0, %v2804
        %v2806 = vpop.f32.mrf.mxu0
        %v2807 = vpop.f32.mrf.mxu0
        %v2808 = vadd.f32 0.0, %v2807
        %v2809 = vpop.f32.mrf.mxu0
        %2810 = vmatprep.mubr.bf16.mxu0 0
        %2811 = vmatmul.mubr.bf16.gmra.mxu0 %v1871
        %v2812 = vpop.f32.mrf.mxu0
        %v2813 = vadd.f32 0.0, %v2812
        %v2814 = vpop.f32.mrf.mxu0
        %v2815 = vpop.f32.mrf.mxu0
        %v2816 = vadd.f32 0.0, %v2815
        %v2817 = vpop.f32.mrf.mxu0
        %2818 = vmatprep.mubr.bf16.mxu0 0
        %2819 = vmatmul.mubr.bf16.gmra.mxu0 %v1874
        %v2820 = vpop.f32.mrf.mxu0
        %v2821 = vadd.f32 0.0, %v2820
        %v2822 = vpop.f32.mrf.mxu0
        %v2823 = vpop.f32.mrf.mxu0
        %v2824 = vadd.f32 0.0, %v2823
        %v2825 = vpop.f32.mrf.mxu0
        %2826 = vmatprep.mubr.bf16.mxu0 0
        %2827 = vmatmul.mubr.bf16.gmra.mxu0 %v1877
        %v2828 = vpop.f32.mrf.mxu0
        %v2829 = vadd.f32 0.0, %v2828
        %v2830 = vpop.f32.mrf.mxu0
        %v2831 = vpop.f32.mrf.mxu0
        %v2832 = vadd.f32 0.0, %v2831
        %v2833 = vpop.f32.mrf.mxu0
        %2834 = vdwg.mxu0
        %v2835 = vpack.c.bf16 %v2808, %v2805
        %v2836 = vpack.c.bf16 %v2816, %v2813
        %v2837 = vpack.c.bf16 %v2824, %v2821
        %v2838 = vpack.c.bf16 %v2832, %v2829
        %s2839 = scalar_lea.vmem %s7, 56
        %v2840 = vld [vmem:[%s2839] sm:$0xf]
        %v2841 = vld [vmem:[%s2839 + $0x4] sm:$0xf]
        %v2844 = vunpack.c.l.b16 %v2840
        %v2845 = vunpack.c.l.b16 %v2841
        %v2846 = vpack.c.b16 %v2845, %v2844
        %v2848 = vsel %vm928, %v2846, 0
        %2850 = vmatprep.subr.bf16.mxu0 0
        %2851 = vmatpush1.bf16.msra.mxu0 0
        %2852 = vmatprep.subr.bf16.mxu0 0
        %2853 = vmatpush1.bf16.msra.mxu0 0
        %2854 = vmatprep.subr.bf16.mxu0 0
        %2855 = vmatpush1.bf16.msra.mxu0 0
        %2856 = vmatprep.subr.bf16.mxu0 0
        %2857 = vmatpush1.bf16.msra.mxu0 0
        %2858 = vmatprep.subr.bf16.mxu0 0
        %2859 = vmatpush1.bf16.msra.mxu0 %v2838
        %2860 = vmatprep.subr.bf16.mxu0 0
        %2861 = vmatpush1.bf16.msra.mxu0 %v2837
        %2862 = vmatprep.subr.bf16.mxu0 0
        %2863 = vmatpush1.bf16.msra.mxu0 %v2836
        %2864 = vmatprep.subr.bf16.mxu0 0
        %2865 = vmatpush1.bf16.msra.mxu0 %v2835
        %2866 = vmatprep.subr.bf16.mxu0 0
        %2867 = vmatpush2.bf16.msra.mxu0 0
        %2868 = vmatprep.subr.bf16.mxu0 0
        %2869 = vmatpush2.bf16.msra.mxu0 0
        %2870 = vmatprep.subr.bf16.mxu0 0
        %2871 = vmatpush2.bf16.msra.mxu0 0
        %2872 = vmatprep.subr.bf16.mxu0 0
        %2873 = vmatpush2.bf16.msra.mxu0 0
        %2874 = vmatprep.subr.bf16.mxu0 0
        %2875 = vmatpush2.bf16.msra.mxu0 0
        %2876 = vmatprep.subr.bf16.mxu0 0
        %2877 = vmatpush2.bf16.msra.mxu0 0
        %2878 = vmatprep.subr.bf16.mxu0 0
        %2879 = vmatpush2.bf16.msra.mxu0 0
        %2880 = vmatprep.subr.bf16.mxu0 0
        %2881 = vmatpush2.bf16.msra.mxu0 0
        %2882 = vmatprep.mubr.bf16.mxu0 0
        %2883 = vmatmul.mubr.bf16.gmra.mxu0 %v2848
        %v2884 = vpop.f32.mrf.mxu0
        %v2885 = vadd.f32 0.0, %v2884
        %v2886 = vpop.f32.mrf.mxu0
        %v2887 = vpop.f32.mrf.mxu0
        %v2888 = vadd.f32 0.0, %v2887
        %v2889 = vpop.f32.mrf.mxu0
        %2890 = vdwg.mxu0
        %v2891 = vadd.f32 %v2763, %v2885
        %v2892 = vadd.f32 %v2764, %v2888
        %vm2893 = vcmp.eq.s32.totalorder %v1860, 8
        %vm2894 = vcmp.eq.s32.totalorder %v1861, 8
        %v2895 = vsel %vm2893, 1.0, 0.0
        %v2896 = vsel %vm2894, 1.0, 0.0
        %v2897 = vpack.c.bf16 %v2896, %v2895
        %2898 = vmatprep.subr.bf16.mxu0 0
        %2899 = vmatpush1.bf16.msra.mxu0 0
        %2900 = vmatprep.subr.bf16.mxu0 0
        %2901 = vmatpush1.bf16.msra.mxu0 0
        %2902 = vmatprep.subr.bf16.mxu0 0
        %2903 = vmatpush1.bf16.msra.mxu0 0
        %2904 = vmatprep.subr.bf16.mxu0 0
        %2905 = vmatpush1.bf16.msra.mxu0 0
        %2906 = vmatprep.subr.bf16.mxu0 0
        %2907 = vmatpush1.bf16.msra.mxu0 0
        %2908 = vmatprep.subr.bf16.mxu0 0
        %2909 = vmatpush1.bf16.msra.mxu0 0
        %2910 = vmatprep.subr.bf16.mxu0 0
        %2911 = vmatpush1.bf16.msra.mxu0 0
        %2912 = vmatprep.subr.bf16.mxu0 0
        %2913 = vmatpush1.bf16.msra.mxu0 %v2897
        %2914 = vmatprep.subr.bf16.mxu0 0
        %2915 = vmatpush2.bf16.msra.mxu0 0
        %2916 = vmatprep.subr.bf16.mxu0 0
        %2917 = vmatpush2.bf16.msra.mxu0 0
        %2918 = vmatprep.subr.bf16.mxu0 0
        %2919 = vmatpush2.bf16.msra.mxu0 0
        %2920 = vmatprep.subr.bf16.mxu0 0
        %2921 = vmatpush2.bf16.msra.mxu0 0
        %2922 = vmatprep.subr.bf16.mxu0 0
        %2923 = vmatpush2.bf16.msra.mxu0 0
        %2924 = vmatprep.subr.bf16.mxu0 0
        %2925 = vmatpush2.bf16.msra.mxu0 0
        %2926 = vmatprep.subr.bf16.mxu0 0
        %2927 = vmatpush2.bf16.msra.mxu0 0
        %2928 = vmatprep.subr.bf16.mxu0 0
        %2929 = vmatpush2.bf16.msra.mxu0 0
        %2930 = vmatprep.mubr.bf16.mxu0 0
        %2931 = vmatmul.mubr.bf16.gmra.mxu0 %v1868
        %v2932 = vpop.f32.mrf.mxu0
        %v2933 = vadd.f32 0.0, %v2932
        %v2934 = vpop.f32.mrf.mxu0
        %v2935 = vpop.f32.mrf.mxu0
        %v2936 = vadd.f32 0.0, %v2935
        %v2937 = vpop.f32.mrf.mxu0
        %2938 = vmatprep.mubr.bf16.mxu0 0
        %2939 = vmatmul.mubr.bf16.gmra.mxu0 %v1871
        %v2940 = vpop.f32.mrf.mxu0
        %v2941 = vadd.f32 0.0, %v2940
        %v2942 = vpop.f32.mrf.mxu0
        %v2943 = vpop.f32.mrf.mxu0
        %v2944 = vadd.f32 0.0, %v2943
        %v2945 = vpop.f32.mrf.mxu0
        %2946 = vmatprep.mubr.bf16.mxu0 0
        %2947 = vmatmul.mubr.bf16.gmra.mxu0 %v1874
        %v2948 = vpop.f32.mrf.mxu0
        %v2949 = vadd.f32 0.0, %v2948
        %v2950 = vpop.f32.mrf.mxu0
        %v2951 = vpop.f32.mrf.mxu0
        %v2952 = vadd.f32 0.0, %v2951
        %v2953 = vpop.f32.mrf.mxu0
        %2954 = vmatprep.mubr.bf16.mxu0 0
        %2955 = vmatmul.mubr.bf16.gmra.mxu0 %v1877
        %v2956 = vpop.f32.mrf.mxu0
        %v2957 = vadd.f32 0.0, %v2956
        %v2958 = vpop.f32.mrf.mxu0
        %v2959 = vpop.f32.mrf.mxu0
        %v2960 = vadd.f32 0.0, %v2959
        %v2961 = vpop.f32.mrf.mxu0
        %2962 = vdwg.mxu0
        %v2963 = vpack.c.bf16 %v2936, %v2933
        %v2964 = vpack.c.bf16 %v2944, %v2941
        %v2965 = vpack.c.bf16 %v2952, %v2949
        %v2966 = vpack.c.bf16 %v2960, %v2957
        %s2967 = scalar_lea.vmem %s7, 64
        %v2968 = vld [vmem:[%s2967] sm:$0xf]
        %v2969 = vld [vmem:[%s2967 + $0x4] sm:$0xf]
        %v2972 = vunpack.c.l.b16 %v2968
        %v2973 = vunpack.c.l.b16 %v2969
        %v2974 = vpack.c.b16 %v2973, %v2972
        %v2976 = vsel %vm928, %v2974, 0
        %2978 = vmatprep.subr.bf16.mxu0 0
        %2979 = vmatpush1.bf16.msra.mxu0 0
        %2980 = vmatprep.subr.bf16.mxu0 0
        %2981 = vmatpush1.bf16.msra.mxu0 0
        %2982 = vmatprep.subr.bf16.mxu0 0
        %2983 = vmatpush1.bf16.msra.mxu0 0
        %2984 = vmatprep.subr.bf16.mxu0 0
        %2985 = vmatpush1.bf16.msra.mxu0 0
        %2986 = vmatprep.subr.bf16.mxu0 0
        %2987 = vmatpush1.bf16.msra.mxu0 %v2966
        %2988 = vmatprep.subr.bf16.mxu0 0
        %2989 = vmatpush1.bf16.msra.mxu0 %v2965
        %2990 = vmatprep.subr.bf16.mxu0 0
        %2991 = vmatpush1.bf16.msra.mxu0 %v2964
        %2992 = vmatprep.subr.bf16.mxu0 0
        %2993 = vmatpush1.bf16.msra.mxu0 %v2963
        %2994 = vmatprep.subr.bf16.mxu0 0
        %2995 = vmatpush2.bf16.msra.mxu0 0
        %2996 = vmatprep.subr.bf16.mxu0 0
        %2997 = vmatpush2.bf16.msra.mxu0 0
        %2998 = vmatprep.subr.bf16.mxu0 0
        %2999 = vmatpush2.bf16.msra.mxu0 0
        %3000 = vmatprep.subr.bf16.mxu0 0
        %3001 = vmatpush2.bf16.msra.mxu0 0
        %3002 = vmatprep.subr.bf16.mxu0 0
        %3003 = vmatpush2.bf16.msra.mxu0 0
        %3004 = vmatprep.subr.bf16.mxu0 0
        %3005 = vmatpush2.bf16.msra.mxu0 0
        %3006 = vmatprep.subr.bf16.mxu0 0
        %3007 = vmatpush2.bf16.msra.mxu0 0
        %3008 = vmatprep.subr.bf16.mxu0 0
        %3009 = vmatpush2.bf16.msra.mxu0 0
        %3010 = vmatprep.mubr.bf16.mxu0 0
        %3011 = vmatmul.mubr.bf16.gmra.mxu0 %v2976
        %v3012 = vpop.f32.mrf.mxu0
        %v3013 = vadd.f32 0.0, %v3012
        %v3014 = vpop.f32.mrf.mxu0
        %v3015 = vpop.f32.mrf.mxu0
        %v3016 = vadd.f32 0.0, %v3015
        %v3017 = vpop.f32.mrf.mxu0
        %3018 = vdwg.mxu0
        %v3019 = vadd.f32 %v2891, %v3013
        %v3020 = vadd.f32 %v2892, %v3016
        %vm3021 = vcmp.eq.s32.totalorder %v1860, 9
        %vm3022 = vcmp.eq.s32.totalorder %v1861, 9
        %v3023 = vsel %vm3021, 1.0, 0.0
        %v3024 = vsel %vm3022, 1.0, 0.0
        %v3025 = vpack.c.bf16 %v3024, %v3023
        %3026 = vmatprep.subr.bf16.mxu0 0
        %3027 = vmatpush1.bf16.msra.mxu0 0
        %3028 = vmatprep.subr.bf16.mxu0 0
        %3029 = vmatpush1.bf16.msra.mxu0 0
        %3030 = vmatprep.subr.bf16.mxu0 0
        %3031 = vmatpush1.bf16.msra.mxu0 0
        %3032 = vmatprep.subr.bf16.mxu0 0
        %3033 = vmatpush1.bf16.msra.mxu0 0
        %3034 = vmatprep.subr.bf16.mxu0 0
        %3035 = vmatpush1.bf16.msra.mxu0 0
        %3036 = vmatprep.subr.bf16.mxu0 0
        %3037 = vmatpush1.bf16.msra.mxu0 0
        %3038 = vmatprep.subr.bf16.mxu0 0
        %3039 = vmatpush1.bf16.msra.mxu0 0
        %3040 = vmatprep.subr.bf16.mxu0 0
        %3041 = vmatpush1.bf16.msra.mxu0 %v3025
        %3042 = vmatprep.subr.bf16.mxu0 0
        %3043 = vmatpush2.bf16.msra.mxu0 0
        %3044 = vmatprep.subr.bf16.mxu0 0
        %3045 = vmatpush2.bf16.msra.mxu0 0
        %3046 = vmatprep.subr.bf16.mxu0 0
        %3047 = vmatpush2.bf16.msra.mxu0 0
        %3048 = vmatprep.subr.bf16.mxu0 0
        %3049 = vmatpush2.bf16.msra.mxu0 0
        %3050 = vmatprep.subr.bf16.mxu0 0
        %3051 = vmatpush2.bf16.msra.mxu0 0
        %3052 = vmatprep.subr.bf16.mxu0 0
        %3053 = vmatpush2.bf16.msra.mxu0 0
        %3054 = vmatprep.subr.bf16.mxu0 0
        %3055 = vmatpush2.bf16.msra.mxu0 0
        %3056 = vmatprep.subr.bf16.mxu0 0
        %3057 = vmatpush2.bf16.msra.mxu0 0
        %3058 = vmatprep.mubr.bf16.mxu0 0
        %3059 = vmatmul.mubr.bf16.gmra.mxu0 %v1868
        %v3060 = vpop.f32.mrf.mxu0
        %v3061 = vadd.f32 0.0, %v3060
        %v3062 = vpop.f32.mrf.mxu0
        %v3063 = vpop.f32.mrf.mxu0
        %v3064 = vadd.f32 0.0, %v3063
        %v3065 = vpop.f32.mrf.mxu0
        %3066 = vmatprep.mubr.bf16.mxu0 0
        %3067 = vmatmul.mubr.bf16.gmra.mxu0 %v1871
        %v3068 = vpop.f32.mrf.mxu0
        %v3069 = vadd.f32 0.0, %v3068
        %v3070 = vpop.f32.mrf.mxu0
        %v3071 = vpop.f32.mrf.mxu0
        %v3072 = vadd.f32 0.0, %v3071
        %v3073 = vpop.f32.mrf.mxu0
        %3074 = vmatprep.mubr.bf16.mxu0 0
        %3075 = vmatmul.mubr.bf16.gmra.mxu0 %v1874
        %v3076 = vpop.f32.mrf.mxu0
        %v3077 = vadd.f32 0.0, %v3076
        %v3078 = vpop.f32.mrf.mxu0
        %v3079 = vpop.f32.mrf.mxu0
        %v3080 = vadd.f32 0.0, %v3079
        %v3081 = vpop.f32.mrf.mxu0
        %3082 = vmatprep.mubr.bf16.mxu0 0
        %3083 = vmatmul.mubr.bf16.gmra.mxu0 %v1877
        %v3084 = vpop.f32.mrf.mxu0
        %v3085 = vadd.f32 0.0, %v3084
        %v3086 = vpop.f32.mrf.mxu0
        %v3087 = vpop.f32.mrf.mxu0
        %v3088 = vadd.f32 0.0, %v3087
        %v3089 = vpop.f32.mrf.mxu0
        %3090 = vdwg.mxu0
        %v3091 = vpack.c.bf16 %v3064, %v3061
        %v3092 = vpack.c.bf16 %v3072, %v3069
        %v3093 = vpack.c.bf16 %v3080, %v3077
        %v3094 = vpack.c.bf16 %v3088, %v3085
        %s3095 = scalar_lea.vmem %s7, 72
        %v3096 = vld [vmem:[%s3095] sm:$0xf]
        %v3097 = vld [vmem:[%s3095 + $0x4] sm:$0xf]
        %v3100 = vunpack.c.l.b16 %v3096
        %v3101 = vunpack.c.l.b16 %v3097
        %v3102 = vpack.c.b16 %v3101, %v3100
        %v3104 = vsel %vm928, %v3102, 0
        %3106 = vmatprep.subr.bf16.mxu0 0
        %3107 = vmatpush1.bf16.msra.mxu0 0
        %3108 = vmatprep.subr.bf16.mxu0 0
        %3109 = vmatpush1.bf16.msra.mxu0 0
        %3110 = vmatprep.subr.bf16.mxu0 0
        %3111 = vmatpush1.bf16.msra.mxu0 0
        %3112 = vmatprep.subr.bf16.mxu0 0
        %3113 = vmatpush1.bf16.msra.mxu0 0
        %3114 = vmatprep.subr.bf16.mxu0 0
        %3115 = vmatpush1.bf16.msra.mxu0 %v3094
        %3116 = vmatprep.subr.bf16.mxu0 0
        %3117 = vmatpush1.bf16.msra.mxu0 %v3093
        %3118 = vmatprep.subr.bf16.mxu0 0
        %3119 = vmatpush1.bf16.msra.mxu0 %v3092
        %3120 = vmatprep.subr.bf16.mxu0 0
        %3121 = vmatpush1.bf16.msra.mxu0 %v3091
        %3122 = vmatprep.subr.bf16.mxu0 0
        %3123 = vmatpush2.bf16.msra.mxu0 0
        %3124 = vmatprep.subr.bf16.mxu0 0
        %3125 = vmatpush2.bf16.msra.mxu0 0
        %3126 = vmatprep.subr.bf16.mxu0 0
        %3127 = vmatpush2.bf16.msra.mxu0 0
        %3128 = vmatprep.subr.bf16.mxu0 0
        %3129 = vmatpush2.bf16.msra.mxu0 0
        %3130 = vmatprep.subr.bf16.mxu0 0
        %3131 = vmatpush2.bf16.msra.mxu0 0
        %3132 = vmatprep.subr.bf16.mxu0 0
        %3133 = vmatpush2.bf16.msra.mxu0 0
        %3134 = vmatprep.subr.bf16.mxu0 0
        %3135 = vmatpush2.bf16.msra.mxu0 0
        %3136 = vmatprep.subr.bf16.mxu0 0
        %3137 = vmatpush2.bf16.msra.mxu0 0
        %3138 = vmatprep.mubr.bf16.mxu0 0
        %3139 = vmatmul.mubr.bf16.gmra.mxu0 %v3104
        %v3140 = vpop.f32.mrf.mxu0
        %v3141 = vadd.f32 0.0, %v3140
        %v3142 = vpop.f32.mrf.mxu0
        %v3143 = vpop.f32.mrf.mxu0
        %v3144 = vadd.f32 0.0, %v3143
        %v3145 = vpop.f32.mrf.mxu0
        %3146 = vdwg.mxu0
        %v3147 = vadd.f32 %v3019, %v3141
        %v3148 = vadd.f32 %v3020, %v3144
        %vm3149 = vcmp.eq.s32.totalorder %v1860, 10
        %vm3150 = vcmp.eq.s32.totalorder %v1861, 10
        %v3151 = vsel %vm3149, 1.0, 0.0
        %v3152 = vsel %vm3150, 1.0, 0.0
        %v3153 = vpack.c.bf16 %v3152, %v3151
        %3154 = vmatprep.subr.bf16.mxu0 0
        %3155 = vmatpush1.bf16.msra.mxu0 0
        %3156 = vmatprep.subr.bf16.mxu0 0
        %3157 = vmatpush1.bf16.msra.mxu0 0
        %3158 = vmatprep.subr.bf16.mxu0 0
        %3159 = vmatpush1.bf16.msra.mxu0 0
        %3160 = vmatprep.subr.bf16.mxu0 0
        %3161 = vmatpush1.bf16.msra.mxu0 0
        %3162 = vmatprep.subr.bf16.mxu0 0
        %3163 = vmatpush1.bf16.msra.mxu0 0
        %3164 = vmatprep.subr.bf16.mxu0 0
        %3165 = vmatpush1.bf16.msra.mxu0 0
        %3166 = vmatprep.subr.bf16.mxu0 0
        %3167 = vmatpush1.bf16.msra.mxu0 0
        %3168 = vmatprep.subr.bf16.mxu0 0
        %3169 = vmatpush1.bf16.msra.mxu0 %v3153
        %3170 = vmatprep.subr.bf16.mxu0 0
        %3171 = vmatpush2.bf16.msra.mxu0 0
        %3172 = vmatprep.subr.bf16.mxu0 0
        %3173 = vmatpush2.bf16.msra.mxu0 0
        %3174 = vmatprep.subr.bf16.mxu0 0
        %3175 = vmatpush2.bf16.msra.mxu0 0
        %3176 = vmatprep.subr.bf16.mxu0 0
        %3177 = vmatpush2.bf16.msra.mxu0 0
        %3178 = vmatprep.subr.bf16.mxu0 0
        %3179 = vmatpush2.bf16.msra.mxu0 0
        %3180 = vmatprep.subr.bf16.mxu0 0
        %3181 = vmatpush2.bf16.msra.mxu0 0
        %3182 = vmatprep.subr.bf16.mxu0 0
        %3183 = vmatpush2.bf16.msra.mxu0 0
        %3184 = vmatprep.subr.bf16.mxu0 0
        %3185 = vmatpush2.bf16.msra.mxu0 0
        %3186 = vmatprep.mubr.bf16.mxu0 0
        %3187 = vmatmul.mubr.bf16.gmra.mxu0 %v1868
        %v3188 = vpop.f32.mrf.mxu0
        %v3189 = vadd.f32 0.0, %v3188
        %v3190 = vpop.f32.mrf.mxu0
        %v3191 = vpop.f32.mrf.mxu0
        %v3192 = vadd.f32 0.0, %v3191
        %v3193 = vpop.f32.mrf.mxu0
        %3194 = vmatprep.mubr.bf16.mxu0 0
        %3195 = vmatmul.mubr.bf16.gmra.mxu0 %v1871
        %v3196 = vpop.f32.mrf.mxu0
        %v3197 = vadd.f32 0.0, %v3196
        %v3198 = vpop.f32.mrf.mxu0
        %v3199 = vpop.f32.mrf.mxu0
        %v3200 = vadd.f32 0.0, %v3199
        %v3201 = vpop.f32.mrf.mxu0
        %3202 = vmatprep.mubr.bf16.mxu0 0
        %3203 = vmatmul.mubr.bf16.gmra.mxu0 %v1874
        %v3204 = vpop.f32.mrf.mxu0
        %v3205 = vadd.f32 0.0, %v3204
        %v3206 = vpop.f32.mrf.mxu0
        %v3207 = vpop.f32.mrf.mxu0
        %v3208 = vadd.f32 0.0, %v3207
        %v3209 = vpop.f32.mrf.mxu0
        %3210 = vmatprep.mubr.bf16.mxu0 0
        %3211 = vmatmul.mubr.bf16.gmra.mxu0 %v1877
        %v3212 = vpop.f32.mrf.mxu0
        %v3213 = vadd.f32 0.0, %v3212
        %v3214 = vpop.f32.mrf.mxu0
        %v3215 = vpop.f32.mrf.mxu0
        %v3216 = vadd.f32 0.0, %v3215
        %v3217 = vpop.f32.mrf.mxu0
        %3218 = vdwg.mxu0
        %v3219 = vpack.c.bf16 %v3192, %v3189
        %v3220 = vpack.c.bf16 %v3200, %v3197
        %v3221 = vpack.c.bf16 %v3208, %v3205
        %v3222 = vpack.c.bf16 %v3216, %v3213
        %s3223 = scalar_lea.vmem %s7, 80
        %v3224 = vld [vmem:[%s3223] sm:$0xf]
        %v3225 = vld [vmem:[%s3223 + $0x4] sm:$0xf]
        %v3228 = vunpack.c.l.b16 %v3224
        %v3229 = vunpack.c.l.b16 %v3225
        %v3230 = vpack.c.b16 %v3229, %v3228
        %v3232 = vsel %vm928, %v3230, 0
        %3234 = vmatprep.subr.bf16.mxu0 0
        %3235 = vmatpush1.bf16.msra.mxu0 0
        %3236 = vmatprep.subr.bf16.mxu0 0
        %3237 = vmatpush1.bf16.msra.mxu0 0
        %3238 = vmatprep.subr.bf16.mxu0 0
        %3239 = vmatpush1.bf16.msra.mxu0 0
        %3240 = vmatprep.subr.bf16.mxu0 0
        %3241 = vmatpush1.bf16.msra.mxu0 0
        %3242 = vmatprep.subr.bf16.mxu0 0
        %3243 = vmatpush1.bf16.msra.mxu0 %v3222
        %3244 = vmatprep.subr.bf16.mxu0 0
        %3245 = vmatpush1.bf16.msra.mxu0 %v3221
        %3246 = vmatprep.subr.bf16.mxu0 0
        %3247 = vmatpush1.bf16.msra.mxu0 %v3220
        %3248 = vmatprep.subr.bf16.mxu0 0
        %3249 = vmatpush1.bf16.msra.mxu0 %v3219
        %3250 = vmatprep.subr.bf16.mxu0 0
        %3251 = vmatpush2.bf16.msra.mxu0 0
        %3252 = vmatprep.subr.bf16.mxu0 0
        %3253 = vmatpush2.bf16.msra.mxu0 0
        %3254 = vmatprep.subr.bf16.mxu0 0
        %3255 = vmatpush2.bf16.msra.mxu0 0
        %3256 = vmatprep.subr.bf16.mxu0 0
        %3257 = vmatpush2.bf16.msra.mxu0 0
        %3258 = vmatprep.subr.bf16.mxu0 0
        %3259 = vmatpush2.bf16.msra.mxu0 0
        %3260 = vmatprep.subr.bf16.mxu0 0
        %3261 = vmatpush2.bf16.msra.mxu0 0
        %3262 = vmatprep.subr.bf16.mxu0 0
        %3263 = vmatpush2.bf16.msra.mxu0 0
        %3264 = vmatprep.subr.bf16.mxu0 0
        %3265 = vmatpush2.bf16.msra.mxu0 0
        %3266 = vmatprep.mubr.bf16.mxu0 0
        %3267 = vmatmul.mubr.bf16.gmra.mxu0 %v3232
        %v3268 = vpop.f32.mrf.mxu0
        %v3269 = vadd.f32 0.0, %v3268
        %v3270 = vpop.f32.mrf.mxu0
        %v3271 = vpop.f32.mrf.mxu0
        %v3272 = vadd.f32 0.0, %v3271
        %v3273 = vpop.f32.mrf.mxu0
        %3274 = vdwg.mxu0
        %v3275 = vadd.f32 %v3147, %v3269
        %v3276 = vadd.f32 %v3148, %v3272
        %vm3277 = vcmp.eq.s32.totalorder %v1860, 11
        %vm3278 = vcmp.eq.s32.totalorder %v1861, 11
        %v3279 = vsel %vm3277, 1.0, 0.0
        %v3280 = vsel %vm3278, 1.0, 0.0
        %v3281 = vpack.c.bf16 %v3280, %v3279
        %3282 = vmatprep.subr.bf16.mxu0 0
        %3283 = vmatpush1.bf16.msra.mxu0 0
        %3284 = vmatprep.subr.bf16.mxu0 0
        %3285 = vmatpush1.bf16.msra.mxu0 0
        %3286 = vmatprep.subr.bf16.mxu0 0
        %3287 = vmatpush1.bf16.msra.mxu0 0
        %3288 = vmatprep.subr.bf16.mxu0 0
        %3289 = vmatpush1.bf16.msra.mxu0 0
        %3290 = vmatprep.subr.bf16.mxu0 0
        %3291 = vmatpush1.bf16.msra.mxu0 0
        %3292 = vmatprep.subr.bf16.mxu0 0
        %3293 = vmatpush1.bf16.msra.mxu0 0
        %3294 = vmatprep.subr.bf16.mxu0 0
        %3295 = vmatpush1.bf16.msra.mxu0 0
        %3296 = vmatprep.subr.bf16.mxu0 0
        %3297 = vmatpush1.bf16.msra.mxu0 %v3281
        %3298 = vmatprep.subr.bf16.mxu0 0
        %3299 = vmatpush2.bf16.msra.mxu0 0
        %3300 = vmatprep.subr.bf16.mxu0 0
        %3301 = vmatpush2.bf16.msra.mxu0 0
        %3302 = vmatprep.subr.bf16.mxu0 0
        %3303 = vmatpush2.bf16.msra.mxu0 0
        %3304 = vmatprep.subr.bf16.mxu0 0
        %3305 = vmatpush2.bf16.msra.mxu0 0
        %3306 = vmatprep.subr.bf16.mxu0 0
        %3307 = vmatpush2.bf16.msra.mxu0 0
        %3308 = vmatprep.subr.bf16.mxu0 0
        %3309 = vmatpush2.bf16.msra.mxu0 0
        %3310 = vmatprep.subr.bf16.mxu0 0
        %3311 = vmatpush2.bf16.msra.mxu0 0
        %3312 = vmatprep.subr.bf16.mxu0 0
        %3313 = vmatpush2.bf16.msra.mxu0 0
        %3314 = vmatprep.mubr.bf16.mxu0 0
        %3315 = vmatmul.mubr.bf16.gmra.mxu0 %v1868
        %v3316 = vpop.f32.mrf.mxu0
        %v3317 = vadd.f32 0.0, %v3316
        %v3318 = vpop.f32.mrf.mxu0
        %v3319 = vpop.f32.mrf.mxu0
        %v3320 = vadd.f32 0.0, %v3319
        %v3321 = vpop.f32.mrf.mxu0
        %3322 = vmatprep.mubr.bf16.mxu0 0
        %3323 = vmatmul.mubr.bf16.gmra.mxu0 %v1871
        %v3324 = vpop.f32.mrf.mxu0
        %v3325 = vadd.f32 0.0, %v3324
        %v3326 = vpop.f32.mrf.mxu0
        %v3327 = vpop.f32.mrf.mxu0
        %v3328 = vadd.f32 0.0, %v3327
        %v3329 = vpop.f32.mrf.mxu0
        %3330 = vmatprep.mubr.bf16.mxu0 0
        %3331 = vmatmul.mubr.bf16.gmra.mxu0 %v1874
        %v3332 = vpop.f32.mrf.mxu0
        %v3333 = vadd.f32 0.0, %v3332
        %v3334 = vpop.f32.mrf.mxu0
        %v3335 = vpop.f32.mrf.mxu0
        %v3336 = vadd.f32 0.0, %v3335
        %v3337 = vpop.f32.mrf.mxu0
        %3338 = vmatprep.mubr.bf16.mxu0 0
        %3339 = vmatmul.mubr.bf16.gmra.mxu0 %v1877
        %v3340 = vpop.f32.mrf.mxu0
        %v3341 = vadd.f32 0.0, %v3340
        %v3342 = vpop.f32.mrf.mxu0
        %v3343 = vpop.f32.mrf.mxu0
        %v3344 = vadd.f32 0.0, %v3343
        %v3345 = vpop.f32.mrf.mxu0
        %3346 = vdwg.mxu0
        %v3347 = vpack.c.bf16 %v3320, %v3317
        %v3348 = vpack.c.bf16 %v3328, %v3325
        %v3349 = vpack.c.bf16 %v3336, %v3333
        %v3350 = vpack.c.bf16 %v3344, %v3341
        %s3351 = scalar_lea.vmem %s7, 88
        %v3352 = vld [vmem:[%s3351] sm:$0xf]
        %v3353 = vld [vmem:[%s3351 + $0x4] sm:$0xf]
        %v3356 = vunpack.c.l.b16 %v3352
        %v3357 = vunpack.c.l.b16 %v3353
        %v3358 = vpack.c.b16 %v3357, %v3356
        %v3360 = vsel %vm928, %v3358, 0
        %3362 = vmatprep.subr.bf16.mxu0 0
        %3363 = vmatpush1.bf16.msra.mxu0 0
        %3364 = vmatprep.subr.bf16.mxu0 0
        %3365 = vmatpush1.bf16.msra.mxu0 0
        %3366 = vmatprep.subr.bf16.mxu0 0
        %3367 = vmatpush1.bf16.msra.mxu0 0
        %3368 = vmatprep.subr.bf16.mxu0 0
        %3369 = vmatpush1.bf16.msra.mxu0 0
        %3370 = vmatprep.subr.bf16.mxu0 0
        %3371 = vmatpush1.bf16.msra.mxu0 %v3350
        %3372 = vmatprep.subr.bf16.mxu0 0
        %3373 = vmatpush1.bf16.msra.mxu0 %v3349
        %3374 = vmatprep.subr.bf16.mxu0 0
        %3375 = vmatpush1.bf16.msra.mxu0 %v3348
        %3376 = vmatprep.subr.bf16.mxu0 0
        %3377 = vmatpush1.bf16.msra.mxu0 %v3347
        %3378 = vmatprep.subr.bf16.mxu0 0
        %3379 = vmatpush2.bf16.msra.mxu0 0
        %3380 = vmatprep.subr.bf16.mxu0 0
        %3381 = vmatpush2.bf16.msra.mxu0 0
        %3382 = vmatprep.subr.bf16.mxu0 0
        %3383 = vmatpush2.bf16.msra.mxu0 0
        %3384 = vmatprep.subr.bf16.mxu0 0
        %3385 = vmatpush2.bf16.msra.mxu0 0
        %3386 = vmatprep.subr.bf16.mxu0 0
        %3387 = vmatpush2.bf16.msra.mxu0 0
        %3388 = vmatprep.subr.bf16.mxu0 0
        %3389 = vmatpush2.bf16.msra.mxu0 0
        %3390 = vmatprep.subr.bf16.mxu0 0
        %3391 = vmatpush2.bf16.msra.mxu0 0
        %3392 = vmatprep.subr.bf16.mxu0 0
        %3393 = vmatpush2.bf16.msra.mxu0 0
        %3394 = vmatprep.mubr.bf16.mxu0 0
        %3395 = vmatmul.mubr.bf16.gmra.mxu0 %v3360
        %v3396 = vpop.f32.mrf.mxu0
        %v3397 = vadd.f32 0.0, %v3396
        %v3398 = vpop.f32.mrf.mxu0
        %v3399 = vpop.f32.mrf.mxu0
        %v3400 = vadd.f32 0.0, %v3399
        %v3401 = vpop.f32.mrf.mxu0
        %3402 = vdwg.mxu0
        %v3403 = vadd.f32 %v3275, %v3397
        %v3404 = vadd.f32 %v3276, %v3400
        %vm3405 = vcmp.eq.s32.totalorder %v1860, 12
        %vm3406 = vcmp.eq.s32.totalorder %v1861, 12
        %v3407 = vsel %vm3405, 1.0, 0.0
        %v3408 = vsel %vm3406, 1.0, 0.0
        %v3409 = vpack.c.bf16 %v3408, %v3407
        %3410 = vmatprep.subr.bf16.mxu0 0
        %3411 = vmatpush1.bf16.msra.mxu0 0
        %3412 = vmatprep.subr.bf16.mxu0 0
        %3413 = vmatpush1.bf16.msra.mxu0 0
        %3414 = vmatprep.subr.bf16.mxu0 0
        %3415 = vmatpush1.bf16.msra.mxu0 0
        %3416 = vmatprep.subr.bf16.mxu0 0
        %3417 = vmatpush1.bf16.msra.mxu0 0
        %3418 = vmatprep.subr.bf16.mxu0 0
        %3419 = vmatpush1.bf16.msra.mxu0 0
        %3420 = vmatprep.subr.bf16.mxu0 0
        %3421 = vmatpush1.bf16.msra.mxu0 0
        %3422 = vmatprep.subr.bf16.mxu0 0
        %3423 = vmatpush1.bf16.msra.mxu0 0
        %3424 = vmatprep.subr.bf16.mxu0 0
        %3425 = vmatpush1.bf16.msra.mxu0 %v3409
        %3426 = vmatprep.subr.bf16.mxu0 0
        %3427 = vmatpush2.bf16.msra.mxu0 0
        %3428 = vmatprep.subr.bf16.mxu0 0
        %3429 = vmatpush2.bf16.msra.mxu0 0
        %3430 = vmatprep.subr.bf16.mxu0 0
        %3431 = vmatpush2.bf16.msra.mxu0 0
        %3432 = vmatprep.subr.bf16.mxu0 0
        %3433 = vmatpush2.bf16.msra.mxu0 0
        %3434 = vmatprep.subr.bf16.mxu0 0
        %3435 = vmatpush2.bf16.msra.mxu0 0
        %3436 = vmatprep.subr.bf16.mxu0 0
        %3437 = vmatpush2.bf16.msra.mxu0 0
        %3438 = vmatprep.subr.bf16.mxu0 0
        %3439 = vmatpush2.bf16.msra.mxu0 0
        %3440 = vmatprep.subr.bf16.mxu0 0
        %3441 = vmatpush2.bf16.msra.mxu0 0
        %3442 = vmatprep.mubr.bf16.mxu0 0
        %3443 = vmatmul.mubr.bf16.gmra.mxu0 %v1868
        %v3444 = vpop.f32.mrf.mxu0
        %v3445 = vadd.f32 0.0, %v3444
        %v3446 = vpop.f32.mrf.mxu0
        %v3447 = vpop.f32.mrf.mxu0
        %v3448 = vadd.f32 0.0, %v3447
        %v3449 = vpop.f32.mrf.mxu0
        %3450 = vmatprep.mubr.bf16.mxu0 0
        %3451 = vmatmul.mubr.bf16.gmra.mxu0 %v1871
        %v3452 = vpop.f32.mrf.mxu0
        %v3453 = vadd.f32 0.0, %v3452
        %v3454 = vpop.f32.mrf.mxu0
        %v3455 = vpop.f32.mrf.mxu0
        %v3456 = vadd.f32 0.0, %v3455
        %v3457 = vpop.f32.mrf.mxu0
        %3458 = vmatprep.mubr.bf16.mxu0 0
        %3459 = vmatmul.mubr.bf16.gmra.mxu0 %v1874
        %v3460 = vpop.f32.mrf.mxu0
        %v3461 = vadd.f32 0.0, %v3460
        %v3462 = vpop.f32.mrf.mxu0
        %v3463 = vpop.f32.mrf.mxu0
        %v3464 = vadd.f32 0.0, %v3463
        %v3465 = vpop.f32.mrf.mxu0
        %3466 = vmatprep.mubr.bf16.mxu0 0
        %3467 = vmatmul.mubr.bf16.gmra.mxu0 %v1877
        %v3468 = vpop.f32.mrf.mxu0
        %v3469 = vadd.f32 0.0, %v3468
        %v3470 = vpop.f32.mrf.mxu0
        %v3471 = vpop.f32.mrf.mxu0
        %v3472 = vadd.f32 0.0, %v3471
        %v3473 = vpop.f32.mrf.mxu0
        %3474 = vdwg.mxu0
        %v3475 = vpack.c.bf16 %v3448, %v3445
        %v3476 = vpack.c.bf16 %v3456, %v3453
        %v3477 = vpack.c.bf16 %v3464, %v3461
        %v3478 = vpack.c.bf16 %v3472, %v3469
        %s3479 = scalar_lea.vmem %s7, 96
        %v3480 = vld [vmem:[%s3479] sm:$0xf]
        %v3481 = vld [vmem:[%s3479 + $0x4] sm:$0xf]
        %v3484 = vunpack.c.l.b16 %v3480
        %v3485 = vunpack.c.l.b16 %v3481
        %v3486 = vpack.c.b16 %v3485, %v3484
        %v3488 = vsel %vm928, %v3486, 0
        %3490 = vmatprep.subr.bf16.mxu0 0
        %3491 = vmatpush1.bf16.msra.mxu0 0
        %3492 = vmatprep.subr.bf16.mxu0 0
        %3493 = vmatpush1.bf16.msra.mxu0 0
        %3494 = vmatprep.subr.bf16.mxu0 0
        %3495 = vmatpush1.bf16.msra.mxu0 0
        %3496 = vmatprep.subr.bf16.mxu0 0
        %3497 = vmatpush1.bf16.msra.mxu0 0
        %3498 = vmatprep.subr.bf16.mxu0 0
        %3499 = vmatpush1.bf16.msra.mxu0 %v3478
        %3500 = vmatprep.subr.bf16.mxu0 0
        %3501 = vmatpush1.bf16.msra.mxu0 %v3477
        %3502 = vmatprep.subr.bf16.mxu0 0
        %3503 = vmatpush1.bf16.msra.mxu0 %v3476
        %3504 = vmatprep.subr.bf16.mxu0 0
        %3505 = vmatpush1.bf16.msra.mxu0 %v3475
        %3506 = vmatprep.subr.bf16.mxu0 0
        %3507 = vmatpush2.bf16.msra.mxu0 0
        %3508 = vmatprep.subr.bf16.mxu0 0
        %3509 = vmatpush2.bf16.msra.mxu0 0
        %3510 = vmatprep.subr.bf16.mxu0 0
        %3511 = vmatpush2.bf16.msra.mxu0 0
        %3512 = vmatprep.subr.bf16.mxu0 0
        %3513 = vmatpush2.bf16.msra.mxu0 0
        %3514 = vmatprep.subr.bf16.mxu0 0
        %3515 = vmatpush2.bf16.msra.mxu0 0
        %3516 = vmatprep.subr.bf16.mxu0 0
        %3517 = vmatpush2.bf16.msra.mxu0 0
        %3518 = vmatprep.subr.bf16.mxu0 0
        %3519 = vmatpush2.bf16.msra.mxu0 0
        %3520 = vmatprep.subr.bf16.mxu0 0
        %3521 = vmatpush2.bf16.msra.mxu0 0
        %3522 = vmatprep.mubr.bf16.mxu0 0
        %3523 = vmatmul.mubr.bf16.gmra.mxu0 %v3488
        %v3524 = vpop.f32.mrf.mxu0
        %v3525 = vadd.f32 0.0, %v3524
        %v3526 = vpop.f32.mrf.mxu0
        %v3527 = vpop.f32.mrf.mxu0
        %v3528 = vadd.f32 0.0, %v3527
        %v3529 = vpop.f32.mrf.mxu0
        %3530 = vdwg.mxu0
        %v3531 = vadd.f32 %v3403, %v3525
        %v3532 = vadd.f32 %v3404, %v3528
        %vm3533 = vcmp.eq.s32.totalorder %v1860, 13
        %vm3534 = vcmp.eq.s32.totalorder %v1861, 13
        %v3535 = vsel %vm3533, 1.0, 0.0
        %v3536 = vsel %vm3534, 1.0, 0.0
        %v3537 = vpack.c.bf16 %v3536, %v3535
        %3538 = vmatprep.subr.bf16.mxu0 0
        %3539 = vmatpush1.bf16.msra.mxu0 0
        %3540 = vmatprep.subr.bf16.mxu0 0
        %3541 = vmatpush1.bf16.msra.mxu0 0
        %3542 = vmatprep.subr.bf16.mxu0 0
        %3543 = vmatpush1.bf16.msra.mxu0 0
        %3544 = vmatprep.subr.bf16.mxu0 0
        %3545 = vmatpush1.bf16.msra.mxu0 0
        %3546 = vmatprep.subr.bf16.mxu0 0
        %3547 = vmatpush1.bf16.msra.mxu0 0
        %3548 = vmatprep.subr.bf16.mxu0 0
        %3549 = vmatpush1.bf16.msra.mxu0 0
        %3550 = vmatprep.subr.bf16.mxu0 0
        %3551 = vmatpush1.bf16.msra.mxu0 0
        %3552 = vmatprep.subr.bf16.mxu0 0
        %3553 = vmatpush1.bf16.msra.mxu0 %v3537
        %3554 = vmatprep.subr.bf16.mxu0 0
        %3555 = vmatpush2.bf16.msra.mxu0 0
        %3556 = vmatprep.subr.bf16.mxu0 0
        %3557 = vmatpush2.bf16.msra.mxu0 0
        %3558 = vmatprep.subr.bf16.mxu0 0
        %3559 = vmatpush2.bf16.msra.mxu0 0
        %3560 = vmatprep.subr.bf16.mxu0 0
        %3561 = vmatpush2.bf16.msra.mxu0 0
        %3562 = vmatprep.subr.bf16.mxu0 0
        %3563 = vmatpush2.bf16.msra.mxu0 0
        %3564 = vmatprep.subr.bf16.mxu0 0
        %3565 = vmatpush2.bf16.msra.mxu0 0
        %3566 = vmatprep.subr.bf16.mxu0 0
        %3567 = vmatpush2.bf16.msra.mxu0 0
        %3568 = vmatprep.subr.bf16.mxu0 0
        %3569 = vmatpush2.bf16.msra.mxu0 0
        %3570 = vmatprep.mubr.bf16.mxu0 0
        %3571 = vmatmul.mubr.bf16.gmra.mxu0 %v1868
        %v3572 = vpop.f32.mrf.mxu0
        %v3573 = vadd.f32 0.0, %v3572
        %v3574 = vpop.f32.mrf.mxu0
        %v3575 = vpop.f32.mrf.mxu0
        %v3576 = vadd.f32 0.0, %v3575
        %v3577 = vpop.f32.mrf.mxu0
        %3578 = vmatprep.mubr.bf16.mxu0 0
        %3579 = vmatmul.mubr.bf16.gmra.mxu0 %v1871
        %v3580 = vpop.f32.mrf.mxu0
        %v3581 = vadd.f32 0.0, %v3580
        %v3582 = vpop.f32.mrf.mxu0
        %v3583 = vpop.f32.mrf.mxu0
        %v3584 = vadd.f32 0.0, %v3583
        %v3585 = vpop.f32.mrf.mxu0
        %3586 = vmatprep.mubr.bf16.mxu0 0
        %3587 = vmatmul.mubr.bf16.gmra.mxu0 %v1874
        %v3588 = vpop.f32.mrf.mxu0
        %v3589 = vadd.f32 0.0, %v3588
        %v3590 = vpop.f32.mrf.mxu0
        %v3591 = vpop.f32.mrf.mxu0
        %v3592 = vadd.f32 0.0, %v3591
        %v3593 = vpop.f32.mrf.mxu0
        %3594 = vmatprep.mubr.bf16.mxu0 0
        %3595 = vmatmul.mubr.bf16.gmra.mxu0 %v1877
        %v3596 = vpop.f32.mrf.mxu0
        %v3597 = vadd.f32 0.0, %v3596
        %v3598 = vpop.f32.mrf.mxu0
        %v3599 = vpop.f32.mrf.mxu0
        %v3600 = vadd.f32 0.0, %v3599
        %v3601 = vpop.f32.mrf.mxu0
        %3602 = vdwg.mxu0
        %v3603 = vpack.c.bf16 %v3576, %v3573
        %v3604 = vpack.c.bf16 %v3584, %v3581
        %v3605 = vpack.c.bf16 %v3592, %v3589
        %v3606 = vpack.c.bf16 %v3600, %v3597
        %s3607 = scalar_lea.vmem %s7, 104
        %v3608 = vld [vmem:[%s3607] sm:$0xf]
        %v3609 = vld [vmem:[%s3607 + $0x4] sm:$0xf]
        %v3612 = vunpack.c.l.b16 %v3608
        %v3613 = vunpack.c.l.b16 %v3609
        %v3614 = vpack.c.b16 %v3613, %v3612
        %v3616 = vsel %vm928, %v3614, 0
        %3618 = vmatprep.subr.bf16.mxu0 0
        %3619 = vmatpush1.bf16.msra.mxu0 0
        %3620 = vmatprep.subr.bf16.mxu0 0
        %3621 = vmatpush1.bf16.msra.mxu0 0
        %3622 = vmatprep.subr.bf16.mxu0 0
        %3623 = vmatpush1.bf16.msra.mxu0 0
        %3624 = vmatprep.subr.bf16.mxu0 0
        %3625 = vmatpush1.bf16.msra.mxu0 0
        %3626 = vmatprep.subr.bf16.mxu0 0
        %3627 = vmatpush1.bf16.msra.mxu0 %v3606
        %3628 = vmatprep.subr.bf16.mxu0 0
        %3629 = vmatpush1.bf16.msra.mxu0 %v3605
        %3630 = vmatprep.subr.bf16.mxu0 0
        %3631 = vmatpush1.bf16.msra.mxu0 %v3604
        %3632 = vmatprep.subr.bf16.mxu0 0
        %3633 = vmatpush1.bf16.msra.mxu0 %v3603
        %3634 = vmatprep.subr.bf16.mxu0 0
        %3635 = vmatpush2.bf16.msra.mxu0 0
        %3636 = vmatprep.subr.bf16.mxu0 0
        %3637 = vmatpush2.bf16.msra.mxu0 0
        %3638 = vmatprep.subr.bf16.mxu0 0
        %3639 = vmatpush2.bf16.msra.mxu0 0
        %3640 = vmatprep.subr.bf16.mxu0 0
        %3641 = vmatpush2.bf16.msra.mxu0 0
        %3642 = vmatprep.subr.bf16.mxu0 0
        %3643 = vmatpush2.bf16.msra.mxu0 0
        %3644 = vmatprep.subr.bf16.mxu0 0
        %3645 = vmatpush2.bf16.msra.mxu0 0
        %3646 = vmatprep.subr.bf16.mxu0 0
        %3647 = vmatpush2.bf16.msra.mxu0 0
        %3648 = vmatprep.subr.bf16.mxu0 0
        %3649 = vmatpush2.bf16.msra.mxu0 0
        %3650 = vmatprep.mubr.bf16.mxu0 0
        %3651 = vmatmul.mubr.bf16.gmra.mxu0 %v3616
        %v3652 = vpop.f32.mrf.mxu0
        %v3653 = vadd.f32 0.0, %v3652
        %v3654 = vpop.f32.mrf.mxu0
        %v3655 = vpop.f32.mrf.mxu0
        %v3656 = vadd.f32 0.0, %v3655
        %v3657 = vpop.f32.mrf.mxu0
        %3658 = vdwg.mxu0
        %v3659 = vadd.f32 %v3531, %v3653
        %v3660 = vadd.f32 %v3532, %v3656
        %vm3661 = vcmp.eq.s32.totalorder %v1860, 14
        %vm3662 = vcmp.eq.s32.totalorder %v1861, 14
        %v3663 = vsel %vm3661, 1.0, 0.0
        %v3664 = vsel %vm3662, 1.0, 0.0
        %v3665 = vpack.c.bf16 %v3664, %v3663
        %3666 = vmatprep.subr.bf16.mxu0 0
        %3667 = vmatpush1.bf16.msra.mxu0 0
        %3668 = vmatprep.subr.bf16.mxu0 0
        %3669 = vmatpush1.bf16.msra.mxu0 0
        %3670 = vmatprep.subr.bf16.mxu0 0
        %3671 = vmatpush1.bf16.msra.mxu0 0
        %3672 = vmatprep.subr.bf16.mxu0 0
        %3673 = vmatpush1.bf16.msra.mxu0 0
        %3674 = vmatprep.subr.bf16.mxu0 0
        %3675 = vmatpush1.bf16.msra.mxu0 0
        %3676 = vmatprep.subr.bf16.mxu0 0
        %3677 = vmatpush1.bf16.msra.mxu0 0
        %3678 = vmatprep.subr.bf16.mxu0 0
        %3679 = vmatpush1.bf16.msra.mxu0 0
        %3680 = vmatprep.subr.bf16.mxu0 0
        %3681 = vmatpush1.bf16.msra.mxu0 %v3665
        %3682 = vmatprep.subr.bf16.mxu0 0
        %3683 = vmatpush2.bf16.msra.mxu0 0
        %3684 = vmatprep.subr.bf16.mxu0 0
        %3685 = vmatpush2.bf16.msra.mxu0 0
        %3686 = vmatprep.subr.bf16.mxu0 0
        %3687 = vmatpush2.bf16.msra.mxu0 0
        %3688 = vmatprep.subr.bf16.mxu0 0
        %3689 = vmatpush2.bf16.msra.mxu0 0
        %3690 = vmatprep.subr.bf16.mxu0 0
        %3691 = vmatpush2.bf16.msra.mxu0 0
        %3692 = vmatprep.subr.bf16.mxu0 0
        %3693 = vmatpush2.bf16.msra.mxu0 0
        %3694 = vmatprep.subr.bf16.mxu0 0
        %3695 = vmatpush2.bf16.msra.mxu0 0
        %3696 = vmatprep.subr.bf16.mxu0 0
        %3697 = vmatpush2.bf16.msra.mxu0 0
        %3698 = vmatprep.mubr.bf16.mxu0 0
        %3699 = vmatmul.mubr.bf16.gmra.mxu0 %v1868
        %v3700 = vpop.f32.mrf.mxu0
        %v3701 = vadd.f32 0.0, %v3700
        %v3702 = vpop.f32.mrf.mxu0
        %v3703 = vpop.f32.mrf.mxu0
        %v3704 = vadd.f32 0.0, %v3703
        %v3705 = vpop.f32.mrf.mxu0
        %3706 = vmatprep.mubr.bf16.mxu0 0
        %3707 = vmatmul.mubr.bf16.gmra.mxu0 %v1871
        %v3708 = vpop.f32.mrf.mxu0
        %v3709 = vadd.f32 0.0, %v3708
        %v3710 = vpop.f32.mrf.mxu0
        %v3711 = vpop.f32.mrf.mxu0
        %v3712 = vadd.f32 0.0, %v3711
        %v3713 = vpop.f32.mrf.mxu0
        %3714 = vmatprep.mubr.bf16.mxu0 0
        %3715 = vmatmul.mubr.bf16.gmra.mxu0 %v1874
        %v3716 = vpop.f32.mrf.mxu0
        %v3717 = vadd.f32 0.0, %v3716
        %v3718 = vpop.f32.mrf.mxu0
        %v3719 = vpop.f32.mrf.mxu0
        %v3720 = vadd.f32 0.0, %v3719
        %v3721 = vpop.f32.mrf.mxu0
        %3722 = vmatprep.mubr.bf16.mxu0 0
        %3723 = vmatmul.mubr.bf16.gmra.mxu0 %v1877
        %v3724 = vpop.f32.mrf.mxu0
        %v3725 = vadd.f32 0.0, %v3724
        %v3726 = vpop.f32.mrf.mxu0
        %v3727 = vpop.f32.mrf.mxu0
        %v3728 = vadd.f32 0.0, %v3727
        %v3729 = vpop.f32.mrf.mxu0
        %3730 = vdwg.mxu0
        %v3731 = vpack.c.bf16 %v3704, %v3701
        %v3732 = vpack.c.bf16 %v3712, %v3709
        %v3733 = vpack.c.bf16 %v3720, %v3717
        %v3734 = vpack.c.bf16 %v3728, %v3725
        %s3735 = scalar_lea.vmem %s7, 112
        %v3736 = vld [vmem:[%s3735] sm:$0xf]
        %v3737 = vld [vmem:[%s3735 + $0x4] sm:$0xf]
        %v3740 = vunpack.c.l.b16 %v3736
        %v3741 = vunpack.c.l.b16 %v3737
        %v3742 = vpack.c.b16 %v3741, %v3740
        %v3744 = vsel %vm928, %v3742, 0
        %3746 = vmatprep.subr.bf16.mxu0 0
        %3747 = vmatpush1.bf16.msra.mxu0 0
        %3748 = vmatprep.subr.bf16.mxu0 0
        %3749 = vmatpush1.bf16.msra.mxu0 0
        %3750 = vmatprep.subr.bf16.mxu0 0
        %3751 = vmatpush1.bf16.msra.mxu0 0
        %3752 = vmatprep.subr.bf16.mxu0 0
        %3753 = vmatpush1.bf16.msra.mxu0 0
        %3754 = vmatprep.subr.bf16.mxu0 0
        %3755 = vmatpush1.bf16.msra.mxu0 %v3734
        %3756 = vmatprep.subr.bf16.mxu0 0
        %3757 = vmatpush1.bf16.msra.mxu0 %v3733
        %3758 = vmatprep.subr.bf16.mxu0 0
        %3759 = vmatpush1.bf16.msra.mxu0 %v3732
        %3760 = vmatprep.subr.bf16.mxu0 0
        %3761 = vmatpush1.bf16.msra.mxu0 %v3731
        %3762 = vmatprep.subr.bf16.mxu0 0
        %3763 = vmatpush2.bf16.msra.mxu0 0
        %3764 = vmatprep.subr.bf16.mxu0 0
        %3765 = vmatpush2.bf16.msra.mxu0 0
        %3766 = vmatprep.subr.bf16.mxu0 0
        %3767 = vmatpush2.bf16.msra.mxu0 0
        %3768 = vmatprep.subr.bf16.mxu0 0
        %3769 = vmatpush2.bf16.msra.mxu0 0
        %3770 = vmatprep.subr.bf16.mxu0 0
        %3771 = vmatpush2.bf16.msra.mxu0 0
        %3772 = vmatprep.subr.bf16.mxu0 0
        %3773 = vmatpush2.bf16.msra.mxu0 0
        %3774 = vmatprep.subr.bf16.mxu0 0
        %3775 = vmatpush2.bf16.msra.mxu0 0
        %3776 = vmatprep.subr.bf16.mxu0 0
        %3777 = vmatpush2.bf16.msra.mxu0 0
        %3778 = vmatprep.mubr.bf16.mxu0 0
        %3779 = vmatmul.mubr.bf16.gmra.mxu0 %v3744
        %v3780 = vpop.f32.mrf.mxu0
        %v3781 = vadd.f32 0.0, %v3780
        %v3782 = vpop.f32.mrf.mxu0
        %v3783 = vpop.f32.mrf.mxu0
        %v3784 = vadd.f32 0.0, %v3783
        %v3785 = vpop.f32.mrf.mxu0
        %3786 = vdwg.mxu0
        %v3787 = vadd.f32 %v3659, %v3781
        %v3788 = vadd.f32 %v3660, %v3784
        %vm3789 = vcmp.eq.s32.totalorder %v1860, 15
        %vm3790 = vcmp.eq.s32.totalorder %v1861, 15
        %v3791 = vsel %vm3789, 1.0, 0.0
        %v3792 = vsel %vm3790, 1.0, 0.0
        %v3793 = vpack.c.bf16 %v3792, %v3791
        %3794 = vmatprep.subr.bf16.mxu0 0
        %3795 = vmatpush1.bf16.msra.mxu0 0
        %3796 = vmatprep.subr.bf16.mxu0 0
        %3797 = vmatpush1.bf16.msra.mxu0 0
        %3798 = vmatprep.subr.bf16.mxu0 0
        %3799 = vmatpush1.bf16.msra.mxu0 0
        %3800 = vmatprep.subr.bf16.mxu0 0
        %3801 = vmatpush1.bf16.msra.mxu0 0
        %3802 = vmatprep.subr.bf16.mxu0 0
        %3803 = vmatpush1.bf16.msra.mxu0 0
        %3804 = vmatprep.subr.bf16.mxu0 0
        %3805 = vmatpush1.bf16.msra.mxu0 0
        %3806 = vmatprep.subr.bf16.mxu0 0
        %3807 = vmatpush1.bf16.msra.mxu0 0
        %3808 = vmatprep.subr.bf16.mxu0 0
        %3809 = vmatpush1.bf16.msra.mxu0 %v3793
        %3810 = vmatprep.subr.bf16.mxu0 0
        %3811 = vmatpush2.bf16.msra.mxu0 0
        %3812 = vmatprep.subr.bf16.mxu0 0
        %3813 = vmatpush2.bf16.msra.mxu0 0
        %3814 = vmatprep.subr.bf16.mxu0 0
        %3815 = vmatpush2.bf16.msra.mxu0 0
        %3816 = vmatprep.subr.bf16.mxu0 0
        %3817 = vmatpush2.bf16.msra.mxu0 0
        %3818 = vmatprep.subr.bf16.mxu0 0
        %3819 = vmatpush2.bf16.msra.mxu0 0
        %3820 = vmatprep.subr.bf16.mxu0 0
        %3821 = vmatpush2.bf16.msra.mxu0 0
        %3822 = vmatprep.subr.bf16.mxu0 0
        %3823 = vmatpush2.bf16.msra.mxu0 0
        %3824 = vmatprep.subr.bf16.mxu0 0
        %3825 = vmatpush2.bf16.msra.mxu0 0
        %3826 = vmatprep.mubr.bf16.mxu0 0
        %3827 = vmatmul.mubr.bf16.gmra.mxu0 %v1868
        %v3828 = vpop.f32.mrf.mxu0
        %v3829 = vadd.f32 0.0, %v3828
        %v3830 = vpop.f32.mrf.mxu0
        %v3831 = vpop.f32.mrf.mxu0
        %v3832 = vadd.f32 0.0, %v3831
        %v3833 = vpop.f32.mrf.mxu0
        %3834 = vmatprep.mubr.bf16.mxu0 0
        %3835 = vmatmul.mubr.bf16.gmra.mxu0 %v1871
        %v3836 = vpop.f32.mrf.mxu0
        %v3837 = vadd.f32 0.0, %v3836
        %v3838 = vpop.f32.mrf.mxu0
        %v3839 = vpop.f32.mrf.mxu0
        %v3840 = vadd.f32 0.0, %v3839
        %v3841 = vpop.f32.mrf.mxu0
        %3842 = vmatprep.mubr.bf16.mxu0 0
        %3843 = vmatmul.mubr.bf16.gmra.mxu0 %v1874
        %v3844 = vpop.f32.mrf.mxu0
        %v3845 = vadd.f32 0.0, %v3844
        %v3846 = vpop.f32.mrf.mxu0
        %v3847 = vpop.f32.mrf.mxu0
        %v3848 = vadd.f32 0.0, %v3847
        %v3849 = vpop.f32.mrf.mxu0
        %3850 = vmatprep.mubr.bf16.mxu0 0
        %3851 = vmatmul.mubr.bf16.gmra.mxu0 %v1877
        %v3852 = vpop.f32.mrf.mxu0
        %v3853 = vadd.f32 0.0, %v3852
        %v3854 = vpop.f32.mrf.mxu0
        %v3855 = vpop.f32.mrf.mxu0
        %v3856 = vadd.f32 0.0, %v3855
        %v3857 = vpop.f32.mrf.mxu0
        %3858 = vdwg.mxu0
        %v3859 = vpack.c.bf16 %v3832, %v3829
        %v3860 = vpack.c.bf16 %v3840, %v3837
        %v3861 = vpack.c.bf16 %v3848, %v3845
        %v3862 = vpack.c.bf16 %v3856, %v3853
        %s3863 = scalar_lea.vmem %s7, 120
        %v3864 = vld [vmem:[%s3863] sm:$0xf]
        %v3865 = vld [vmem:[%s3863 + $0x4] sm:$0xf]
        %v3868 = vunpack.c.l.b16 %v3864
        %v3869 = vunpack.c.l.b16 %v3865
        %v3870 = vpack.c.b16 %v3869, %v3868
        %v3872 = vsel %vm928, %v3870, 0
        %3874 = vmatprep.subr.bf16.mxu0 0
        %3875 = vmatpush1.bf16.msra.mxu0 0
        %3876 = vmatprep.subr.bf16.mxu0 0
        %3877 = vmatpush1.bf16.msra.mxu0 0
        %3878 = vmatprep.subr.bf16.mxu0 0
        %3879 = vmatpush1.bf16.msra.mxu0 0
        %3880 = vmatprep.subr.bf16.mxu0 0
        %3881 = vmatpush1.bf16.msra.mxu0 0
        %3882 = vmatprep.subr.bf16.mxu0 0
        %3883 = vmatpush1.bf16.msra.mxu0 %v3862
        %3884 = vmatprep.subr.bf16.mxu0 0
        %3885 = vmatpush1.bf16.msra.mxu0 %v3861
        %3886 = vmatprep.subr.bf16.mxu0 0
        %3887 = vmatpush1.bf16.msra.mxu0 %v3860
        %3888 = vmatprep.subr.bf16.mxu0 0
        %3889 = vmatpush1.bf16.msra.mxu0 %v3859
        %3890 = vmatprep.subr.bf16.mxu0 0
        %3891 = vmatpush2.bf16.msra.mxu0 0
        %3892 = vmatprep.subr.bf16.mxu0 0
        %3893 = vmatpush2.bf16.msra.mxu0 0
        %3894 = vmatprep.subr.bf16.mxu0 0
        %3895 = vmatpush2.bf16.msra.mxu0 0
        %3896 = vmatprep.subr.bf16.mxu0 0
        %3897 = vmatpush2.bf16.msra.mxu0 0
        %3898 = vmatprep.subr.bf16.mxu0 0
        %3899 = vmatpush2.bf16.msra.mxu0 0
        %3900 = vmatprep.subr.bf16.mxu0 0
        %3901 = vmatpush2.bf16.msra.mxu0 0
        %3902 = vmatprep.subr.bf16.mxu0 0
        %3903 = vmatpush2.bf16.msra.mxu0 0
        %3904 = vmatprep.subr.bf16.mxu0 0
        %3905 = vmatpush2.bf16.msra.mxu0 0
        %3906 = vmatprep.mubr.bf16.mxu0 0
        %3907 = vmatmul.mubr.bf16.gmra.mxu0 %v3872
        %v3908 = vpop.f32.mrf.mxu0
        %v3909 = vadd.f32 0.0, %v3908
        %v3910 = vpop.f32.mrf.mxu0
        %v3911 = vpop.f32.mrf.mxu0
        %v3912 = vadd.f32 0.0, %v3911
        %v3913 = vpop.f32.mrf.mxu0
        %3914 = vdwg.mxu0
        %v3915 = vadd.f32 %v3787, %v3909
        %v3916 = vadd.f32 %v3788, %v3912
        %v3917 = vld [vmem:[%s8] sm:$0xff]
        %v3918 = vld [vmem:[%s8 + $0x8] sm:$0xff]
        %v3919 = vadd.f32 %v3915, %v3917
        %v3920 = vadd.f32 %v3916, %v3918
        %vm3921 = vcmp.ge.f32.partialorder %v3919, 0.0
        %vm3922 = vcmp.ge.f32.partialorder %v3920, 0.0
        %v3923 = vmul.f32 %v3919, 0.01
        %v3924 = vmul.f32 %v3920, 0.01
        %v3925 = vsel %vm3921, %v3919, %v3923
        %v3926 = vsel %vm3922, %v3920, %v3924
        %v3927 = vpack.c.bf16 %v3926, %v3925
        %v3928 = vmul.u32 %v546, 8
        %v3929 = vsub.s32 %v563, %v3928
        %vm3930 = vcmp.eq.s32.totalorder %v3929, 0
        %v3931 = vsel %vm3930, 1.0, 0.0
        %v3932 = vpack.c.bf16 %v3931, %v3931
        %3934 = vset.pattern.permute.xlu0 0
        %3935 = vperm.xlu0 %3934, %v3927
        %v3936 = vpop.permute.xlu0 %3935
        %v3939 = vpack.i.b16 %v3932, %v3932
        %v3941 = vlaneseq
        %v3942 = vshrl.u32 %v3941, 7
        %v3943 = vsub.s32 0, %v3942
        %v3944 = vrot.slane %v3939, %v3943
        %v3945 = vmul.bf16 %v3936, %v3944
        %v3946 = vld [vmem:[%s9] sm:$0xf]
        %v3947 = vld [vmem:[%s9 + $0x4] sm:$0xf]
        %v3948 = vld [vmem:[%s9 + $0x8] sm:$0xf]
        %v3949 = vld [vmem:[%s9 + $0xc] sm:$0xf]
        %v3950 = vld [vmem:[%s9 + $0x10] sm:$0xf]
        %v3951 = vld [vmem:[%s9 + $0x14] sm:$0xf]
        %v3952 = vld [vmem:[%s9 + $0x18] sm:$0xf]
        %v3953 = vld [vmem:[%s9 + $0x1c] sm:$0xf]
        %vm3954 = vcmp.eq.s32.totalorder %v3929, 1
        %v3955 = vsel %vm3954, 1.0, 0.0
        %v3956 = vpack.c.bf16 %v3955, %v3955
        %v3958 = vpack.i.b16 %v3956, %v3956
        %v3960 = vlaneseq
        %v3961 = vshrl.u32 %v3960, 7
        %v3962 = vsub.s32 0, %v3961
        %v3963 = vrot.slane %v3958, %v3962
        %v3964 = vmul.bf16 %v3936, %v3963
        %s3965 = scalar_lea.vmem %s9, 32
        %v3966 = vld [vmem:[%s3965] sm:$0xf]
        %v3967 = vld [vmem:[%s3965 + $0x4] sm:$0xf]
        %v3968 = vld [vmem:[%s3965 + $0x8] sm:$0xf]
        %v3969 = vld [vmem:[%s3965 + $0xc] sm:$0xf]
        %v3970 = vld [vmem:[%s3965 + $0x10] sm:$0xf]
        %v3971 = vld [vmem:[%s3965 + $0x14] sm:$0xf]
        %v3972 = vld [vmem:[%s3965 + $0x18] sm:$0xf]
        %v3973 = vld [vmem:[%s3965 + $0x1c] sm:$0xf]
        %v3982 = vunpack.c.l.b16 %v3966
        %v3983 = vunpack.c.l.b16 %v3967
        %v3984 = vunpack.c.l.b16 %v3968
        %v3985 = vunpack.c.l.b16 %v3969
        %v3986 = vunpack.c.l.b16 %v3970
        %v3987 = vunpack.c.l.b16 %v3971
        %v3988 = vunpack.c.l.b16 %v3972
        %v3989 = vunpack.c.l.b16 %v3973
        %v3990 = vpack.c.b16 %v3983, %v3982
        %v3991 = vpack.c.b16 %v3985, %v3984
        %v3992 = vpack.c.b16 %v3987, %v3986
        %v3993 = vpack.c.b16 %v3989, %v3988
        %v3995 = vsel %vm1035, %v3990, 0
        %v3998 = vsel %vm1035, %v3991, 0
        %v4001 = vsel %vm1035, %v3992, 0
        %v4004 = vsel %vm1035, %v3993, 0
        %4006 = vmatprep.subr.bf16.mxu0 0
        %4007 = vmatpush1.bf16.msra.mxu0 0
        %4008 = vmatprep.subr.bf16.mxu0 0
        %4009 = vmatpush1.bf16.msra.mxu0 0
        %4010 = vmatprep.subr.bf16.mxu0 0
        %4011 = vmatpush1.bf16.msra.mxu0 0
        %4012 = vmatprep.subr.bf16.mxu0 0
        %4013 = vmatpush1.bf16.msra.mxu0 0
        %4014 = vmatprep.subr.bf16.mxu0 0
        %4015 = vmatpush1.bf16.msra.mxu0 0
        %4016 = vmatprep.subr.bf16.mxu0 0
        %4017 = vmatpush1.bf16.msra.mxu0 0
        %4018 = vmatprep.subr.bf16.mxu0 0
        %4019 = vmatpush1.bf16.msra.mxu0 0
        %4020 = vmatprep.subr.bf16.mxu0 0
        %4021 = vmatpush1.bf16.msra.mxu0 %v3964
        %4022 = vmatprep.subr.bf16.mxu0 0
        %4023 = vmatpush2.bf16.msra.mxu0 0
        %4024 = vmatprep.subr.bf16.mxu0 0
        %4025 = vmatpush2.bf16.msra.mxu0 0
        %4026 = vmatprep.subr.bf16.mxu0 0
        %4027 = vmatpush2.bf16.msra.mxu0 0
        %4028 = vmatprep.subr.bf16.mxu0 0
        %4029 = vmatpush2.bf16.msra.mxu0 0
        %4030 = vmatprep.subr.bf16.mxu0 0
        %4031 = vmatpush2.bf16.msra.mxu0 0
        %4032 = vmatprep.subr.bf16.mxu0 0
        %4033 = vmatpush2.bf16.msra.mxu0 0
        %4034 = vmatprep.subr.bf16.mxu0 0
        %4035 = vmatpush2.bf16.msra.mxu0 0
        %4036 = vmatprep.subr.bf16.mxu0 0
        %4037 = vmatpush2.bf16.msra.mxu0 0
        %4038 = vmatprep.mubr.bf16.mxu0 0
        %4039 = vmatmul.mubr.bf16.gmra.mxu0 %v3995
        %v4040 = vpop.f32.mrf.mxu0
        %v4041 = vadd.f32 0.0, %v4040
        %v4042 = vpop.f32.mrf.mxu0
        %v4043 = vpop.f32.mrf.mxu0
        %v4044 = vadd.f32 0.0, %v4043
        %v4045 = vpop.f32.mrf.mxu0
        %4046 = vmatprep.mubr.bf16.mxu0 0
        %4047 = vmatmul.mubr.bf16.gmra.mxu0 %v3998
        %v4048 = vpop.f32.mrf.mxu0
        %v4049 = vadd.f32 0.0, %v4048
        %v4050 = vpop.f32.mrf.mxu0
        %v4051 = vpop.f32.mrf.mxu0
        %v4052 = vadd.f32 0.0, %v4051
        %v4053 = vpop.f32.mrf.mxu0
        %4054 = vmatprep.mubr.bf16.mxu0 0
        %4055 = vmatmul.mubr.bf16.gmra.mxu0 %v4001
        %v4056 = vpop.f32.mrf.mxu0
        %v4057 = vadd.f32 0.0, %v4056
        %v4058 = vpop.f32.mrf.mxu0
        %v4059 = vpop.f32.mrf.mxu0
        %v4060 = vadd.f32 0.0, %v4059
        %v4061 = vpop.f32.mrf.mxu0
        %4062 = vmatprep.mubr.bf16.mxu0 0
        %4063 = vmatmul.mubr.bf16.gmra.mxu0 %v4004
        %v4064 = vpop.f32.mrf.mxu0
        %v4065 = vadd.f32 0.0, %v4064
        %v4066 = vpop.f32.mrf.mxu0
        %v4067 = vpop.f32.mrf.mxu0
        %v4068 = vadd.f32 0.0, %v4067
        %v4069 = vpop.f32.mrf.mxu0
        %4070 = vdwg.mxu0
        %v4079 = vunpack.c.l.b16 %v3946
        %v4080 = vunpack.c.l.b16 %v3947
        %v4081 = vunpack.c.l.b16 %v3948
        %v4082 = vunpack.c.l.b16 %v3949
        %v4083 = vunpack.c.l.b16 %v3950
        %v4084 = vunpack.c.l.b16 %v3951
        %v4085 = vunpack.c.l.b16 %v3952
        %v4086 = vunpack.c.l.b16 %v3953
        %v4087 = vpack.c.b16 %v4080, %v4079
        %v4088 = vpack.c.b16 %v4082, %v4081
        %v4089 = vpack.c.b16 %v4084, %v4083
        %v4090 = vpack.c.b16 %v4086, %v4085
        %v4092 = vsel %vm1035, %v4087, 0
        %v4095 = vsel %vm1035, %v4088, 0
        %v4098 = vsel %vm1035, %v4089, 0
        %v4101 = vsel %vm1035, %v4090, 0
        %4103 = vmatprep.subr.bf16.mxu0 0
        %4104 = vmatpush1.bf16.msra.mxu0 0
        %4105 = vmatprep.subr.bf16.mxu0 0
        %4106 = vmatpush1.bf16.msra.mxu0 0
        %4107 = vmatprep.subr.bf16.mxu0 0
        %4108 = vmatpush1.bf16.msra.mxu0 0
        %4109 = vmatprep.subr.bf16.mxu0 0
        %4110 = vmatpush1.bf16.msra.mxu0 0
        %4111 = vmatprep.subr.bf16.mxu0 0
        %4112 = vmatpush1.bf16.msra.mxu0 0
        %4113 = vmatprep.subr.bf16.mxu0 0
        %4114 = vmatpush1.bf16.msra.mxu0 0
        %4115 = vmatprep.subr.bf16.mxu0 0
        %4116 = vmatpush1.bf16.msra.mxu0 0
        %4117 = vmatprep.subr.bf16.mxu0 0
        %4118 = vmatpush1.bf16.msra.mxu0 %v3945
        %4119 = vmatprep.subr.bf16.mxu0 0
        %4120 = vmatpush2.bf16.msra.mxu0 0
        %4121 = vmatprep.subr.bf16.mxu0 0
        %4122 = vmatpush2.bf16.msra.mxu0 0
        %4123 = vmatprep.subr.bf16.mxu0 0
        %4124 = vmatpush2.bf16.msra.mxu0 0
        %4125 = vmatprep.subr.bf16.mxu0 0
        %4126 = vmatpush2.bf16.msra.mxu0 0
        %4127 = vmatprep.subr.bf16.mxu0 0
        %4128 = vmatpush2.bf16.msra.mxu0 0
        %4129 = vmatprep.subr.bf16.mxu0 0
        %4130 = vmatpush2.bf16.msra.mxu0 0
        %4131 = vmatprep.subr.bf16.mxu0 0
        %4132 = vmatpush2.bf16.msra.mxu0 0
        %4133 = vmatprep.subr.bf16.mxu0 0
        %4134 = vmatpush2.bf16.msra.mxu0 0
        %4135 = vmatprep.mubr.bf16.mxu0 0
        %4136 = vmatmul.mubr.bf16.gmra.mxu0 %v4092
        %v4137 = vpop.f32.mrf.mxu0
        %v4138 = vadd.f32 %v4041, %v4137
        %v4139 = vpop.f32.mrf.mxu0
        %v4140 = vpop.f32.mrf.mxu0
        %v4141 = vadd.f32 %v4044, %v4140
        %v4142 = vpop.f32.mrf.mxu0
        %4143 = vmatprep.mubr.bf16.mxu0 0
        %4144 = vmatmul.mubr.bf16.gmra.mxu0 %v4095
        %v4145 = vpop.f32.mrf.mxu0
        %v4146 = vadd.f32 %v4049, %v4145
        %v4147 = vpop.f32.mrf.mxu0
        %v4148 = vpop.f32.mrf.mxu0
        %v4149 = vadd.f32 %v4052, %v4148
        %v4150 = vpop.f32.mrf.mxu0
        %4151 = vmatprep.mubr.bf16.mxu0 0
        %4152 = vmatmul.mubr.bf16.gmra.mxu0 %v4098
        %v4153 = vpop.f32.mrf.mxu0
        %v4154 = vadd.f32 %v4057, %v4153
        %v4155 = vpop.f32.mrf.mxu0
        %v4156 = vpop.f32.mrf.mxu0
        %v4157 = vadd.f32 %v4060, %v4156
        %v4158 = vpop.f32.mrf.mxu0
        %4159 = vmatprep.mubr.bf16.mxu0 0
        %4160 = vmatmul.mubr.bf16.gmra.mxu0 %v4101
        %v4161 = vpop.f32.mrf.mxu0
        %v4162 = vadd.f32 %v4065, %v4161
        %v4163 = vpop.f32.mrf.mxu0
        %v4164 = vpop.f32.mrf.mxu0
        %v4165 = vadd.f32 %v4068, %v4164
        %v4166 = vpop.f32.mrf.mxu0
        %4167 = vdwg.mxu0
        %vm4168 = vcmp.eq.s32.totalorder %v3929, 2
        %v4169 = vsel %vm4168, 1.0, 0.0
        %v4170 = vpack.c.bf16 %v4169, %v4169
        %v4172 = vpack.i.b16 %v4170, %v4170
        %v4174 = vlaneseq
        %v4175 = vshrl.u32 %v4174, 7
        %v4176 = vsub.s32 0, %v4175
        %v4177 = vrot.slane %v4172, %v4176
        %v4178 = vmul.bf16 %v3936, %v4177
        %s4179 = scalar_lea.vmem %s9, 64
        %v4180 = vld [vmem:[%s4179] sm:$0xf]
        %v4181 = vld [vmem:[%s4179 + $0x4] sm:$0xf]
        %v4182 = vld [vmem:[%s4179 + $0x8] sm:$0xf]
        %v4183 = vld [vmem:[%s4179 + $0xc] sm:$0xf]
        %v4184 = vld [vmem:[%s4179 + $0x10] sm:$0xf]
        %v4185 = vld [vmem:[%s4179 + $0x14] sm:$0xf]
        %v4186 = vld [vmem:[%s4179 + $0x18] sm:$0xf]
        %v4187 = vld [vmem:[%s4179 + $0x1c] sm:$0xf]
        %v4196 = vunpack.c.l.b16 %v4180
        %v4197 = vunpack.c.l.b16 %v4181
        %v4198 = vunpack.c.l.b16 %v4182
        %v4199 = vunpack.c.l.b16 %v4183
        %v4200 = vunpack.c.l.b16 %v4184
        %v4201 = vunpack.c.l.b16 %v4185
        %v4202 = vunpack.c.l.b16 %v4186
        %v4203 = vunpack.c.l.b16 %v4187
        %v4204 = vpack.c.b16 %v4197, %v4196
        %v4205 = vpack.c.b16 %v4199, %v4198
        %v4206 = vpack.c.b16 %v4201, %v4200
        %v4207 = vpack.c.b16 %v4203, %v4202
        %v4209 = vsel %vm1035, %v4204, 0
        %v4212 = vsel %vm1035, %v4205, 0
        %v4215 = vsel %vm1035, %v4206, 0
        %v4218 = vsel %vm1035, %v4207, 0
        %4220 = vmatprep.subr.bf16.mxu0 0
        %4221 = vmatpush1.bf16.msra.mxu0 0
        %4222 = vmatprep.subr.bf16.mxu0 0
        %4223 = vmatpush1.bf16.msra.mxu0 0
        %4224 = vmatprep.subr.bf16.mxu0 0
        %4225 = vmatpush1.bf16.msra.mxu0 0
        %4226 = vmatprep.subr.bf16.mxu0 0
        %4227 = vmatpush1.bf16.msra.mxu0 0
        %4228 = vmatprep.subr.bf16.mxu0 0
        %4229 = vmatpush1.bf16.msra.mxu0 0
        %4230 = vmatprep.subr.bf16.mxu0 0
        %4231 = vmatpush1.bf16.msra.mxu0 0
        %4232 = vmatprep.subr.bf16.mxu0 0
        %4233 = vmatpush1.bf16.msra.mxu0 0
        %4234 = vmatprep.subr.bf16.mxu0 0
        %4235 = vmatpush1.bf16.msra.mxu0 %v4178
        %4236 = vmatprep.subr.bf16.mxu0 0
        %4237 = vmatpush2.bf16.msra.mxu0 0
        %4238 = vmatprep.subr.bf16.mxu0 0
        %4239 = vmatpush2.bf16.msra.mxu0 0
        %4240 = vmatprep.subr.bf16.mxu0 0
        %4241 = vmatpush2.bf16.msra.mxu0 0
        %4242 = vmatprep.subr.bf16.mxu0 0
        %4243 = vmatpush2.bf16.msra.mxu0 0
        %4244 = vmatprep.subr.bf16.mxu0 0
        %4245 = vmatpush2.bf16.msra.mxu0 0
        %4246 = vmatprep.subr.bf16.mxu0 0
        %4247 = vmatpush2.bf16.msra.mxu0 0
        %4248 = vmatprep.subr.bf16.mxu0 0
        %4249 = vmatpush2.bf16.msra.mxu0 0
        %4250 = vmatprep.subr.bf16.mxu0 0
        %4251 = vmatpush2.bf16.msra.mxu0 0
        %4252 = vmatprep.mubr.bf16.mxu0 0
        %4253 = vmatmul.mubr.bf16.gmra.mxu0 %v4209
        %v4254 = vpop.f32.mrf.mxu0
        %v4255 = vadd.f32 0.0, %v4254
        %v4256 = vpop.f32.mrf.mxu0
        %v4257 = vpop.f32.mrf.mxu0
        %v4258 = vadd.f32 0.0, %v4257
        %v4259 = vpop.f32.mrf.mxu0
        %4260 = vmatprep.mubr.bf16.mxu0 0
        %4261 = vmatmul.mubr.bf16.gmra.mxu0 %v4212
        %v4262 = vpop.f32.mrf.mxu0
        %v4263 = vadd.f32 0.0, %v4262
        %v4264 = vpop.f32.mrf.mxu0
        %v4265 = vpop.f32.mrf.mxu0
        %v4266 = vadd.f32 0.0, %v4265
        %v4267 = vpop.f32.mrf.mxu0
        %4268 = vmatprep.mubr.bf16.mxu0 0
        %4269 = vmatmul.mubr.bf16.gmra.mxu0 %v4215
        %v4270 = vpop.f32.mrf.mxu0
        %v4271 = vadd.f32 0.0, %v4270
        %v4272 = vpop.f32.mrf.mxu0
        %v4273 = vpop.f32.mrf.mxu0
        %v4274 = vadd.f32 0.0, %v4273
        %v4275 = vpop.f32.mrf.mxu0
        %4276 = vmatprep.mubr.bf16.mxu0 0
        %4277 = vmatmul.mubr.bf16.gmra.mxu0 %v4218
        %v4278 = vpop.f32.mrf.mxu0
        %v4279 = vadd.f32 0.0, %v4278
        %v4280 = vpop.f32.mrf.mxu0
        %v4281 = vpop.f32.mrf.mxu0
        %v4282 = vadd.f32 0.0, %v4281
        %v4283 = vpop.f32.mrf.mxu0
        %4284 = vdwg.mxu0
        %v4285 = vadd.f32 %v4138, %v4255
        %v4286 = vadd.f32 %v4141, %v4258
        %v4287 = vadd.f32 %v4146, %v4263
        %v4288 = vadd.f32 %v4149, %v4266
        %v4289 = vadd.f32 %v4154, %v4271
        %v4290 = vadd.f32 %v4157, %v4274
        %v4291 = vadd.f32 %v4162, %v4279
        %v4292 = vadd.f32 %v4165, %v4282
        %vm4293 = vcmp.eq.s32.totalorder %v3929, 3
        %v4294 = vsel %vm4293, 1.0, 0.0
        %v4295 = vpack.c.bf16 %v4294, %v4294
        %v4297 = vpack.i.b16 %v4295, %v4295
        %v4299 = vlaneseq
        %v4300 = vshrl.u32 %v4299, 7
        %v4301 = vsub.s32 0, %v4300
        %v4302 = vrot.slane %v4297, %v4301
        %v4303 = vmul.bf16 %v3936, %v4302
        %s4304 = scalar_lea.vmem %s9, 96
        %v4305 = vld [vmem:[%s4304] sm:$0xf]
        %v4306 = vld [vmem:[%s4304 + $0x4] sm:$0xf]
        %v4307 = vld [vmem:[%s4304 + $0x8] sm:$0xf]
        %v4308 = vld [vmem:[%s4304 + $0xc] sm:$0xf]
        %v4309 = vld [vmem:[%s4304 + $0x10] sm:$0xf]
        %v4310 = vld [vmem:[%s4304 + $0x14] sm:$0xf]
        %v4311 = vld [vmem:[%s4304 + $0x18] sm:$0xf]
        %v4312 = vld [vmem:[%s4304 + $0x1c] sm:$0xf]
        %v4321 = vunpack.c.l.b16 %v4305
        %v4322 = vunpack.c.l.b16 %v4306
        %v4323 = vunpack.c.l.b16 %v4307
        %v4324 = vunpack.c.l.b16 %v4308
        %v4325 = vunpack.c.l.b16 %v4309
        %v4326 = vunpack.c.l.b16 %v4310
        %v4327 = vunpack.c.l.b16 %v4311
        %v4328 = vunpack.c.l.b16 %v4312
        %v4329 = vpack.c.b16 %v4322, %v4321
        %v4330 = vpack.c.b16 %v4324, %v4323
        %v4331 = vpack.c.b16 %v4326, %v4325
        %v4332 = vpack.c.b16 %v4328, %v4327
        %v4334 = vsel %vm1035, %v4329, 0
        %v4337 = vsel %vm1035, %v4330, 0
        %v4340 = vsel %vm1035, %v4331, 0
        %v4343 = vsel %vm1035, %v4332, 0
        %4345 = vmatprep.subr.bf16.mxu0 0
        %4346 = vmatpush1.bf16.msra.mxu0 0
        %4347 = vmatprep.subr.bf16.mxu0 0
        %4348 = vmatpush1.bf16.msra.mxu0 0
        %4349 = vmatprep.subr.bf16.mxu0 0
        %4350 = vmatpush1.bf16.msra.mxu0 0
        %4351 = vmatprep.subr.bf16.mxu0 0
        %4352 = vmatpush1.bf16.msra.mxu0 0
        %4353 = vmatprep.subr.bf16.mxu0 0
        %4354 = vmatpush1.bf16.msra.mxu0 0
        %4355 = vmatprep.subr.bf16.mxu0 0
        %4356 = vmatpush1.bf16.msra.mxu0 0
        %4357 = vmatprep.subr.bf16.mxu0 0
        %4358 = vmatpush1.bf16.msra.mxu0 0
        %4359 = vmatprep.subr.bf16.mxu0 0
        %4360 = vmatpush1.bf16.msra.mxu0 %v4303
        %4361 = vmatprep.subr.bf16.mxu0 0
        %4362 = vmatpush2.bf16.msra.mxu0 0
        %4363 = vmatprep.subr.bf16.mxu0 0
        %4364 = vmatpush2.bf16.msra.mxu0 0
        %4365 = vmatprep.subr.bf16.mxu0 0
        %4366 = vmatpush2.bf16.msra.mxu0 0
        %4367 = vmatprep.subr.bf16.mxu0 0
        %4368 = vmatpush2.bf16.msra.mxu0 0
        %4369 = vmatprep.subr.bf16.mxu0 0
        %4370 = vmatpush2.bf16.msra.mxu0 0
        %4371 = vmatprep.subr.bf16.mxu0 0
        %4372 = vmatpush2.bf16.msra.mxu0 0
        %4373 = vmatprep.subr.bf16.mxu0 0
        %4374 = vmatpush2.bf16.msra.mxu0 0
        %4375 = vmatprep.subr.bf16.mxu0 0
        %4376 = vmatpush2.bf16.msra.mxu0 0
        %4377 = vmatprep.mubr.bf16.mxu0 0
        %4378 = vmatmul.mubr.bf16.gmra.mxu0 %v4334
        %v4379 = vpop.f32.mrf.mxu0
        %v4380 = vadd.f32 0.0, %v4379
        %v4381 = vpop.f32.mrf.mxu0
        %v4382 = vpop.f32.mrf.mxu0
        %v4383 = vadd.f32 0.0, %v4382
        %v4384 = vpop.f32.mrf.mxu0
        %4385 = vmatprep.mubr.bf16.mxu0 0
        %4386 = vmatmul.mubr.bf16.gmra.mxu0 %v4337
        %v4387 = vpop.f32.mrf.mxu0
        %v4388 = vadd.f32 0.0, %v4387
        %v4389 = vpop.f32.mrf.mxu0
        %v4390 = vpop.f32.mrf.mxu0
        %v4391 = vadd.f32 0.0, %v4390
        %v4392 = vpop.f32.mrf.mxu0
        %4393 = vmatprep.mubr.bf16.mxu0 0
        %4394 = vmatmul.mubr.bf16.gmra.mxu0 %v4340
        %v4395 = vpop.f32.mrf.mxu0
        %v4396 = vadd.f32 0.0, %v4395
        %v4397 = vpop.f32.mrf.mxu0
        %v4398 = vpop.f32.mrf.mxu0
        %v4399 = vadd.f32 0.0, %v4398
        %v4400 = vpop.f32.mrf.mxu0
        %4401 = vmatprep.mubr.bf16.mxu0 0
        %4402 = vmatmul.mubr.bf16.gmra.mxu0 %v4343
        %v4403 = vpop.f32.mrf.mxu0
        %v4404 = vadd.f32 0.0, %v4403
        %v4405 = vpop.f32.mrf.mxu0
        %v4406 = vpop.f32.mrf.mxu0
        %v4407 = vadd.f32 0.0, %v4406
        %v4408 = vpop.f32.mrf.mxu0
        %4409 = vdwg.mxu0
        %v4410 = vadd.f32 %v4285, %v4380
        %v4411 = vadd.f32 %v4286, %v4383
        %v4412 = vadd.f32 %v4287, %v4388
        %v4413 = vadd.f32 %v4288, %v4391
        %v4414 = vadd.f32 %v4289, %v4396
        %v4415 = vadd.f32 %v4290, %v4399
        %v4416 = vadd.f32 %v4291, %v4404
        %v4417 = vadd.f32 %v4292, %v4407
        %vm4418 = vcmp.eq.s32.totalorder %v3929, 4
        %v4419 = vsel %vm4418, 1.0, 0.0
        %v4420 = vpack.c.bf16 %v4419, %v4419
        %v4422 = vpack.i.b16 %v4420, %v4420
        %v4424 = vlaneseq
        %v4425 = vshrl.u32 %v4424, 7
        %v4426 = vsub.s32 0, %v4425
        %v4427 = vrot.slane %v4422, %v4426
        %v4428 = vmul.bf16 %v3936, %v4427
        %s4429 = scalar_lea.vmem %s9, 128
        %v4430 = vld [vmem:[%s4429] sm:$0xf]
        %v4431 = vld [vmem:[%s4429 + $0x4] sm:$0xf]
        %v4432 = vld [vmem:[%s4429 + $0x8] sm:$0xf]
        %v4433 = vld [vmem:[%s4429 + $0xc] sm:$0xf]
        %v4434 = vld [vmem:[%s4429 + $0x10] sm:$0xf]
        %v4435 = vld [vmem:[%s4429 + $0x14] sm:$0xf]
        %v4436 = vld [vmem:[%s4429 + $0x18] sm:$0xf]
        %v4437 = vld [vmem:[%s4429 + $0x1c] sm:$0xf]
        %v4446 = vunpack.c.l.b16 %v4430
        %v4447 = vunpack.c.l.b16 %v4431
        %v4448 = vunpack.c.l.b16 %v4432
        %v4449 = vunpack.c.l.b16 %v4433
        %v4450 = vunpack.c.l.b16 %v4434
        %v4451 = vunpack.c.l.b16 %v4435
        %v4452 = vunpack.c.l.b16 %v4436
        %v4453 = vunpack.c.l.b16 %v4437
        %v4454 = vpack.c.b16 %v4447, %v4446
        %v4455 = vpack.c.b16 %v4449, %v4448
        %v4456 = vpack.c.b16 %v4451, %v4450
        %v4457 = vpack.c.b16 %v4453, %v4452
        %v4459 = vsel %vm1035, %v4454, 0
        %v4462 = vsel %vm1035, %v4455, 0
        %v4465 = vsel %vm1035, %v4456, 0
        %v4468 = vsel %vm1035, %v4457, 0
        %4470 = vmatprep.subr.bf16.mxu0 0
        %4471 = vmatpush1.bf16.msra.mxu0 0
        %4472 = vmatprep.subr.bf16.mxu0 0
        %4473 = vmatpush1.bf16.msra.mxu0 0
        %4474 = vmatprep.subr.bf16.mxu0 0
        %4475 = vmatpush1.bf16.msra.mxu0 0
        %4476 = vmatprep.subr.bf16.mxu0 0
        %4477 = vmatpush1.bf16.msra.mxu0 0
        %4478 = vmatprep.subr.bf16.mxu0 0
        %4479 = vmatpush1.bf16.msra.mxu0 0
        %4480 = vmatprep.subr.bf16.mxu0 0
        %4481 = vmatpush1.bf16.msra.mxu0 0
        %4482 = vmatprep.subr.bf16.mxu0 0
        %4483 = vmatpush1.bf16.msra.mxu0 0
        %4484 = vmatprep.subr.bf16.mxu0 0
        %4485 = vmatpush1.bf16.msra.mxu0 %v4428
        %4486 = vmatprep.subr.bf16.mxu0 0
        %4487 = vmatpush2.bf16.msra.mxu0 0
        %4488 = vmatprep.subr.bf16.mxu0 0
        %4489 = vmatpush2.bf16.msra.mxu0 0
        %4490 = vmatprep.subr.bf16.mxu0 0
        %4491 = vmatpush2.bf16.msra.mxu0 0
        %4492 = vmatprep.subr.bf16.mxu0 0
        %4493 = vmatpush2.bf16.msra.mxu0 0
        %4494 = vmatprep.subr.bf16.mxu0 0
        %4495 = vmatpush2.bf16.msra.mxu0 0
        %4496 = vmatprep.subr.bf16.mxu0 0
        %4497 = vmatpush2.bf16.msra.mxu0 0
        %4498 = vmatprep.subr.bf16.mxu0 0
        %4499 = vmatpush2.bf16.msra.mxu0 0
        %4500 = vmatprep.subr.bf16.mxu0 0
        %4501 = vmatpush2.bf16.msra.mxu0 0
        %4502 = vmatprep.mubr.bf16.mxu0 0
        %4503 = vmatmul.mubr.bf16.gmra.mxu0 %v4459
        %v4504 = vpop.f32.mrf.mxu0
        %v4505 = vadd.f32 0.0, %v4504
        %v4506 = vpop.f32.mrf.mxu0
        %v4507 = vpop.f32.mrf.mxu0
        %v4508 = vadd.f32 0.0, %v4507
        %v4509 = vpop.f32.mrf.mxu0
        %4510 = vmatprep.mubr.bf16.mxu0 0
        %4511 = vmatmul.mubr.bf16.gmra.mxu0 %v4462
        %v4512 = vpop.f32.mrf.mxu0
        %v4513 = vadd.f32 0.0, %v4512
        %v4514 = vpop.f32.mrf.mxu0
        %v4515 = vpop.f32.mrf.mxu0
        %v4516 = vadd.f32 0.0, %v4515
        %v4517 = vpop.f32.mrf.mxu0
        %4518 = vmatprep.mubr.bf16.mxu0 0
        %4519 = vmatmul.mubr.bf16.gmra.mxu0 %v4465
        %v4520 = vpop.f32.mrf.mxu0
        %v4521 = vadd.f32 0.0, %v4520
        %v4522 = vpop.f32.mrf.mxu0
        %v4523 = vpop.f32.mrf.mxu0
        %v4524 = vadd.f32 0.0, %v4523
        %v4525 = vpop.f32.mrf.mxu0
        %4526 = vmatprep.mubr.bf16.mxu0 0
        %4527 = vmatmul.mubr.bf16.gmra.mxu0 %v4468
        %v4528 = vpop.f32.mrf.mxu0
        %v4529 = vadd.f32 0.0, %v4528
        %v4530 = vpop.f32.mrf.mxu0
        %v4531 = vpop.f32.mrf.mxu0
        %v4532 = vadd.f32 0.0, %v4531
        %v4533 = vpop.f32.mrf.mxu0
        %4534 = vdwg.mxu0
        %v4535 = vadd.f32 %v4410, %v4505
        %v4536 = vadd.f32 %v4411, %v4508
        %v4537 = vadd.f32 %v4412, %v4513
        %v4538 = vadd.f32 %v4413, %v4516
        %v4539 = vadd.f32 %v4414, %v4521
        %v4540 = vadd.f32 %v4415, %v4524
        %v4541 = vadd.f32 %v4416, %v4529
        %v4542 = vadd.f32 %v4417, %v4532
        %vm4543 = vcmp.eq.s32.totalorder %v3929, 5
        %v4544 = vsel %vm4543, 1.0, 0.0
        %v4545 = vpack.c.bf16 %v4544, %v4544
        %v4547 = vpack.i.b16 %v4545, %v4545
        %v4549 = vlaneseq
        %v4550 = vshrl.u32 %v4549, 7
        %v4551 = vsub.s32 0, %v4550
        %v4552 = vrot.slane %v4547, %v4551
        %v4553 = vmul.bf16 %v3936, %v4552
        %s4554 = scalar_lea.vmem %s9, 160
        %v4555 = vld [vmem:[%s4554] sm:$0xf]
        %v4556 = vld [vmem:[%s4554 + $0x4] sm:$0xf]
        %v4557 = vld [vmem:[%s4554 + $0x8] sm:$0xf]
        %v4558 = vld [vmem:[%s4554 + $0xc] sm:$0xf]
        %v4559 = vld [vmem:[%s4554 + $0x10] sm:$0xf]
        %v4560 = vld [vmem:[%s4554 + $0x14] sm:$0xf]
        %v4561 = vld [vmem:[%s4554 + $0x18] sm:$0xf]
        %v4562 = vld [vmem:[%s4554 + $0x1c] sm:$0xf]
        %v4571 = vunpack.c.l.b16 %v4555
        %v4572 = vunpack.c.l.b16 %v4556
        %v4573 = vunpack.c.l.b16 %v4557
        %v4574 = vunpack.c.l.b16 %v4558
        %v4575 = vunpack.c.l.b16 %v4559
        %v4576 = vunpack.c.l.b16 %v4560
        %v4577 = vunpack.c.l.b16 %v4561
        %v4578 = vunpack.c.l.b16 %v4562
        %v4579 = vpack.c.b16 %v4572, %v4571
        %v4580 = vpack.c.b16 %v4574, %v4573
        %v4581 = vpack.c.b16 %v4576, %v4575
        %v4582 = vpack.c.b16 %v4578, %v4577
        %v4584 = vsel %vm1035, %v4579, 0
        %v4587 = vsel %vm1035, %v4580, 0
        %v4590 = vsel %vm1035, %v4581, 0
        %v4593 = vsel %vm1035, %v4582, 0
        %4595 = vmatprep.subr.bf16.mxu0 0
        %4596 = vmatpush1.bf16.msra.mxu0 0
        %4597 = vmatprep.subr.bf16.mxu0 0
        %4598 = vmatpush1.bf16.msra.mxu0 0
        %4599 = vmatprep.subr.bf16.mxu0 0
        %4600 = vmatpush1.bf16.msra.mxu0 0
        %4601 = vmatprep.subr.bf16.mxu0 0
        %4602 = vmatpush1.bf16.msra.mxu0 0
        %4603 = vmatprep.subr.bf16.mxu0 0
        %4604 = vmatpush1.bf16.msra.mxu0 0
        %4605 = vmatprep.subr.bf16.mxu0 0
        %4606 = vmatpush1.bf16.msra.mxu0 0
        %4607 = vmatprep.subr.bf16.mxu0 0
        %4608 = vmatpush1.bf16.msra.mxu0 0
        %4609 = vmatprep.subr.bf16.mxu0 0
        %4610 = vmatpush1.bf16.msra.mxu0 %v4553
        %4611 = vmatprep.subr.bf16.mxu0 0
        %4612 = vmatpush2.bf16.msra.mxu0 0
        %4613 = vmatprep.subr.bf16.mxu0 0
        %4614 = vmatpush2.bf16.msra.mxu0 0
        %4615 = vmatprep.subr.bf16.mxu0 0
        %4616 = vmatpush2.bf16.msra.mxu0 0
        %4617 = vmatprep.subr.bf16.mxu0 0
        %4618 = vmatpush2.bf16.msra.mxu0 0
        %4619 = vmatprep.subr.bf16.mxu0 0
        %4620 = vmatpush2.bf16.msra.mxu0 0
        %4621 = vmatprep.subr.bf16.mxu0 0
        %4622 = vmatpush2.bf16.msra.mxu0 0
        %4623 = vmatprep.subr.bf16.mxu0 0
        %4624 = vmatpush2.bf16.msra.mxu0 0
        %4625 = vmatprep.subr.bf16.mxu0 0
        %4626 = vmatpush2.bf16.msra.mxu0 0
        %4627 = vmatprep.mubr.bf16.mxu0 0
        %4628 = vmatmul.mubr.bf16.gmra.mxu0 %v4584
        %v4629 = vpop.f32.mrf.mxu0
        %v4630 = vadd.f32 0.0, %v4629
        %v4631 = vpop.f32.mrf.mxu0
        %v4632 = vpop.f32.mrf.mxu0
        %v4633 = vadd.f32 0.0, %v4632
        %v4634 = vpop.f32.mrf.mxu0
        %4635 = vmatprep.mubr.bf16.mxu0 0
        %4636 = vmatmul.mubr.bf16.gmra.mxu0 %v4587
        %v4637 = vpop.f32.mrf.mxu0
        %v4638 = vadd.f32 0.0, %v4637
        %v4639 = vpop.f32.mrf.mxu0
        %v4640 = vpop.f32.mrf.mxu0
        %v4641 = vadd.f32 0.0, %v4640
        %v4642 = vpop.f32.mrf.mxu0
        %4643 = vmatprep.mubr.bf16.mxu0 0
        %4644 = vmatmul.mubr.bf16.gmra.mxu0 %v4590
        %v4645 = vpop.f32.mrf.mxu0
        %v4646 = vadd.f32 0.0, %v4645
        %v4647 = vpop.f32.mrf.mxu0
        %v4648 = vpop.f32.mrf.mxu0
        %v4649 = vadd.f32 0.0, %v4648
        %v4650 = vpop.f32.mrf.mxu0
        %4651 = vmatprep.mubr.bf16.mxu0 0
        %4652 = vmatmul.mubr.bf16.gmra.mxu0 %v4593
        %v4653 = vpop.f32.mrf.mxu0
        %v4654 = vadd.f32 0.0, %v4653
        %v4655 = vpop.f32.mrf.mxu0
        %v4656 = vpop.f32.mrf.mxu0
        %v4657 = vadd.f32 0.0, %v4656
        %v4658 = vpop.f32.mrf.mxu0
        %4659 = vdwg.mxu0
        %v4660 = vadd.f32 %v4535, %v4630
        %v4661 = vadd.f32 %v4536, %v4633
        %v4662 = vadd.f32 %v4537, %v4638
        %v4663 = vadd.f32 %v4538, %v4641
        %v4664 = vadd.f32 %v4539, %v4646
        %v4665 = vadd.f32 %v4540, %v4649
        %v4666 = vadd.f32 %v4541, %v4654
        %v4667 = vadd.f32 %v4542, %v4657
        %vm4668 = vcmp.eq.s32.totalorder %v3929, 6
        %v4669 = vsel %vm4668, 1.0, 0.0
        %v4670 = vpack.c.bf16 %v4669, %v4669
        %v4672 = vpack.i.b16 %v4670, %v4670
        %v4674 = vlaneseq
        %v4675 = vshrl.u32 %v4674, 7
        %v4676 = vsub.s32 0, %v4675
        %v4677 = vrot.slane %v4672, %v4676
        %v4678 = vmul.bf16 %v3936, %v4677
        %s4679 = scalar_lea.vmem %s9, 192
        %v4680 = vld [vmem:[%s4679] sm:$0xf]
        %v4681 = vld [vmem:[%s4679 + $0x4] sm:$0xf]
        %v4682 = vld [vmem:[%s4679 + $0x8] sm:$0xf]
        %v4683 = vld [vmem:[%s4679 + $0xc] sm:$0xf]
        %v4684 = vld [vmem:[%s4679 + $0x10] sm:$0xf]
        %v4685 = vld [vmem:[%s4679 + $0x14] sm:$0xf]
        %v4686 = vld [vmem:[%s4679 + $0x18] sm:$0xf]
        %v4687 = vld [vmem:[%s4679 + $0x1c] sm:$0xf]
        %v4696 = vunpack.c.l.b16 %v4680
        %v4697 = vunpack.c.l.b16 %v4681
        %v4698 = vunpack.c.l.b16 %v4682
        %v4699 = vunpack.c.l.b16 %v4683
        %v4700 = vunpack.c.l.b16 %v4684
        %v4701 = vunpack.c.l.b16 %v4685
        %v4702 = vunpack.c.l.b16 %v4686
        %v4703 = vunpack.c.l.b16 %v4687
        %v4704 = vpack.c.b16 %v4697, %v4696
        %v4705 = vpack.c.b16 %v4699, %v4698
        %v4706 = vpack.c.b16 %v4701, %v4700
        %v4707 = vpack.c.b16 %v4703, %v4702
        %v4709 = vsel %vm1035, %v4704, 0
        %v4712 = vsel %vm1035, %v4705, 0
        %v4715 = vsel %vm1035, %v4706, 0
        %v4718 = vsel %vm1035, %v4707, 0
        %4720 = vmatprep.subr.bf16.mxu0 0
        %4721 = vmatpush1.bf16.msra.mxu0 0
        %4722 = vmatprep.subr.bf16.mxu0 0
        %4723 = vmatpush1.bf16.msra.mxu0 0
        %4724 = vmatprep.subr.bf16.mxu0 0
        %4725 = vmatpush1.bf16.msra.mxu0 0
        %4726 = vmatprep.subr.bf16.mxu0 0
        %4727 = vmatpush1.bf16.msra.mxu0 0
        %4728 = vmatprep.subr.bf16.mxu0 0
        %4729 = vmatpush1.bf16.msra.mxu0 0
        %4730 = vmatprep.subr.bf16.mxu0 0
        %4731 = vmatpush1.bf16.msra.mxu0 0
        %4732 = vmatprep.subr.bf16.mxu0 0
        %4733 = vmatpush1.bf16.msra.mxu0 0
        %4734 = vmatprep.subr.bf16.mxu0 0
        %4735 = vmatpush1.bf16.msra.mxu0 %v4678
        %4736 = vmatprep.subr.bf16.mxu0 0
        %4737 = vmatpush2.bf16.msra.mxu0 0
        %4738 = vmatprep.subr.bf16.mxu0 0
        %4739 = vmatpush2.bf16.msra.mxu0 0
        %4740 = vmatprep.subr.bf16.mxu0 0
        %4741 = vmatpush2.bf16.msra.mxu0 0
        %4742 = vmatprep.subr.bf16.mxu0 0
        %4743 = vmatpush2.bf16.msra.mxu0 0
        %4744 = vmatprep.subr.bf16.mxu0 0
        %4745 = vmatpush2.bf16.msra.mxu0 0
        %4746 = vmatprep.subr.bf16.mxu0 0
        %4747 = vmatpush2.bf16.msra.mxu0 0
        %4748 = vmatprep.subr.bf16.mxu0 0
        %4749 = vmatpush2.bf16.msra.mxu0 0
        %4750 = vmatprep.subr.bf16.mxu0 0
        %4751 = vmatpush2.bf16.msra.mxu0 0
        %4752 = vmatprep.mubr.bf16.mxu0 0
        %4753 = vmatmul.mubr.bf16.gmra.mxu0 %v4709
        %v4754 = vpop.f32.mrf.mxu0
        %v4755 = vadd.f32 0.0, %v4754
        %v4756 = vpop.f32.mrf.mxu0
        %v4757 = vpop.f32.mrf.mxu0
        %v4758 = vadd.f32 0.0, %v4757
        %v4759 = vpop.f32.mrf.mxu0
        %4760 = vmatprep.mubr.bf16.mxu0 0
        %4761 = vmatmul.mubr.bf16.gmra.mxu0 %v4712
        %v4762 = vpop.f32.mrf.mxu0
        %v4763 = vadd.f32 0.0, %v4762
        %v4764 = vpop.f32.mrf.mxu0
        %v4765 = vpop.f32.mrf.mxu0
        %v4766 = vadd.f32 0.0, %v4765
        %v4767 = vpop.f32.mrf.mxu0
        %4768 = vmatprep.mubr.bf16.mxu0 0
        %4769 = vmatmul.mubr.bf16.gmra.mxu0 %v4715
        %v4770 = vpop.f32.mrf.mxu0
        %v4771 = vadd.f32 0.0, %v4770
        %v4772 = vpop.f32.mrf.mxu0
        %v4773 = vpop.f32.mrf.mxu0
        %v4774 = vadd.f32 0.0, %v4773
        %v4775 = vpop.f32.mrf.mxu0
        %4776 = vmatprep.mubr.bf16.mxu0 0
        %4777 = vmatmul.mubr.bf16.gmra.mxu0 %v4718
        %v4778 = vpop.f32.mrf.mxu0
        %v4779 = vadd.f32 0.0, %v4778
        %v4780 = vpop.f32.mrf.mxu0
        %v4781 = vpop.f32.mrf.mxu0
        %v4782 = vadd.f32 0.0, %v4781
        %v4783 = vpop.f32.mrf.mxu0
        %4784 = vdwg.mxu0
        %v4785 = vadd.f32 %v4660, %v4755
        %v4786 = vadd.f32 %v4661, %v4758
        %v4787 = vadd.f32 %v4662, %v4763
        %v4788 = vadd.f32 %v4663, %v4766
        %v4789 = vadd.f32 %v4664, %v4771
        %v4790 = vadd.f32 %v4665, %v4774
        %v4791 = vadd.f32 %v4666, %v4779
        %v4792 = vadd.f32 %v4667, %v4782
        %vm4793 = vcmp.eq.s32.totalorder %v3929, 7
        %v4794 = vsel %vm4793, 1.0, 0.0
        %v4795 = vpack.c.bf16 %v4794, %v4794
        %v4797 = vpack.i.b16 %v4795, %v4795
        %v4799 = vlaneseq
        %v4800 = vshrl.u32 %v4799, 7
        %v4801 = vsub.s32 0, %v4800
        %v4802 = vrot.slane %v4797, %v4801
        %v4803 = vmul.bf16 %v3936, %v4802
        %s4804 = scalar_lea.vmem %s9, 224
        %v4805 = vld [vmem:[%s4804] sm:$0xf]
        %v4806 = vld [vmem:[%s4804 + $0x4] sm:$0xf]
        %v4807 = vld [vmem:[%s4804 + $0x8] sm:$0xf]
        %v4808 = vld [vmem:[%s4804 + $0xc] sm:$0xf]
        %v4809 = vld [vmem:[%s4804 + $0x10] sm:$0xf]
        %v4810 = vld [vmem:[%s4804 + $0x14] sm:$0xf]
        %v4811 = vld [vmem:[%s4804 + $0x18] sm:$0xf]
        %v4812 = vld [vmem:[%s4804 + $0x1c] sm:$0xf]
        %v4821 = vunpack.c.l.b16 %v4805
        %v4822 = vunpack.c.l.b16 %v4806
        %v4823 = vunpack.c.l.b16 %v4807
        %v4824 = vunpack.c.l.b16 %v4808
        %v4825 = vunpack.c.l.b16 %v4809
        %v4826 = vunpack.c.l.b16 %v4810
        %v4827 = vunpack.c.l.b16 %v4811
        %v4828 = vunpack.c.l.b16 %v4812
        %v4829 = vpack.c.b16 %v4822, %v4821
        %v4830 = vpack.c.b16 %v4824, %v4823
        %v4831 = vpack.c.b16 %v4826, %v4825
        %v4832 = vpack.c.b16 %v4828, %v4827
        %v4834 = vsel %vm1035, %v4829, 0
        %v4837 = vsel %vm1035, %v4830, 0
        %v4840 = vsel %vm1035, %v4831, 0
        %v4843 = vsel %vm1035, %v4832, 0
        %4845 = vmatprep.subr.bf16.mxu0 0
        %4846 = vmatpush1.bf16.msra.mxu0 0
        %4847 = vmatprep.subr.bf16.mxu0 0
        %4848 = vmatpush1.bf16.msra.mxu0 0
        %4849 = vmatprep.subr.bf16.mxu0 0
        %4850 = vmatpush1.bf16.msra.mxu0 0
        %4851 = vmatprep.subr.bf16.mxu0 0
        %4852 = vmatpush1.bf16.msra.mxu0 0
        %4853 = vmatprep.subr.bf16.mxu0 0
        %4854 = vmatpush1.bf16.msra.mxu0 0
        %4855 = vmatprep.subr.bf16.mxu0 0
        %4856 = vmatpush1.bf16.msra.mxu0 0
        %4857 = vmatprep.subr.bf16.mxu0 0
        %4858 = vmatpush1.bf16.msra.mxu0 0
        %4859 = vmatprep.subr.bf16.mxu0 0
        %4860 = vmatpush1.bf16.msra.mxu0 %v4803
        %4861 = vmatprep.subr.bf16.mxu0 0
        %4862 = vmatpush2.bf16.msra.mxu0 0
        %4863 = vmatprep.subr.bf16.mxu0 0
        %4864 = vmatpush2.bf16.msra.mxu0 0
        %4865 = vmatprep.subr.bf16.mxu0 0
        %4866 = vmatpush2.bf16.msra.mxu0 0
        %4867 = vmatprep.subr.bf16.mxu0 0
        %4868 = vmatpush2.bf16.msra.mxu0 0
        %4869 = vmatprep.subr.bf16.mxu0 0
        %4870 = vmatpush2.bf16.msra.mxu0 0
        %4871 = vmatprep.subr.bf16.mxu0 0
        %4872 = vmatpush2.bf16.msra.mxu0 0
        %4873 = vmatprep.subr.bf16.mxu0 0
        %4874 = vmatpush2.bf16.msra.mxu0 0
        %4875 = vmatprep.subr.bf16.mxu0 0
        %4876 = vmatpush2.bf16.msra.mxu0 0
        %4877 = vmatprep.mubr.bf16.mxu0 0
        %4878 = vmatmul.mubr.bf16.gmra.mxu0 %v4834
        %v4879 = vpop.f32.mrf.mxu0
        %v4880 = vadd.f32 0.0, %v4879
        %v4881 = vpop.f32.mrf.mxu0
        %v4882 = vpop.f32.mrf.mxu0
        %v4883 = vadd.f32 0.0, %v4882
        %v4884 = vpop.f32.mrf.mxu0
        %4885 = vmatprep.mubr.bf16.mxu0 0
        %4886 = vmatmul.mubr.bf16.gmra.mxu0 %v4837
        %v4887 = vpop.f32.mrf.mxu0
        %v4888 = vadd.f32 0.0, %v4887
        %v4889 = vpop.f32.mrf.mxu0
        %v4890 = vpop.f32.mrf.mxu0
        %v4891 = vadd.f32 0.0, %v4890
        %v4892 = vpop.f32.mrf.mxu0
        %4893 = vmatprep.mubr.bf16.mxu0 0
        %4894 = vmatmul.mubr.bf16.gmra.mxu0 %v4840
        %v4895 = vpop.f32.mrf.mxu0
        %v4896 = vadd.f32 0.0, %v4895
        %v4897 = vpop.f32.mrf.mxu0
        %v4898 = vpop.f32.mrf.mxu0
        %v4899 = vadd.f32 0.0, %v4898
        %v4900 = vpop.f32.mrf.mxu0
        %4901 = vmatprep.mubr.bf16.mxu0 0
        %4902 = vmatmul.mubr.bf16.gmra.mxu0 %v4843
        %v4903 = vpop.f32.mrf.mxu0
        %v4904 = vadd.f32 0.0, %v4903
        %v4905 = vpop.f32.mrf.mxu0
        %v4906 = vpop.f32.mrf.mxu0
        %v4907 = vadd.f32 0.0, %v4906
        %v4908 = vpop.f32.mrf.mxu0
        %4909 = vdwg.mxu0
        %v4910 = vadd.f32 %v4785, %v4880
        %v4911 = vadd.f32 %v4786, %v4883
        %v4912 = vadd.f32 %v4787, %v4888
        %v4913 = vadd.f32 %v4788, %v4891
        %v4914 = vadd.f32 %v4789, %v4896
        %v4915 = vadd.f32 %v4790, %v4899
        %v4916 = vadd.f32 %v4791, %v4904
        %v4917 = vadd.f32 %v4792, %v4907
        %vm4918 = vcmp.eq.s32.totalorder %v3929, 8
        %v4919 = vsel %vm4918, 1.0, 0.0
        %v4920 = vpack.c.bf16 %v4919, %v4919
        %v4922 = vpack.i.b16 %v4920, %v4920
        %v4924 = vlaneseq
        %v4925 = vshrl.u32 %v4924, 7
        %v4926 = vsub.s32 0, %v4925
        %v4927 = vrot.slane %v4922, %v4926
        %v4928 = vmul.bf16 %v3936, %v4927
        %s4929 = scalar_lea.vmem %s9, 256
        %v4930 = vld [vmem:[%s4929] sm:$0xf]
        %v4931 = vld [vmem:[%s4929 + $0x4] sm:$0xf]
        %v4932 = vld [vmem:[%s4929 + $0x8] sm:$0xf]
        %v4933 = vld [vmem:[%s4929 + $0xc] sm:$0xf]
        %v4934 = vld [vmem:[%s4929 + $0x10] sm:$0xf]
        %v4935 = vld [vmem:[%s4929 + $0x14] sm:$0xf]
        %v4936 = vld [vmem:[%s4929 + $0x18] sm:$0xf]
        %v4937 = vld [vmem:[%s4929 + $0x1c] sm:$0xf]
        %v4946 = vunpack.c.l.b16 %v4930
        %v4947 = vunpack.c.l.b16 %v4931
        %v4948 = vunpack.c.l.b16 %v4932
        %v4949 = vunpack.c.l.b16 %v4933
        %v4950 = vunpack.c.l.b16 %v4934
        %v4951 = vunpack.c.l.b16 %v4935
        %v4952 = vunpack.c.l.b16 %v4936
        %v4953 = vunpack.c.l.b16 %v4937
        %v4954 = vpack.c.b16 %v4947, %v4946
        %v4955 = vpack.c.b16 %v4949, %v4948
        %v4956 = vpack.c.b16 %v4951, %v4950
        %v4957 = vpack.c.b16 %v4953, %v4952
        %v4959 = vsel %vm1035, %v4954, 0
        %v4962 = vsel %vm1035, %v4955, 0
        %v4965 = vsel %vm1035, %v4956, 0
        %v4968 = vsel %vm1035, %v4957, 0
        %4970 = vmatprep.subr.bf16.mxu0 0
        %4971 = vmatpush1.bf16.msra.mxu0 0
        %4972 = vmatprep.subr.bf16.mxu0 0
        %4973 = vmatpush1.bf16.msra.mxu0 0
        %4974 = vmatprep.subr.bf16.mxu0 0
        %4975 = vmatpush1.bf16.msra.mxu0 0
        %4976 = vmatprep.subr.bf16.mxu0 0
        %4977 = vmatpush1.bf16.msra.mxu0 0
        %4978 = vmatprep.subr.bf16.mxu0 0
        %4979 = vmatpush1.bf16.msra.mxu0 0
        %4980 = vmatprep.subr.bf16.mxu0 0
        %4981 = vmatpush1.bf16.msra.mxu0 0
        %4982 = vmatprep.subr.bf16.mxu0 0
        %4983 = vmatpush1.bf16.msra.mxu0 0
        %4984 = vmatprep.subr.bf16.mxu0 0
        %4985 = vmatpush1.bf16.msra.mxu0 %v4928
        %4986 = vmatprep.subr.bf16.mxu0 0
        %4987 = vmatpush2.bf16.msra.mxu0 0
        %4988 = vmatprep.subr.bf16.mxu0 0
        %4989 = vmatpush2.bf16.msra.mxu0 0
        %4990 = vmatprep.subr.bf16.mxu0 0
        %4991 = vmatpush2.bf16.msra.mxu0 0
        %4992 = vmatprep.subr.bf16.mxu0 0
        %4993 = vmatpush2.bf16.msra.mxu0 0
        %4994 = vmatprep.subr.bf16.mxu0 0
        %4995 = vmatpush2.bf16.msra.mxu0 0
        %4996 = vmatprep.subr.bf16.mxu0 0
        %4997 = vmatpush2.bf16.msra.mxu0 0
        %4998 = vmatprep.subr.bf16.mxu0 0
        %4999 = vmatpush2.bf16.msra.mxu0 0
        %5000 = vmatprep.subr.bf16.mxu0 0
        %5001 = vmatpush2.bf16.msra.mxu0 0
        %5002 = vmatprep.mubr.bf16.mxu0 0
        %5003 = vmatmul.mubr.bf16.gmra.mxu0 %v4959
        %v5004 = vpop.f32.mrf.mxu0
        %v5005 = vadd.f32 0.0, %v5004
        %v5006 = vpop.f32.mrf.mxu0
        %v5007 = vpop.f32.mrf.mxu0
        %v5008 = vadd.f32 0.0, %v5007
        %v5009 = vpop.f32.mrf.mxu0
        %5010 = vmatprep.mubr.bf16.mxu0 0
        %5011 = vmatmul.mubr.bf16.gmra.mxu0 %v4962
        %v5012 = vpop.f32.mrf.mxu0
        %v5013 = vadd.f32 0.0, %v5012
        %v5014 = vpop.f32.mrf.mxu0
        %v5015 = vpop.f32.mrf.mxu0
        %v5016 = vadd.f32 0.0, %v5015
        %v5017 = vpop.f32.mrf.mxu0
        %5018 = vmatprep.mubr.bf16.mxu0 0
        %5019 = vmatmul.mubr.bf16.gmra.mxu0 %v4965
        %v5020 = vpop.f32.mrf.mxu0
        %v5021 = vadd.f32 0.0, %v5020
        %v5022 = vpop.f32.mrf.mxu0
        %v5023 = vpop.f32.mrf.mxu0
        %v5024 = vadd.f32 0.0, %v5023
        %v5025 = vpop.f32.mrf.mxu0
        %5026 = vmatprep.mubr.bf16.mxu0 0
        %5027 = vmatmul.mubr.bf16.gmra.mxu0 %v4968
        %v5028 = vpop.f32.mrf.mxu0
        %v5029 = vadd.f32 0.0, %v5028
        %v5030 = vpop.f32.mrf.mxu0
        %v5031 = vpop.f32.mrf.mxu0
        %v5032 = vadd.f32 0.0, %v5031
        %v5033 = vpop.f32.mrf.mxu0
        %5034 = vdwg.mxu0
        %v5035 = vadd.f32 %v4910, %v5005
        %v5036 = vadd.f32 %v4911, %v5008
        %v5037 = vadd.f32 %v4912, %v5013
        %v5038 = vadd.f32 %v4913, %v5016
        %v5039 = vadd.f32 %v4914, %v5021
        %v5040 = vadd.f32 %v4915, %v5024
        %v5041 = vadd.f32 %v4916, %v5029
        %v5042 = vadd.f32 %v4917, %v5032
        %vm5043 = vcmp.eq.s32.totalorder %v3929, 9
        %v5044 = vsel %vm5043, 1.0, 0.0
        %v5045 = vpack.c.bf16 %v5044, %v5044
        %v5047 = vpack.i.b16 %v5045, %v5045
        %v5049 = vlaneseq
        %v5050 = vshrl.u32 %v5049, 7
        %v5051 = vsub.s32 0, %v5050
        %v5052 = vrot.slane %v5047, %v5051
        %v5053 = vmul.bf16 %v3936, %v5052
        %s5054 = scalar_lea.vmem %s9, 288
        %v5055 = vld [vmem:[%s5054] sm:$0xf]
        %v5056 = vld [vmem:[%s5054 + $0x4] sm:$0xf]
        %v5057 = vld [vmem:[%s5054 + $0x8] sm:$0xf]
        %v5058 = vld [vmem:[%s5054 + $0xc] sm:$0xf]
        %v5059 = vld [vmem:[%s5054 + $0x10] sm:$0xf]
        %v5060 = vld [vmem:[%s5054 + $0x14] sm:$0xf]
        %v5061 = vld [vmem:[%s5054 + $0x18] sm:$0xf]
        %v5062 = vld [vmem:[%s5054 + $0x1c] sm:$0xf]
        %v5071 = vunpack.c.l.b16 %v5055
        %v5072 = vunpack.c.l.b16 %v5056
        %v5073 = vunpack.c.l.b16 %v5057
        %v5074 = vunpack.c.l.b16 %v5058
        %v5075 = vunpack.c.l.b16 %v5059
        %v5076 = vunpack.c.l.b16 %v5060
        %v5077 = vunpack.c.l.b16 %v5061
        %v5078 = vunpack.c.l.b16 %v5062
        %v5079 = vpack.c.b16 %v5072, %v5071
        %v5080 = vpack.c.b16 %v5074, %v5073
        %v5081 = vpack.c.b16 %v5076, %v5075
        %v5082 = vpack.c.b16 %v5078, %v5077
        %v5084 = vsel %vm1035, %v5079, 0
        %v5087 = vsel %vm1035, %v5080, 0
        %v5090 = vsel %vm1035, %v5081, 0
        %v5093 = vsel %vm1035, %v5082, 0
        %5095 = vmatprep.subr.bf16.mxu0 0
        %5096 = vmatpush1.bf16.msra.mxu0 0
        %5097 = vmatprep.subr.bf16.mxu0 0
        %5098 = vmatpush1.bf16.msra.mxu0 0
        %5099 = vmatprep.subr.bf16.mxu0 0
        %5100 = vmatpush1.bf16.msra.mxu0 0
        %5101 = vmatprep.subr.bf16.mxu0 0
        %5102 = vmatpush1.bf16.msra.mxu0 0
        %5103 = vmatprep.subr.bf16.mxu0 0
        %5104 = vmatpush1.bf16.msra.mxu0 0
        %5105 = vmatprep.subr.bf16.mxu0 0
        %5106 = vmatpush1.bf16.msra.mxu0 0
        %5107 = vmatprep.subr.bf16.mxu0 0
        %5108 = vmatpush1.bf16.msra.mxu0 0
        %5109 = vmatprep.subr.bf16.mxu0 0
        %5110 = vmatpush1.bf16.msra.mxu0 %v5053
        %5111 = vmatprep.subr.bf16.mxu0 0
        %5112 = vmatpush2.bf16.msra.mxu0 0
        %5113 = vmatprep.subr.bf16.mxu0 0
        %5114 = vmatpush2.bf16.msra.mxu0 0
        %5115 = vmatprep.subr.bf16.mxu0 0
        %5116 = vmatpush2.bf16.msra.mxu0 0
        %5117 = vmatprep.subr.bf16.mxu0 0
        %5118 = vmatpush2.bf16.msra.mxu0 0
        %5119 = vmatprep.subr.bf16.mxu0 0
        %5120 = vmatpush2.bf16.msra.mxu0 0
        %5121 = vmatprep.subr.bf16.mxu0 0
        %5122 = vmatpush2.bf16.msra.mxu0 0
        %5123 = vmatprep.subr.bf16.mxu0 0
        %5124 = vmatpush2.bf16.msra.mxu0 0
        %5125 = vmatprep.subr.bf16.mxu0 0
        %5126 = vmatpush2.bf16.msra.mxu0 0
        %5127 = vmatprep.mubr.bf16.mxu0 0
        %5128 = vmatmul.mubr.bf16.gmra.mxu0 %v5084
        %v5129 = vpop.f32.mrf.mxu0
        %v5130 = vadd.f32 0.0, %v5129
        %v5131 = vpop.f32.mrf.mxu0
        %v5132 = vpop.f32.mrf.mxu0
        %v5133 = vadd.f32 0.0, %v5132
        %v5134 = vpop.f32.mrf.mxu0
        %5135 = vmatprep.mubr.bf16.mxu0 0
        %5136 = vmatmul.mubr.bf16.gmra.mxu0 %v5087
        %v5137 = vpop.f32.mrf.mxu0
        %v5138 = vadd.f32 0.0, %v5137
        %v5139 = vpop.f32.mrf.mxu0
        %v5140 = vpop.f32.mrf.mxu0
        %v5141 = vadd.f32 0.0, %v5140
        %v5142 = vpop.f32.mrf.mxu0
        %5143 = vmatprep.mubr.bf16.mxu0 0
        %5144 = vmatmul.mubr.bf16.gmra.mxu0 %v5090
        %v5145 = vpop.f32.mrf.mxu0
        %v5146 = vadd.f32 0.0, %v5145
        %v5147 = vpop.f32.mrf.mxu0
        %v5148 = vpop.f32.mrf.mxu0
        %v5149 = vadd.f32 0.0, %v5148
        %v5150 = vpop.f32.mrf.mxu0
        %5151 = vmatprep.mubr.bf16.mxu0 0
        %5152 = vmatmul.mubr.bf16.gmra.mxu0 %v5093
        %v5153 = vpop.f32.mrf.mxu0
        %v5154 = vadd.f32 0.0, %v5153
        %v5155 = vpop.f32.mrf.mxu0
        %v5156 = vpop.f32.mrf.mxu0
        %v5157 = vadd.f32 0.0, %v5156
        %v5158 = vpop.f32.mrf.mxu0
        %5159 = vdwg.mxu0
        %v5160 = vadd.f32 %v5035, %v5130
        %v5161 = vadd.f32 %v5036, %v5133
        %v5162 = vadd.f32 %v5037, %v5138
        %v5163 = vadd.f32 %v5038, %v5141
        %v5164 = vadd.f32 %v5039, %v5146
        %v5165 = vadd.f32 %v5040, %v5149
        %v5166 = vadd.f32 %v5041, %v5154
        %v5167 = vadd.f32 %v5042, %v5157
        %vm5168 = vcmp.eq.s32.totalorder %v3929, 10
        %v5169 = vsel %vm5168, 1.0, 0.0
        %v5170 = vpack.c.bf16 %v5169, %v5169
        %v5172 = vpack.i.b16 %v5170, %v5170
        %v5174 = vlaneseq
        %v5175 = vshrl.u32 %v5174, 7
        %v5176 = vsub.s32 0, %v5175
        %v5177 = vrot.slane %v5172, %v5176
        %v5178 = vmul.bf16 %v3936, %v5177
        %s5179 = scalar_lea.vmem %s9, 320
        %v5180 = vld [vmem:[%s5179] sm:$0xf]
        %v5181 = vld [vmem:[%s5179 + $0x4] sm:$0xf]
        %v5182 = vld [vmem:[%s5179 + $0x8] sm:$0xf]
        %v5183 = vld [vmem:[%s5179 + $0xc] sm:$0xf]
        %v5184 = vld [vmem:[%s5179 + $0x10] sm:$0xf]
        %v5185 = vld [vmem:[%s5179 + $0x14] sm:$0xf]
        %v5186 = vld [vmem:[%s5179 + $0x18] sm:$0xf]
        %v5187 = vld [vmem:[%s5179 + $0x1c] sm:$0xf]
        %v5196 = vunpack.c.l.b16 %v5180
        %v5197 = vunpack.c.l.b16 %v5181
        %v5198 = vunpack.c.l.b16 %v5182
        %v5199 = vunpack.c.l.b16 %v5183
        %v5200 = vunpack.c.l.b16 %v5184
        %v5201 = vunpack.c.l.b16 %v5185
        %v5202 = vunpack.c.l.b16 %v5186
        %v5203 = vunpack.c.l.b16 %v5187
        %v5204 = vpack.c.b16 %v5197, %v5196
        %v5205 = vpack.c.b16 %v5199, %v5198
        %v5206 = vpack.c.b16 %v5201, %v5200
        %v5207 = vpack.c.b16 %v5203, %v5202
        %v5209 = vsel %vm1035, %v5204, 0
        %v5212 = vsel %vm1035, %v5205, 0
        %v5215 = vsel %vm1035, %v5206, 0
        %v5218 = vsel %vm1035, %v5207, 0
        %5220 = vmatprep.subr.bf16.mxu0 0
        %5221 = vmatpush1.bf16.msra.mxu0 0
        %5222 = vmatprep.subr.bf16.mxu0 0
        %5223 = vmatpush1.bf16.msra.mxu0 0
        %5224 = vmatprep.subr.bf16.mxu0 0
        %5225 = vmatpush1.bf16.msra.mxu0 0
        %5226 = vmatprep.subr.bf16.mxu0 0
        %5227 = vmatpush1.bf16.msra.mxu0 0
        %5228 = vmatprep.subr.bf16.mxu0 0
        %5229 = vmatpush1.bf16.msra.mxu0 0
        %5230 = vmatprep.subr.bf16.mxu0 0
        %5231 = vmatpush1.bf16.msra.mxu0 0
        %5232 = vmatprep.subr.bf16.mxu0 0
        %5233 = vmatpush1.bf16.msra.mxu0 0
        %5234 = vmatprep.subr.bf16.mxu0 0
        %5235 = vmatpush1.bf16.msra.mxu0 %v5178
        %5236 = vmatprep.subr.bf16.mxu0 0
        %5237 = vmatpush2.bf16.msra.mxu0 0
        %5238 = vmatprep.subr.bf16.mxu0 0
        %5239 = vmatpush2.bf16.msra.mxu0 0
        %5240 = vmatprep.subr.bf16.mxu0 0
        %5241 = vmatpush2.bf16.msra.mxu0 0
        %5242 = vmatprep.subr.bf16.mxu0 0
        %5243 = vmatpush2.bf16.msra.mxu0 0
        %5244 = vmatprep.subr.bf16.mxu0 0
        %5245 = vmatpush2.bf16.msra.mxu0 0
        %5246 = vmatprep.subr.bf16.mxu0 0
        %5247 = vmatpush2.bf16.msra.mxu0 0
        %5248 = vmatprep.subr.bf16.mxu0 0
        %5249 = vmatpush2.bf16.msra.mxu0 0
        %5250 = vmatprep.subr.bf16.mxu0 0
        %5251 = vmatpush2.bf16.msra.mxu0 0
        %5252 = vmatprep.mubr.bf16.mxu0 0
        %5253 = vmatmul.mubr.bf16.gmra.mxu0 %v5209
        %v5254 = vpop.f32.mrf.mxu0
        %v5255 = vadd.f32 0.0, %v5254
        %v5256 = vpop.f32.mrf.mxu0
        %v5257 = vpop.f32.mrf.mxu0
        %v5258 = vadd.f32 0.0, %v5257
        %v5259 = vpop.f32.mrf.mxu0
        %5260 = vmatprep.mubr.bf16.mxu0 0
        %5261 = vmatmul.mubr.bf16.gmra.mxu0 %v5212
        %v5262 = vpop.f32.mrf.mxu0
        %v5263 = vadd.f32 0.0, %v5262
        %v5264 = vpop.f32.mrf.mxu0
        %v5265 = vpop.f32.mrf.mxu0
        %v5266 = vadd.f32 0.0, %v5265
        %v5267 = vpop.f32.mrf.mxu0
        %5268 = vmatprep.mubr.bf16.mxu0 0
        %5269 = vmatmul.mubr.bf16.gmra.mxu0 %v5215
        %v5270 = vpop.f32.mrf.mxu0
        %v5271 = vadd.f32 0.0, %v5270
        %v5272 = vpop.f32.mrf.mxu0
        %v5273 = vpop.f32.mrf.mxu0
        %v5274 = vadd.f32 0.0, %v5273
        %v5275 = vpop.f32.mrf.mxu0
        %5276 = vmatprep.mubr.bf16.mxu0 0
        %5277 = vmatmul.mubr.bf16.gmra.mxu0 %v5218
        %v5278 = vpop.f32.mrf.mxu0
        %v5279 = vadd.f32 0.0, %v5278
        %v5280 = vpop.f32.mrf.mxu0
        %v5281 = vpop.f32.mrf.mxu0
        %v5282 = vadd.f32 0.0, %v5281
        %v5283 = vpop.f32.mrf.mxu0
        %5284 = vdwg.mxu0
        %v5285 = vadd.f32 %v5160, %v5255
        %v5286 = vadd.f32 %v5161, %v5258
        %v5287 = vadd.f32 %v5162, %v5263
        %v5288 = vadd.f32 %v5163, %v5266
        %v5289 = vadd.f32 %v5164, %v5271
        %v5290 = vadd.f32 %v5165, %v5274
        %v5291 = vadd.f32 %v5166, %v5279
        %v5292 = vadd.f32 %v5167, %v5282
        %vm5293 = vcmp.eq.s32.totalorder %v3929, 11
        %v5294 = vsel %vm5293, 1.0, 0.0
        %v5295 = vpack.c.bf16 %v5294, %v5294
        %v5297 = vpack.i.b16 %v5295, %v5295
        %v5299 = vlaneseq
        %v5300 = vshrl.u32 %v5299, 7
        %v5301 = vsub.s32 0, %v5300
        %v5302 = vrot.slane %v5297, %v5301
        %v5303 = vmul.bf16 %v3936, %v5302
        %s5304 = scalar_lea.vmem %s9, 352
        %v5305 = vld [vmem:[%s5304] sm:$0xf]
        %v5306 = vld [vmem:[%s5304 + $0x4] sm:$0xf]
        %v5307 = vld [vmem:[%s5304 + $0x8] sm:$0xf]
        %v5308 = vld [vmem:[%s5304 + $0xc] sm:$0xf]
        %v5309 = vld [vmem:[%s5304 + $0x10] sm:$0xf]
        %v5310 = vld [vmem:[%s5304 + $0x14] sm:$0xf]
        %v5311 = vld [vmem:[%s5304 + $0x18] sm:$0xf]
        %v5312 = vld [vmem:[%s5304 + $0x1c] sm:$0xf]
        %v5321 = vunpack.c.l.b16 %v5305
        %v5322 = vunpack.c.l.b16 %v5306
        %v5323 = vunpack.c.l.b16 %v5307
        %v5324 = vunpack.c.l.b16 %v5308
        %v5325 = vunpack.c.l.b16 %v5309
        %v5326 = vunpack.c.l.b16 %v5310
        %v5327 = vunpack.c.l.b16 %v5311
        %v5328 = vunpack.c.l.b16 %v5312
        %v5329 = vpack.c.b16 %v5322, %v5321
        %v5330 = vpack.c.b16 %v5324, %v5323
        %v5331 = vpack.c.b16 %v5326, %v5325
        %v5332 = vpack.c.b16 %v5328, %v5327
        %v5334 = vsel %vm1035, %v5329, 0
        %v5337 = vsel %vm1035, %v5330, 0
        %v5340 = vsel %vm1035, %v5331, 0
        %v5343 = vsel %vm1035, %v5332, 0
        %5345 = vmatprep.subr.bf16.mxu0 0
        %5346 = vmatpush1.bf16.msra.mxu0 0
        %5347 = vmatprep.subr.bf16.mxu0 0
        %5348 = vmatpush1.bf16.msra.mxu0 0
        %5349 = vmatprep.subr.bf16.mxu0 0
        %5350 = vmatpush1.bf16.msra.mxu0 0
        %5351 = vmatprep.subr.bf16.mxu0 0
        %5352 = vmatpush1.bf16.msra.mxu0 0
        %5353 = vmatprep.subr.bf16.mxu0 0
        %5354 = vmatpush1.bf16.msra.mxu0 0
        %5355 = vmatprep.subr.bf16.mxu0 0
        %5356 = vmatpush1.bf16.msra.mxu0 0
        %5357 = vmatprep.subr.bf16.mxu0 0
        %5358 = vmatpush1.bf16.msra.mxu0 0
        %5359 = vmatprep.subr.bf16.mxu0 0
        %5360 = vmatpush1.bf16.msra.mxu0 %v5303
        %5361 = vmatprep.subr.bf16.mxu0 0
        %5362 = vmatpush2.bf16.msra.mxu0 0
        %5363 = vmatprep.subr.bf16.mxu0 0
        %5364 = vmatpush2.bf16.msra.mxu0 0
        %5365 = vmatprep.subr.bf16.mxu0 0
        %5366 = vmatpush2.bf16.msra.mxu0 0
        %5367 = vmatprep.subr.bf16.mxu0 0
        %5368 = vmatpush2.bf16.msra.mxu0 0
        %5369 = vmatprep.subr.bf16.mxu0 0
        %5370 = vmatpush2.bf16.msra.mxu0 0
        %5371 = vmatprep.subr.bf16.mxu0 0
        %5372 = vmatpush2.bf16.msra.mxu0 0
        %5373 = vmatprep.subr.bf16.mxu0 0
        %5374 = vmatpush2.bf16.msra.mxu0 0
        %5375 = vmatprep.subr.bf16.mxu0 0
        %5376 = vmatpush2.bf16.msra.mxu0 0
        %5377 = vmatprep.mubr.bf16.mxu0 0
        %5378 = vmatmul.mubr.bf16.gmra.mxu0 %v5334
        %v5379 = vpop.f32.mrf.mxu0
        %v5380 = vadd.f32 0.0, %v5379
        %v5381 = vpop.f32.mrf.mxu0
        %v5382 = vpop.f32.mrf.mxu0
        %v5383 = vadd.f32 0.0, %v5382
        %v5384 = vpop.f32.mrf.mxu0
        %5385 = vmatprep.mubr.bf16.mxu0 0
        %5386 = vmatmul.mubr.bf16.gmra.mxu0 %v5337
        %v5387 = vpop.f32.mrf.mxu0
        %v5388 = vadd.f32 0.0, %v5387
        %v5389 = vpop.f32.mrf.mxu0
        %v5390 = vpop.f32.mrf.mxu0
        %v5391 = vadd.f32 0.0, %v5390
        %v5392 = vpop.f32.mrf.mxu0
        %5393 = vmatprep.mubr.bf16.mxu0 0
        %5394 = vmatmul.mubr.bf16.gmra.mxu0 %v5340
        %v5395 = vpop.f32.mrf.mxu0
        %v5396 = vadd.f32 0.0, %v5395
        %v5397 = vpop.f32.mrf.mxu0
        %v5398 = vpop.f32.mrf.mxu0
        %v5399 = vadd.f32 0.0, %v5398
        %v5400 = vpop.f32.mrf.mxu0
        %5401 = vmatprep.mubr.bf16.mxu0 0
        %5402 = vmatmul.mubr.bf16.gmra.mxu0 %v5343
        %v5403 = vpop.f32.mrf.mxu0
        %v5404 = vadd.f32 0.0, %v5403
        %v5405 = vpop.f32.mrf.mxu0
        %v5406 = vpop.f32.mrf.mxu0
        %v5407 = vadd.f32 0.0, %v5406
        %v5408 = vpop.f32.mrf.mxu0
        %5409 = vdwg.mxu0
        %v5410 = vadd.f32 %v5285, %v5380
        %v5411 = vadd.f32 %v5286, %v5383
        %v5412 = vadd.f32 %v5287, %v5388
        %v5413 = vadd.f32 %v5288, %v5391
        %v5414 = vadd.f32 %v5289, %v5396
        %v5415 = vadd.f32 %v5290, %v5399
        %v5416 = vadd.f32 %v5291, %v5404
        %v5417 = vadd.f32 %v5292, %v5407
        %vm5418 = vcmp.eq.s32.totalorder %v3929, 12
        %v5419 = vsel %vm5418, 1.0, 0.0
        %v5420 = vpack.c.bf16 %v5419, %v5419
        %v5422 = vpack.i.b16 %v5420, %v5420
        %v5424 = vlaneseq
        %v5425 = vshrl.u32 %v5424, 7
        %v5426 = vsub.s32 0, %v5425
        %v5427 = vrot.slane %v5422, %v5426
        %v5428 = vmul.bf16 %v3936, %v5427
        %s5429 = scalar_lea.vmem %s9, 384
        %v5430 = vld [vmem:[%s5429] sm:$0xf]
        %v5431 = vld [vmem:[%s5429 + $0x4] sm:$0xf]
        %v5432 = vld [vmem:[%s5429 + $0x8] sm:$0xf]
        %v5433 = vld [vmem:[%s5429 + $0xc] sm:$0xf]
        %v5434 = vld [vmem:[%s5429 + $0x10] sm:$0xf]
        %v5435 = vld [vmem:[%s5429 + $0x14] sm:$0xf]
        %v5436 = vld [vmem:[%s5429 + $0x18] sm:$0xf]
        %v5437 = vld [vmem:[%s5429 + $0x1c] sm:$0xf]
        %v5446 = vunpack.c.l.b16 %v5430
        %v5447 = vunpack.c.l.b16 %v5431
        %v5448 = vunpack.c.l.b16 %v5432
        %v5449 = vunpack.c.l.b16 %v5433
        %v5450 = vunpack.c.l.b16 %v5434
        %v5451 = vunpack.c.l.b16 %v5435
        %v5452 = vunpack.c.l.b16 %v5436
        %v5453 = vunpack.c.l.b16 %v5437
        %v5454 = vpack.c.b16 %v5447, %v5446
        %v5455 = vpack.c.b16 %v5449, %v5448
        %v5456 = vpack.c.b16 %v5451, %v5450
        %v5457 = vpack.c.b16 %v5453, %v5452
        %v5459 = vsel %vm1035, %v5454, 0
        %v5462 = vsel %vm1035, %v5455, 0
        %v5465 = vsel %vm1035, %v5456, 0
        %v5468 = vsel %vm1035, %v5457, 0
        %5470 = vmatprep.subr.bf16.mxu0 0
        %5471 = vmatpush1.bf16.msra.mxu0 0
        %5472 = vmatprep.subr.bf16.mxu0 0
        %5473 = vmatpush1.bf16.msra.mxu0 0
        %5474 = vmatprep.subr.bf16.mxu0 0
        %5475 = vmatpush1.bf16.msra.mxu0 0
        %5476 = vmatprep.subr.bf16.mxu0 0
        %5477 = vmatpush1.bf16.msra.mxu0 0
        %5478 = vmatprep.subr.bf16.mxu0 0
        %5479 = vmatpush1.bf16.msra.mxu0 0
        %5480 = vmatprep.subr.bf16.mxu0 0
        %5481 = vmatpush1.bf16.msra.mxu0 0
        %5482 = vmatprep.subr.bf16.mxu0 0
        %5483 = vmatpush1.bf16.msra.mxu0 0
        %5484 = vmatprep.subr.bf16.mxu0 0
        %5485 = vmatpush1.bf16.msra.mxu0 %v5428
        %5486 = vmatprep.subr.bf16.mxu0 0
        %5487 = vmatpush2.bf16.msra.mxu0 0
        %5488 = vmatprep.subr.bf16.mxu0 0
        %5489 = vmatpush2.bf16.msra.mxu0 0
        %5490 = vmatprep.subr.bf16.mxu0 0
        %5491 = vmatpush2.bf16.msra.mxu0 0
        %5492 = vmatprep.subr.bf16.mxu0 0
        %5493 = vmatpush2.bf16.msra.mxu0 0
        %5494 = vmatprep.subr.bf16.mxu0 0
        %5495 = vmatpush2.bf16.msra.mxu0 0
        %5496 = vmatprep.subr.bf16.mxu0 0
        %5497 = vmatpush2.bf16.msra.mxu0 0
        %5498 = vmatprep.subr.bf16.mxu0 0
        %5499 = vmatpush2.bf16.msra.mxu0 0
        %5500 = vmatprep.subr.bf16.mxu0 0
        %5501 = vmatpush2.bf16.msra.mxu0 0
        %5502 = vmatprep.mubr.bf16.mxu0 0
        %5503 = vmatmul.mubr.bf16.gmra.mxu0 %v5459
        %v5504 = vpop.f32.mrf.mxu0
        %v5505 = vadd.f32 0.0, %v5504
        %v5506 = vpop.f32.mrf.mxu0
        %v5507 = vpop.f32.mrf.mxu0
        %v5508 = vadd.f32 0.0, %v5507
        %v5509 = vpop.f32.mrf.mxu0
        %5510 = vmatprep.mubr.bf16.mxu0 0
        %5511 = vmatmul.mubr.bf16.gmra.mxu0 %v5462
        %v5512 = vpop.f32.mrf.mxu0
        %v5513 = vadd.f32 0.0, %v5512
        %v5514 = vpop.f32.mrf.mxu0
        %v5515 = vpop.f32.mrf.mxu0
        %v5516 = vadd.f32 0.0, %v5515
        %v5517 = vpop.f32.mrf.mxu0
        %5518 = vmatprep.mubr.bf16.mxu0 0
        %5519 = vmatmul.mubr.bf16.gmra.mxu0 %v5465
        %v5520 = vpop.f32.mrf.mxu0
        %v5521 = vadd.f32 0.0, %v5520
        %v5522 = vpop.f32.mrf.mxu0
        %v5523 = vpop.f32.mrf.mxu0
        %v5524 = vadd.f32 0.0, %v5523
        %v5525 = vpop.f32.mrf.mxu0
        %5526 = vmatprep.mubr.bf16.mxu0 0
        %5527 = vmatmul.mubr.bf16.gmra.mxu0 %v5468
        %v5528 = vpop.f32.mrf.mxu0
        %v5529 = vadd.f32 0.0, %v5528
        %v5530 = vpop.f32.mrf.mxu0
        %v5531 = vpop.f32.mrf.mxu0
        %v5532 = vadd.f32 0.0, %v5531
        %v5533 = vpop.f32.mrf.mxu0
        %5534 = vdwg.mxu0
        %v5535 = vadd.f32 %v5410, %v5505
        %v5536 = vadd.f32 %v5411, %v5508
        %v5537 = vadd.f32 %v5412, %v5513
        %v5538 = vadd.f32 %v5413, %v5516
        %v5539 = vadd.f32 %v5414, %v5521
        %v5540 = vadd.f32 %v5415, %v5524
        %v5541 = vadd.f32 %v5416, %v5529
        %v5542 = vadd.f32 %v5417, %v5532
        %vm5543 = vcmp.eq.s32.totalorder %v3929, 13
        %v5544 = vsel %vm5543, 1.0, 0.0
        %v5545 = vpack.c.bf16 %v5544, %v5544
        %v5547 = vpack.i.b16 %v5545, %v5545
        %v5549 = vlaneseq
        %v5550 = vshrl.u32 %v5549, 7
        %v5551 = vsub.s32 0, %v5550
        %v5552 = vrot.slane %v5547, %v5551
        %v5553 = vmul.bf16 %v3936, %v5552
        %s5554 = scalar_lea.vmem %s9, 416
        %v5555 = vld [vmem:[%s5554] sm:$0xf]
        %v5556 = vld [vmem:[%s5554 + $0x4] sm:$0xf]
        %v5557 = vld [vmem:[%s5554 + $0x8] sm:$0xf]
        %v5558 = vld [vmem:[%s5554 + $0xc] sm:$0xf]
        %v5559 = vld [vmem:[%s5554 + $0x10] sm:$0xf]
        %v5560 = vld [vmem:[%s5554 + $0x14] sm:$0xf]
        %v5561 = vld [vmem:[%s5554 + $0x18] sm:$0xf]
        %v5562 = vld [vmem:[%s5554 + $0x1c] sm:$0xf]
        %v5571 = vunpack.c.l.b16 %v5555
        %v5572 = vunpack.c.l.b16 %v5556
        %v5573 = vunpack.c.l.b16 %v5557
        %v5574 = vunpack.c.l.b16 %v5558
        %v5575 = vunpack.c.l.b16 %v5559
        %v5576 = vunpack.c.l.b16 %v5560
        %v5577 = vunpack.c.l.b16 %v5561
        %v5578 = vunpack.c.l.b16 %v5562
        %v5579 = vpack.c.b16 %v5572, %v5571
        %v5580 = vpack.c.b16 %v5574, %v5573
        %v5581 = vpack.c.b16 %v5576, %v5575
        %v5582 = vpack.c.b16 %v5578, %v5577
        %v5584 = vsel %vm1035, %v5579, 0
        %v5587 = vsel %vm1035, %v5580, 0
        %v5590 = vsel %vm1035, %v5581, 0
        %v5593 = vsel %vm1035, %v5582, 0
        %5595 = vmatprep.subr.bf16.mxu0 0
        %5596 = vmatpush1.bf16.msra.mxu0 0
        %5597 = vmatprep.subr.bf16.mxu0 0
        %5598 = vmatpush1.bf16.msra.mxu0 0
        %5599 = vmatprep.subr.bf16.mxu0 0
        %5600 = vmatpush1.bf16.msra.mxu0 0
        %5601 = vmatprep.subr.bf16.mxu0 0
        %5602 = vmatpush1.bf16.msra.mxu0 0
        %5603 = vmatprep.subr.bf16.mxu0 0
        %5604 = vmatpush1.bf16.msra.mxu0 0
        %5605 = vmatprep.subr.bf16.mxu0 0
        %5606 = vmatpush1.bf16.msra.mxu0 0
        %5607 = vmatprep.subr.bf16.mxu0 0
        %5608 = vmatpush1.bf16.msra.mxu0 0
        %5609 = vmatprep.subr.bf16.mxu0 0
        %5610 = vmatpush1.bf16.msra.mxu0 %v5553
        %5611 = vmatprep.subr.bf16.mxu0 0
        %5612 = vmatpush2.bf16.msra.mxu0 0
        %5613 = vmatprep.subr.bf16.mxu0 0
        %5614 = vmatpush2.bf16.msra.mxu0 0
        %5615 = vmatprep.subr.bf16.mxu0 0
        %5616 = vmatpush2.bf16.msra.mxu0 0
        %5617 = vmatprep.subr.bf16.mxu0 0
        %5618 = vmatpush2.bf16.msra.mxu0 0
        %5619 = vmatprep.subr.bf16.mxu0 0
        %5620 = vmatpush2.bf16.msra.mxu0 0
        %5621 = vmatprep.subr.bf16.mxu0 0
        %5622 = vmatpush2.bf16.msra.mxu0 0
        %5623 = vmatprep.subr.bf16.mxu0 0
        %5624 = vmatpush2.bf16.msra.mxu0 0
        %5625 = vmatprep.subr.bf16.mxu0 0
        %5626 = vmatpush2.bf16.msra.mxu0 0
        %5627 = vmatprep.mubr.bf16.mxu0 0
        %5628 = vmatmul.mubr.bf16.gmra.mxu0 %v5584
        %v5629 = vpop.f32.mrf.mxu0
        %v5630 = vadd.f32 0.0, %v5629
        %v5631 = vpop.f32.mrf.mxu0
        %v5632 = vpop.f32.mrf.mxu0
        %v5633 = vadd.f32 0.0, %v5632
        %v5634 = vpop.f32.mrf.mxu0
        %5635 = vmatprep.mubr.bf16.mxu0 0
        %5636 = vmatmul.mubr.bf16.gmra.mxu0 %v5587
        %v5637 = vpop.f32.mrf.mxu0
        %v5638 = vadd.f32 0.0, %v5637
        %v5639 = vpop.f32.mrf.mxu0
        %v5640 = vpop.f32.mrf.mxu0
        %v5641 = vadd.f32 0.0, %v5640
        %v5642 = vpop.f32.mrf.mxu0
        %5643 = vmatprep.mubr.bf16.mxu0 0
        %5644 = vmatmul.mubr.bf16.gmra.mxu0 %v5590
        %v5645 = vpop.f32.mrf.mxu0
        %v5646 = vadd.f32 0.0, %v5645
        %v5647 = vpop.f32.mrf.mxu0
        %v5648 = vpop.f32.mrf.mxu0
        %v5649 = vadd.f32 0.0, %v5648
        %v5650 = vpop.f32.mrf.mxu0
        %5651 = vmatprep.mubr.bf16.mxu0 0
        %5652 = vmatmul.mubr.bf16.gmra.mxu0 %v5593
        %v5653 = vpop.f32.mrf.mxu0
        %v5654 = vadd.f32 0.0, %v5653
        %v5655 = vpop.f32.mrf.mxu0
        %v5656 = vpop.f32.mrf.mxu0
        %v5657 = vadd.f32 0.0, %v5656
        %v5658 = vpop.f32.mrf.mxu0
        %5659 = vdwg.mxu0
        %v5660 = vadd.f32 %v5535, %v5630
        %v5661 = vadd.f32 %v5536, %v5633
        %v5662 = vadd.f32 %v5537, %v5638
        %v5663 = vadd.f32 %v5538, %v5641
        %v5664 = vadd.f32 %v5539, %v5646
        %v5665 = vadd.f32 %v5540, %v5649
        %v5666 = vadd.f32 %v5541, %v5654
        %v5667 = vadd.f32 %v5542, %v5657
        %vm5668 = vcmp.eq.s32.totalorder %v3929, 14
        %v5669 = vsel %vm5668, 1.0, 0.0
        %v5670 = vpack.c.bf16 %v5669, %v5669
        %v5672 = vpack.i.b16 %v5670, %v5670
        %v5674 = vlaneseq
        %v5675 = vshrl.u32 %v5674, 7
        %v5676 = vsub.s32 0, %v5675
        %v5677 = vrot.slane %v5672, %v5676
        %v5678 = vmul.bf16 %v3936, %v5677
        %s5679 = scalar_lea.vmem %s9, 448
        %v5680 = vld [vmem:[%s5679] sm:$0xf]
        %v5681 = vld [vmem:[%s5679 + $0x4] sm:$0xf]
        %v5682 = vld [vmem:[%s5679 + $0x8] sm:$0xf]
        %v5683 = vld [vmem:[%s5679 + $0xc] sm:$0xf]
        %v5684 = vld [vmem:[%s5679 + $0x10] sm:$0xf]
        %v5685 = vld [vmem:[%s5679 + $0x14] sm:$0xf]
        %v5686 = vld [vmem:[%s5679 + $0x18] sm:$0xf]
        %v5687 = vld [vmem:[%s5679 + $0x1c] sm:$0xf]
        %v5696 = vunpack.c.l.b16 %v5680
        %v5697 = vunpack.c.l.b16 %v5681
        %v5698 = vunpack.c.l.b16 %v5682
        %v5699 = vunpack.c.l.b16 %v5683
        %v5700 = vunpack.c.l.b16 %v5684
        %v5701 = vunpack.c.l.b16 %v5685
        %v5702 = vunpack.c.l.b16 %v5686
        %v5703 = vunpack.c.l.b16 %v5687
        %v5704 = vpack.c.b16 %v5697, %v5696
        %v5705 = vpack.c.b16 %v5699, %v5698
        %v5706 = vpack.c.b16 %v5701, %v5700
        %v5707 = vpack.c.b16 %v5703, %v5702
        %v5709 = vsel %vm1035, %v5704, 0
        %v5712 = vsel %vm1035, %v5705, 0
        %v5715 = vsel %vm1035, %v5706, 0
        %v5718 = vsel %vm1035, %v5707, 0
        %5720 = vmatprep.subr.bf16.mxu0 0
        %5721 = vmatpush1.bf16.msra.mxu0 0
        %5722 = vmatprep.subr.bf16.mxu0 0
        %5723 = vmatpush1.bf16.msra.mxu0 0
        %5724 = vmatprep.subr.bf16.mxu0 0
        %5725 = vmatpush1.bf16.msra.mxu0 0
        %5726 = vmatprep.subr.bf16.mxu0 0
        %5727 = vmatpush1.bf16.msra.mxu0 0
        %5728 = vmatprep.subr.bf16.mxu0 0
        %5729 = vmatpush1.bf16.msra.mxu0 0
        %5730 = vmatprep.subr.bf16.mxu0 0
        %5731 = vmatpush1.bf16.msra.mxu0 0
        %5732 = vmatprep.subr.bf16.mxu0 0
        %5733 = vmatpush1.bf16.msra.mxu0 0
        %5734 = vmatprep.subr.bf16.mxu0 0
        %5735 = vmatpush1.bf16.msra.mxu0 %v5678
        %5736 = vmatprep.subr.bf16.mxu0 0
        %5737 = vmatpush2.bf16.msra.mxu0 0
        %5738 = vmatprep.subr.bf16.mxu0 0
        %5739 = vmatpush2.bf16.msra.mxu0 0
        %5740 = vmatprep.subr.bf16.mxu0 0
        %5741 = vmatpush2.bf16.msra.mxu0 0
        %5742 = vmatprep.subr.bf16.mxu0 0
        %5743 = vmatpush2.bf16.msra.mxu0 0
        %5744 = vmatprep.subr.bf16.mxu0 0
        %5745 = vmatpush2.bf16.msra.mxu0 0
        %5746 = vmatprep.subr.bf16.mxu0 0
        %5747 = vmatpush2.bf16.msra.mxu0 0
        %5748 = vmatprep.subr.bf16.mxu0 0
        %5749 = vmatpush2.bf16.msra.mxu0 0
        %5750 = vmatprep.subr.bf16.mxu0 0
        %5751 = vmatpush2.bf16.msra.mxu0 0
        %5752 = vmatprep.mubr.bf16.mxu0 0
        %5753 = vmatmul.mubr.bf16.gmra.mxu0 %v5709
        %v5754 = vpop.f32.mrf.mxu0
        %v5755 = vadd.f32 0.0, %v5754
        %v5756 = vpop.f32.mrf.mxu0
        %v5757 = vpop.f32.mrf.mxu0
        %v5758 = vadd.f32 0.0, %v5757
        %v5759 = vpop.f32.mrf.mxu0
        %5760 = vmatprep.mubr.bf16.mxu0 0
        %5761 = vmatmul.mubr.bf16.gmra.mxu0 %v5712
        %v5762 = vpop.f32.mrf.mxu0
        %v5763 = vadd.f32 0.0, %v5762
        %v5764 = vpop.f32.mrf.mxu0
        %v5765 = vpop.f32.mrf.mxu0
        %v5766 = vadd.f32 0.0, %v5765
        %v5767 = vpop.f32.mrf.mxu0
        %5768 = vmatprep.mubr.bf16.mxu0 0
        %5769 = vmatmul.mubr.bf16.gmra.mxu0 %v5715
        %v5770 = vpop.f32.mrf.mxu0
        %v5771 = vadd.f32 0.0, %v5770
        %v5772 = vpop.f32.mrf.mxu0
        %v5773 = vpop.f32.mrf.mxu0
        %v5774 = vadd.f32 0.0, %v5773
        %v5775 = vpop.f32.mrf.mxu0
        %5776 = vmatprep.mubr.bf16.mxu0 0
        %5777 = vmatmul.mubr.bf16.gmra.mxu0 %v5718
        %v5778 = vpop.f32.mrf.mxu0
        %v5779 = vadd.f32 0.0, %v5778
        %v5780 = vpop.f32.mrf.mxu0
        %v5781 = vpop.f32.mrf.mxu0
        %v5782 = vadd.f32 0.0, %v5781
        %v5783 = vpop.f32.mrf.mxu0
        %5784 = vdwg.mxu0
        %v5785 = vadd.f32 %v5660, %v5755
        %v5786 = vadd.f32 %v5661, %v5758
        %v5787 = vadd.f32 %v5662, %v5763
        %v5788 = vadd.f32 %v5663, %v5766
        %v5789 = vadd.f32 %v5664, %v5771
        %v5790 = vadd.f32 %v5665, %v5774
        %v5791 = vadd.f32 %v5666, %v5779
        %v5792 = vadd.f32 %v5667, %v5782
        %vm5793 = vcmp.eq.s32.totalorder %v3929, 15
        %v5794 = vsel %vm5793, 1.0, 0.0
        %v5795 = vpack.c.bf16 %v5794, %v5794
        %v5797 = vpack.i.b16 %v5795, %v5795
        %v5799 = vlaneseq
        %v5800 = vshrl.u32 %v5799, 7
        %v5801 = vsub.s32 0, %v5800
        %v5802 = vrot.slane %v5797, %v5801
        %v5803 = vmul.bf16 %v3936, %v5802
        %s5804 = scalar_lea.vmem %s9, 480
        %v5805 = vld [vmem:[%s5804] sm:$0xf]
        %v5806 = vld [vmem:[%s5804 + $0x4] sm:$0xf]
        %v5807 = vld [vmem:[%s5804 + $0x8] sm:$0xf]
        %v5808 = vld [vmem:[%s5804 + $0xc] sm:$0xf]
        %v5809 = vld [vmem:[%s5804 + $0x10] sm:$0xf]
        %v5810 = vld [vmem:[%s5804 + $0x14] sm:$0xf]
        %v5811 = vld [vmem:[%s5804 + $0x18] sm:$0xf]
        %v5812 = vld [vmem:[%s5804 + $0x1c] sm:$0xf]
        %v5821 = vunpack.c.l.b16 %v5805
        %v5822 = vunpack.c.l.b16 %v5806
        %v5823 = vunpack.c.l.b16 %v5807
        %v5824 = vunpack.c.l.b16 %v5808
        %v5825 = vunpack.c.l.b16 %v5809
        %v5826 = vunpack.c.l.b16 %v5810
        %v5827 = vunpack.c.l.b16 %v5811
        %v5828 = vunpack.c.l.b16 %v5812
        %v5829 = vpack.c.b16 %v5822, %v5821
        %v5830 = vpack.c.b16 %v5824, %v5823
        %v5831 = vpack.c.b16 %v5826, %v5825
        %v5832 = vpack.c.b16 %v5828, %v5827
        %v5834 = vsel %vm1035, %v5829, 0
        %v5837 = vsel %vm1035, %v5830, 0
        %v5840 = vsel %vm1035, %v5831, 0
        %v5843 = vsel %vm1035, %v5832, 0
        %5845 = vmatprep.subr.bf16.mxu0 0
        %5846 = vmatpush1.bf16.msra.mxu0 0
        %5847 = vmatprep.subr.bf16.mxu0 0
        %5848 = vmatpush1.bf16.msra.mxu0 0
        %5849 = vmatprep.subr.bf16.mxu0 0
        %5850 = vmatpush1.bf16.msra.mxu0 0
        %5851 = vmatprep.subr.bf16.mxu0 0
        %5852 = vmatpush1.bf16.msra.mxu0 0
        %5853 = vmatprep.subr.bf16.mxu0 0
        %5854 = vmatpush1.bf16.msra.mxu0 0
        %5855 = vmatprep.subr.bf16.mxu0 0
        %5856 = vmatpush1.bf16.msra.mxu0 0
        %5857 = vmatprep.subr.bf16.mxu0 0
        %5858 = vmatpush1.bf16.msra.mxu0 0
        %5859 = vmatprep.subr.bf16.mxu0 0
        %5860 = vmatpush1.bf16.msra.mxu0 %v5803
        %5861 = vmatprep.subr.bf16.mxu0 0
        %5862 = vmatpush2.bf16.msra.mxu0 0
        %5863 = vmatprep.subr.bf16.mxu0 0
        %5864 = vmatpush2.bf16.msra.mxu0 0
        %5865 = vmatprep.subr.bf16.mxu0 0
        %5866 = vmatpush2.bf16.msra.mxu0 0
        %5867 = vmatprep.subr.bf16.mxu0 0
        %5868 = vmatpush2.bf16.msra.mxu0 0
        %5869 = vmatprep.subr.bf16.mxu0 0
        %5870 = vmatpush2.bf16.msra.mxu0 0
        %5871 = vmatprep.subr.bf16.mxu0 0
        %5872 = vmatpush2.bf16.msra.mxu0 0
        %5873 = vmatprep.subr.bf16.mxu0 0
        %5874 = vmatpush2.bf16.msra.mxu0 0
        %5875 = vmatprep.subr.bf16.mxu0 0
        %5876 = vmatpush2.bf16.msra.mxu0 0
        %5877 = vmatprep.mubr.bf16.mxu0 0
        %5878 = vmatmul.mubr.bf16.gmra.mxu0 %v5834
        %v5879 = vpop.f32.mrf.mxu0
        %v5880 = vadd.f32 0.0, %v5879
        %v5881 = vpop.f32.mrf.mxu0
        %v5882 = vpop.f32.mrf.mxu0
        %v5883 = vadd.f32 0.0, %v5882
        %v5884 = vpop.f32.mrf.mxu0
        %5885 = vmatprep.mubr.bf16.mxu0 0
        %5886 = vmatmul.mubr.bf16.gmra.mxu0 %v5837
        %v5887 = vpop.f32.mrf.mxu0
        %v5888 = vadd.f32 0.0, %v5887
        %v5889 = vpop.f32.mrf.mxu0
        %v5890 = vpop.f32.mrf.mxu0
        %v5891 = vadd.f32 0.0, %v5890
        %v5892 = vpop.f32.mrf.mxu0
        %5893 = vmatprep.mubr.bf16.mxu0 0
        %5894 = vmatmul.mubr.bf16.gmra.mxu0 %v5840
        %v5895 = vpop.f32.mrf.mxu0
        %v5896 = vadd.f32 0.0, %v5895
        %v5897 = vpop.f32.mrf.mxu0
        %v5898 = vpop.f32.mrf.mxu0
        %v5899 = vadd.f32 0.0, %v5898
        %v5900 = vpop.f32.mrf.mxu0
        %5901 = vmatprep.mubr.bf16.mxu0 0
        %5902 = vmatmul.mubr.bf16.gmra.mxu0 %v5843
        %v5903 = vpop.f32.mrf.mxu0
        %v5904 = vadd.f32 0.0, %v5903
        %v5905 = vpop.f32.mrf.mxu0
        %v5906 = vpop.f32.mrf.mxu0
        %v5907 = vadd.f32 0.0, %v5906
        %v5908 = vpop.f32.mrf.mxu0
        %5909 = vdwg.mxu0
        %v5910 = vadd.f32 %v5785, %v5880
        %v5911 = vadd.f32 %v5786, %v5883
        %v5912 = vadd.f32 %v5787, %v5888
        %v5913 = vadd.f32 %v5788, %v5891
        %v5914 = vadd.f32 %v5789, %v5896
        %v5915 = vadd.f32 %v5790, %v5899
        %v5916 = vadd.f32 %v5791, %v5904
        %v5917 = vadd.f32 %v5792, %v5907
        %v5918 = vld [vmem:[%s10] sm:$0xff]
        %v5919 = vld [vmem:[%s10 + $0x8] sm:$0xff]
        %v5920 = vld [vmem:[%s10 + $0x10] sm:$0xff]
        %v5921 = vld [vmem:[%s10 + $0x18] sm:$0xff]
        %v5922 = vld [vmem:[%s10 + $0x20] sm:$0xff]
        %v5923 = vld [vmem:[%s10 + $0x28] sm:$0xff]
        %v5924 = vld [vmem:[%s10 + $0x30] sm:$0xff]
        %v5925 = vld [vmem:[%s10 + $0x38] sm:$0xff]
        %5927 = vset.pattern.permute.xlu0 0
        %5928 = vperm.xlu0 %5927, %v5918
        %v5929 = vpop.permute.xlu0 %5928
        %5932 = vset.pattern.permute.xlu0 0
        %5933 = vperm.xlu0 %5932, %v5919
        %v5934 = vpop.permute.xlu0 %5933
        %5937 = vset.pattern.permute.xlu0 0
        %5938 = vperm.xlu0 %5937, %v5920
        %v5939 = vpop.permute.xlu0 %5938
        %5942 = vset.pattern.permute.xlu0 0
        %5943 = vperm.xlu0 %5942, %v5921
        %v5944 = vpop.permute.xlu0 %5943
        %5947 = vset.pattern.permute.xlu0 0
        %5948 = vperm.xlu0 %5947, %v5922
        %v5949 = vpop.permute.xlu0 %5948
        %5952 = vset.pattern.permute.xlu0 0
        %5953 = vperm.xlu0 %5952, %v5923
        %v5954 = vpop.permute.xlu0 %5953
        %5957 = vset.pattern.permute.xlu0 0
        %5958 = vperm.xlu0 %5957, %v5924
        %v5959 = vpop.permute.xlu0 %5958
        %5962 = vset.pattern.permute.xlu0 0
        %5963 = vperm.xlu0 %5962, %v5925
        %v5964 = vpop.permute.xlu0 %5963
        %v5966 = vadd.f32 %v5910, %v5929
        %v5967 = vadd.f32 %v5911, %v5934
        %v5968 = vadd.f32 %v5912, %v5939
        %v5969 = vadd.f32 %v5913, %v5944
        %v5970 = vadd.f32 %v5914, %v5949
        %v5971 = vadd.f32 %v5915, %v5954
        %v5972 = vadd.f32 %v5916, %v5959
        %v5973 = vadd.f32 %v5917, %v5964
        %v5974 = vmax.f32 %v5966, 0.0
        %v5975 = vmax.f32 %v5967, 0.0
        %v5976 = vmax.f32 %v5968, 0.0
        %v5977 = vmax.f32 %v5969, 0.0
        %v5978 = vmax.f32 %v5970, 0.0
        %v5979 = vmax.f32 %v5971, 0.0
        %v5980 = vmax.f32 %v5972, 0.0
        %v5981 = vmax.f32 %v5973, 0.0
        %v5982 = vpack.c.bf16 %v5975, %v5974
        %v5983 = vpack.c.bf16 %v5977, %v5976
        %v5984 = vpack.c.bf16 %v5979, %v5978
        %v5985 = vpack.c.bf16 %v5981, %v5980
        %v5986 = vmul.u32 %v546, 2
        %v5987 = vmul.u32 %v547, 2
        %v5988 = vsub.s32 %v563, %v5986
        %v5989 = vsub.s32 %v563, %v5987
        %v5990 = vadd.s32 %v5988, 1
        %v5991 = vadd.s32 %v5989, 1
        %vm5992 = vcmp.eq.s32.totalorder %v5990, 0
        %vm5993 = vcmp.eq.s32.totalorder %v5991, 0
        %v5994 = vsel %vm5992, 1.0, 0.0
        %v5995 = vsel %vm5993, 1.0, 0.0
        %v5996 = vpack.c.bf16 %v5995, %v5994
        %v5998 = vsel %vm1035, %v5982, 0
        %v6001 = vsel %vm1035, %v5983, 0
        %v6004 = vsel %vm1035, %v5984, 0
        %v6007 = vsel %vm1035, %v5985, 0
        %6009 = vmatprep.subr.bf16.mxu0 0
        %6010 = vmatpush1.bf16.msra.mxu0 0
        %6011 = vmatprep.subr.bf16.mxu0 0
        %6012 = vmatpush1.bf16.msra.mxu0 0
        %6013 = vmatprep.subr.bf16.mxu0 0
        %6014 = vmatpush1.bf16.msra.mxu0 0
        %6015 = vmatprep.subr.bf16.mxu0 0
        %6016 = vmatpush1.bf16.msra.mxu0 0
        %6017 = vmatprep.subr.bf16.mxu0 0
        %6018 = vmatpush1.bf16.msra.mxu0 0
        %6019 = vmatprep.subr.bf16.mxu0 0
        %6020 = vmatpush1.bf16.msra.mxu0 0
        %6021 = vmatprep.subr.bf16.mxu0 0
        %6022 = vmatpush1.bf16.msra.mxu0 0
        %6023 = vmatprep.subr.bf16.mxu0 0
        %6024 = vmatpush1.bf16.msra.mxu0 %v5996
        %6025 = vmatprep.subr.bf16.mxu0 0
        %6026 = vmatpush2.bf16.msra.mxu0 0
        %6027 = vmatprep.subr.bf16.mxu0 0
        %6028 = vmatpush2.bf16.msra.mxu0 0
        %6029 = vmatprep.subr.bf16.mxu0 0
        %6030 = vmatpush2.bf16.msra.mxu0 0
        %6031 = vmatprep.subr.bf16.mxu0 0
        %6032 = vmatpush2.bf16.msra.mxu0 0
        %6033 = vmatprep.subr.bf16.mxu0 0
        %6034 = vmatpush2.bf16.msra.mxu0 0
        %6035 = vmatprep.subr.bf16.mxu0 0
        %6036 = vmatpush2.bf16.msra.mxu0 0
        %6037 = vmatprep.subr.bf16.mxu0 0
        %6038 = vmatpush2.bf16.msra.mxu0 0
        %6039 = vmatprep.subr.bf16.mxu0 0
        %6040 = vmatpush2.bf16.msra.mxu0 0
        %6041 = vmatprep.mubr.bf16.mxu0 0
        %6042 = vmatmul.mubr.bf16.gmra.mxu0 %v5998
        %v6043 = vpop.f32.mrf.mxu0
        %v6044 = vadd.f32 0.0, %v6043
        %v6045 = vpop.f32.mrf.mxu0
        %v6046 = vpop.f32.mrf.mxu0
        %v6047 = vadd.f32 0.0, %v6046
        %v6048 = vpop.f32.mrf.mxu0
        %6049 = vmatprep.mubr.bf16.mxu0 0
        %6050 = vmatmul.mubr.bf16.gmra.mxu0 %v6001
        %v6051 = vpop.f32.mrf.mxu0
        %v6052 = vadd.f32 0.0, %v6051
        %v6053 = vpop.f32.mrf.mxu0
        %v6054 = vpop.f32.mrf.mxu0
        %v6055 = vadd.f32 0.0, %v6054
        %v6056 = vpop.f32.mrf.mxu0
        %6057 = vmatprep.mubr.bf16.mxu0 0
        %6058 = vmatmul.mubr.bf16.gmra.mxu0 %v6004
        %v6059 = vpop.f32.mrf.mxu0
        %v6060 = vadd.f32 0.0, %v6059
        %v6061 = vpop.f32.mrf.mxu0
        %v6062 = vpop.f32.mrf.mxu0
        %v6063 = vadd.f32 0.0, %v6062
        %v6064 = vpop.f32.mrf.mxu0
        %6065 = vmatprep.mubr.bf16.mxu0 0
        %6066 = vmatmul.mubr.bf16.gmra.mxu0 %v6007
        %v6067 = vpop.f32.mrf.mxu0
        %v6068 = vadd.f32 0.0, %v6067
        %v6069 = vpop.f32.mrf.mxu0
        %v6070 = vpop.f32.mrf.mxu0
        %v6071 = vadd.f32 0.0, %v6070
        %v6072 = vpop.f32.mrf.mxu0
        %6073 = vdwg.mxu0
        %v6074 = vpack.c.bf16 %v6047, %v6044
        %v6075 = vpack.c.bf16 %v6055, %v6052
        %v6076 = vpack.c.bf16 %v6063, %v6060
        %v6077 = vpack.c.bf16 %v6071, %v6068
        %v6078 = vld [vmem:[%s11] sm:$0xf]
        %v6079 = vld [vmem:[%s11 + $0x4] sm:$0xf]
        %v6080 = vld [vmem:[%s11 + $0x8] sm:$0xf]
        %v6081 = vld [vmem:[%s11 + $0xc] sm:$0xf]
        %vm6082 = vcmp.eq.s32.totalorder %v5990, 1
        %vm6083 = vcmp.eq.s32.totalorder %v5991, 1
        %v6084 = vsel %vm6082, 1.0, 0.0
        %v6085 = vsel %vm6083, 1.0, 0.0
        %v6086 = vpack.c.bf16 %v6085, %v6084
        %6087 = vmatprep.subr.bf16.mxu0 0
        %6088 = vmatpush1.bf16.msra.mxu0 0
        %6089 = vmatprep.subr.bf16.mxu0 0
        %6090 = vmatpush1.bf16.msra.mxu0 0
        %6091 = vmatprep.subr.bf16.mxu0 0
        %6092 = vmatpush1.bf16.msra.mxu0 0
        %6093 = vmatprep.subr.bf16.mxu0 0
        %6094 = vmatpush1.bf16.msra.mxu0 0
        %6095 = vmatprep.subr.bf16.mxu0 0
        %6096 = vmatpush1.bf16.msra.mxu0 0
        %6097 = vmatprep.subr.bf16.mxu0 0
        %6098 = vmatpush1.bf16.msra.mxu0 0
        %6099 = vmatprep.subr.bf16.mxu0 0
        %6100 = vmatpush1.bf16.msra.mxu0 0
        %6101 = vmatprep.subr.bf16.mxu0 0
        %6102 = vmatpush1.bf16.msra.mxu0 %v6086
        %6103 = vmatprep.subr.bf16.mxu0 0
        %6104 = vmatpush2.bf16.msra.mxu0 0
        %6105 = vmatprep.subr.bf16.mxu0 0
        %6106 = vmatpush2.bf16.msra.mxu0 0
        %6107 = vmatprep.subr.bf16.mxu0 0
        %6108 = vmatpush2.bf16.msra.mxu0 0
        %6109 = vmatprep.subr.bf16.mxu0 0
        %6110 = vmatpush2.bf16.msra.mxu0 0
        %6111 = vmatprep.subr.bf16.mxu0 0
        %6112 = vmatpush2.bf16.msra.mxu0 0
        %6113 = vmatprep.subr.bf16.mxu0 0
        %6114 = vmatpush2.bf16.msra.mxu0 0
        %6115 = vmatprep.subr.bf16.mxu0 0
        %6116 = vmatpush2.bf16.msra.mxu0 0
        %6117 = vmatprep.subr.bf16.mxu0 0
        %6118 = vmatpush2.bf16.msra.mxu0 0
        %6119 = vmatprep.mubr.bf16.mxu0 0
        %6120 = vmatmul.mubr.bf16.gmra.mxu0 %v5998
        %v6121 = vpop.f32.mrf.mxu0
        %v6122 = vadd.f32 0.0, %v6121
        %v6123 = vpop.f32.mrf.mxu0
        %v6124 = vpop.f32.mrf.mxu0
        %v6125 = vadd.f32 0.0, %v6124
        %v6126 = vpop.f32.mrf.mxu0
        %6127 = vmatprep.mubr.bf16.mxu0 0
        %6128 = vmatmul.mubr.bf16.gmra.mxu0 %v6001
        %v6129 = vpop.f32.mrf.mxu0
        %v6130 = vadd.f32 0.0, %v6129
        %v6131 = vpop.f32.mrf.mxu0
        %v6132 = vpop.f32.mrf.mxu0
        %v6133 = vadd.f32 0.0, %v6132
        %v6134 = vpop.f32.mrf.mxu0
        %6135 = vmatprep.mubr.bf16.mxu0 0
        %6136 = vmatmul.mubr.bf16.gmra.mxu0 %v6004
        %v6137 = vpop.f32.mrf.mxu0
        %v6138 = vadd.f32 0.0, %v6137
        %v6139 = vpop.f32.mrf.mxu0
        %v6140 = vpop.f32.mrf.mxu0
        %v6141 = vadd.f32 0.0, %v6140
        %v6142 = vpop.f32.mrf.mxu0
        %6143 = vmatprep.mubr.bf16.mxu0 0
        %6144 = vmatmul.mubr.bf16.gmra.mxu0 %v6007
        %v6145 = vpop.f32.mrf.mxu0
        %v6146 = vadd.f32 0.0, %v6145
        %v6147 = vpop.f32.mrf.mxu0
        %v6148 = vpop.f32.mrf.mxu0
        %v6149 = vadd.f32 0.0, %v6148
        %v6150 = vpop.f32.mrf.mxu0
        %6151 = vdwg.mxu0
        %v6152 = vpack.c.bf16 %v6125, %v6122
        %v6153 = vpack.c.bf16 %v6133, %v6130
        %v6154 = vpack.c.bf16 %v6141, %v6138
        %v6155 = vpack.c.bf16 %v6149, %v6146
        %s6156 = scalar_lea.vmem %s11, 16
        %v6157 = vld [vmem:[%s6156] sm:$0xf]
        %v6158 = vld [vmem:[%s6156 + $0x4] sm:$0xf]
        %v6159 = vld [vmem:[%s6156 + $0x8] sm:$0xf]
        %v6160 = vld [vmem:[%s6156 + $0xc] sm:$0xf]
        %v6165 = vunpack.c.l.b16 %v6157
        %v6166 = vunpack.c.l.b16 %v6158
        %v6167 = vunpack.c.l.b16 %v6159
        %v6168 = vunpack.c.l.b16 %v6160
        %v6169 = vpack.c.b16 %v6166, %v6165
        %v6170 = vpack.c.b16 %v6168, %v6167
        %v6172 = vsel %vm928, %v6169, 0
        %v6175 = vsel %vm928, %v6170, 0
        %6177 = vmatprep.subr.bf16.mxu0 0
        %6178 = vmatpush1.bf16.msra.mxu0 0
        %6179 = vmatprep.subr.bf16.mxu0 0
        %6180 = vmatpush1.bf16.msra.mxu0 0
        %6181 = vmatprep.subr.bf16.mxu0 0
        %6182 = vmatpush1.bf16.msra.mxu0 0
        %6183 = vmatprep.subr.bf16.mxu0 0
        %6184 = vmatpush1.bf16.msra.mxu0 0
        %6185 = vmatprep.subr.bf16.mxu0 0
        %6186 = vmatpush1.bf16.msra.mxu0 %v6155
        %6187 = vmatprep.subr.bf16.mxu0 0
        %6188 = vmatpush1.bf16.msra.mxu0 %v6154
        %6189 = vmatprep.subr.bf16.mxu0 0
        %6190 = vmatpush1.bf16.msra.mxu0 %v6153
        %6191 = vmatprep.subr.bf16.mxu0 0
        %6192 = vmatpush1.bf16.msra.mxu0 %v6152
        %6193 = vmatprep.subr.bf16.mxu0 0
        %6194 = vmatpush2.bf16.msra.mxu0 0
        %6195 = vmatprep.subr.bf16.mxu0 0
        %6196 = vmatpush2.bf16.msra.mxu0 0
        %6197 = vmatprep.subr.bf16.mxu0 0
        %6198 = vmatpush2.bf16.msra.mxu0 0
        %6199 = vmatprep.subr.bf16.mxu0 0
        %6200 = vmatpush2.bf16.msra.mxu0 0
        %6201 = vmatprep.subr.bf16.mxu0 0
        %6202 = vmatpush2.bf16.msra.mxu0 0
        %6203 = vmatprep.subr.bf16.mxu0 0
        %6204 = vmatpush2.bf16.msra.mxu0 0
        %6205 = vmatprep.subr.bf16.mxu0 0
        %6206 = vmatpush2.bf16.msra.mxu0 0
        %6207 = vmatprep.subr.bf16.mxu0 0
        %6208 = vmatpush2.bf16.msra.mxu0 0
        %6209 = vmatprep.mubr.bf16.mxu0 0
        %6210 = vmatmul.mubr.bf16.gmra.mxu0 %v6172
        %v6211 = vpop.f32.mrf.mxu0
        %v6212 = vadd.f32 0.0, %v6211
        %v6213 = vpop.f32.mrf.mxu0
        %v6214 = vpop.f32.mrf.mxu0
        %v6215 = vadd.f32 0.0, %v6214
        %v6216 = vpop.f32.mrf.mxu0
        %6217 = vmatprep.mubr.bf16.mxu0 0
        %6218 = vmatmul.mubr.bf16.gmra.mxu0 %v6175
        %v6219 = vpop.f32.mrf.mxu0
        %v6220 = vadd.f32 0.0, %v6219
        %v6221 = vpop.f32.mrf.mxu0
        %v6222 = vpop.f32.mrf.mxu0
        %v6223 = vadd.f32 0.0, %v6222
        %v6224 = vpop.f32.mrf.mxu0
        %6225 = vdwg.mxu0
        %v6230 = vunpack.c.l.b16 %v6078
        %v6231 = vunpack.c.l.b16 %v6079
        %v6232 = vunpack.c.l.b16 %v6080
        %v6233 = vunpack.c.l.b16 %v6081
        %v6234 = vpack.c.b16 %v6231, %v6230
        %v6235 = vpack.c.b16 %v6233, %v6232
        %v6237 = vsel %vm928, %v6234, 0
        %v6240 = vsel %vm928, %v6235, 0
        %6242 = vmatprep.subr.bf16.mxu0 0
        %6243 = vmatpush1.bf16.msra.mxu0 0
        %6244 = vmatprep.subr.bf16.mxu0 0
        %6245 = vmatpush1.bf16.msra.mxu0 0
        %6246 = vmatprep.subr.bf16.mxu0 0
        %6247 = vmatpush1.bf16.msra.mxu0 0
        %6248 = vmatprep.subr.bf16.mxu0 0
        %6249 = vmatpush1.bf16.msra.mxu0 0
        %6250 = vmatprep.subr.bf16.mxu0 0
        %6251 = vmatpush1.bf16.msra.mxu0 %v6077
        %6252 = vmatprep.subr.bf16.mxu0 0
        %6253 = vmatpush1.bf16.msra.mxu0 %v6076
        %6254 = vmatprep.subr.bf16.mxu0 0
        %6255 = vmatpush1.bf16.msra.mxu0 %v6075
        %6256 = vmatprep.subr.bf16.mxu0 0
        %6257 = vmatpush1.bf16.msra.mxu0 %v6074
        %6258 = vmatprep.subr.bf16.mxu0 0
        %6259 = vmatpush2.bf16.msra.mxu0 0
        %6260 = vmatprep.subr.bf16.mxu0 0
        %6261 = vmatpush2.bf16.msra.mxu0 0
        %6262 = vmatprep.subr.bf16.mxu0 0
        %6263 = vmatpush2.bf16.msra.mxu0 0
        %6264 = vmatprep.subr.bf16.mxu0 0
        %6265 = vmatpush2.bf16.msra.mxu0 0
        %6266 = vmatprep.subr.bf16.mxu0 0
        %6267 = vmatpush2.bf16.msra.mxu0 0
        %6268 = vmatprep.subr.bf16.mxu0 0
        %6269 = vmatpush2.bf16.msra.mxu0 0
        %6270 = vmatprep.subr.bf16.mxu0 0
        %6271 = vmatpush2.bf16.msra.mxu0 0
        %6272 = vmatprep.subr.bf16.mxu0 0
        %6273 = vmatpush2.bf16.msra.mxu0 0
        %6274 = vmatprep.mubr.bf16.mxu0 0
        %6275 = vmatmul.mubr.bf16.gmra.mxu0 %v6237
        %v6276 = vpop.f32.mrf.mxu0
        %v6277 = vadd.f32 %v6212, %v6276
        %v6278 = vpop.f32.mrf.mxu0
        %v6279 = vpop.f32.mrf.mxu0
        %v6280 = vadd.f32 %v6215, %v6279
        %v6281 = vpop.f32.mrf.mxu0
        %6282 = vmatprep.mubr.bf16.mxu0 0
        %6283 = vmatmul.mubr.bf16.gmra.mxu0 %v6240
        %v6284 = vpop.f32.mrf.mxu0
        %v6285 = vadd.f32 %v6220, %v6284
        %v6286 = vpop.f32.mrf.mxu0
        %v6287 = vpop.f32.mrf.mxu0
        %v6288 = vadd.f32 %v6223, %v6287
        %v6289 = vpop.f32.mrf.mxu0
        %6290 = vdwg.mxu0
        %vm6291 = vcmp.eq.s32.totalorder %v5990, 2
        %vm6292 = vcmp.eq.s32.totalorder %v5991, 2
        %v6293 = vsel %vm6291, 1.0, 0.0
        %v6294 = vsel %vm6292, 1.0, 0.0
        %v6295 = vpack.c.bf16 %v6294, %v6293
        %6296 = vmatprep.subr.bf16.mxu0 0
        %6297 = vmatpush1.bf16.msra.mxu0 0
        %6298 = vmatprep.subr.bf16.mxu0 0
        %6299 = vmatpush1.bf16.msra.mxu0 0
        %6300 = vmatprep.subr.bf16.mxu0 0
        %6301 = vmatpush1.bf16.msra.mxu0 0
        %6302 = vmatprep.subr.bf16.mxu0 0
        %6303 = vmatpush1.bf16.msra.mxu0 0
        %6304 = vmatprep.subr.bf16.mxu0 0
        %6305 = vmatpush1.bf16.msra.mxu0 0
        %6306 = vmatprep.subr.bf16.mxu0 0
        %6307 = vmatpush1.bf16.msra.mxu0 0
        %6308 = vmatprep.subr.bf16.mxu0 0
        %6309 = vmatpush1.bf16.msra.mxu0 0
        %6310 = vmatprep.subr.bf16.mxu0 0
        %6311 = vmatpush1.bf16.msra.mxu0 %v6295
        %6312 = vmatprep.subr.bf16.mxu0 0
        %6313 = vmatpush2.bf16.msra.mxu0 0
        %6314 = vmatprep.subr.bf16.mxu0 0
        %6315 = vmatpush2.bf16.msra.mxu0 0
        %6316 = vmatprep.subr.bf16.mxu0 0
        %6317 = vmatpush2.bf16.msra.mxu0 0
        %6318 = vmatprep.subr.bf16.mxu0 0
        %6319 = vmatpush2.bf16.msra.mxu0 0
        %6320 = vmatprep.subr.bf16.mxu0 0
        %6321 = vmatpush2.bf16.msra.mxu0 0
        %6322 = vmatprep.subr.bf16.mxu0 0
        %6323 = vmatpush2.bf16.msra.mxu0 0
        %6324 = vmatprep.subr.bf16.mxu0 0
        %6325 = vmatpush2.bf16.msra.mxu0 0
        %6326 = vmatprep.subr.bf16.mxu0 0
        %6327 = vmatpush2.bf16.msra.mxu0 0
        %6328 = vmatprep.mubr.bf16.mxu0 0
        %6329 = vmatmul.mubr.bf16.gmra.mxu0 %v5998
        %v6330 = vpop.f32.mrf.mxu0
        %v6331 = vadd.f32 0.0, %v6330
        %v6332 = vpop.f32.mrf.mxu0
        %v6333 = vpop.f32.mrf.mxu0
        %v6334 = vadd.f32 0.0, %v6333
        %v6335 = vpop.f32.mrf.mxu0
        %6336 = vmatprep.mubr.bf16.mxu0 0
        %6337 = vmatmul.mubr.bf16.gmra.mxu0 %v6001
        %v6338 = vpop.f32.mrf.mxu0
        %v6339 = vadd.f32 0.0, %v6338
        %v6340 = vpop.f32.mrf.mxu0
        %v6341 = vpop.f32.mrf.mxu0
        %v6342 = vadd.f32 0.0, %v6341
        %v6343 = vpop.f32.mrf.mxu0
        %6344 = vmatprep.mubr.bf16.mxu0 0
        %6345 = vmatmul.mubr.bf16.gmra.mxu0 %v6004
        %v6346 = vpop.f32.mrf.mxu0
        %v6347 = vadd.f32 0.0, %v6346
        %v6348 = vpop.f32.mrf.mxu0
        %v6349 = vpop.f32.mrf.mxu0
        %v6350 = vadd.f32 0.0, %v6349
        %v6351 = vpop.f32.mrf.mxu0
        %6352 = vmatprep.mubr.bf16.mxu0 0
        %6353 = vmatmul.mubr.bf16.gmra.mxu0 %v6007
        %v6354 = vpop.f32.mrf.mxu0
        %v6355 = vadd.f32 0.0, %v6354
        %v6356 = vpop.f32.mrf.mxu0
        %v6357 = vpop.f32.mrf.mxu0
        %v6358 = vadd.f32 0.0, %v6357
        %v6359 = vpop.f32.mrf.mxu0
        %6360 = vdwg.mxu0
        %v6361 = vpack.c.bf16 %v6334, %v6331
        %v6362 = vpack.c.bf16 %v6342, %v6339
        %v6363 = vpack.c.bf16 %v6350, %v6347
        %v6364 = vpack.c.bf16 %v6358, %v6355
        %s6365 = scalar_lea.vmem %s11, 32
        %v6366 = vld [vmem:[%s6365] sm:$0xf]
        %v6367 = vld [vmem:[%s6365 + $0x4] sm:$0xf]
        %v6368 = vld [vmem:[%s6365 + $0x8] sm:$0xf]
        %v6369 = vld [vmem:[%s6365 + $0xc] sm:$0xf]
        %v6374 = vunpack.c.l.b16 %v6366
        %v6375 = vunpack.c.l.b16 %v6367
        %v6376 = vunpack.c.l.b16 %v6368
        %v6377 = vunpack.c.l.b16 %v6369
        %v6378 = vpack.c.b16 %v6375, %v6374
        %v6379 = vpack.c.b16 %v6377, %v6376
        %v6381 = vsel %vm928, %v6378, 0
        %v6384 = vsel %vm928, %v6379, 0
        %6386 = vmatprep.subr.bf16.mxu0 0
        %6387 = vmatpush1.bf16.msra.mxu0 0
        %6388 = vmatprep.subr.bf16.mxu0 0
        %6389 = vmatpush1.bf16.msra.mxu0 0
        %6390 = vmatprep.subr.bf16.mxu0 0
        %6391 = vmatpush1.bf16.msra.mxu0 0
        %6392 = vmatprep.subr.bf16.mxu0 0
        %6393 = vmatpush1.bf16.msra.mxu0 0
        %6394 = vmatprep.subr.bf16.mxu0 0
        %6395 = vmatpush1.bf16.msra.mxu0 %v6364
        %6396 = vmatprep.subr.bf16.mxu0 0
        %6397 = vmatpush1.bf16.msra.mxu0 %v6363
        %6398 = vmatprep.subr.bf16.mxu0 0
        %6399 = vmatpush1.bf16.msra.mxu0 %v6362
        %6400 = vmatprep.subr.bf16.mxu0 0
        %6401 = vmatpush1.bf16.msra.mxu0 %v6361
        %6402 = vmatprep.subr.bf16.mxu0 0
        %6403 = vmatpush2.bf16.msra.mxu0 0
        %6404 = vmatprep.subr.bf16.mxu0 0
        %6405 = vmatpush2.bf16.msra.mxu0 0
        %6406 = vmatprep.subr.bf16.mxu0 0
        %6407 = vmatpush2.bf16.msra.mxu0 0
        %6408 = vmatprep.subr.bf16.mxu0 0
        %6409 = vmatpush2.bf16.msra.mxu0 0
        %6410 = vmatprep.subr.bf16.mxu0 0
        %6411 = vmatpush2.bf16.msra.mxu0 0
        %6412 = vmatprep.subr.bf16.mxu0 0
        %6413 = vmatpush2.bf16.msra.mxu0 0
        %6414 = vmatprep.subr.bf16.mxu0 0
        %6415 = vmatpush2.bf16.msra.mxu0 0
        %6416 = vmatprep.subr.bf16.mxu0 0
        %6417 = vmatpush2.bf16.msra.mxu0 0
        %6418 = vmatprep.mubr.bf16.mxu0 0
        %6419 = vmatmul.mubr.bf16.gmra.mxu0 %v6381
        %v6420 = vpop.f32.mrf.mxu0
        %v6421 = vadd.f32 0.0, %v6420
        %v6422 = vpop.f32.mrf.mxu0
        %v6423 = vpop.f32.mrf.mxu0
        %v6424 = vadd.f32 0.0, %v6423
        %v6425 = vpop.f32.mrf.mxu0
        %6426 = vmatprep.mubr.bf16.mxu0 0
        %6427 = vmatmul.mubr.bf16.gmra.mxu0 %v6384
        %v6428 = vpop.f32.mrf.mxu0
        %v6429 = vadd.f32 0.0, %v6428
        %v6430 = vpop.f32.mrf.mxu0
        %v6431 = vpop.f32.mrf.mxu0
        %v6432 = vadd.f32 0.0, %v6431
        %v6433 = vpop.f32.mrf.mxu0
        %6434 = vdwg.mxu0
        %v6435 = vadd.f32 %v6277, %v6421
        %v6436 = vadd.f32 %v6280, %v6424
        %v6437 = vadd.f32 %v6285, %v6429
        %v6438 = vadd.f32 %v6288, %v6432
        %v6439 = vld [vmem:[%s12] sm:$0xff]
        %v6440 = vld [vmem:[%s12 + $0x8] sm:$0xff]
        %v6441 = vld [vmem:[%s12 + $0x10] sm:$0xff]
        %v6442 = vld [vmem:[%s12 + $0x18] sm:$0xff]
        %6444 = vset.pattern.permute.xlu0 0
        %6445 = vperm.xlu0 %6444, %v6439
        %v6446 = vpop.permute.xlu0 %6445
        %6449 = vset.pattern.permute.xlu0 0
        %6450 = vperm.xlu0 %6449, %v6440
        %v6451 = vpop.permute.xlu0 %6450
        %6454 = vset.pattern.permute.xlu0 0
        %6455 = vperm.xlu0 %6454, %v6441
        %v6456 = vpop.permute.xlu0 %6455
        %6459 = vset.pattern.permute.xlu0 0
        %6460 = vperm.xlu0 %6459, %v6442
        %v6461 = vpop.permute.xlu0 %6460
        %v6463 = vadd.f32 %v6435, %v6446
        %v6464 = vadd.f32 %v6436, %v6451
        %v6465 = vadd.f32 %v6437, %v6456
        %v6466 = vadd.f32 %v6438, %v6461
        %v6467 = vmax.f32 %v6463, 0.0
        %v6468 = vmax.f32 %v6464, 0.0
        %v6469 = vmax.f32 %v6465, 0.0
        %v6470 = vmax.f32 %v6466, 0.0
        %v6471 = vpack.c.bf16 %v6468, %v6467
        %v6472 = vpack.c.bf16 %v6470, %v6469
        %v6473 = vmul.u32 %v548, 2
        %v6474 = vmul.u32 %v549, 2
        %v6475 = vsub.s32 %v563, %v6473
        %v6476 = vsub.s32 %v563, %v6474
        %v6477 = vadd.s32 %v6475, 1
        %v6478 = vadd.s32 %v6476, 1
        %vm6479 = vcmp.eq.s32.totalorder %v6477, 0
        %vm6480 = vcmp.eq.s32.totalorder %v6478, 0
        %v6481 = vsel %vm6479, 1.0, 0.0
        %v6482 = vsel %vm6480, 1.0, 0.0
        %v6483 = vpack.c.bf16 %v6482, %v6481
        %v6485 = vsel %vm1306, %v6471, 0
        %v6488 = vsel %vm1306, %v6472, 0
        %6490 = vmatprep.subr.bf16.mxu0 0
        %6491 = vmatpush1.bf16.msra.mxu0 0
        %6492 = vmatprep.subr.bf16.mxu0 0
        %6493 = vmatpush1.bf16.msra.mxu0 0
        %6494 = vmatprep.subr.bf16.mxu0 0
        %6495 = vmatpush1.bf16.msra.mxu0 0
        %6496 = vmatprep.subr.bf16.mxu0 0
        %6497 = vmatpush1.bf16.msra.mxu0 0
        %6498 = vmatprep.subr.bf16.mxu0 0
        %6499 = vmatpush1.bf16.msra.mxu0 0
        %6500 = vmatprep.subr.bf16.mxu0 0
        %6501 = vmatpush1.bf16.msra.mxu0 0
        %6502 = vmatprep.subr.bf16.mxu0 0
        %6503 = vmatpush1.bf16.msra.mxu0 %v6483
        %6504 = vmatprep.subr.bf16.mxu0 0
        %6505 = vmatpush1.bf16.msra.mxu0 %v5996
        %6506 = vmatprep.subr.bf16.mxu0 0
        %6507 = vmatpush2.bf16.msra.mxu0 0
        %6508 = vmatprep.subr.bf16.mxu0 0
        %6509 = vmatpush2.bf16.msra.mxu0 0
        %6510 = vmatprep.subr.bf16.mxu0 0
        %6511 = vmatpush2.bf16.msra.mxu0 0
        %6512 = vmatprep.subr.bf16.mxu0 0
        %6513 = vmatpush2.bf16.msra.mxu0 0
        %6514 = vmatprep.subr.bf16.mxu0 0
        %6515 = vmatpush2.bf16.msra.mxu0 0
        %6516 = vmatprep.subr.bf16.mxu0 0
        %6517 = vmatpush2.bf16.msra.mxu0 0
        %6518 = vmatprep.subr.bf16.mxu0 0
        %6519 = vmatpush2.bf16.msra.mxu0 0
        %6520 = vmatprep.subr.bf16.mxu0 0
        %6521 = vmatpush2.bf16.msra.mxu0 0
        %6522 = vmatprep.mubr.bf16.mxu0 0
        %6523 = vmatmul.mubr.bf16.gmra.mxu0 %v6485
        %v6524 = vpop.f32.mrf.mxu0
        %v6525 = vadd.f32 0.0, %v6524
        %v6526 = vpop.f32.mrf.mxu0
        %v6527 = vpop.f32.mrf.mxu0
        %v6528 = vadd.f32 0.0, %v6527
        %v6529 = vpop.f32.mrf.mxu0
        %6530 = vmatprep.mubr.bf16.mxu0 0
        %6531 = vmatmul.mubr.bf16.gmra.mxu0 %v6488
        %v6532 = vpop.f32.mrf.mxu0
        %v6533 = vadd.f32 0.0, %v6532
        %v6534 = vpop.f32.mrf.mxu0
        %v6535 = vpop.f32.mrf.mxu0
        %v6536 = vadd.f32 0.0, %v6535
        %v6537 = vpop.f32.mrf.mxu0
        %6538 = vdwg.mxu0
        %v6539 = vpack.c.bf16 %v6528, %v6525
        %v6540 = vpack.c.bf16 %v6536, %v6533
        %v6541 = vld [vmem:[%s13] sm:$0xf]
        %v6542 = vld [vmem:[%s13 + $0x4] sm:$0xf]
        %vm6543 = vcmp.eq.s32.totalorder %v6477, 1
        %vm6544 = vcmp.eq.s32.totalorder %v6478, 1
        %v6545 = vsel %vm6543, 1.0, 0.0
        %v6546 = vsel %vm6544, 1.0, 0.0
        %v6547 = vpack.c.bf16 %v6546, %v6545
        %6548 = vmatprep.subr.bf16.mxu0 0
        %6549 = vmatpush1.bf16.msra.mxu0 0
        %6550 = vmatprep.subr.bf16.mxu0 0
        %6551 = vmatpush1.bf16.msra.mxu0 0
        %6552 = vmatprep.subr.bf16.mxu0 0
        %6553 = vmatpush1.bf16.msra.mxu0 0
        %6554 = vmatprep.subr.bf16.mxu0 0
        %6555 = vmatpush1.bf16.msra.mxu0 0
        %6556 = vmatprep.subr.bf16.mxu0 0
        %6557 = vmatpush1.bf16.msra.mxu0 0
        %6558 = vmatprep.subr.bf16.mxu0 0
        %6559 = vmatpush1.bf16.msra.mxu0 0
        %6560 = vmatprep.subr.bf16.mxu0 0
        %6561 = vmatpush1.bf16.msra.mxu0 %v6547
        %6562 = vmatprep.subr.bf16.mxu0 0
        %6563 = vmatpush1.bf16.msra.mxu0 %v6086
        %6564 = vmatprep.subr.bf16.mxu0 0
        %6565 = vmatpush2.bf16.msra.mxu0 0
        %6566 = vmatprep.subr.bf16.mxu0 0
        %6567 = vmatpush2.bf16.msra.mxu0 0
        %6568 = vmatprep.subr.bf16.mxu0 0
        %6569 = vmatpush2.bf16.msra.mxu0 0
        %6570 = vmatprep.subr.bf16.mxu0 0
        %6571 = vmatpush2.bf16.msra.mxu0 0
        %6572 = vmatprep.subr.bf16.mxu0 0
        %6573 = vmatpush2.bf16.msra.mxu0 0
        %6574 = vmatprep.subr.bf16.mxu0 0
        %6575 = vmatpush2.bf16.msra.mxu0 0
        %6576 = vmatprep.subr.bf16.mxu0 0
        %6577 = vmatpush2.bf16.msra.mxu0 0
        %6578 = vmatprep.subr.bf16.mxu0 0
        %6579 = vmatpush2.bf16.msra.mxu0 0
        %6580 = vmatprep.mubr.bf16.mxu0 0
        %6581 = vmatmul.mubr.bf16.gmra.mxu0 %v6485
        %v6582 = vpop.f32.mrf.mxu0
        %v6583 = vadd.f32 0.0, %v6582
        %v6584 = vpop.f32.mrf.mxu0
        %v6585 = vpop.f32.mrf.mxu0
        %v6586 = vadd.f32 0.0, %v6585
        %v6587 = vpop.f32.mrf.mxu0
        %6588 = vmatprep.mubr.bf16.mxu0 0
        %6589 = vmatmul.mubr.bf16.gmra.mxu0 %v6488
        %v6590 = vpop.f32.mrf.mxu0
        %v6591 = vadd.f32 0.0, %v6590
        %v6592 = vpop.f32.mrf.mxu0
        %v6593 = vpop.f32.mrf.mxu0
        %v6594 = vadd.f32 0.0, %v6593
        %v6595 = vpop.f32.mrf.mxu0
        %6596 = vdwg.mxu0
        %v6597 = vpack.c.bf16 %v6586, %v6583
        %v6598 = vpack.c.bf16 %v6594, %v6591
        %s6599 = scalar_lea.vmem %s13, 8
        %v6600 = vld [vmem:[%s6599] sm:$0xf]
        %v6601 = vld [vmem:[%s6599 + $0x4] sm:$0xf]
        %v6604 = vunpack.c.l.b16 %v6600
        %v6605 = vunpack.c.l.b16 %v6601
        %v6606 = vpack.c.b16 %v6605, %v6604
        %v6608 = vsel %vm1306, %v6606, 0
        %6610 = vmatprep.subr.bf16.mxu0 0
        %6611 = vmatpush1.bf16.msra.mxu0 0
        %6612 = vmatprep.subr.bf16.mxu0 0
        %6613 = vmatpush1.bf16.msra.mxu0 0
        %6614 = vmatprep.subr.bf16.mxu0 0
        %6615 = vmatpush1.bf16.msra.mxu0 0
        %6616 = vmatprep.subr.bf16.mxu0 0
        %6617 = vmatpush1.bf16.msra.mxu0 0
        %6618 = vmatprep.subr.bf16.mxu0 0
        %6619 = vmatpush1.bf16.msra.mxu0 0
        %6620 = vmatprep.subr.bf16.mxu0 0
        %6621 = vmatpush1.bf16.msra.mxu0 0
        %6622 = vmatprep.subr.bf16.mxu0 0
        %6623 = vmatpush1.bf16.msra.mxu0 %v6598
        %6624 = vmatprep.subr.bf16.mxu0 0
        %6625 = vmatpush1.bf16.msra.mxu0 %v6597
        %6626 = vmatprep.subr.bf16.mxu0 0
        %6627 = vmatpush2.bf16.msra.mxu0 0
        %6628 = vmatprep.subr.bf16.mxu0 0
        %6629 = vmatpush2.bf16.msra.mxu0 0
        %6630 = vmatprep.subr.bf16.mxu0 0
        %6631 = vmatpush2.bf16.msra.mxu0 0
        %6632 = vmatprep.subr.bf16.mxu0 0
        %6633 = vmatpush2.bf16.msra.mxu0 0
        %6634 = vmatprep.subr.bf16.mxu0 0
        %6635 = vmatpush2.bf16.msra.mxu0 0
        %6636 = vmatprep.subr.bf16.mxu0 0
        %6637 = vmatpush2.bf16.msra.mxu0 0
        %6638 = vmatprep.subr.bf16.mxu0 0
        %6639 = vmatpush2.bf16.msra.mxu0 0
        %6640 = vmatprep.subr.bf16.mxu0 0
        %6641 = vmatpush2.bf16.msra.mxu0 0
        %6642 = vmatprep.mubr.bf16.mxu0 0
        %6643 = vmatmul.mubr.bf16.gmra.mxu0 %v6608
        %v6644 = vpop.f32.mrf.mxu0
        %v6645 = vadd.f32 0.0, %v6644
        %v6646 = vpop.f32.mrf.mxu0
        %v6647 = vpop.f32.mrf.mxu0
        %v6648 = vadd.f32 0.0, %v6647
        %v6649 = vpop.f32.mrf.mxu0
        %6650 = vdwg.mxu0
        %v6653 = vunpack.c.l.b16 %v6541
        %v6654 = vunpack.c.l.b16 %v6542
        %v6655 = vpack.c.b16 %v6654, %v6653
        %v6657 = vsel %vm1306, %v6655, 0
        %6659 = vmatprep.subr.bf16.mxu0 0
        %6660 = vmatpush1.bf16.msra.mxu0 0
        %6661 = vmatprep.subr.bf16.mxu0 0
        %6662 = vmatpush1.bf16.msra.mxu0 0
        %6663 = vmatprep.subr.bf16.mxu0 0
        %6664 = vmatpush1.bf16.msra.mxu0 0
        %6665 = vmatprep.subr.bf16.mxu0 0
        %6666 = vmatpush1.bf16.msra.mxu0 0
        %6667 = vmatprep.subr.bf16.mxu0 0
        %6668 = vmatpush1.bf16.msra.mxu0 0
        %6669 = vmatprep.subr.bf16.mxu0 0
        %6670 = vmatpush1.bf16.msra.mxu0 0
        %6671 = vmatprep.subr.bf16.mxu0 0
        %6672 = vmatpush1.bf16.msra.mxu0 %v6540
        %6673 = vmatprep.subr.bf16.mxu0 0
        %6674 = vmatpush1.bf16.msra.mxu0 %v6539
        %6675 = vmatprep.subr.bf16.mxu0 0
        %6676 = vmatpush2.bf16.msra.mxu0 0
        %6677 = vmatprep.subr.bf16.mxu0 0
        %6678 = vmatpush2.bf16.msra.mxu0 0
        %6679 = vmatprep.subr.bf16.mxu0 0
        %6680 = vmatpush2.bf16.msra.mxu0 0
        %6681 = vmatprep.subr.bf16.mxu0 0
        %6682 = vmatpush2.bf16.msra.mxu0 0
        %6683 = vmatprep.subr.bf16.mxu0 0
        %6684 = vmatpush2.bf16.msra.mxu0 0
        %6685 = vmatprep.subr.bf16.mxu0 0
        %6686 = vmatpush2.bf16.msra.mxu0 0
        %6687 = vmatprep.subr.bf16.mxu0 0
        %6688 = vmatpush2.bf16.msra.mxu0 0
        %6689 = vmatprep.subr.bf16.mxu0 0
        %6690 = vmatpush2.bf16.msra.mxu0 0
        %6691 = vmatprep.mubr.bf16.mxu0 0
        %6692 = vmatmul.mubr.bf16.gmra.mxu0 %v6657
        %v6693 = vpop.f32.mrf.mxu0
        %v6694 = vadd.f32 %v6645, %v6693
        %v6695 = vpop.f32.mrf.mxu0
        %v6696 = vpop.f32.mrf.mxu0
        %v6697 = vadd.f32 %v6648, %v6696
        %v6698 = vpop.f32.mrf.mxu0
        %6699 = vdwg.mxu0
        %vm6700 = vcmp.eq.s32.totalorder %v6477, 2
        %vm6701 = vcmp.eq.s32.totalorder %v6478, 2
        %v6702 = vsel %vm6700, 1.0, 0.0
        %v6703 = vsel %vm6701, 1.0, 0.0
        %v6704 = vpack.c.bf16 %v6703, %v6702
        %6705 = vmatprep.subr.bf16.mxu0 0
        %6706 = vmatpush1.bf16.msra.mxu0 0
        %6707 = vmatprep.subr.bf16.mxu0 0
        %6708 = vmatpush1.bf16.msra.mxu0 0
        %6709 = vmatprep.subr.bf16.mxu0 0
        %6710 = vmatpush1.bf16.msra.mxu0 0
        %6711 = vmatprep.subr.bf16.mxu0 0
        %6712 = vmatpush1.bf16.msra.mxu0 0
        %6713 = vmatprep.subr.bf16.mxu0 0
        %6714 = vmatpush1.bf16.msra.mxu0 0
        %6715 = vmatprep.subr.bf16.mxu0 0
        %6716 = vmatpush1.bf16.msra.mxu0 0
        %6717 = vmatprep.subr.bf16.mxu0 0
        %6718 = vmatpush1.bf16.msra.mxu0 %v6704
        %6719 = vmatprep.subr.bf16.mxu0 0
        %6720 = vmatpush1.bf16.msra.mxu0 %v6295
        %6721 = vmatprep.subr.bf16.mxu0 0
        %6722 = vmatpush2.bf16.msra.mxu0 0
        %6723 = vmatprep.subr.bf16.mxu0 0
        %6724 = vmatpush2.bf16.msra.mxu0 0
        %6725 = vmatprep.subr.bf16.mxu0 0
        %6726 = vmatpush2.bf16.msra.mxu0 0
        %6727 = vmatprep.subr.bf16.mxu0 0
        %6728 = vmatpush2.bf16.msra.mxu0 0
        %6729 = vmatprep.subr.bf16.mxu0 0
        %6730 = vmatpush2.bf16.msra.mxu0 0
        %6731 = vmatprep.subr.bf16.mxu0 0
        %6732 = vmatpush2.bf16.msra.mxu0 0
        %6733 = vmatprep.subr.bf16.mxu0 0
        %6734 = vmatpush2.bf16.msra.mxu0 0
        %6735 = vmatprep.subr.bf16.mxu0 0
        %6736 = vmatpush2.bf16.msra.mxu0 0
        %6737 = vmatprep.mubr.bf16.mxu0 0
        %6738 = vmatmul.mubr.bf16.gmra.mxu0 %v6485
        %v6739 = vpop.f32.mrf.mxu0
        %v6740 = vadd.f32 0.0, %v6739
        %v6741 = vpop.f32.mrf.mxu0
        %v6742 = vpop.f32.mrf.mxu0
        %v6743 = vadd.f32 0.0, %v6742
        %v6744 = vpop.f32.mrf.mxu0
        %6745 = vmatprep.mubr.bf16.mxu0 0
        %6746 = vmatmul.mubr.bf16.gmra.mxu0 %v6488
        %v6747 = vpop.f32.mrf.mxu0
        %v6748 = vadd.f32 0.0, %v6747
        %v6749 = vpop.f32.mrf.mxu0
        %v6750 = vpop.f32.mrf.mxu0
        %v6751 = vadd.f32 0.0, %v6750
        %v6752 = vpop.f32.mrf.mxu0
        %6753 = vdwg.mxu0
        %v6754 = vpack.c.bf16 %v6743, %v6740
        %v6755 = vpack.c.bf16 %v6751, %v6748
        %s6756 = scalar_lea.vmem %s13, 16
        %v6757 = vld [vmem:[%s6756] sm:$0xf]
        %v6758 = vld [vmem:[%s6756 + $0x4] sm:$0xf]
        %v6761 = vunpack.c.l.b16 %v6757
        %v6762 = vunpack.c.l.b16 %v6758
        %v6763 = vpack.c.b16 %v6762, %v6761
        %v6765 = vsel %vm1306, %v6763, 0
        %6767 = vmatprep.subr.bf16.mxu0 0
        %6768 = vmatpush1.bf16.msra.mxu0 0
        %6769 = vmatprep.subr.bf16.mxu0 0
        %6770 = vmatpush1.bf16.msra.mxu0 0
        %6771 = vmatprep.subr.bf16.mxu0 0
        %6772 = vmatpush1.bf16.msra.mxu0 0
        %6773 = vmatprep.subr.bf16.mxu0 0
        %6774 = vmatpush1.bf16.msra.mxu0 0
        %6775 = vmatprep.subr.bf16.mxu0 0
        %6776 = vmatpush1.bf16.msra.mxu0 0
        %6777 = vmatprep.subr.bf16.mxu0 0
        %6778 = vmatpush1.bf16.msra.mxu0 0
        %6779 = vmatprep.subr.bf16.mxu0 0
        %6780 = vmatpush1.bf16.msra.mxu0 %v6755
        %6781 = vmatprep.subr.bf16.mxu0 0
        %6782 = vmatpush1.bf16.msra.mxu0 %v6754
        %6783 = vmatprep.subr.bf16.mxu0 0
        %6784 = vmatpush2.bf16.msra.mxu0 0
        %6785 = vmatprep.subr.bf16.mxu0 0
        %6786 = vmatpush2.bf16.msra.mxu0 0
        %6787 = vmatprep.subr.bf16.mxu0 0
        %6788 = vmatpush2.bf16.msra.mxu0 0
        %6789 = vmatprep.subr.bf16.mxu0 0
        %6790 = vmatpush2.bf16.msra.mxu0 0
        %6791 = vmatprep.subr.bf16.mxu0 0
        %6792 = vmatpush2.bf16.msra.mxu0 0
        %6793 = vmatprep.subr.bf16.mxu0 0
        %6794 = vmatpush2.bf16.msra.mxu0 0
        %6795 = vmatprep.subr.bf16.mxu0 0
        %6796 = vmatpush2.bf16.msra.mxu0 0
        %6797 = vmatprep.subr.bf16.mxu0 0
        %6798 = vmatpush2.bf16.msra.mxu0 0
        %6799 = vmatprep.mubr.bf16.mxu0 0
        %6800 = vmatmul.mubr.bf16.gmra.mxu0 %v6765
        %v6801 = vpop.f32.mrf.mxu0
        %v6802 = vadd.f32 0.0, %v6801
        %v6803 = vpop.f32.mrf.mxu0
        %v6804 = vpop.f32.mrf.mxu0
        %v6805 = vadd.f32 0.0, %v6804
        %v6806 = vpop.f32.mrf.mxu0
        %6807 = vdwg.mxu0
        %v6808 = vadd.f32 %v6694, %v6802
        %v6809 = vadd.f32 %v6697, %v6805
        %v6810 = vld [vmem:[%s14] sm:$0xff]
        %v6811 = vld [vmem:[%s14 + $0x8] sm:$0xff]
        %6813 = vset.pattern.permute.xlu0 0
        %6814 = vperm.xlu0 %6813, %v6810
        %v6815 = vpop.permute.xlu0 %6814
        %6818 = vset.pattern.permute.xlu0 0
        %6819 = vperm.xlu0 %6818, %v6811
        %v6820 = vpop.permute.xlu0 %6819
        %v6822 = vadd.f32 %v6808, %v6815
        %v6823 = vadd.f32 %v6809, %v6820
        %v6824 = vmax.f32 %v6822, 0.0
        %v6825 = vmax.f32 %v6823, 0.0
        %v6826 = vpack.c.bf16 %v6825, %v6824
        %v6827 = vmul.u32 %v550, 2
        %v6828 = vmul.u32 %v551, 2
        %v6829 = vmul.u32 %v552, 2
        %v6830 = vmul.u32 %v553, 2
        %v6831 = vsub.s32 %v563, %v6827
        %v6832 = vsub.s32 %v563, %v6828
        %v6833 = vsub.s32 %v563, %v6829
        %v6834 = vsub.s32 %v563, %v6830
        %v6835 = vadd.s32 %v6831, 1
        %v6836 = vadd.s32 %v6832, 1
        %v6837 = vadd.s32 %v6833, 1
        %v6838 = vadd.s32 %v6834, 1
        %vm6839 = vcmp.eq.s32.totalorder %v6835, 0
        %vm6840 = vcmp.eq.s32.totalorder %v6836, 0
        %vm6841 = vcmp.eq.s32.totalorder %v6837, 0
        %vm6842 = vcmp.eq.s32.totalorder %v6838, 0
        %v6843 = vsel %vm6839, 1.0, 0.0
        %v6844 = vsel %vm6840, 1.0, 0.0
        %v6845 = vsel %vm6841, 1.0, 0.0
        %v6846 = vsel %vm6842, 1.0, 0.0
        %v6847 = vpack.c.bf16 %v6844, %v6843
        %v6848 = vpack.c.bf16 %v6846, %v6845
        %v6850 = vsel %vm928, %v6826, 0
        %6852 = vmatprep.subr.bf16.mxu0 0
        %6853 = vmatpush1.bf16.msra.mxu0 0
        %6854 = vmatprep.subr.bf16.mxu0 0
        %6855 = vmatpush1.bf16.msra.mxu0 0
        %6856 = vmatprep.subr.bf16.mxu0 0
        %6857 = vmatpush1.bf16.msra.mxu0 0
        %6858 = vmatprep.subr.bf16.mxu0 0
        %6859 = vmatpush1.bf16.msra.mxu0 0
        %6860 = vmatprep.subr.bf16.mxu0 0
        %6861 = vmatpush1.bf16.msra.mxu0 %v6848
        %6862 = vmatprep.subr.bf16.mxu0 0
        %6863 = vmatpush1.bf16.msra.mxu0 %v6847
        %6864 = vmatprep.subr.bf16.mxu0 0
        %6865 = vmatpush1.bf16.msra.mxu0 %v6483
        %6866 = vmatprep.subr.bf16.mxu0 0
        %6867 = vmatpush1.bf16.msra.mxu0 %v5996
        %6868 = vmatprep.subr.bf16.mxu0 0
        %6869 = vmatpush2.bf16.msra.mxu0 0
        %6870 = vmatprep.subr.bf16.mxu0 0
        %6871 = vmatpush2.bf16.msra.mxu0 0
        %6872 = vmatprep.subr.bf16.mxu0 0
        %6873 = vmatpush2.bf16.msra.mxu0 0
        %6874 = vmatprep.subr.bf16.mxu0 0
        %6875 = vmatpush2.bf16.msra.mxu0 0
        %6876 = vmatprep.subr.bf16.mxu0 0
        %6877 = vmatpush2.bf16.msra.mxu0 0
        %6878 = vmatprep.subr.bf16.mxu0 0
        %6879 = vmatpush2.bf16.msra.mxu0 0
        %6880 = vmatprep.subr.bf16.mxu0 0
        %6881 = vmatpush2.bf16.msra.mxu0 0
        %6882 = vmatprep.subr.bf16.mxu0 0
        %6883 = vmatpush2.bf16.msra.mxu0 0
        %6884 = vmatprep.mubr.bf16.mxu0 0
        %6885 = vmatmul.mubr.bf16.gmra.mxu0 %v6850
        %v6886 = vpop.f32.mrf.mxu0
        %v6887 = vadd.f32 0.0, %v6886
        %v6888 = vpop.f32.mrf.mxu0
        %v6889 = vpop.f32.mrf.mxu0
        %v6890 = vadd.f32 0.0, %v6889
        %v6891 = vpop.f32.mrf.mxu0
        %6892 = vdwg.mxu0
        %v6893 = vpack.c.bf16 %v6890, %v6887
        %v6894 = vld [vmem:[%s15] sm:$0x1]
        %vm6895 = vcmp.eq.s32.totalorder %v6835, 1
        %vm6896 = vcmp.eq.s32.totalorder %v6836, 1
        %vm6897 = vcmp.eq.s32.totalorder %v6837, 1
        %vm6898 = vcmp.eq.s32.totalorder %v6838, 1
        %v6899 = vsel %vm6895, 1.0, 0.0
        %v6900 = vsel %vm6896, 1.0, 0.0
        %v6901 = vsel %vm6897, 1.0, 0.0
        %v6902 = vsel %vm6898, 1.0, 0.0
        %v6903 = vpack.c.bf16 %v6900, %v6899
        %v6904 = vpack.c.bf16 %v6902, %v6901
        %6905 = vmatprep.subr.bf16.mxu0 0
        %6906 = vmatpush1.bf16.msra.mxu0 0
        %6907 = vmatprep.subr.bf16.mxu0 0
        %6908 = vmatpush1.bf16.msra.mxu0 0
        %6909 = vmatprep.subr.bf16.mxu0 0
        %6910 = vmatpush1.bf16.msra.mxu0 0
        %6911 = vmatprep.subr.bf16.mxu0 0
        %6912 = vmatpush1.bf16.msra.mxu0 0
        %6913 = vmatprep.subr.bf16.mxu0 0
        %6914 = vmatpush1.bf16.msra.mxu0 %v6904
        %6915 = vmatprep.subr.bf16.mxu0 0
        %6916 = vmatpush1.bf16.msra.mxu0 %v6903
        %6917 = vmatprep.subr.bf16.mxu0 0
        %6918 = vmatpush1.bf16.msra.mxu0 %v6547
        %6919 = vmatprep.subr.bf16.mxu0 0
        %6920 = vmatpush1.bf16.msra.mxu0 %v6086
        %6921 = vmatprep.subr.bf16.mxu0 0
        %6922 = vmatpush2.bf16.msra.mxu0 0
        %6923 = vmatprep.subr.bf16.mxu0 0
        %6924 = vmatpush2.bf16.msra.mxu0 0
        %6925 = vmatprep.subr.bf16.mxu0 0
        %6926 = vmatpush2.bf16.msra.mxu0 0
        %6927 = vmatprep.subr.bf16.mxu0 0
        %6928 = vmatpush2.bf16.msra.mxu0 0
        %6929 = vmatprep.subr.bf16.mxu0 0
        %6930 = vmatpush2.bf16.msra.mxu0 0
        %6931 = vmatprep.subr.bf16.mxu0 0
        %6932 = vmatpush2.bf16.msra.mxu0 0
        %6933 = vmatprep.subr.bf16.mxu0 0
        %6934 = vmatpush2.bf16.msra.mxu0 0
        %6935 = vmatprep.subr.bf16.mxu0 0
        %6936 = vmatpush2.bf16.msra.mxu0 0
        %6937 = vmatprep.mubr.bf16.mxu0 0
        %6938 = vmatmul.mubr.bf16.gmra.mxu0 %v6850
        %v6939 = vpop.f32.mrf.mxu0
        %v6940 = vadd.f32 0.0, %v6939
        %v6941 = vpop.f32.mrf.mxu0
        %v6942 = vpop.f32.mrf.mxu0
        %v6943 = vadd.f32 0.0, %v6942
        %v6944 = vpop.f32.mrf.mxu0
        %6945 = vdwg.mxu0
        %v6946 = vpack.c.bf16 %v6943, %v6940
        %s6947 = scalar_lea.vmem %s15, 1
        %v6948 = vld [vmem:[%s6947] sm:$0x1]
        %v6950 = vsel %vm1035, %v6948, 0
        %6952 = vmatprep.subr.bf16.mxu0 0
        %6953 = vmatpush1.bf16.msra.mxu0 0
        %6954 = vmatprep.subr.bf16.mxu0 0
        %6955 = vmatpush1.bf16.msra.mxu0 0
        %6956 = vmatprep.subr.bf16.mxu0 0
        %6957 = vmatpush1.bf16.msra.mxu0 0
        %6958 = vmatprep.subr.bf16.mxu0 0
        %6959 = vmatpush1.bf16.msra.mxu0 0
        %6960 = vmatprep.subr.bf16.mxu0 0
        %6961 = vmatpush1.bf16.msra.mxu0 0
        %6962 = vmatprep.subr.bf16.mxu0 0
        %6963 = vmatpush1.bf16.msra.mxu0 0
        %6964 = vmatprep.subr.bf16.mxu0 0
        %6965 = vmatpush1.bf16.msra.mxu0 0
        %6966 = vmatprep.subr.bf16.mxu0 0
        %6967 = vmatpush1.bf16.msra.mxu0 %v6946
        %6968 = vmatprep.subr.bf16.mxu0 0
        %6969 = vmatpush2.bf16.msra.mxu0 0
        %6970 = vmatprep.subr.bf16.mxu0 0
        %6971 = vmatpush2.bf16.msra.mxu0 0
        %6972 = vmatprep.subr.bf16.mxu0 0
        %6973 = vmatpush2.bf16.msra.mxu0 0
        %6974 = vmatprep.subr.bf16.mxu0 0
        %6975 = vmatpush2.bf16.msra.mxu0 0
        %6976 = vmatprep.subr.bf16.mxu0 0
        %6977 = vmatpush2.bf16.msra.mxu0 0
        %6978 = vmatprep.subr.bf16.mxu0 0
        %6979 = vmatpush2.bf16.msra.mxu0 0
        %6980 = vmatprep.subr.bf16.mxu0 0
        %6981 = vmatpush2.bf16.msra.mxu0 0
        %6982 = vmatprep.subr.bf16.mxu0 0
        %6983 = vmatpush2.bf16.msra.mxu0 0
        %6984 = vmatprep.mubr.bf16.mxu0 0
        %6985 = vmatmul.mubr.bf16.gmra.mxu0 %v6950
        %v6986 = vpop.f32.mrf.mxu0
        %v6987 = vadd.f32 0.0, %v6986
        %v6988 = vpop.f32.mrf.mxu0
        %v6989 = vpop.f32.mrf.mxu0
        %v6990 = vpop.f32.mrf.mxu0
        %6991 = vdwg.mxu0
        %v6993 = vsel %vm1035, %v6894, 0
        %6995 = vmatprep.subr.bf16.mxu0 0
        %6996 = vmatpush1.bf16.msra.mxu0 0
        %6997 = vmatprep.subr.bf16.mxu0 0
        %6998 = vmatpush1.bf16.msra.mxu0 0
        %6999 = vmatprep.subr.bf16.mxu0 0
        %7000 = vmatpush1.bf16.msra.mxu0 0
        %7001 = vmatprep.subr.bf16.mxu0 0
        %7002 = vmatpush1.bf16.msra.mxu0 0
        %7003 = vmatprep.subr.bf16.mxu0 0
        %7004 = vmatpush1.bf16.msra.mxu0 0
        %7005 = vmatprep.subr.bf16.mxu0 0
        %7006 = vmatpush1.bf16.msra.mxu0 0
        %7007 = vmatprep.subr.bf16.mxu0 0
        %7008 = vmatpush1.bf16.msra.mxu0 0
        %7009 = vmatprep.subr.bf16.mxu0 0
        %7010 = vmatpush1.bf16.msra.mxu0 %v6893
        %7011 = vmatprep.subr.bf16.mxu0 0
        %7012 = vmatpush2.bf16.msra.mxu0 0
        %7013 = vmatprep.subr.bf16.mxu0 0
        %7014 = vmatpush2.bf16.msra.mxu0 0
        %7015 = vmatprep.subr.bf16.mxu0 0
        %7016 = vmatpush2.bf16.msra.mxu0 0
        %7017 = vmatprep.subr.bf16.mxu0 0
        %7018 = vmatpush2.bf16.msra.mxu0 0
        %7019 = vmatprep.subr.bf16.mxu0 0
        %7020 = vmatpush2.bf16.msra.mxu0 0
        %7021 = vmatprep.subr.bf16.mxu0 0
        %7022 = vmatpush2.bf16.msra.mxu0 0
        %7023 = vmatprep.subr.bf16.mxu0 0
        %7024 = vmatpush2.bf16.msra.mxu0 0
        %7025 = vmatprep.subr.bf16.mxu0 0
        %7026 = vmatpush2.bf16.msra.mxu0 0
        %7027 = vmatprep.mubr.bf16.mxu0 0
        %7028 = vmatmul.mubr.bf16.gmra.mxu0 %v6993
        %v7029 = vpop.f32.mrf.mxu0
        %v7030 = vadd.f32 %v6987, %v7029
        %v7031 = vpop.f32.mrf.mxu0
        %v7032 = vpop.f32.mrf.mxu0
        %v7033 = vpop.f32.mrf.mxu0
        %7034 = vdwg.mxu0
        %vm7035 = vcmp.eq.s32.totalorder %v6835, 2
        %vm7036 = vcmp.eq.s32.totalorder %v6836, 2
        %vm7037 = vcmp.eq.s32.totalorder %v6837, 2
        %vm7038 = vcmp.eq.s32.totalorder %v6838, 2
        %v7039 = vsel %vm7035, 1.0, 0.0
        %v7040 = vsel %vm7036, 1.0, 0.0
        %v7041 = vsel %vm7037, 1.0, 0.0
        %v7042 = vsel %vm7038, 1.0, 0.0
        %v7043 = vpack.c.bf16 %v7040, %v7039
        %v7044 = vpack.c.bf16 %v7042, %v7041
        %7045 = vmatprep.subr.bf16.mxu0 0
        %7046 = vmatpush1.bf16.msra.mxu0 0
        %7047 = vmatprep.subr.bf16.mxu0 0
        %7048 = vmatpush1.bf16.msra.mxu0 0
        %7049 = vmatprep.subr.bf16.mxu0 0
        %7050 = vmatpush1.bf16.msra.mxu0 0
        %7051 = vmatprep.subr.bf16.mxu0 0
        %7052 = vmatpush1.bf16.msra.mxu0 0
        %7053 = vmatprep.subr.bf16.mxu0 0
        %7054 = vmatpush1.bf16.msra.mxu0 %v7044
        %7055 = vmatprep.subr.bf16.mxu0 0
        %7056 = vmatpush1.bf16.msra.mxu0 %v7043
        %7057 = vmatprep.subr.bf16.mxu0 0
        %7058 = vmatpush1.bf16.msra.mxu0 %v6704
        %7059 = vmatprep.subr.bf16.mxu0 0
        %7060 = vmatpush1.bf16.msra.mxu0 %v6295
        %7061 = vmatprep.subr.bf16.mxu0 0
        %7062 = vmatpush2.bf16.msra.mxu0 0
        %7063 = vmatprep.subr.bf16.mxu0 0
        %7064 = vmatpush2.bf16.msra.mxu0 0
        %7065 = vmatprep.subr.bf16.mxu0 0
        %7066 = vmatpush2.bf16.msra.mxu0 0
        %7067 = vmatprep.subr.bf16.mxu0 0
        %7068 = vmatpush2.bf16.msra.mxu0 0
        %7069 = vmatprep.subr.bf16.mxu0 0
        %7070 = vmatpush2.bf16.msra.mxu0 0
        %7071 = vmatprep.subr.bf16.mxu0 0
        %7072 = vmatpush2.bf16.msra.mxu0 0
        %7073 = vmatprep.subr.bf16.mxu0 0
        %7074 = vmatpush2.bf16.msra.mxu0 0
        %7075 = vmatprep.subr.bf16.mxu0 0
        %7076 = vmatpush2.bf16.msra.mxu0 0
        %7077 = vmatprep.mubr.bf16.mxu0 0
        %7078 = vmatmul.mubr.bf16.gmra.mxu0 %v6850
        %v7079 = vpop.f32.mrf.mxu0
        %v7080 = vadd.f32 0.0, %v7079
        %v7081 = vpop.f32.mrf.mxu0
        %v7082 = vpop.f32.mrf.mxu0
        %v7083 = vadd.f32 0.0, %v7082
        %v7084 = vpop.f32.mrf.mxu0
        %7085 = vdwg.mxu0
        %v7086 = vpack.c.bf16 %v7083, %v7080
        %s7087 = scalar_lea.vmem %s15, 2
        %v7088 = vld [vmem:[%s7087] sm:$0x1]
        %v7090 = vsel %vm1035, %v7088, 0
        %7092 = vmatprep.subr.bf16.mxu0 0
        %7093 = vmatpush1.bf16.msra.mxu0 0
        %7094 = vmatprep.subr.bf16.mxu0 0
        %7095 = vmatpush1.bf16.msra.mxu0 0
        %7096 = vmatprep.subr.bf16.mxu0 0
        %7097 = vmatpush1.bf16.msra.mxu0 0
        %7098 = vmatprep.subr.bf16.mxu0 0
        %7099 = vmatpush1.bf16.msra.mxu0 0
        %7100 = vmatprep.subr.bf16.mxu0 0
        %7101 = vmatpush1.bf16.msra.mxu0 0
        %7102 = vmatprep.subr.bf16.mxu0 0
        %7103 = vmatpush1.bf16.msra.mxu0 0
        %7104 = vmatprep.subr.bf16.mxu0 0
        %7105 = vmatpush1.bf16.msra.mxu0 0
        %7106 = vmatprep.subr.bf16.mxu0 0
        %7107 = vmatpush1.bf16.msra.mxu0 %v7086
        %7108 = vmatprep.subr.bf16.mxu0 0
        %7109 = vmatpush2.bf16.msra.mxu0 0
        %7110 = vmatprep.subr.bf16.mxu0 0
        %7111 = vmatpush2.bf16.msra.mxu0 0
        %7112 = vmatprep.subr.bf16.mxu0 0
        %7113 = vmatpush2.bf16.msra.mxu0 0
        %7114 = vmatprep.subr.bf16.mxu0 0
        %7115 = vmatpush2.bf16.msra.mxu0 0
        %7116 = vmatprep.subr.bf16.mxu0 0
        %7117 = vmatpush2.bf16.msra.mxu0 0
        %7118 = vmatprep.subr.bf16.mxu0 0
        %7119 = vmatpush2.bf16.msra.mxu0 0
        %7120 = vmatprep.subr.bf16.mxu0 0
        %7121 = vmatpush2.bf16.msra.mxu0 0
        %7122 = vmatprep.subr.bf16.mxu0 0
        %7123 = vmatpush2.bf16.msra.mxu0 0
        %7124 = vmatprep.mubr.bf16.mxu0 0
        %7125 = vmatmul.mubr.bf16.gmra.mxu0 %v7090
        %v7126 = vpop.f32.mrf.mxu0
        %v7127 = vadd.f32 0.0, %v7126
        %v7128 = vpop.f32.mrf.mxu0
        %v7129 = vpop.f32.mrf.mxu0
        %v7130 = vpop.f32.mrf.mxu0
        %7131 = vdwg.mxu0
        %v7132 = vadd.f32 %v7030, %v7127
        %v7133 = vld [vmem:[#allocation2] sm:$0x1]
        %7135 = vset.pattern.permute.xlu0 0
        %7136 = vperm.xlu0 %7135, %v7133
        %v7137 = vpop.permute.xlu0 %7136
        %v7139 = vlaneseq
        %v7140 = vshrl.u32 %v7139, 7
        %v7141 = vsub.s32 0, %v7140
        %v7142 = vrot.slane %v7137, %v7141
        %v7143 = vadd.f32 %v7132, %v7142
        %vm7144 = vcmp.ge.f32.partialorder %v7143, 0.0
        %v7145 = vmul.f32 %v7143, 0.1
        %v7146 = vsel %vm7144, %v7143, %v7145
        %7147 = vst [vmem:[%s538] sm:$0x1] %v7146
        %s7148 = sand.u32 %s403, 1
        %s7149 = scalar_lea.sflag [#allocation4], %s7148
        %s7150 = sand.u32 %s403, 1
        %s7151 = scalar_lea.vmem [#allocation3], %s7150
        // Predicated region
        $region89: #{forward.1} parent=87 // pred_check
          %p7152 = pneg %p413
        $region90: #{forward.1} parent=87 // pred_check_branch
          %7154 = sbr.rel (%p7152) target = $region92
        $region91: #{forward.1} parent=87 // pred_region
          %s7156 = ssub.s32 16, 16
          %7157 = vsyncadd %s7149, %s7156
          %s7158 = smul.addr %s33, 16
          %s7159 = scalar_lea.hbm %s17, %s7158
          %s7161 = sshll.u32 %s7151, 4
          %s7162 = int_to_ptr.vmem [resolvable:$true] %s7161
          %7164 = dma.vmem_to_hbm [thread:$0]  %s7162, 16, %s7159, %s7149
        $region92: #{forward.1} parent=87 // pred_fallthru
          _
      $region88: #{forward.1} parent=5 // pred_fallthru
        _
      %p7165 = scmp.le.s32.totalorder 2, %s28
      // Predicated region
      $region93: #{forward.1} parent=5 // pred_check
        %p7166 = pneg %p7165
      $region94: #{forward.1} parent=5 // pred_check_branch
        %7168 = sbr.rel (%p7166) target = $region96
      $region95: #{forward.1} parent=5 // pred_region
        %s7169 = ssub.s32 %s28, 2
        // Predicated region
        $region97: #{forward.1} parent=95 // pred_check
          %p7170 = pneg %p419
        $region98: #{forward.1} parent=95 // pred_check_branch
          %7172 = sbr.rel (%p7170) target = $region100
        $region99: #{forward.1} parent=95 // pred_region
          %s7173 = sand.u32 %s404, 1
          %s7174 = scalar_lea.sflag [#allocation4], %s7173
          %s7175 = sand.u32 %s404, 1
          %s7176 = scalar_lea.vmem [#allocation3], %s7175
          %7177 = dma.done %s7174, 16
        $region100: #{forward.1} parent=95 // pred_fallthru
          _
      $region96: #{forward.1} parent=5 // pred_fallthru
        _
    $region6: #{forward.1} parent=1 // loop_footer
      %s32 = sadd.s32 1, %s28
    $region7: #{forward.1} parent=1 // loop_footer_branch
      %27 = sbr.rel target = $region3
    $region8: #{forward.1} parent=1 // loop_exit
      _
    %7178 = vsyncpa [#allocation4], 1
    %s7179 = scalar_lea.sflag [#allocation4], 1
    %7180 = vsyncpa %s7179, 1

</llo_original>
